<compile_context>
chip_gen: v7x
topology: tpu7x:2x2x1
jax: 0.10.0
libtpu: 0.0.40
codegen_flags: <defaults>
</compile_context>

<pallas_src>
import functools
from typing import NamedTuple

import numpy as np
import jax
import jax.numpy as jnp
from jax.experimental import pallas as pl
from jax.experimental.pallas import tpu as pltpu

LEAKY_SLOPE = 0.2
BN_EPS = 1e-5          # PyTorch BatchNorm2d default
KH = KW = 4            # every conv in this module is 4x4, pad=1

_VMEM = pl.BlockSpec(memory_space=pltpu.MemorySpace.VMEM)


class _Blk(NamedTuple):
    cin: int
    cout: int
    stride: int
    h: int    # input spatial size (square)
    hp: int   # padded input spatial size
    ho: int   # output spatial size


def _arch_dims(input_nc, spatial):
    """Static per-block dims for the ndf=4 / n_layers=3 NLayerDiscriminator."""
    specs = ((input_nc, 4, 2), (4, 8, 2), (8, 16, 2), (16, 32, 1))
    blocks, h = [], spatial
    for cin, cout, stride in specs:
        hp = h + 2
        ho = (hp - KH) // stride + 1
        blocks.append(_Blk(cin, cout, stride, h, hp, ho))
        h = ho
    hp5 = h + 2
    ho5 = hp5 - KH + 1                 # conv5: 4x4, stride 1, pad 1
    return tuple(blocks), (h, hp5, ho5)


# ----------------------------- host-side packing -----------------------------

def _pack_banded(w_oihw, wp, wo, stride):
    """(4, Wp*Cin, Wo*Cout): per kernel-row banded RHS folding the 4 kernel columns and the
    column stride into a band over the padded-width lane axis (lanes ordered (col, cin))."""
    w = np.asarray(w_oihw, np.float32)
    cout, cin, kh, kw = w.shape
    band = np.zeros((kh, wp * cin, wo * cout), np.float32)
    for i in range(kh):
        for j in range(kw):
            blk = w[:, :, i, j].T                      # (Cin, Cout)
            for o in range(wo):
                wi = stride * o + j                    # padded input column
                band[i, wi * cin:(wi + 1) * cin, o * cout:(o + 1) * cout] = blk
    return band


def _unfold_conv5(w_oihw, hp, ho):
    """(Hp*Wp*Cin, Ho*Wo) unfolded conv5 weight acting on the flattened, zero-padded input."""
    w = np.asarray(w_oihw, np.float32)[0]              # (Cin, 4, 4)
    cin = w.shape[0]
    u = np.zeros((hp * hp * cin, ho * ho), np.float32)
    for oh in range(ho):
        for ow in range(ho):
            for i in range(KH):
                for j in range(KW):
                    r, c = oh + i, ow + j
                    u[(r * hp + c) * cin:(r * hp + c + 1) * cin, oh * ho + ow] = w[:, i, j]
    return u


def pack_params(params, input_nc, spatial):
    """One-time host-side weight packing (all per-forward weight prep hoisted here)."""
    dims, (_, hp5, ho5) = _arch_dims(input_nc, spatial)
    d1, d2, d3, d4 = dims
    f32 = np.float32

    def band(name, d):
        return jnp.asarray(_pack_banded(params[name], d.hp, d.ho, d.stride), jnp.bfloat16)

    packed = {
        "w1": band("conv1_w", d1),
        "b1": jnp.asarray(np.tile(np.asarray(params["conv1_b"], f32), d1.ho)[None, :]),
        "w2": band("conv2_w", d2),
        "g2": jnp.asarray(np.asarray(params["bn2_gamma"], f32)[None, :]),
        "be2": jnp.asarray(np.asarray(params["bn2_beta"], f32)[None, :]),
        "w3": band("conv3_w", d3),
        "g3": jnp.asarray(np.asarray(params["bn3_gamma"], f32)[None, :]),
        "be3": jnp.asarray(np.asarray(params["bn3_beta"], f32)[None, :]),
        "w4": band("conv4_w", d4),
        "g4": jnp.asarray(np.asarray(params["bn4_gamma"], f32)[None, :]),
        "be4": jnp.asarray(np.asarray(params["bn4_beta"], f32)[None, :]),
    }
    # Tail: conv5 (unfolded over the padded flat input) folded into fc1; fc2 padded to 128 lanes.
    u = _unfold_conv5(params["conv5_w"], hp5, ho5)                       # (Hp5*Wp5*C4, Ho5*Wo5)
    fc1 = np.asarray(params["fc1_w"], f32)                               # (flat, 512)
    wt1 = u @ fc1
    bt1 = float(np.asarray(params["conv5_b"], f32)[0]) * fc1.sum(0) + np.asarray(params["fc1_b"], f32)
    fc2 = np.asarray(params["fc2_w"], f32)                               # (512, 1)
    wt2 = np.zeros((fc2.shape[0], 128), f32)
    wt2[:, :fc2.shape[1]] = fc2
    bt2 = np.zeros((1, 128), f32)
    bt2[0, :1] = np.asarray(params["fc2_b"], f32)
    packed.update(wt1=jnp.asarray(wt1), bt1=jnp.asarray(bt1[None, :]),
                  wt2=jnp.asarray(wt2), bt2=jnp.asarray(bt2))
    return packed


# --------------------------------- kernel ------------------------------------

def _leaky(x):
    return jnp.where(x >= 0, x, LEAKY_SLOPE * x)


def _bn_lrelu(acc, gamma, beta, *, batch, ho, rpb, wo, cout):
    """BatchNorm2d (training batch stats, biased var, two-pass) + LeakyReLU on the fused
    (rows=(b,h), lanes=(w,c)) f32 accumulator.  Junk rows are normalized but never read."""
    lout = wo * cout
    cnt = float(batch * ho * wo)
    # lane <-> channel selection matrices, built from iota (param independent, tiny).
    lane_i = jax.lax.broadcasted_iota(jnp.int32, (lout, cout), 0)
    chan_i = jax.lax.broadcasted_iota(jnp.int32, (lout, cout), 1)
    gsum = (lane_i % cout == chan_i).astype(jnp.float32)       # (Lout, Cout): per-channel sum
    chan_j = jax.lax.broadcasted_iota(jnp.int32, (cout, lout), 0)
    lane_j = jax.lax.broadcasted_iota(jnp.int32, (cout, lout), 1)
    gbc = (lane_j % cout == chan_j).astype(jnp.float32)        # (Cout, Lout): channel -> lanes

    s1 = None
    for b in range(batch):
        r = jnp.sum(acc[b * rpb:b * rpb + ho, :], axis=0, keepdims=True)
        s1 = r if s1 is None else s1 + r
    mean_c = jnp.dot(s1, gsum, preferred_element_type=jnp.float32) / cnt       # (1, Cout)
    mean_l = jnp.dot(mean_c, gbc, preferred_element_type=jnp.float32)          # (1, Lout)
    s2 = None
    for b in range(batch):
        d = acc[b * rpb:b * rpb + ho, :] - mean_l
        r = jnp.sum(d * d, axis=0, keepdims=True)
        s2 = r if s2 is None else s2 + r
    var_c = jnp.dot(s2, gsum, preferred_element_type=jnp.float32) / cnt
    scale_c = gamma * jax.lax.rsqrt(var_c + BN_EPS)
    scale_l = jnp.dot(scale_c, gbc, preferred_element_type=jnp.float32)
    shift_l = jnp.dot(beta - mean_c * scale_c, gbc, preferred_element_type=jnp.float32)
    return _leaky(acc * scale_l + shift_l)


def _disc_kernel(x1_ref, w1_ref, b1_ref,
                 w2_ref, g2_ref, be2_ref,
                 w3_ref, g3_ref, be3_ref,
                 w4_ref, g4_ref, be4_ref,
                 wt1_ref, bt1_ref, wt2_ref, bt2_ref,
                 o_ref,
                 s2_ref, s3_ref, s4_ref, x5f_ref,
                 *, batch, dims, tail):
    _, hp5, _ = tail

    # Zero the padded VMEM scratch slabs (padding borders must read as 0).
    for ref in (s2_ref, s3_ref, s4_ref, x5f_ref):
        ref[...] = jnp.zeros(ref.shape, ref.dtype)

    def conv_taps(in_ref, w_ref, stride, rpb):
        """4x4 conv as 4 MXU dots (one per kernel row).  Batch is merged into M; column taps and
        the column stride live in the banded RHS.  Valid acc row for (b, h) is b*rpb + h."""
        m = batch * rpb - (1 if stride == 2 else 3)
        acc = None
        for i in range(KH):
            if stride == 2:
                base = (i % 2) * (batch * rpb) + i // 2      # row-parity block + row tap offset
            else:
                base = i
            lhs = in_ref[base:base + m, :].astype(jnp.bfloat16)
            part = jnp.dot(lhs, w_ref[i], preferred_element_type=jnp.float32)
            acc = part if acc is None else acc + part
        return acc

    in_refs = (x1_ref, s2_ref, s3_ref, s4_ref)
    w_refs = (w1_ref, w2_ref, w3_ref, w4_ref)
    bn_refs = (None, (g2_ref, be2_ref), (g3_ref, be3_ref), (g4_ref, be4_ref))

    for k, d in enumerate(dims):
        rpb = d.hp // 2 if d.stride == 2 else d.hp           # input-slab rows per batch
        acc = conv_taps(in_refs[k], w_refs[k], d.stride, rpb)
        if k == 0:
            y = _leaky(acc + b1_ref[...])                    # conv1: bias + LeakyReLU
        else:
            g_ref, be_ref = bn_refs[k]
            y = _bn_lrelu(acc, g_ref[...], be_ref[...],
                          batch=batch, ho=d.ho, rpb=rpb, wo=d.ho, cout=d.cout)
        width = d.ho * d.cout                                # Wo*Cout lanes per output row
        if k < 3:
            # Scatter valid rows into the next block's padded input slab; the producer writes the
            # row-parity split needed by a stride-2 consumer.  Lane offset nd.cin == left zero pad.
            nd = dims[k + 1]
            dst = (s2_ref, s3_ref, s4_ref)[k]
            split = nd.stride == 2
            dst_rpb = nd.hp // 2 if split else nd.hp
            for b in range(batch):
                for h in range(d.ho):
                    if split:
                        par = (h + 1) % 2
                        dr = par * (batch * dst_rpb) + b * dst_rpb + (h + 1) // 2
                    else:
                        dr = b * dst_rpb + h + 1
                    dst[pl.ds(dr, 1), pl.ds(nd.cin, width)] = (
                        y[b * rpb + h:b * rpb + h + 1, :].astype(dst.dtype))
        else:
            # Block 4 -> flattened, zero-padded conv5/fc input: lane = (r*Wp5 + c)*C4 + cin.
            for b in range(batch):
                for h in range(d.ho):
                    lane0 = ((h + 1) * hp5 + 1) * d.cout
                    x5f_ref[pl.ds(b, 1), pl.ds(lane0, width)] = (
                        y[b * rpb + h:b * rpb + h + 1, :].astype(x5f_ref.dtype))

    # Tail: (conv5 + Flatten + Linear(512)) as one matmul, ReLU, Linear(1) padded to 128 lanes.
    hid = jnp.dot(x5f_ref[...], wt1_ref[...], preferred_element_type=jnp.float32) + bt1_ref[...]
    hid = jnp.maximum(hid, 0.0)
    out = jnp.dot(hid, wt2_ref[...], preferred_element_type=jnp.float32) + bt2_ref[...]
    o_ref[...] = out.astype(o_ref.dtype)


# --------------------------------- forward -----------------------------------

@jax.jit
def nlayer_discriminator_forward(packed, x_nchw):
    """NCHW input -> (B, 1) logits.  One fused pallas_call for the whole network."""
    batch, cin, spatial, _ = x_nchw.shape
    dims, tail = _arch_dims(cin, spatial)
    d1, d2, d3, d4 = dims
    _, hp5, _ = tail

    # Only XLA glue: NCHW->NHWC, pad=1, row-parity split for the stride-2 conv1, fuse lanes (w,c).
    x = jnp.transpose(x_nchw, (0, 2, 3, 1)).astype(jnp.float32)
    x = jnp.pad(x, ((0, 0), (1, 1), (1, 1), (0, 0)))
    hph = d1.hp // 2
    even = x[:, 0::2].reshape(batch * hph, d1.hp * cin)
    odd = x[:, 1::2].reshape(batch * hph, d1.hp * cin)
    x_slabs = jnp.concatenate([even, odd], axis=0)

    kern = functools.partial(_disc_kernel, batch=batch, dims=dims, tail=tail)
    out = pl.pallas_call(
        kern,
        out_shape=jax.ShapeDtypeStruct((batch, 128), jnp.float32),
        in_specs=[_VMEM] * 16,
        out_specs=_VMEM,
        scratch_shapes=[
            pltpu.VMEM((2 * batch * (d2.hp // 2), d2.hp * d2.cin), jnp.float32),  # conv2 input
            pltpu.VMEM((2 * batch * (d3.hp // 2), d3.hp * d3.cin), jnp.float32),  # conv3 input
            pltpu.VMEM((batch * d4.hp, d4.hp * d4.cin), jnp.float32),             # conv4 input
            pltpu.VMEM((batch, hp5 * hp5 * d4.cout), jnp.float32),                # conv5/fc input
        ],
    )(x_slabs, packed["w1"], packed["b1"],
      packed["w2"], packed["g2"], packed["be2"],
      packed["w3"], packed["g3"], packed["be3"],
      packed["w4"], packed["g4"], packed["be4"],
      packed["wt1"], packed["bt1"], packed["wt2"], packed["bt2"])
    return out[:, :1]


# ------------------------- params + pure-JAX reference ------------------------

def init_params(key, input_nc, flat_dim):
    ks = jax.random.split(key, 11)

    def w(k, shape, scale=0.05):
        return scale * jax.random.normal(k, shape, jnp.float32)

    return {
        "conv1_w": w(ks[0], (4, input_nc, 4, 4)),  "conv1_b": w(ks[1], (4,)),
        "conv2_w": w(ks[2], (8, 4, 4, 4)),
        "conv3_w": w(ks[3], (16, 8, 4, 4)),
        "conv4_w": w(ks[4], (32, 16, 4, 4)),
        "bn2_gamma": jnp.ones((8,), jnp.float32),  "bn2_beta": jnp.zeros((8,), jnp.float32),
        "bn3_gamma": jnp.ones((16,), jnp.float32), "bn3_beta": jnp.zeros((16,), jnp.float32),
        "bn4_gamma": jnp.ones((32,), jnp.float32), "bn4_beta": jnp.zeros((32,), jnp.float32),
        "conv5_w": w(ks[5], (1, 32, 4, 4)),        "conv5_b": w(ks[6], (1,)),
        "fc1_w": w(ks[7], (flat_dim, 512)),        "fc1_b": w(ks[8], (512,)),
        "fc2_w": w(ks[9], (512, 1)),               "fc2_b": w(ks[10], (1,)),
    }


def _ref_forward(params, x_nchw):
    """Pure-JAX f32 reference (lax convs) used to validate the fused kernel numerically."""
    def conv(x, w, stride):
        return jax.lax.conv_general_dilated(
            x, jnp.transpose(w, (2, 3, 1, 0)), (stride, stride), ((1, 1), (1, 1)),
            dimension_numbers=("NHWC", "HWIO", "NHWC"))

    def bn(x, g, b):
        m = jnp.mean(x, axis=(0, 1, 2))
        v = jnp.mean((x - m) ** 2, axis=(0, 1, 2))
        return (x - m) * (g * jax.lax.rsqrt(v + BN_EPS)) + b

    def lrelu(x):
        return jnp.where(x >= 0, x, LEAKY_SLOPE * x)

    x = jnp.transpose(x_nchw, (0, 2, 3, 1)).astype(jnp.float32)
    x = lrelu(conv(x, params["conv1_w"], 2) + params["conv1_b"])
    x = lrelu(bn(conv(x, params["conv2_w"], 2), params["bn2_gamma"], params["bn2_beta"]))
    x = lrelu(bn(conv(x, params["conv3_w"], 2), params["bn3_gamma"], params["bn3_beta"]))
    x = lrelu(bn(conv(x, params["conv4_w"], 1), params["bn4_gamma"], params["bn4_beta"]))
    x = conv(x, params["conv5_w"], 1) + params["conv5_b"]
    x = x.reshape(x.shape[0], -1)        # NHWC with C=1 matches torch's NCHW flatten order
    x = jnp.maximum(x @ params["fc1_w"] + params["fc1_b"], 0.0)
    return x @ params["fc2_w"] + params["fc2_b"]


if __name__ == "__main__":
    # batch=2, input_nc=4, spatial=32 (minimum spatial size keeping every k=4 conv valid):
    # 32 -s2-> 16 -s2-> 8 -s2-> 4 -s1-> 3 -s1-> 2 ; flatten = 1*2*2 = 4
    B, input_nc, S = 2, 4, 32
    key = jax.random.PRNGKey(0)
    k_x, k_p = jax.random.split(key)
    x = jax.random.normal(k_x, (B, input_nc, S, S), jnp.float32)
    params = init_params(k_p, input_nc, flat_dim=4)
    packed = pack_params(params, input_nc, S)            # one-time host-side weight packing

    out = jax.block_until_ready(nlayer_discriminator_forward(packed, x))
    assert out.shape == (B, 1), out.shape
    assert bool(jnp.all(jnp.isfinite(out)))

    ref = _ref_forward(params, x)
    np.testing.assert_allclose(np.asarray(out), np.asarray(ref), rtol=5e-2, atol=1e-2)
    print("KERNEL_OK")
</pallas_src>

<mosaic_0001>
module attributes {stable_mosaic.version = 11 : i64} {
  func.func @_disc_kernel(%arg0: memref<68x136xf32, #tpu.memory_space<vmem>>, %arg1: memref<4x136x64xbf16, #tpu.memory_space<vmem>>, %arg2: memref<1x64xf32, #tpu.memory_space<vmem>>, %arg3: memref<4x72x64xbf16, #tpu.memory_space<vmem>>, %arg4: memref<1x8xf32, #tpu.memory_space<vmem>>, %arg5: memref<1x8xf32, #tpu.memory_space<vmem>>, %arg6: memref<4x80x64xbf16, #tpu.memory_space<vmem>>, %arg7: memref<1x16xf32, #tpu.memory_space<vmem>>, %arg8: memref<1x16xf32, #tpu.memory_space<vmem>>, %arg9: memref<4x96x96xbf16, #tpu.memory_space<vmem>>, %arg10: memref<1x32xf32, #tpu.memory_space<vmem>>, %arg11: memref<1x32xf32, #tpu.memory_space<vmem>>, %arg12: memref<800x512xf32, #tpu.memory_space<vmem>>, %arg13: memref<1x512xf32, #tpu.memory_space<vmem>>, %arg14: memref<512x128xf32, #tpu.memory_space<vmem>>, %arg15: memref<1x128xf32, #tpu.memory_space<vmem>>, %arg16: memref<2x128xf32, #tpu.memory_space<vmem>>, %arg17: memref<36x72xf32, #tpu.memory_space<vmem>>, %arg18: memref<20x80xf32, #tpu.memory_space<vmem>>, %arg19: memref<12x96xf32, #tpu.memory_space<vmem>>, %arg20: memref<2x800xf32, #tpu.memory_space<vmem>>) attributes {dimension_semantics = [], scalar_prefetch = 0 : i64, scratch_operands = 4 : i64, tpu.core_type = #tpu.core_type<tc>} {
    %cst = arith.constant 0.000000e+00 : f32
    %0 = vector.broadcast %cst : f32 to vector<36x72xf32>
    %c0 = arith.constant 0 : index
    %c0_0 = arith.constant 0 : index
    %1 = vector.load %arg17[%c0, %c0_0] : memref<36x72xf32, #tpu.memory_space<vmem>>, vector<36x72xf32>
    tpu.vector_store %arg17[%c0, %c0_0], %0 {strides = array<i32>} : memref<36x72xf32, #tpu.memory_space<vmem>>, vector<36x72xf32>,
    %cst_1 = arith.constant 0.000000e+00 : f32
    %2 = vector.broadcast %cst_1 : f32 to vector<20x80xf32>
    %c0_2 = arith.constant 0 : index
    %c0_3 = arith.constant 0 : index
    %3 = vector.load %arg18[%c0_2, %c0_3] : memref<20x80xf32, #tpu.memory_space<vmem>>, vector<20x80xf32>
    tpu.vector_store %arg18[%c0_2, %c0_3], %2 {strides = array<i32>} : memref<20x80xf32, #tpu.memory_space<vmem>>, vector<20x80xf32>,
    %cst_4 = arith.constant 0.000000e+00 : f32
    %4 = vector.broadcast %cst_4 : f32 to vector<12x96xf32>
    %c0_5 = arith.constant 0 : index
    %c0_6 = arith.constant 0 : index
    %5 = vector.load %arg19[%c0_5, %c0_6] : memref<12x96xf32, #tpu.memory_space<vmem>>, vector<12x96xf32>
    tpu.vector_store %arg19[%c0_5, %c0_6], %4 {strides = array<i32>} : memref<12x96xf32, #tpu.memory_space<vmem>>, vector<12x96xf32>,
    %cst_7 = arith.constant 0.000000e+00 : f32
    %6 = vector.broadcast %cst_7 : f32 to vector<2x800xf32>
    %c0_8 = arith.constant 0 : index
    %c0_9 = arith.constant 0 : index
    %7 = vector.load %arg20[%c0_8, %c0_9] : memref<2x800xf32, #tpu.memory_space<vmem>>, vector<2x800xf32>
    tpu.vector_store %arg20[%c0_8, %c0_9], %6 {strides = array<i32>} : memref<2x800xf32, #tpu.memory_space<vmem>>, vector<2x800xf32>,
    %c0_10 = arith.constant 0 : index
    %c0_11 = arith.constant 0 : index
    %8 = vector.load %arg0[%c0_10, %c0_11] : memref<68x136xf32, #tpu.memory_space<vmem>>, vector<33x136xf32>
    %9 = arith.truncf %8 : vector<33x136xf32> to vector<33x136xbf16>
    %c0_12 = arith.constant 0 : index
    %c0_13 = arith.constant 0 : index
    %c0_14 = arith.constant 0 : index
    %10 = vector.load %arg1[%c0_12, %c0_13, %c0_14] : memref<4x136x64xbf16, #tpu.memory_space<vmem>>, vector<1x136x64xbf16>
    %11 = vector.shape_cast %10 : vector<1x136x64xbf16> to vector<136x64xbf16>
    %cst_15 = arith.constant dense<0.000000e+00> : vector<33x64xf32>
    %12 = tpu.matmul %9, %11, %cst_15 {dimension_numbers = #tpu.dot_dimension_numbers<[1], [0], [0], [1], [0, 0, 1, 1], [], []>} : vector<33x136xbf16>, vector<136x64xbf16>, vector<33x64xf32> -> vector<33x64xf32>
    %c34 = arith.constant 34 : index
    %c0_16 = arith.constant 0 : index
    %13 = vector.load %arg0[%c34, %c0_16] : memref<68x136xf32, #tpu.memory_space<vmem>>, vector<33x136xf32>
    %14 = arith.truncf %13 : vector<33x136xf32> to vector<33x136xbf16>
    %c1 = arith.constant 1 : index
    %c0_17 = arith.constant 0 : index
    %c0_18 = arith.constant 0 : index
    %15 = vector.load %arg1[%c1, %c0_17, %c0_18] : memref<4x136x64xbf16, #tpu.memory_space<vmem>>, vector<1x136x64xbf16>
    %16 = vector.shape_cast %15 : vector<1x136x64xbf16> to vector<136x64xbf16>
    %cst_19 = arith.constant dense<0.000000e+00> : vector<33x64xf32>
    %17 = tpu.matmul %14, %16, %cst_19 {dimension_numbers = #tpu.dot_dimension_numbers<[1], [0], [0], [1], [0, 0, 1, 1], [], []>} : vector<33x136xbf16>, vector<136x64xbf16>, vector<33x64xf32> -> vector<33x64xf32>
    %18 = arith.addf %12, %17 : vector<33x64xf32>
    %c1_20 = arith.constant 1 : index
    %c0_21 = arith.constant 0 : index
    %19 = vector.load %arg0[%c1_20, %c0_21] : memref<68x136xf32, #tpu.memory_space<vmem>>, vector<33x136xf32>
    %20 = arith.truncf %19 : vector<33x136xf32> to vector<33x136xbf16>
    %c2 = arith.constant 2 : index
    %c0_22 = arith.constant 0 : index
    %c0_23 = arith.constant 0 : index
    %21 = vector.load %arg1[%c2, %c0_22, %c0_23] : memref<4x136x64xbf16, #tpu.memory_space<vmem>>, vector<1x136x64xbf16>
    %22 = vector.shape_cast %21 : vector<1x136x64xbf16> to vector<136x64xbf16>
    %cst_24 = arith.constant dense<0.000000e+00> : vector<33x64xf32>
    %23 = tpu.matmul %20, %22, %cst_24 {dimension_numbers = #tpu.dot_dimension_numbers<[1], [0], [0], [1], [0, 0, 1, 1], [], []>} : vector<33x136xbf16>, vector<136x64xbf16>, vector<33x64xf32> -> vector<33x64xf32>
    %24 = arith.addf %18, %23 : vector<33x64xf32>
    %c35 = arith.constant 35 : index
    %c0_25 = arith.constant 0 : index
    %25 = vector.load %arg0[%c35, %c0_25] : memref<68x136xf32, #tpu.memory_space<vmem>>, vector<33x136xf32>
    %26 = arith.truncf %25 : vector<33x136xf32> to vector<33x136xbf16>
    %c3 = arith.constant 3 : index
    %c0_26 = arith.constant 0 : index
    %c0_27 = arith.constant 0 : index
    %27 = vector.load %arg1[%c3, %c0_26, %c0_27] : memref<4x136x64xbf16, #tpu.memory_space<vmem>>, vector<1x136x64xbf16>
    %28 = vector.shape_cast %27 : vector<1x136x64xbf16> to vector<136x64xbf16>
    %cst_28 = arith.constant dense<0.000000e+00> : vector<33x64xf32>
    %29 = tpu.matmul %26, %28, %cst_28 {dimension_numbers = #tpu.dot_dimension_numbers<[1], [0], [0], [1], [0, 0, 1, 1], [], []>} : vector<33x136xbf16>, vector<136x64xbf16>, vector<33x64xf32> -> vector<33x64xf32>
    %30 = arith.addf %24, %29 : vector<33x64xf32>
    %c0_29 = arith.constant 0 : index
    %c0_30 = arith.constant 0 : index
    %31 = vector.load %arg2[%c0_29, %c0_30] : memref<1x64xf32, #tpu.memory_space<vmem>>, vector<1x64xf32>
    %32 = vector.broadcast %31 : vector<1x64xf32> to vector<33x64xf32>
    %33 = arith.addf %30, %32 : vector<33x64xf32>
    %cst_31 = arith.constant 0.000000e+00 : f32
    %34 = vector.broadcast %cst_31 : f32 to vector<33x64xf32>
    %35 = arith.cmpf oge, %33, %34 : vector<33x64xf32>
    %cst_32 = arith.constant 2.000000e-01 : f32
    %36 = vector.broadcast %cst_32 : f32 to vector<33x64xf32>
    %37 = arith.mulf %36, %33 : vector<33x64xf32>
    %38 = arith.select %35, %33, %37 : vector<33x64xi1>, vector<33x64xf32>
    %39 = vector.extract_strided_slice %38 {offsets = [0, 0], sizes = [1, 64], strides = [1, 1]} : vector<33x64xf32> to vector<1x64xf32>
    %c18 = arith.constant 18 : index
    %c4 = arith.constant 4 : index
    %40 = vector.load %arg17[%c18, %c4] : memref<36x72xf32, #tpu.memory_space<vmem>>, vector<1x64xf32>
    tpu.vector_store %arg17[%c18, %c4], %39 {strides = array<i32>} : memref<36x72xf32, #tpu.memory_space<vmem>>, vector<1x64xf32>,
    %41 = vector.extract_strided_slice %38 {offsets = [1, 0], sizes = [1, 64], strides = [1, 1]} : vector<33x64xf32> to vector<1x64xf32>
    %c1_33 = arith.constant 1 : index
    %c4_34 = arith.constant 4 : index
    %42 = vector.load %arg17[%c1_33, %c4_34] : memref<36x72xf32, #tpu.memory_space<vmem>>, vector<1x64xf32>
    tpu.vector_store %arg17[%c1_33, %c4_34], %41 {strides = array<i32>} : memref<36x72xf32, #tpu.memory_space<vmem>>, vector<1x64xf32>,
    %43 = vector.extract_strided_slice %38 {offsets = [2, 0], sizes = [1, 64], strides = [1, 1]} : vector<33x64xf32> to vector<1x64xf32>
    %c19 = arith.constant 19 : index
    %c4_35 = arith.constant 4 : index
    %44 = vector.load %arg17[%c19, %c4_35] : memref<36x72xf32, #tpu.memory_space<vmem>>, vector<1x64xf32>
    tpu.vector_store %arg17[%c19, %c4_35], %43 {strides = array<i32>} : memref<36x72xf32, #tpu.memory_space<vmem>>, vector<1x64xf32>,
    %45 = vector.extract_strided_slice %38 {offsets = [3, 0], sizes = [1, 64], strides = [1, 1]} : vector<33x64xf32> to vector<1x64xf32>
    %c2_36 = arith.constant 2 : index
    %c4_37 = arith.constant 4 : index
    %46 = vector.load %arg17[%c2_36, %c4_37] : memref<36x72xf32, #tpu.memory_space<vmem>>, vector<1x64xf32>
    tpu.vector_store %arg17[%c2_36, %c4_37], %45 {strides = array<i32>} : memref<36x72xf32, #tpu.memory_space<vmem>>, vector<1x64xf32>,
    %47 = vector.extract_strided_slice %38 {offsets = [4, 0], sizes = [1, 64], strides = [1, 1]} : vector<33x64xf32> to vector<1x64xf32>
    %c20 = arith.constant 20 : index
    %c4_38 = arith.constant 4 : index
    %48 = vector.load %arg17[%c20, %c4_38] : memref<36x72xf32, #tpu.memory_space<vmem>>, vector<1x64xf32>
    tpu.vector_store %arg17[%c20, %c4_38], %47 {strides = array<i32>} : memref<36x72xf32, #tpu.memory_space<vmem>>, vector<1x64xf32>,
    %49 = vector.extract_strided_slice %38 {offsets = [5, 0], sizes = [1, 64], strides = [1, 1]} : vector<33x64xf32> to vector<1x64xf32>
    %c3_39 = arith.constant 3 : index
    %c4_40 = arith.constant 4 : index
    %50 = vector.load %arg17[%c3_39, %c4_40] : memref<36x72xf32, #tpu.memory_space<vmem>>, vector<1x64xf32>
    tpu.vector_store %arg17[%c3_39, %c4_40], %49 {strides = array<i32>} : memref<36x72xf32, #tpu.memory_space<vmem>>, vector<1x64xf32>,
    %51 = vector.extract_strided_slice %38 {offsets = [6, 0], sizes = [1, 64], strides = [1, 1]} : vector<33x64xf32> to vector<1x64xf32>
    %c21 = arith.constant 21 : index
    %c4_41 = arith.constant 4 : index
    %52 = vector.load %arg17[%c21, %c4_41] : memref<36x72xf32, #tpu.memory_space<vmem>>, vector<1x64xf32>
    tpu.vector_store %arg17[%c21, %c4_41], %51 {strides = array<i32>} : memref<36x72xf32, #tpu.memory_space<vmem>>, vector<1x64xf32>,
    %53 = vector.extract_strided_slice %38 {offsets = [7, 0], sizes = [1, 64], strides = [1, 1]} : vector<33x64xf32> to vector<1x64xf32>
    %c4_42 = arith.constant 4 : index
    %c4_43 = arith.constant 4 : index
    %54 = vector.load %arg17[%c4_42, %c4_43] : memref<36x72xf32, #tpu.memory_space<vmem>>, vector<1x64xf32>
    tpu.vector_store %arg17[%c4_42, %c4_43], %53 {strides = array<i32>} : memref<36x72xf32, #tpu.memory_space<vmem>>, vector<1x64xf32>,
    %55 = vector.extract_strided_slice %38 {offsets = [8, 0], sizes = [1, 64], strides = [1, 1]} : vector<33x64xf32> to vector<1x64xf32>
    %c22 = arith.constant 22 : index
    %c4_44 = arith.constant 4 : index
    %56 = vector.load %arg17[%c22, %c4_44] : memref<36x72xf32, #tpu.memory_space<vmem>>, vector<1x64xf32>
    tpu.vector_store %arg17[%c22, %c4_44], %55 {strides = array<i32>} : memref<36x72xf32, #tpu.memory_space<vmem>>, vector<1x64xf32>,
    %57 = vector.extract_strided_slice %38 {offsets = [9, 0], sizes = [1, 64], strides = [1, 1]} : vector<33x64xf32> to vector<1x64xf32>
    %c5 = arith.constant 5 : index
    %c4_45 = arith.constant 4 : index
    %58 = vector.load %arg17[%c5, %c4_45] : memref<36x72xf32, #tpu.memory_space<vmem>>, vector<1x64xf32>
    tpu.vector_store %arg17[%c5, %c4_45], %57 {strides = array<i32>} : memref<36x72xf32, #tpu.memory_space<vmem>>, vector<1x64xf32>,
    %59 = vector.extract_strided_slice %38 {offsets = [10, 0], sizes = [1, 64], strides = [1, 1]} : vector<33x64xf32> to vector<1x64xf32>
    %c23 = arith.constant 23 : index
    %c4_46 = arith.constant 4 : index
    %60 = vector.load %arg17[%c23, %c4_46] : memref<36x72xf32, #tpu.memory_space<vmem>>, vector<1x64xf32>
    tpu.vector_store %arg17[%c23, %c4_46], %59 {strides = array<i32>} : memref<36x72xf32, #tpu.memory_space<vmem>>, vector<1x64xf32>,
    %61 = vector.extract_strided_slice %38 {offsets = [11, 0], sizes = [1, 64], strides = [1, 1]} : vector<33x64xf32> to vector<1x64xf32>
    %c6 = arith.constant 6 : index
    %c4_47 = arith.constant 4 : index
    %62 = vector.load %arg17[%c6, %c4_47] : memref<36x72xf32, #tpu.memory_space<vmem>>, vector<1x64xf32>
    tpu.vector_store %arg17[%c6, %c4_47], %61 {strides = array<i32>} : memref<36x72xf32, #tpu.memory_space<vmem>>, vector<1x64xf32>,
    %63 = vector.extract_strided_slice %38 {offsets = [12, 0], sizes = [1, 64], strides = [1, 1]} : vector<33x64xf32> to vector<1x64xf32>
    %c24 = arith.constant 24 : index
    %c4_48 = arith.constant 4 : index
    %64 = vector.load %arg17[%c24, %c4_48] : memref<36x72xf32, #tpu.memory_space<vmem>>, vector<1x64xf32>
    tpu.vector_store %arg17[%c24, %c4_48], %63 {strides = array<i32>} : memref<36x72xf32, #tpu.memory_space<vmem>>, vector<1x64xf32>,
    %65 = vector.extract_strided_slice %38 {offsets = [13, 0], sizes = [1, 64], strides = [1, 1]} : vector<33x64xf32> to vector<1x64xf32>
    %c7 = arith.constant 7 : index
    %c4_49 = arith.constant 4 : index
    %66 = vector.load %arg17[%c7, %c4_49] : memref<36x72xf32, #tpu.memory_space<vmem>>, vector<1x64xf32>
    tpu.vector_store %arg17[%c7, %c4_49], %65 {strides = array<i32>} : memref<36x72xf32, #tpu.memory_space<vmem>>, vector<1x64xf32>,
    %67 = vector.extract_strided_slice %38 {offsets = [14, 0], sizes = [1, 64], strides = [1, 1]} : vector<33x64xf32> to vector<1x64xf32>
    %c25 = arith.constant 25 : index
    %c4_50 = arith.constant 4 : index
    %68 = vector.load %arg17[%c25, %c4_50] : memref<36x72xf32, #tpu.memory_space<vmem>>, vector<1x64xf32>
    tpu.vector_store %arg17[%c25, %c4_50], %67 {strides = array<i32>} : memref<36x72xf32, #tpu.memory_space<vmem>>, vector<1x64xf32>,
    %69 = vector.extract_strided_slice %38 {offsets = [15, 0], sizes = [1, 64], strides = [1, 1]} : vector<33x64xf32> to vector<1x64xf32>
    %c8 = arith.constant 8 : index
    %c4_51 = arith.constant 4 : index
    %70 = vector.load %arg17[%c8, %c4_51] : memref<36x72xf32, #tpu.memory_space<vmem>>, vector<1x64xf32>
    tpu.vector_store %arg17[%c8, %c4_51], %69 {strides = array<i32>} : memref<36x72xf32, #tpu.memory_space<vmem>>, vector<1x64xf32>,
    %71 = vector.extract_strided_slice %38 {offsets = [17, 0], sizes = [1, 64], strides = [1, 1]} : vector<33x64xf32> to vector<1x64xf32>
    %c27 = arith.constant 27 : index
    %c4_52 = arith.constant 4 : index
    %72 = vector.load %arg17[%c27, %c4_52] : memref<36x72xf32, #tpu.memory_space<vmem>>, vector<1x64xf32>
    tpu.vector_store %arg17[%c27, %c4_52], %71 {strides = array<i32>} : memref<36x72xf32, #tpu.memory_space<vmem>>, vector<1x64xf32>,
    %73 = vector.extract_strided_slice %38 {offsets = [18, 0], sizes = [1, 64], strides = [1, 1]} : vector<33x64xf32> to vector<1x64xf32>
    %c10 = arith.constant 10 : index
    %c4_53 = arith.constant 4 : index
    %74 = vector.load %arg17[%c10, %c4_53] : memref<36x72xf32, #tpu.memory_space<vmem>>, vector<1x64xf32>
    tpu.vector_store %arg17[%c10, %c4_53], %73 {strides = array<i32>} : memref<36x72xf32, #tpu.memory_space<vmem>>, vector<1x64xf32>,
    %75 = vector.extract_strided_slice %38 {offsets = [19, 0], sizes = [1, 64], strides = [1, 1]} : vector<33x64xf32> to vector<1x64xf32>
    %c28 = arith.constant 28 : index
    %c4_54 = arith.constant 4 : index
    %76 = vector.load %arg17[%c28, %c4_54] : memref<36x72xf32, #tpu.memory_space<vmem>>, vector<1x64xf32>
    tpu.vector_store %arg17[%c28, %c4_54], %75 {strides = array<i32>} : memref<36x72xf32, #tpu.memory_space<vmem>>, vector<1x64xf32>,
    %77 = vector.extract_strided_slice %38 {offsets = [20, 0], sizes = [1, 64], strides = [1, 1]} : vector<33x64xf32> to vector<1x64xf32>
    %c11 = arith.constant 11 : index
    %c4_55 = arith.constant 4 : index
    %78 = vector.load %arg17[%c11, %c4_55] : memref<36x72xf32, #tpu.memory_space<vmem>>, vector<1x64xf32>
    tpu.vector_store %arg17[%c11, %c4_55], %77 {strides = array<i32>} : memref<36x72xf32, #tpu.memory_space<vmem>>, vector<1x64xf32>,
    %79 = vector.extract_strided_slice %38 {offsets = [21, 0], sizes = [1, 64], strides = [1, 1]} : vector<33x64xf32> to vector<1x64xf32>
    %c29 = arith.constant 29 : index
    %c4_56 = arith.constant 4 : index
    %80 = vector.load %arg17[%c29, %c4_56] : memref<36x72xf32, #tpu.memory_space<vmem>>, vector<1x64xf32>
    tpu.vector_store %arg17[%c29, %c4_56], %79 {strides = array<i32>} : memref<36x72xf32, #tpu.memory_space<vmem>>, vector<1x64xf32>,
    %81 = vector.extract_strided_slice %38 {offsets = [22, 0], sizes = [1, 64], strides = [1, 1]} : vector<33x64xf32> to vector<1x64xf32>
    %c12 = arith.constant 12 : index
    %c4_57 = arith.constant 4 : index
    %82 = vector.load %arg17[%c12, %c4_57] : memref<36x72xf32, #tpu.memory_space<vmem>>, vector<1x64xf32>
    tpu.vector_store %arg17[%c12, %c4_57], %81 {strides = array<i32>} : memref<36x72xf32, #tpu.memory_space<vmem>>, vector<1x64xf32>,
    %83 = vector.extract_strided_slice %38 {offsets = [23, 0], sizes = [1, 64], strides = [1, 1]} : vector<33x64xf32> to vector<1x64xf32>
    %c30 = arith.constant 30 : index
    %c4_58 = arith.constant 4 : index
    %84 = vector.load %arg17[%c30, %c4_58] : memref<36x72xf32, #tpu.memory_space<vmem>>, vector<1x64xf32>
    tpu.vector_store %arg17[%c30, %c4_58], %83 {strides = array<i32>} : memref<36x72xf32, #tpu.memory_space<vmem>>, vector<1x64xf32>,
    %85 = vector.extract_strided_slice %38 {offsets = [24, 0], sizes = [1, 64], strides = [1, 1]} : vector<33x64xf32> to vector<1x64xf32>
    %c13 = arith.constant 13 : index
    %c4_59 = arith.constant 4 : index
    %86 = vector.load %arg17[%c13, %c4_59] : memref<36x72xf32, #tpu.memory_space<vmem>>, vector<1x64xf32>
    tpu.vector_store %arg17[%c13, %c4_59], %85 {strides = array<i32>} : memref<36x72xf32, #tpu.memory_space<vmem>>, vector<1x64xf32>,
    %87 = vector.extract_strided_slice %38 {offsets = [25, 0], sizes = [1, 64], strides = [1, 1]} : vector<33x64xf32> to vector<1x64xf32>
    %c31 = arith.constant 31 : index
    %c4_60 = arith.constant 4 : index
    %88 = vector.load %arg17[%c31, %c4_60] : memref<36x72xf32, #tpu.memory_space<vmem>>, vector<1x64xf32>
    tpu.vector_store %arg17[%c31, %c4_60], %87 {strides = array<i32>} : memref<36x72xf32, #tpu.memory_space<vmem>>, vector<1x64xf32>,
    %89 = vector.extract_strided_slice %38 {offsets = [26, 0], sizes = [1, 64], strides = [1, 1]} : vector<33x64xf32> to vector<1x64xf32>
    %c14 = arith.constant 14 : index
    %c4_61 = arith.constant 4 : index
    %90 = vector.load %arg17[%c14, %c4_61] : memref<36x72xf32, #tpu.memory_space<vmem>>, vector<1x64xf32>
    tpu.vector_store %arg17[%c14, %c4_61], %89 {strides = array<i32>} : memref<36x72xf32, #tpu.memory_space<vmem>>, vector<1x64xf32>,
    %91 = vector.extract_strided_slice %38 {offsets = [27, 0], sizes = [1, 64], strides = [1, 1]} : vector<33x64xf32> to vector<1x64xf32>
    %c32 = arith.constant 32 : index
    %c4_62 = arith.constant 4 : index
    %92 = vector.load %arg17[%c32, %c4_62] : memref<36x72xf32, #tpu.memory_space<vmem>>, vector<1x64xf32>
    tpu.vector_store %arg17[%c32, %c4_62], %91 {strides = array<i32>} : memref<36x72xf32, #tpu.memory_space<vmem>>, vector<1x64xf32>,
    %93 = vector.extract_strided_slice %38 {offsets = [28, 0], sizes = [1, 64], strides = [1, 1]} : vector<33x64xf32> to vector<1x64xf32>
    %c15 = arith.constant 15 : index
    %c4_63 = arith.constant 4 : index
    %94 = vector.load %arg17[%c15, %c4_63] : memref<36x72xf32, #tpu.memory_space<vmem>>, vector<1x64xf32>
    tpu.vector_store %arg17[%c15, %c4_63], %93 {strides = array<i32>} : memref<36x72xf32, #tpu.memory_space<vmem>>, vector<1x64xf32>,
    %95 = vector.extract_strided_slice %38 {offsets = [29, 0], sizes = [1, 64], strides = [1, 1]} : vector<33x64xf32> to vector<1x64xf32>
    %c33 = arith.constant 33 : index
    %c4_64 = arith.constant 4 : index
    %96 = vector.load %arg17[%c33, %c4_64] : memref<36x72xf32, #tpu.memory_space<vmem>>, vector<1x64xf32>
    tpu.vector_store %arg17[%c33, %c4_64], %95 {strides = array<i32>} : memref<36x72xf32, #tpu.memory_space<vmem>>, vector<1x64xf32>,
    %97 = vector.extract_strided_slice %38 {offsets = [30, 0], sizes = [1, 64], strides = [1, 1]} : vector<33x64xf32> to vector<1x64xf32>
    %c16 = arith.constant 16 : index
    %c4_65 = arith.constant 4 : index
    %98 = vector.load %arg17[%c16, %c4_65] : memref<36x72xf32, #tpu.memory_space<vmem>>, vector<1x64xf32>
    tpu.vector_store %arg17[%c16, %c4_65], %97 {strides = array<i32>} : memref<36x72xf32, #tpu.memory_space<vmem>>, vector<1x64xf32>,
    %99 = vector.extract_strided_slice %38 {offsets = [31, 0], sizes = [1, 64], strides = [1, 1]} : vector<33x64xf32> to vector<1x64xf32>
    %c34_66 = arith.constant 34 : index
    %c4_67 = arith.constant 4 : index
    %100 = vector.load %arg17[%c34_66, %c4_67] : memref<36x72xf32, #tpu.memory_space<vmem>>, vector<1x64xf32>
    tpu.vector_store %arg17[%c34_66, %c4_67], %99 {strides = array<i32>} : memref<36x72xf32, #tpu.memory_space<vmem>>, vector<1x64xf32>,
    %101 = vector.extract_strided_slice %38 {offsets = [32, 0], sizes = [1, 64], strides = [1, 1]} : vector<33x64xf32> to vector<1x64xf32>
    %c17 = arith.constant 17 : index
    %c4_68 = arith.constant 4 : index
    %102 = vector.load %arg17[%c17, %c4_68] : memref<36x72xf32, #tpu.memory_space<vmem>>, vector<1x64xf32>
    tpu.vector_store %arg17[%c17, %c4_68], %101 {strides = array<i32>} : memref<36x72xf32, #tpu.memory_space<vmem>>, vector<1x64xf32>,
    %c0_69 = arith.constant 0 : index
    %c0_70 = arith.constant 0 : index
    %103 = vector.load %arg17[%c0_69, %c0_70] : memref<36x72xf32, #tpu.memory_space<vmem>>, vector<17x72xf32>
    %104 = arith.truncf %103 : vector<17x72xf32> to vector<17x72xbf16>
    %c0_71 = arith.constant 0 : index
    %c0_72 = arith.constant 0 : index
    %c0_73 = arith.constant 0 : index
    %105 = vector.load %arg3[%c0_71, %c0_72, %c0_73] : memref<4x72x64xbf16, #tpu.memory_space<vmem>>, vector<1x72x64xbf16>
    %106 = vector.shape_cast %105 : vector<1x72x64xbf16> to vector<72x64xbf16>
    %cst_74 = arith.constant dense<0.000000e+00> : vector<17x64xf32>
    %107 = tpu.matmul %104, %106, %cst_74 {dimension_numbers = #tpu.dot_dimension_numbers<[1], [0], [0], [1], [0, 0, 1, 1], [], []>} : vector<17x72xbf16>, vector<72x64xbf16>, vector<17x64xf32> -> vector<17x64xf32>
    %c18_75 = arith.constant 18 : index
    %c0_76 = arith.constant 0 : index
    %108 = vector.load %arg17[%c18_75, %c0_76] : memref<36x72xf32, #tpu.memory_space<vmem>>, vector<17x72xf32>
    %109 = arith.truncf %108 : vector<17x72xf32> to vector<17x72xbf16>
    %c1_77 = arith.constant 1 : index
    %c0_78 = arith.constant 0 : index
    %c0_79 = arith.constant 0 : index
    %110 = vector.load %arg3[%c1_77, %c0_78, %c0_79] : memref<4x72x64xbf16, #tpu.memory_space<vmem>>, vector<1x72x64xbf16>
    %111 = vector.shape_cast %110 : vector<1x72x64xbf16> to vector<72x64xbf16>
    %cst_80 = arith.constant dense<0.000000e+00> : vector<17x64xf32>
    %112 = tpu.matmul %109, %111, %cst_80 {dimension_numbers = #tpu.dot_dimension_numbers<[1], [0], [0], [1], [0, 0, 1, 1], [], []>} : vector<17x72xbf16>, vector<72x64xbf16>, vector<17x64xf32> -> vector<17x64xf32>
    %113 = arith.addf %107, %112 : vector<17x64xf32>
    %c1_81 = arith.constant 1 : index
    %c0_82 = arith.constant 0 : index
    %114 = vector.load %arg17[%c1_81, %c0_82] : memref<36x72xf32, #tpu.memory_space<vmem>>, vector<17x72xf32>
    %115 = arith.truncf %114 : vector<17x72xf32> to vector<17x72xbf16>
    %c2_83 = arith.constant 2 : index
    %c0_84 = arith.constant 0 : index
    %c0_85 = arith.constant 0 : index
    %116 = vector.load %arg3[%c2_83, %c0_84, %c0_85] : memref<4x72x64xbf16, #tpu.memory_space<vmem>>, vector<1x72x64xbf16>
    %117 = vector.shape_cast %116 : vector<1x72x64xbf16> to vector<72x64xbf16>
    %cst_86 = arith.constant dense<0.000000e+00> : vector<17x64xf32>
    %118 = tpu.matmul %115, %117, %cst_86 {dimension_numbers = #tpu.dot_dimension_numbers<[1], [0], [0], [1], [0, 0, 1, 1], [], []>} : vector<17x72xbf16>, vector<72x64xbf16>, vector<17x64xf32> -> vector<17x64xf32>
    %119 = arith.addf %113, %118 : vector<17x64xf32>
    %c19_87 = arith.constant 19 : index
    %c0_88 = arith.constant 0 : index
    %120 = vector.load %arg17[%c19_87, %c0_88] : memref<36x72xf32, #tpu.memory_space<vmem>>, vector<17x72xf32>
    %121 = arith.truncf %120 : vector<17x72xf32> to vector<17x72xbf16>
    %c3_89 = arith.constant 3 : index
    %c0_90 = arith.constant 0 : index
    %c0_91 = arith.constant 0 : index
    %122 = vector.load %arg3[%c3_89, %c0_90, %c0_91] : memref<4x72x64xbf16, #tpu.memory_space<vmem>>, vector<1x72x64xbf16>
    %123 = vector.shape_cast %122 : vector<1x72x64xbf16> to vector<72x64xbf16>
    %cst_92 = arith.constant dense<0.000000e+00> : vector<17x64xf32>
    %124 = tpu.matmul %121, %123, %cst_92 {dimension_numbers = #tpu.dot_dimension_numbers<[1], [0], [0], [1], [0, 0, 1, 1], [], []>} : vector<17x72xbf16>, vector<72x64xbf16>, vector<17x64xf32> -> vector<17x64xf32>
    %125 = arith.addf %119, %124 : vector<17x64xf32>
    %c0_93 = arith.constant 0 : index
    %c0_94 = arith.constant 0 : index
    %126 = vector.load %arg4[%c0_93, %c0_94] : memref<1x8xf32, #tpu.memory_space<vmem>>, vector<1x8xf32>
    %c0_95 = arith.constant 0 : index
    %c0_96 = arith.constant 0 : index
    %127 = vector.load %arg5[%c0_95, %c0_96] : memref<1x8xf32, #tpu.memory_space<vmem>>, vector<1x8xf32>
    %128 = tpu.iota {dimensions = array<i32: 0>} : vector<64x8xi32>
    %129 = tpu.iota {dimensions = array<i32: 1>} : vector<64x8xi32>
    %c8_i32 = arith.constant 8 : i32
    %c0_i32 = arith.constant 0 : i32
    %130 = arith.cmpi eq, %c8_i32, %c0_i32 : i32
    %c1_i32 = arith.constant 1 : i32
    %131 = arith.select %130, %c1_i32, %c8_i32 : i32
    %132 = vector.broadcast %131 : i32 to vector<64x8xi32>
    %133 = arith.remsi %128, %132 : vector<64x8xi32>
    %c0_i32_97 = arith.constant 0 : i32
    %134 = vector.broadcast %c0_i32_97 : i32 to vector<64x8xi32>
    %135 = arith.cmpi ne, %133, %134 : vector<64x8xi32>
    %c0_i32_98 = arith.constant 0 : i32
    %136 = vector.broadcast %c0_i32_98 : i32 to vector<64x8xi32>
    %137 = arith.cmpi slt, %133, %136 : vector<64x8xi32>
    %c0_i32_99 = arith.constant 0 : i32
    %138 = arith.cmpi slt, %131, %c0_i32_99 : i32
    %139 = vector.broadcast %138 : i1 to vector<64x8xi1>
    %140 = vector.broadcast %139 : vector<64x8xi1> to vector<64x8xi1>
    %141 = arith.xori %137, %140 : vector<64x8xi1>
    %142 = arith.andi %141, %135 : vector<64x8xi1>
    %143 = vector.broadcast %131 : i32 to vector<64x8xi32>
    %144 = arith.addi %133, %143 : vector<64x8xi32>
    %145 = arith.select %142, %144, %133 : vector<64x8xi1>, vector<64x8xi32>
    %146 = arith.cmpi eq, %145, %129 : vector<64x8xi32>
    %147 = arith.extui %146 : vector<64x8xi1> to vector<64x8xi32>
    %148 = arith.sitofp %147 : vector<64x8xi32> to vector<64x8xf32>
    %149 = tpu.iota {dimensions = array<i32: 0>} : vector<8x64xi32>
    %150 = tpu.iota {dimensions = array<i32: 1>} : vector<8x64xi32>
    %c8_i32_100 = arith.constant 8 : i32
    %c0_i32_101 = arith.constant 0 : i32
    %151 = arith.cmpi eq, %c8_i32_100, %c0_i32_101 : i32
    %c1_i32_102 = arith.constant 1 : i32
    %152 = arith.select %151, %c1_i32_102, %c8_i32_100 : i32
    %153 = vector.broadcast %152 : i32 to vector<8x64xi32>
    %154 = arith.remsi %150, %153 : vector<8x64xi32>
    %c0_i32_103 = arith.constant 0 : i32
    %155 = vector.broadcast %c0_i32_103 : i32 to vector<8x64xi32>
    %156 = arith.cmpi ne, %154, %155 : vector<8x64xi32>
    %c0_i32_104 = arith.constant 0 : i32
    %157 = vector.broadcast %c0_i32_104 : i32 to vector<8x64xi32>
    %158 = arith.cmpi slt, %154, %157 : vector<8x64xi32>
    %c0_i32_105 = arith.constant 0 : i32
    %159 = arith.cmpi slt, %152, %c0_i32_105 : i32
    %160 = vector.broadcast %159 : i1 to vector<8x64xi1>
    %161 = vector.broadcast %160 : vector<8x64xi1> to vector<8x64xi1>
    %162 = arith.xori %158, %161 : vector<8x64xi1>
    %163 = arith.andi %162, %156 : vector<8x64xi1>
    %164 = vector.broadcast %152 : i32 to vector<8x64xi32>
    %165 = arith.addi %154, %164 : vector<8x64xi32>
    %166 = arith.select %163, %165, %154 : vector<8x64xi1>, vector<8x64xi32>
    %167 = arith.cmpi eq, %166, %149 : vector<8x64xi32>
    %168 = arith.extui %167 : vector<8x64xi1> to vector<8x64xi32>
    %169 = arith.sitofp %168 : vector<8x64xi32> to vector<8x64xf32>
    %170 = vector.extract_strided_slice %125 {offsets = [0, 0], sizes = [8, 64], strides = [1, 1]} : vector<17x64xf32> to vector<8x64xf32>
    %cst_106 = arith.constant dense<0.000000e+00> : vector<64xf32>
    %171 = vector.multi_reduction <add>, %170, %cst_106 [0] : vector<8x64xf32> to vector<64xf32>
    %172 = vector.shape_cast %171 : vector<64xf32> to vector<1x64xf32>
    %173 = vector.extract_strided_slice %125 {offsets = [9, 0], sizes = [8, 64], strides = [1, 1]} : vector<17x64xf32> to vector<8x64xf32>
    %cst_107 = arith.constant dense<0.000000e+00> : vector<64xf32>
    %174 = vector.multi_reduction <add>, %173, %cst_107 [0] : vector<8x64xf32> to vector<64xf32>
    %175 = vector.shape_cast %174 : vector<64xf32> to vector<1x64xf32>
    %176 = arith.addf %172, %175 : vector<1x64xf32>
    %cst_108 = arith.constant dense<0.000000e+00> : vector<1x8xf32>
    %177 = tpu.matmul %176, %148, %cst_108 {dimension_numbers = #tpu.dot_dimension_numbers<[1], [0], [0], [1], [0, 0, 1, 1], [], []>} : vector<1x64xf32>, vector<64x8xf32>, vector<1x8xf32> -> vector<1x8xf32>
    %cst_109 = arith.constant 1.280000e+02 : f32
    %178 = vector.broadcast %cst_109 : f32 to vector<1x8xf32>
    %179 = arith.divf %177, %178 : vector<1x8xf32>
    %cst_110 = arith.constant dense<0.000000e+00> : vector<1x64xf32>
    %180 = tpu.matmul %179, %169, %cst_110 {dimension_numbers = #tpu.dot_dimension_numbers<[1], [0], [0], [1], [0, 0, 1, 1], [], []>} : vector<1x8xf32>, vector<8x64xf32>, vector<1x64xf32> -> vector<1x64xf32>
    %181 = vector.extract_strided_slice %125 {offsets = [0, 0], sizes = [8, 64], strides = [1, 1]} : vector<17x64xf32> to vector<8x64xf32>
    %182 = vector.broadcast %180 : vector<1x64xf32> to vector<8x64xf32>
    %183 = arith.subf %181, %182 : vector<8x64xf32>
    %184 = arith.mulf %183, %183 : vector<8x64xf32>
    %cst_111 = arith.constant dense<0.000000e+00> : vector<64xf32>
    %185 = vector.multi_reduction <add>, %184, %cst_111 [0] : vector<8x64xf32> to vector<64xf32>
    %186 = vector.shape_cast %185 : vector<64xf32> to vector<1x64xf32>
    %187 = vector.extract_strided_slice %125 {offsets = [9, 0], sizes = [8, 64], strides = [1, 1]} : vector<17x64xf32> to vector<8x64xf32>
    %188 = vector.broadcast %180 : vector<1x64xf32> to vector<8x64xf32>
    %189 = arith.subf %187, %188 : vector<8x64xf32>
    %190 = arith.mulf %189, %189 : vector<8x64xf32>
    %cst_112 = arith.constant dense<0.000000e+00> : vector<64xf32>
    %191 = vector.multi_reduction <add>, %190, %cst_112 [0] : vector<8x64xf32> to vector<64xf32>
    %192 = vector.shape_cast %191 : vector<64xf32> to vector<1x64xf32>
    %193 = arith.addf %186, %192 : vector<1x64xf32>
    %cst_113 = arith.constant dense<0.000000e+00> : vector<1x8xf32>
    %194 = tpu.matmul %193, %148, %cst_113 {dimension_numbers = #tpu.dot_dimension_numbers<[1], [0], [0], [1], [0, 0, 1, 1], [], []>} : vector<1x64xf32>, vector<64x8xf32>, vector<1x8xf32> -> vector<1x8xf32>
    %cst_114 = arith.constant 1.280000e+02 : f32
    %195 = vector.broadcast %cst_114 : f32 to vector<1x8xf32>
    %196 = arith.divf %194, %195 : vector<1x8xf32>
    %cst_115 = arith.constant 9.99999974E-6 : f32
    %197 = vector.broadcast %cst_115 : f32 to vector<1x8xf32>
    %198 = arith.addf %196, %197 : vector<1x8xf32>
    %199 = math.rsqrt %198 : vector<1x8xf32>
    %200 = arith.mulf %126, %199 : vector<1x8xf32>
    %cst_116 = arith.constant dense<0.000000e+00> : vector<1x64xf32>
    %201 = tpu.matmul %200, %169, %cst_116 {dimension_numbers = #tpu.dot_dimension_numbers<[1], [0], [0], [1], [0, 0, 1, 1], [], []>} : vector<1x8xf32>, vector<8x64xf32>, vector<1x64xf32> -> vector<1x64xf32>
    %202 = arith.mulf %179, %200 : vector<1x8xf32>
    %203 = arith.subf %127, %202 : vector<1x8xf32>
    %cst_117 = arith.constant dense<0.000000e+00> : vector<1x64xf32>
    %204 = tpu.matmul %203, %169, %cst_117 {dimension_numbers = #tpu.dot_dimension_numbers<[1], [0], [0], [1], [0, 0, 1, 1], [], []>} : vector<1x8xf32>, vector<8x64xf32>, vector<1x64xf32> -> vector<1x64xf32>
    %205 = vector.broadcast %201 : vector<1x64xf32> to vector<17x64xf32>
    %206 = arith.mulf %125, %205 : vector<17x64xf32>
    %207 = vector.broadcast %204 : vector<1x64xf32> to vector<17x64xf32>
    %208 = arith.addf %206, %207 : vector<17x64xf32>
    %cst_118 = arith.constant 0.000000e+00 : f32
    %209 = vector.broadcast %cst_118 : f32 to vector<17x64xf32>
    %210 = arith.cmpf oge, %208, %209 : vector<17x64xf32>
    %cst_119 = arith.constant 2.000000e-01 : f32
    %211 = vector.broadcast %cst_119 : f32 to vector<17x64xf32>
    %212 = arith.mulf %211, %208 : vector<17x64xf32>
    %213 = arith.select %210, %208, %212 : vector<17x64xi1>, vector<17x64xf32>
    %214 = vector.extract_strided_slice %213 {offsets = [0, 0], sizes = [1, 64], strides = [1, 1]} : vector<17x64xf32> to vector<1x64xf32>
    %c10_120 = arith.constant 10 : index
    %c8_121 = arith.constant 8 : index
    %215 = vector.load %arg18[%c10_120, %c8_121] : memref<20x80xf32, #tpu.memory_space<vmem>>, vector<1x64xf32>
    tpu.vector_store %arg18[%c10_120, %c8_121], %214 {strides = array<i32>} : memref<20x80xf32, #tpu.memory_space<vmem>>, vector<1x64xf32>,
    %216 = vector.extract_strided_slice %213 {offsets = [1, 0], sizes = [1, 64], strides = [1, 1]} : vector<17x64xf32> to vector<1x64xf32>
    %c1_122 = arith.constant 1 : index
    %c8_123 = arith.constant 8 : index
    %217 = vector.load %arg18[%c1_122, %c8_123] : memref<20x80xf32, #tpu.memory_space<vmem>>, vector<1x64xf32>
    tpu.vector_store %arg18[%c1_122, %c8_123], %216 {strides = array<i32>} : memref<20x80xf32, #tpu.memory_space<vmem>>, vector<1x64xf32>,
    %218 = vector.extract_strided_slice %213 {offsets = [2, 0], sizes = [1, 64], strides = [1, 1]} : vector<17x64xf32> to vector<1x64xf32>
    %c11_124 = arith.constant 11 : index
    %c8_125 = arith.constant 8 : index
    %219 = vector.load %arg18[%c11_124, %c8_125] : memref<20x80xf32, #tpu.memory_space<vmem>>, vector<1x64xf32>
    tpu.vector_store %arg18[%c11_124, %c8_125], %218 {strides = array<i32>} : memref<20x80xf32, #tpu.memory_space<vmem>>, vector<1x64xf32>,
    %220 = vector.extract_strided_slice %213 {offsets = [3, 0], sizes = [1, 64], strides = [1, 1]} : vector<17x64xf32> to vector<1x64xf32>
    %c2_126 = arith.constant 2 : index
    %c8_127 = arith.constant 8 : index
    %221 = vector.load %arg18[%c2_126, %c8_127] : memref<20x80xf32, #tpu.memory_space<vmem>>, vector<1x64xf32>
    tpu.vector_store %arg18[%c2_126, %c8_127], %220 {strides = array<i32>} : memref<20x80xf32, #tpu.memory_space<vmem>>, vector<1x64xf32>,
    %222 = vector.extract_strided_slice %213 {offsets = [4, 0], sizes = [1, 64], strides = [1, 1]} : vector<17x64xf32> to vector<1x64xf32>
    %c12_128 = arith.constant 12 : index
    %c8_129 = arith.constant 8 : index
    %223 = vector.load %arg18[%c12_128, %c8_129] : memref<20x80xf32, #tpu.memory_space<vmem>>, vector<1x64xf32>
    tpu.vector_store %arg18[%c12_128, %c8_129], %222 {strides = array<i32>} : memref<20x80xf32, #tpu.memory_space<vmem>>, vector<1x64xf32>,
    %224 = vector.extract_strided_slice %213 {offsets = [5, 0], sizes = [1, 64], strides = [1, 1]} : vector<17x64xf32> to vector<1x64xf32>
    %c3_130 = arith.constant 3 : index
    %c8_131 = arith.constant 8 : index
    %225 = vector.load %arg18[%c3_130, %c8_131] : memref<20x80xf32, #tpu.memory_space<vmem>>, vector<1x64xf32>
    tpu.vector_store %arg18[%c3_130, %c8_131], %224 {strides = array<i32>} : memref<20x80xf32, #tpu.memory_space<vmem>>, vector<1x64xf32>,
    %226 = vector.extract_strided_slice %213 {offsets = [6, 0], sizes = [1, 64], strides = [1, 1]} : vector<17x64xf32> to vector<1x64xf32>
    %c13_132 = arith.constant 13 : index
    %c8_133 = arith.constant 8 : index
    %227 = vector.load %arg18[%c13_132, %c8_133] : memref<20x80xf32, #tpu.memory_space<vmem>>, vector<1x64xf32>
    tpu.vector_store %arg18[%c13_132, %c8_133], %226 {strides = array<i32>} : memref<20x80xf32, #tpu.memory_space<vmem>>, vector<1x64xf32>,
    %228 = vector.extract_strided_slice %213 {offsets = [7, 0], sizes = [1, 64], strides = [1, 1]} : vector<17x64xf32> to vector<1x64xf32>
    %c4_134 = arith.constant 4 : index
    %c8_135 = arith.constant 8 : index
    %229 = vector.load %arg18[%c4_134, %c8_135] : memref<20x80xf32, #tpu.memory_space<vmem>>, vector<1x64xf32>
    tpu.vector_store %arg18[%c4_134, %c8_135], %228 {strides = array<i32>} : memref<20x80xf32, #tpu.memory_space<vmem>>, vector<1x64xf32>,
    %230 = vector.extract_strided_slice %213 {offsets = [9, 0], sizes = [1, 64], strides = [1, 1]} : vector<17x64xf32> to vector<1x64xf32>
    %c15_136 = arith.constant 15 : index
    %c8_137 = arith.constant 8 : index
    %231 = vector.load %arg18[%c15_136, %c8_137] : memref<20x80xf32, #tpu.memory_space<vmem>>, vector<1x64xf32>
    tpu.vector_store %arg18[%c15_136, %c8_137], %230 {strides = array<i32>} : memref<20x80xf32, #tpu.memory_space<vmem>>, vector<1x64xf32>,
    %232 = vector.extract_strided_slice %213 {offsets = [10, 0], sizes = [1, 64], strides = [1, 1]} : vector<17x64xf32> to vector<1x64xf32>
    %c6_138 = arith.constant 6 : index
    %c8_139 = arith.constant 8 : index
    %233 = vector.load %arg18[%c6_138, %c8_139] : memref<20x80xf32, #tpu.memory_space<vmem>>, vector<1x64xf32>
    tpu.vector_store %arg18[%c6_138, %c8_139], %232 {strides = array<i32>} : memref<20x80xf32, #tpu.memory_space<vmem>>, vector<1x64xf32>,
    %234 = vector.extract_strided_slice %213 {offsets = [11, 0], sizes = [1, 64], strides = [1, 1]} : vector<17x64xf32> to vector<1x64xf32>
    %c16_140 = arith.constant 16 : index
    %c8_141 = arith.constant 8 : index
    %235 = vector.load %arg18[%c16_140, %c8_141] : memref<20x80xf32, #tpu.memory_space<vmem>>, vector<1x64xf32>
    tpu.vector_store %arg18[%c16_140, %c8_141], %234 {strides = array<i32>} : memref<20x80xf32, #tpu.memory_space<vmem>>, vector<1x64xf32>,
    %236 = vector.extract_strided_slice %213 {offsets = [12, 0], sizes = [1, 64], strides = [1, 1]} : vector<17x64xf32> to vector<1x64xf32>
    %c7_142 = arith.constant 7 : index
    %c8_143 = arith.constant 8 : index
    %237 = vector.load %arg18[%c7_142, %c8_143] : memref<20x80xf32, #tpu.memory_space<vmem>>, vector<1x64xf32>
    tpu.vector_store %arg18[%c7_142, %c8_143], %236 {strides = array<i32>} : memref<20x80xf32, #tpu.memory_space<vmem>>, vector<1x64xf32>,
    %238 = vector.extract_strided_slice %213 {offsets = [13, 0], sizes = [1, 64], strides = [1, 1]} : vector<17x64xf32> to vector<1x64xf32>
    %c17_144 = arith.constant 17 : index
    %c8_145 = arith.constant 8 : index
    %239 = vector.load %arg18[%c17_144, %c8_145] : memref<20x80xf32, #tpu.memory_space<vmem>>, vector<1x64xf32>
    tpu.vector_store %arg18[%c17_144, %c8_145], %238 {strides = array<i32>} : memref<20x80xf32, #tpu.memory_space<vmem>>, vector<1x64xf32>,
    %240 = vector.extract_strided_slice %213 {offsets = [14, 0], sizes = [1, 64], strides = [1, 1]} : vector<17x64xf32> to vector<1x64xf32>
    %c8_146 = arith.constant 8 : index
    %c8_147 = arith.constant 8 : index
    %241 = vector.load %arg18[%c8_146, %c8_147] : memref<20x80xf32, #tpu.memory_space<vmem>>, vector<1x64xf32>
    tpu.vector_store %arg18[%c8_146, %c8_147], %240 {strides = array<i32>} : memref<20x80xf32, #tpu.memory_space<vmem>>, vector<1x64xf32>,
    %242 = vector.extract_strided_slice %213 {offsets = [15, 0], sizes = [1, 64], strides = [1, 1]} : vector<17x64xf32> to vector<1x64xf32>
    %c18_148 = arith.constant 18 : index
    %c8_149 = arith.constant 8 : index
    %243 = vector.load %arg18[%c18_148, %c8_149] : memref<20x80xf32, #tpu.memory_space<vmem>>, vector<1x64xf32>
    tpu.vector_store %arg18[%c18_148, %c8_149], %242 {strides = array<i32>} : memref<20x80xf32, #tpu.memory_space<vmem>>, vector<1x64xf32>,
    %244 = vector.extract_strided_slice %213 {offsets = [16, 0], sizes = [1, 64], strides = [1, 1]} : vector<17x64xf32> to vector<1x64xf32>
    %c9 = arith.constant 9 : index
    %c8_150 = arith.constant 8 : index
    %245 = vector.load %arg18[%c9, %c8_150] : memref<20x80xf32, #tpu.memory_space<vmem>>, vector<1x64xf32>
    tpu.vector_store %arg18[%c9, %c8_150], %244 {strides = array<i32>} : memref<20x80xf32, #tpu.memory_space<vmem>>, vector<1x64xf32>,
    %c0_151 = arith.constant 0 : index
    %c0_152 = arith.constant 0 : index
    %246 = vector.load %arg18[%c0_151, %c0_152] : memref<20x80xf32, #tpu.memory_space<vmem>>, vector<9x80xf32>
    %247 = arith.truncf %246 : vector<9x80xf32> to vector<9x80xbf16>
    %c0_153 = arith.constant 0 : index
    %c0_154 = arith.constant 0 : index
    %c0_155 = arith.constant 0 : index
    %248 = vector.load %arg6[%c0_153, %c0_154, %c0_155] : memref<4x80x64xbf16, #tpu.memory_space<vmem>>, vector<1x80x64xbf16>
    %249 = vector.shape_cast %248 : vector<1x80x64xbf16> to vector<80x64xbf16>
    %cst_156 = arith.constant dense<0.000000e+00> : vector<9x64xf32>
    %250 = tpu.matmul %247, %249, %cst_156 {dimension_numbers = #tpu.dot_dimension_numbers<[1], [0], [0], [1], [0, 0, 1, 1], [], []>} : vector<9x80xbf16>, vector<80x64xbf16>, vector<9x64xf32> -> vector<9x64xf32>
    %c10_157 = arith.constant 10 : index
    %c0_158 = arith.constant 0 : index
    %251 = vector.load %arg18[%c10_157, %c0_158] : memref<20x80xf32, #tpu.memory_space<vmem>>, vector<9x80xf32>
    %252 = arith.truncf %251 : vector<9x80xf32> to vector<9x80xbf16>
    %c1_159 = arith.constant 1 : index
    %c0_160 = arith.constant 0 : index
    %c0_161 = arith.constant 0 : index
    %253 = vector.load %arg6[%c1_159, %c0_160, %c0_161] : memref<4x80x64xbf16, #tpu.memory_space<vmem>>, vector<1x80x64xbf16>
    %254 = vector.shape_cast %253 : vector<1x80x64xbf16> to vector<80x64xbf16>
    %cst_162 = arith.constant dense<0.000000e+00> : vector<9x64xf32>
    %255 = tpu.matmul %252, %254, %cst_162 {dimension_numbers = #tpu.dot_dimension_numbers<[1], [0], [0], [1], [0, 0, 1, 1], [], []>} : vector<9x80xbf16>, vector<80x64xbf16>, vector<9x64xf32> -> vector<9x64xf32>
    %256 = arith.addf %250, %255 : vector<9x64xf32>
    %c1_163 = arith.constant 1 : index
    %c0_164 = arith.constant 0 : index
    %257 = vector.load %arg18[%c1_163, %c0_164] : memref<20x80xf32, #tpu.memory_space<vmem>>, vector<9x80xf32>
    %258 = arith.truncf %257 : vector<9x80xf32> to vector<9x80xbf16>
    %c2_165 = arith.constant 2 : index
    %c0_166 = arith.constant 0 : index
    %c0_167 = arith.constant 0 : index
    %259 = vector.load %arg6[%c2_165, %c0_166, %c0_167] : memref<4x80x64xbf16, #tpu.memory_space<vmem>>, vector<1x80x64xbf16>
    %260 = vector.shape_cast %259 : vector<1x80x64xbf16> to vector<80x64xbf16>
    %cst_168 = arith.constant dense<0.000000e+00> : vector<9x64xf32>
    %261 = tpu.matmul %258, %260, %cst_168 {dimension_numbers = #tpu.dot_dimension_numbers<[1], [0], [0], [1], [0, 0, 1, 1], [], []>} : vector<9x80xbf16>, vector<80x64xbf16>, vector<9x64xf32> -> vector<9x64xf32>
    %262 = arith.addf %256, %261 : vector<9x64xf32>
    %c11_169 = arith.constant 11 : index
    %c0_170 = arith.constant 0 : index
    %263 = vector.load %arg18[%c11_169, %c0_170] : memref<20x80xf32, #tpu.memory_space<vmem>>, vector<9x80xf32>
    %264 = arith.truncf %263 : vector<9x80xf32> to vector<9x80xbf16>
    %c3_171 = arith.constant 3 : index
    %c0_172 = arith.constant 0 : index
    %c0_173 = arith.constant 0 : index
    %265 = vector.load %arg6[%c3_171, %c0_172, %c0_173] : memref<4x80x64xbf16, #tpu.memory_space<vmem>>, vector<1x80x64xbf16>
    %266 = vector.shape_cast %265 : vector<1x80x64xbf16> to vector<80x64xbf16>
    %cst_174 = arith.constant dense<0.000000e+00> : vector<9x64xf32>
    %267 = tpu.matmul %264, %266, %cst_174 {dimension_numbers = #tpu.dot_dimension_numbers<[1], [0], [0], [1], [0, 0, 1, 1], [], []>} : vector<9x80xbf16>, vector<80x64xbf16>, vector<9x64xf32> -> vector<9x64xf32>
    %268 = arith.addf %262, %267 : vector<9x64xf32>
    %c0_175 = arith.constant 0 : index
    %c0_176 = arith.constant 0 : index
    %269 = vector.load %arg7[%c0_175, %c0_176] : memref<1x16xf32, #tpu.memory_space<vmem>>, vector<1x16xf32>
    %c0_177 = arith.constant 0 : index
    %c0_178 = arith.constant 0 : index
    %270 = vector.load %arg8[%c0_177, %c0_178] : memref<1x16xf32, #tpu.memory_space<vmem>>, vector<1x16xf32>
    %271 = tpu.iota {dimensions = array<i32: 0>} : vector<64x16xi32>
    %272 = tpu.iota {dimensions = array<i32: 1>} : vector<64x16xi32>
    %c16_i32 = arith.constant 16 : i32
    %c0_i32_179 = arith.constant 0 : i32
    %273 = arith.cmpi eq, %c16_i32, %c0_i32_179 : i32
    %c1_i32_180 = arith.constant 1 : i32
    %274 = arith.select %273, %c1_i32_180, %c16_i32 : i32
    %275 = vector.broadcast %274 : i32 to vector<64x16xi32>
    %276 = arith.remsi %271, %275 : vector<64x16xi32>
    %c0_i32_181 = arith.constant 0 : i32
    %277 = vector.broadcast %c0_i32_181 : i32 to vector<64x16xi32>
    %278 = arith.cmpi ne, %276, %277 : vector<64x16xi32>
    %c0_i32_182 = arith.constant 0 : i32
    %279 = vector.broadcast %c0_i32_182 : i32 to vector<64x16xi32>
    %280 = arith.cmpi slt, %276, %279 : vector<64x16xi32>
    %c0_i32_183 = arith.constant 0 : i32
    %281 = arith.cmpi slt, %274, %c0_i32_183 : i32
    %282 = vector.broadcast %281 : i1 to vector<64x16xi1>
    %283 = vector.broadcast %282 : vector<64x16xi1> to vector<64x16xi1>
    %284 = arith.xori %280, %283 : vector<64x16xi1>
    %285 = arith.andi %284, %278 : vector<64x16xi1>
    %286 = vector.broadcast %274 : i32 to vector<64x16xi32>
    %287 = arith.addi %276, %286 : vector<64x16xi32>
    %288 = arith.select %285, %287, %276 : vector<64x16xi1>, vector<64x16xi32>
    %289 = arith.cmpi eq, %288, %272 : vector<64x16xi32>
    %290 = arith.extui %289 : vector<64x16xi1> to vector<64x16xi32>
    %291 = arith.sitofp %290 : vector<64x16xi32> to vector<64x16xf32>
    %292 = tpu.iota {dimensions = array<i32: 0>} : vector<16x64xi32>
    %293 = tpu.iota {dimensions = array<i32: 1>} : vector<16x64xi32>
    %c16_i32_184 = arith.constant 16 : i32
    %c0_i32_185 = arith.constant 0 : i32
    %294 = arith.cmpi eq, %c16_i32_184, %c0_i32_185 : i32
    %c1_i32_186 = arith.constant 1 : i32
    %295 = arith.select %294, %c1_i32_186, %c16_i32_184 : i32
    %296 = vector.broadcast %295 : i32 to vector<16x64xi32>
    %297 = arith.remsi %293, %296 : vector<16x64xi32>
    %c0_i32_187 = arith.constant 0 : i32
    %298 = vector.broadcast %c0_i32_187 : i32 to vector<16x64xi32>
    %299 = arith.cmpi ne, %297, %298 : vector<16x64xi32>
    %c0_i32_188 = arith.constant 0 : i32
    %300 = vector.broadcast %c0_i32_188 : i32 to vector<16x64xi32>
    %301 = arith.cmpi slt, %297, %300 : vector<16x64xi32>
    %c0_i32_189 = arith.constant 0 : i32
    %302 = arith.cmpi slt, %295, %c0_i32_189 : i32
    %303 = vector.broadcast %302 : i1 to vector<16x64xi1>
    %304 = vector.broadcast %303 : vector<16x64xi1> to vector<16x64xi1>
    %305 = arith.xori %301, %304 : vector<16x64xi1>
    %306 = arith.andi %305, %299 : vector<16x64xi1>
    %307 = vector.broadcast %295 : i32 to vector<16x64xi32>
    %308 = arith.addi %297, %307 : vector<16x64xi32>
    %309 = arith.select %306, %308, %297 : vector<16x64xi1>, vector<16x64xi32>
    %310 = arith.cmpi eq, %309, %292 : vector<16x64xi32>
    %311 = arith.extui %310 : vector<16x64xi1> to vector<16x64xi32>
    %312 = arith.sitofp %311 : vector<16x64xi32> to vector<16x64xf32>
    %313 = vector.extract_strided_slice %268 {offsets = [0, 0], sizes = [4, 64], strides = [1, 1]} : vector<9x64xf32> to vector<4x64xf32>
    %cst_190 = arith.constant dense<0.000000e+00> : vector<64xf32>
    %314 = vector.multi_reduction <add>, %313, %cst_190 [0] : vector<4x64xf32> to vector<64xf32>
    %315 = vector.shape_cast %314 : vector<64xf32> to vector<1x64xf32>
    %316 = vector.extract_strided_slice %268 {offsets = [5, 0], sizes = [4, 64], strides = [1, 1]} : vector<9x64xf32> to vector<4x64xf32>
    %cst_191 = arith.constant dense<0.000000e+00> : vector<64xf32>
    %317 = vector.multi_reduction <add>, %316, %cst_191 [0] : vector<4x64xf32> to vector<64xf32>
    %318 = vector.shape_cast %317 : vector<64xf32> to vector<1x64xf32>
    %319 = arith.addf %315, %318 : vector<1x64xf32>
    %cst_192 = arith.constant dense<0.000000e+00> : vector<1x16xf32>
    %320 = tpu.matmul %319, %291, %cst_192 {dimension_numbers = #tpu.dot_dimension_numbers<[1], [0], [0], [1], [0, 0, 1, 1], [], []>} : vector<1x64xf32>, vector<64x16xf32>, vector<1x16xf32> -> vector<1x16xf32>
    %cst_193 = arith.constant 3.200000e+01 : f32
    %321 = vector.broadcast %cst_193 : f32 to vector<1x16xf32>
    %322 = arith.divf %320, %321 : vector<1x16xf32>
    %cst_194 = arith.constant dense<0.000000e+00> : vector<1x64xf32>
    %323 = tpu.matmul %322, %312, %cst_194 {dimension_numbers = #tpu.dot_dimension_numbers<[1], [0], [0], [1], [0, 0, 1, 1], [], []>} : vector<1x16xf32>, vector<16x64xf32>, vector<1x64xf32> -> vector<1x64xf32>
    %324 = vector.extract_strided_slice %268 {offsets = [0, 0], sizes = [4, 64], strides = [1, 1]} : vector<9x64xf32> to vector<4x64xf32>
    %325 = vector.broadcast %323 : vector<1x64xf32> to vector<4x64xf32>
    %326 = arith.subf %324, %325 : vector<4x64xf32>
    %327 = arith.mulf %326, %326 : vector<4x64xf32>
    %cst_195 = arith.constant dense<0.000000e+00> : vector<64xf32>
    %328 = vector.multi_reduction <add>, %327, %cst_195 [0] : vector<4x64xf32> to vector<64xf32>
    %329 = vector.shape_cast %328 : vector<64xf32> to vector<1x64xf32>
    %330 = vector.extract_strided_slice %268 {offsets = [5, 0], sizes = [4, 64], strides = [1, 1]} : vector<9x64xf32> to vector<4x64xf32>
    %331 = vector.broadcast %323 : vector<1x64xf32> to vector<4x64xf32>
    %332 = arith.subf %330, %331 : vector<4x64xf32>
    %333 = arith.mulf %332, %332 : vector<4x64xf32>
    %cst_196 = arith.constant dense<0.000000e+00> : vector<64xf32>
    %334 = vector.multi_reduction <add>, %333, %cst_196 [0] : vector<4x64xf32> to vector<64xf32>
    %335 = vector.shape_cast %334 : vector<64xf32> to vector<1x64xf32>
    %336 = arith.addf %329, %335 : vector<1x64xf32>
    %cst_197 = arith.constant dense<0.000000e+00> : vector<1x16xf32>
    %337 = tpu.matmul %336, %291, %cst_197 {dimension_numbers = #tpu.dot_dimension_numbers<[1], [0], [0], [1], [0, 0, 1, 1], [], []>} : vector<1x64xf32>, vector<64x16xf32>, vector<1x16xf32> -> vector<1x16xf32>
    %cst_198 = arith.constant 3.200000e+01 : f32
    %338 = vector.broadcast %cst_198 : f32 to vector<1x16xf32>
    %339 = arith.divf %337, %338 : vector<1x16xf32>
    %cst_199 = arith.constant 9.99999974E-6 : f32
    %340 = vector.broadcast %cst_199 : f32 to vector<1x16xf32>
    %341 = arith.addf %339, %340 : vector<1x16xf32>
    %342 = math.rsqrt %341 : vector<1x16xf32>
    %343 = arith.mulf %269, %342 : vector<1x16xf32>
    %cst_200 = arith.constant dense<0.000000e+00> : vector<1x64xf32>
    %344 = tpu.matmul %343, %312, %cst_200 {dimension_numbers = #tpu.dot_dimension_numbers<[1], [0], [0], [1], [0, 0, 1, 1], [], []>} : vector<1x16xf32>, vector<16x64xf32>, vector<1x64xf32> -> vector<1x64xf32>
    %345 = arith.mulf %322, %343 : vector<1x16xf32>
    %346 = arith.subf %270, %345 : vector<1x16xf32>
    %cst_201 = arith.constant dense<0.000000e+00> : vector<1x64xf32>
    %347 = tpu.matmul %346, %312, %cst_201 {dimension_numbers = #tpu.dot_dimension_numbers<[1], [0], [0], [1], [0, 0, 1, 1], [], []>} : vector<1x16xf32>, vector<16x64xf32>, vector<1x64xf32> -> vector<1x64xf32>
    %348 = vector.broadcast %344 : vector<1x64xf32> to vector<9x64xf32>
    %349 = arith.mulf %268, %348 : vector<9x64xf32>
    %350 = vector.broadcast %347 : vector<1x64xf32> to vector<9x64xf32>
    %351 = arith.addf %349, %350 : vector<9x64xf32>
    %cst_202 = arith.constant 0.000000e+00 : f32
    %352 = vector.broadcast %cst_202 : f32 to vector<9x64xf32>
    %353 = arith.cmpf oge, %351, %352 : vector<9x64xf32>
    %cst_203 = arith.constant 2.000000e-01 : f32
    %354 = vector.broadcast %cst_203 : f32 to vector<9x64xf32>
    %355 = arith.mulf %354, %351 : vector<9x64xf32>
    %356 = arith.select %353, %351, %355 : vector<9x64xi1>, vector<9x64xf32>
    %357 = vector.extract_strided_slice %356 {offsets = [0, 0], sizes = [1, 64], strides = [1, 1]} : vector<9x64xf32> to vector<1x64xf32>
    %c1_204 = arith.constant 1 : index
    %c16_205 = arith.constant 16 : index
    %358 = vector.load %arg19[%c1_204, %c16_205] : memref<12x96xf32, #tpu.memory_space<vmem>>, vector<1x64xf32>
    tpu.vector_store %arg19[%c1_204, %c16_205], %357 {strides = array<i32>} : memref<12x96xf32, #tpu.memory_space<vmem>>, vector<1x64xf32>,
    %359 = vector.extract_strided_slice %356 {offsets = [1, 0], sizes = [1, 64], strides = [1, 1]} : vector<9x64xf32> to vector<1x64xf32>
    %c2_206 = arith.constant 2 : index
    %c16_207 = arith.constant 16 : index
    %360 = vector.load %arg19[%c2_206, %c16_207] : memref<12x96xf32, #tpu.memory_space<vmem>>, vector<1x64xf32>
    tpu.vector_store %arg19[%c2_206, %c16_207], %359 {strides = array<i32>} : memref<12x96xf32, #tpu.memory_space<vmem>>, vector<1x64xf32>,
    %361 = vector.extract_strided_slice %356 {offsets = [2, 0], sizes = [1, 64], strides = [1, 1]} : vector<9x64xf32> to vector<1x64xf32>
    %c3_208 = arith.constant 3 : index
    %c16_209 = arith.constant 16 : index
    %362 = vector.load %arg19[%c3_208, %c16_209] : memref<12x96xf32, #tpu.memory_space<vmem>>, vector<1x64xf32>
    tpu.vector_store %arg19[%c3_208, %c16_209], %361 {strides = array<i32>} : memref<12x96xf32, #tpu.memory_space<vmem>>, vector<1x64xf32>,
    %363 = vector.extract_strided_slice %356 {offsets = [3, 0], sizes = [1, 64], strides = [1, 1]} : vector<9x64xf32> to vector<1x64xf32>
    %c4_210 = arith.constant 4 : index
    %c16_211 = arith.constant 16 : index
    %364 = vector.load %arg19[%c4_210, %c16_211] : memref<12x96xf32, #tpu.memory_space<vmem>>, vector<1x64xf32>
    tpu.vector_store %arg19[%c4_210, %c16_211], %363 {strides = array<i32>} : memref<12x96xf32, #tpu.memory_space<vmem>>, vector<1x64xf32>,
    %365 = vector.extract_strided_slice %356 {offsets = [5, 0], sizes = [1, 64], strides = [1, 1]} : vector<9x64xf32> to vector<1x64xf32>
    %c7_212 = arith.constant 7 : index
    %c16_213 = arith.constant 16 : index
    %366 = vector.load %arg19[%c7_212, %c16_213] : memref<12x96xf32, #tpu.memory_space<vmem>>, vector<1x64xf32>
    tpu.vector_store %arg19[%c7_212, %c16_213], %365 {strides = array<i32>} : memref<12x96xf32, #tpu.memory_space<vmem>>, vector<1x64xf32>,
    %367 = vector.extract_strided_slice %356 {offsets = [6, 0], sizes = [1, 64], strides = [1, 1]} : vector<9x64xf32> to vector<1x64xf32>
    %c8_214 = arith.constant 8 : index
    %c16_215 = arith.constant 16 : index
    %368 = vector.load %arg19[%c8_214, %c16_215] : memref<12x96xf32, #tpu.memory_space<vmem>>, vector<1x64xf32>
    tpu.vector_store %arg19[%c8_214, %c16_215], %367 {strides = array<i32>} : memref<12x96xf32, #tpu.memory_space<vmem>>, vector<1x64xf32>,
    %369 = vector.extract_strided_slice %356 {offsets = [7, 0], sizes = [1, 64], strides = [1, 1]} : vector<9x64xf32> to vector<1x64xf32>
    %c9_216 = arith.constant 9 : index
    %c16_217 = arith.constant 16 : index
    %370 = vector.load %arg19[%c9_216, %c16_217] : memref<12x96xf32, #tpu.memory_space<vmem>>, vector<1x64xf32>
    tpu.vector_store %arg19[%c9_216, %c16_217], %369 {strides = array<i32>} : memref<12x96xf32, #tpu.memory_space<vmem>>, vector<1x64xf32>,
    %371 = vector.extract_strided_slice %356 {offsets = [8, 0], sizes = [1, 64], strides = [1, 1]} : vector<9x64xf32> to vector<1x64xf32>
    %c10_218 = arith.constant 10 : index
    %c16_219 = arith.constant 16 : index
    %372 = vector.load %arg19[%c10_218, %c16_219] : memref<12x96xf32, #tpu.memory_space<vmem>>, vector<1x64xf32>
    tpu.vector_store %arg19[%c10_218, %c16_219], %371 {strides = array<i32>} : memref<12x96xf32, #tpu.memory_space<vmem>>, vector<1x64xf32>,
    %c0_220 = arith.constant 0 : index
    %c0_221 = arith.constant 0 : index
    %373 = vector.load %arg19[%c0_220, %c0_221] : memref<12x96xf32, #tpu.memory_space<vmem>>, vector<9x96xf32>
    %374 = arith.truncf %373 : vector<9x96xf32> to vector<9x96xbf16>
    %c0_222 = arith.constant 0 : index
    %c0_223 = arith.constant 0 : index
    %c0_224 = arith.constant 0 : index
    %375 = vector.load %arg9[%c0_222, %c0_223, %c0_224] : memref<4x96x96xbf16, #tpu.memory_space<vmem>>, vector<1x96x96xbf16>
    %376 = vector.shape_cast %375 : vector<1x96x96xbf16> to vector<96x96xbf16>
    %cst_225 = arith.constant dense<0.000000e+00> : vector<9x96xf32>
    %377 = tpu.matmul %374, %376, %cst_225 {dimension_numbers = #tpu.dot_dimension_numbers<[1], [0], [0], [1], [0, 0, 1, 1], [], []>} : vector<9x96xbf16>, vector<96x96xbf16>, vector<9x96xf32> -> vector<9x96xf32>
    %c1_226 = arith.constant 1 : index
    %c0_227 = arith.constant 0 : index
    %378 = vector.load %arg19[%c1_226, %c0_227] : memref<12x96xf32, #tpu.memory_space<vmem>>, vector<9x96xf32>
    %379 = arith.truncf %378 : vector<9x96xf32> to vector<9x96xbf16>
    %c1_228 = arith.constant 1 : index
    %c0_229 = arith.constant 0 : index
    %c0_230 = arith.constant 0 : index
    %380 = vector.load %arg9[%c1_228, %c0_229, %c0_230] : memref<4x96x96xbf16, #tpu.memory_space<vmem>>, vector<1x96x96xbf16>
    %381 = vector.shape_cast %380 : vector<1x96x96xbf16> to vector<96x96xbf16>
    %cst_231 = arith.constant dense<0.000000e+00> : vector<9x96xf32>
    %382 = tpu.matmul %379, %381, %cst_231 {dimension_numbers = #tpu.dot_dimension_numbers<[1], [0], [0], [1], [0, 0, 1, 1], [], []>} : vector<9x96xbf16>, vector<96x96xbf16>, vector<9x96xf32> -> vector<9x96xf32>
    %383 = arith.addf %377, %382 : vector<9x96xf32>
    %c2_232 = arith.constant 2 : index
    %c0_233 = arith.constant 0 : index
    %384 = vector.load %arg19[%c2_232, %c0_233] : memref<12x96xf32, #tpu.memory_space<vmem>>, vector<9x96xf32>
    %385 = arith.truncf %384 : vector<9x96xf32> to vector<9x96xbf16>
    %c2_234 = arith.constant 2 : index
    %c0_235 = arith.constant 0 : index
    %c0_236 = arith.constant 0 : index
    %386 = vector.load %arg9[%c2_234, %c0_235, %c0_236] : memref<4x96x96xbf16, #tpu.memory_space<vmem>>, vector<1x96x96xbf16>
    %387 = vector.shape_cast %386 : vector<1x96x96xbf16> to vector<96x96xbf16>
    %cst_237 = arith.constant dense<0.000000e+00> : vector<9x96xf32>
    %388 = tpu.matmul %385, %387, %cst_237 {dimension_numbers = #tpu.dot_dimension_numbers<[1], [0], [0], [1], [0, 0, 1, 1], [], []>} : vector<9x96xbf16>, vector<96x96xbf16>, vector<9x96xf32> -> vector<9x96xf32>
    %389 = arith.addf %383, %388 : vector<9x96xf32>
    %c3_238 = arith.constant 3 : index
    %c0_239 = arith.constant 0 : index
    %390 = vector.load %arg19[%c3_238, %c0_239] : memref<12x96xf32, #tpu.memory_space<vmem>>, vector<9x96xf32>
    %391 = arith.truncf %390 : vector<9x96xf32> to vector<9x96xbf16>
    %c3_240 = arith.constant 3 : index
    %c0_241 = arith.constant 0 : index
    %c0_242 = arith.constant 0 : index
    %392 = vector.load %arg9[%c3_240, %c0_241, %c0_242] : memref<4x96x96xbf16, #tpu.memory_space<vmem>>, vector<1x96x96xbf16>
    %393 = vector.shape_cast %392 : vector<1x96x96xbf16> to vector<96x96xbf16>
    %cst_243 = arith.constant dense<0.000000e+00> : vector<9x96xf32>
    %394 = tpu.matmul %391, %393, %cst_243 {dimension_numbers = #tpu.dot_dimension_numbers<[1], [0], [0], [1], [0, 0, 1, 1], [], []>} : vector<9x96xbf16>, vector<96x96xbf16>, vector<9x96xf32> -> vector<9x96xf32>
    %395 = arith.addf %389, %394 : vector<9x96xf32>
    %c0_244 = arith.constant 0 : index
    %c0_245 = arith.constant 0 : index
    %396 = vector.load %arg10[%c0_244, %c0_245] : memref<1x32xf32, #tpu.memory_space<vmem>>, vector<1x32xf32>
    %c0_246 = arith.constant 0 : index
    %c0_247 = arith.constant 0 : index
    %397 = vector.load %arg11[%c0_246, %c0_247] : memref<1x32xf32, #tpu.memory_space<vmem>>, vector<1x32xf32>
    %398 = tpu.iota {dimensions = array<i32: 0>} : vector<96x32xi32>
    %399 = tpu.iota {dimensions = array<i32: 1>} : vector<96x32xi32>
    %c32_i32 = arith.constant 32 : i32
    %c0_i32_248 = arith.constant 0 : i32
    %400 = arith.cmpi eq, %c32_i32, %c0_i32_248 : i32
    %c1_i32_249 = arith.constant 1 : i32
    %401 = arith.select %400, %c1_i32_249, %c32_i32 : i32
    %402 = vector.broadcast %401 : i32 to vector<96x32xi32>
    %403 = arith.remsi %398, %402 : vector<96x32xi32>
    %c0_i32_250 = arith.constant 0 : i32
    %404 = vector.broadcast %c0_i32_250 : i32 to vector<96x32xi32>
    %405 = arith.cmpi ne, %403, %404 : vector<96x32xi32>
    %c0_i32_251 = arith.constant 0 : i32
    %406 = vector.broadcast %c0_i32_251 : i32 to vector<96x32xi32>
    %407 = arith.cmpi slt, %403, %406 : vector<96x32xi32>
    %c0_i32_252 = arith.constant 0 : i32
    %408 = arith.cmpi slt, %401, %c0_i32_252 : i32
    %409 = vector.broadcast %408 : i1 to vector<96x32xi1>
    %410 = vector.broadcast %409 : vector<96x32xi1> to vector<96x32xi1>
    %411 = arith.xori %407, %410 : vector<96x32xi1>
    %412 = arith.andi %411, %405 : vector<96x32xi1>
    %413 = vector.broadcast %401 : i32 to vector<96x32xi32>
    %414 = arith.addi %403, %413 : vector<96x32xi32>
    %415 = arith.select %412, %414, %403 : vector<96x32xi1>, vector<96x32xi32>
    %416 = arith.cmpi eq, %415, %399 : vector<96x32xi32>
    %417 = arith.extui %416 : vector<96x32xi1> to vector<96x32xi32>
    %418 = arith.sitofp %417 : vector<96x32xi32> to vector<96x32xf32>
    %419 = tpu.iota {dimensions = array<i32: 0>} : vector<32x96xi32>
    %420 = tpu.iota {dimensions = array<i32: 1>} : vector<32x96xi32>
    %c32_i32_253 = arith.constant 32 : i32
    %c0_i32_254 = arith.constant 0 : i32
    %421 = arith.cmpi eq, %c32_i32_253, %c0_i32_254 : i32
    %c1_i32_255 = arith.constant 1 : i32
    %422 = arith.select %421, %c1_i32_255, %c32_i32_253 : i32
    %423 = vector.broadcast %422 : i32 to vector<32x96xi32>
    %424 = arith.remsi %420, %423 : vector<32x96xi32>
    %c0_i32_256 = arith.constant 0 : i32
    %425 = vector.broadcast %c0_i32_256 : i32 to vector<32x96xi32>
    %426 = arith.cmpi ne, %424, %425 : vector<32x96xi32>
    %c0_i32_257 = arith.constant 0 : i32
    %427 = vector.broadcast %c0_i32_257 : i32 to vector<32x96xi32>
    %428 = arith.cmpi slt, %424, %427 : vector<32x96xi32>
    %c0_i32_258 = arith.constant 0 : i32
    %429 = arith.cmpi slt, %422, %c0_i32_258 : i32
    %430 = vector.broadcast %429 : i1 to vector<32x96xi1>
    %431 = vector.broadcast %430 : vector<32x96xi1> to vector<32x96xi1>
    %432 = arith.xori %428, %431 : vector<32x96xi1>
    %433 = arith.andi %432, %426 : vector<32x96xi1>
    %434 = vector.broadcast %422 : i32 to vector<32x96xi32>
    %435 = arith.addi %424, %434 : vector<32x96xi32>
    %436 = arith.select %433, %435, %424 : vector<32x96xi1>, vector<32x96xi32>
    %437 = arith.cmpi eq, %436, %419 : vector<32x96xi32>
    %438 = arith.extui %437 : vector<32x96xi1> to vector<32x96xi32>
    %439 = arith.sitofp %438 : vector<32x96xi32> to vector<32x96xf32>
    %440 = vector.extract_strided_slice %395 {offsets = [0, 0], sizes = [3, 96], strides = [1, 1]} : vector<9x96xf32> to vector<3x96xf32>
    %cst_259 = arith.constant dense<0.000000e+00> : vector<96xf32>
    %441 = vector.multi_reduction <add>, %440, %cst_259 [0] : vector<3x96xf32> to vector<96xf32>
    %442 = vector.shape_cast %441 : vector<96xf32> to vector<1x96xf32>
    %443 = vector.extract_strided_slice %395 {offsets = [6, 0], sizes = [3, 96], strides = [1, 1]} : vector<9x96xf32> to vector<3x96xf32>
    %cst_260 = arith.constant dense<0.000000e+00> : vector<96xf32>
    %444 = vector.multi_reduction <add>, %443, %cst_260 [0] : vector<3x96xf32> to vector<96xf32>
    %445 = vector.shape_cast %444 : vector<96xf32> to vector<1x96xf32>
    %446 = arith.addf %442, %445 : vector<1x96xf32>
    %cst_261 = arith.constant dense<0.000000e+00> : vector<1x32xf32>
    %447 = tpu.matmul %446, %418, %cst_261 {dimension_numbers = #tpu.dot_dimension_numbers<[1], [0], [0], [1], [0, 0, 1, 1], [], []>} : vector<1x96xf32>, vector<96x32xf32>, vector<1x32xf32> -> vector<1x32xf32>
    %cst_262 = arith.constant 1.800000e+01 : f32
    %448 = vector.broadcast %cst_262 : f32 to vector<1x32xf32>
    %449 = arith.divf %447, %448 : vector<1x32xf32>
    %cst_263 = arith.constant dense<0.000000e+00> : vector<1x96xf32>
    %450 = tpu.matmul %449, %439, %cst_263 {dimension_numbers = #tpu.dot_dimension_numbers<[1], [0], [0], [1], [0, 0, 1, 1], [], []>} : vector<1x32xf32>, vector<32x96xf32>, vector<1x96xf32> -> vector<1x96xf32>
    %451 = vector.extract_strided_slice %395 {offsets = [0, 0], sizes = [3, 96], strides = [1, 1]} : vector<9x96xf32> to vector<3x96xf32>
    %452 = vector.broadcast %450 : vector<1x96xf32> to vector<3x96xf32>
    %453 = arith.subf %451, %452 : vector<3x96xf32>
    %454 = arith.mulf %453, %453 : vector<3x96xf32>
    %cst_264 = arith.constant dense<0.000000e+00> : vector<96xf32>
    %455 = vector.multi_reduction <add>, %454, %cst_264 [0] : vector<3x96xf32> to vector<96xf32>
    %456 = vector.shape_cast %455 : vector<96xf32> to vector<1x96xf32>
    %457 = vector.extract_strided_slice %395 {offsets = [6, 0], sizes = [3, 96], strides = [1, 1]} : vector<9x96xf32> to vector<3x96xf32>
    %458 = vector.broadcast %450 : vector<1x96xf32> to vector<3x96xf32>
    %459 = arith.subf %457, %458 : vector<3x96xf32>
    %460 = arith.mulf %459, %459 : vector<3x96xf32>
    %cst_265 = arith.constant dense<0.000000e+00> : vector<96xf32>
    %461 = vector.multi_reduction <add>, %460, %cst_265 [0] : vector<3x96xf32> to vector<96xf32>
    %462 = vector.shape_cast %461 : vector<96xf32> to vector<1x96xf32>
    %463 = arith.addf %456, %462 : vector<1x96xf32>
    %cst_266 = arith.constant dense<0.000000e+00> : vector<1x32xf32>
    %464 = tpu.matmul %463, %418, %cst_266 {dimension_numbers = #tpu.dot_dimension_numbers<[1], [0], [0], [1], [0, 0, 1, 1], [], []>} : vector<1x96xf32>, vector<96x32xf32>, vector<1x32xf32> -> vector<1x32xf32>
    %cst_267 = arith.constant 1.800000e+01 : f32
    %465 = vector.broadcast %cst_267 : f32 to vector<1x32xf32>
    %466 = arith.divf %464, %465 : vector<1x32xf32>
    %cst_268 = arith.constant 9.99999974E-6 : f32
    %467 = vector.broadcast %cst_268 : f32 to vector<1x32xf32>
    %468 = arith.addf %466, %467 : vector<1x32xf32>
    %469 = math.rsqrt %468 : vector<1x32xf32>
    %470 = arith.mulf %396, %469 : vector<1x32xf32>
    %cst_269 = arith.constant dense<0.000000e+00> : vector<1x96xf32>
    %471 = tpu.matmul %470, %439, %cst_269 {dimension_numbers = #tpu.dot_dimension_numbers<[1], [0], [0], [1], [0, 0, 1, 1], [], []>} : vector<1x32xf32>, vector<32x96xf32>, vector<1x96xf32> -> vector<1x96xf32>
    %472 = arith.mulf %449, %470 : vector<1x32xf32>
    %473 = arith.subf %397, %472 : vector<1x32xf32>
    %cst_270 = arith.constant dense<0.000000e+00> : vector<1x96xf32>
    %474 = tpu.matmul %473, %439, %cst_270 {dimension_numbers = #tpu.dot_dimension_numbers<[1], [0], [0], [1], [0, 0, 1, 1], [], []>} : vector<1x32xf32>, vector<32x96xf32>, vector<1x96xf32> -> vector<1x96xf32>
    %475 = vector.broadcast %471 : vector<1x96xf32> to vector<9x96xf32>
    %476 = arith.mulf %395, %475 : vector<9x96xf32>
    %477 = vector.broadcast %474 : vector<1x96xf32> to vector<9x96xf32>
    %478 = arith.addf %476, %477 : vector<9x96xf32>
    %cst_271 = arith.constant 0.000000e+00 : f32
    %479 = vector.broadcast %cst_271 : f32 to vector<9x96xf32>
    %480 = arith.cmpf oge, %478, %479 : vector<9x96xf32>
    %cst_272 = arith.constant 2.000000e-01 : f32
    %481 = vector.broadcast %cst_272 : f32 to vector<9x96xf32>
    %482 = arith.mulf %481, %478 : vector<9x96xf32>
    %483 = arith.select %480, %478, %482 : vector<9x96xi1>, vector<9x96xf32>
    %484 = vector.extract_strided_slice %483 {offsets = [0, 0], sizes = [1, 96], strides = [1, 1]} : vector<9x96xf32> to vector<1x96xf32>
    %c0_273 = arith.constant 0 : index
    %c192 = arith.constant 192 : index
    %485 = vector.load %arg20[%c0_273, %c192] : memref<2x800xf32, #tpu.memory_space<vmem>>, vector<1x96xf32>
    tpu.vector_store %arg20[%c0_273, %c192], %484 {strides = array<i32>} : memref<2x800xf32, #tpu.memory_space<vmem>>, vector<1x96xf32>,
    %486 = vector.extract_strided_slice %483 {offsets = [1, 0], sizes = [1, 96], strides = [1, 1]} : vector<9x96xf32> to vector<1x96xf32>
    %c0_274 = arith.constant 0 : index
    %c352 = arith.constant 352 : index
    %487 = vector.load %arg20[%c0_274, %c352] : memref<2x800xf32, #tpu.memory_space<vmem>>, vector<1x96xf32>
    tpu.vector_store %arg20[%c0_274, %c352], %486 {strides = array<i32>} : memref<2x800xf32, #tpu.memory_space<vmem>>, vector<1x96xf32>,
    %488 = vector.extract_strided_slice %483 {offsets = [2, 0], sizes = [1, 96], strides = [1, 1]} : vector<9x96xf32> to vector<1x96xf32>
    %c0_275 = arith.constant 0 : index
    %c512 = arith.constant 512 : index
    %489 = vector.load %arg20[%c0_275, %c512] : memref<2x800xf32, #tpu.memory_space<vmem>>, vector<1x96xf32>
    tpu.vector_store %arg20[%c0_275, %c512], %488 {strides = array<i32>} : memref<2x800xf32, #tpu.memory_space<vmem>>, vector<1x96xf32>,
    %490 = vector.extract_strided_slice %483 {offsets = [6, 0], sizes = [1, 96], strides = [1, 1]} : vector<9x96xf32> to vector<1x96xf32>
    %c1_276 = arith.constant 1 : index
    %c192_277 = arith.constant 192 : index
    %491 = vector.load %arg20[%c1_276, %c192_277] : memref<2x800xf32, #tpu.memory_space<vmem>>, vector<1x96xf32>
    tpu.vector_store %arg20[%c1_276, %c192_277], %490 {strides = array<i32>} : memref<2x800xf32, #tpu.memory_space<vmem>>, vector<1x96xf32>,
    %492 = vector.extract_strided_slice %483 {offsets = [7, 0], sizes = [1, 96], strides = [1, 1]} : vector<9x96xf32> to vector<1x96xf32>
    %c1_278 = arith.constant 1 : index
    %c352_279 = arith.constant 352 : index
    %493 = vector.load %arg20[%c1_278, %c352_279] : memref<2x800xf32, #tpu.memory_space<vmem>>, vector<1x96xf32>
    tpu.vector_store %arg20[%c1_278, %c352_279], %492 {strides = array<i32>} : memref<2x800xf32, #tpu.memory_space<vmem>>, vector<1x96xf32>,
    %494 = vector.extract_strided_slice %483 {offsets = [8, 0], sizes = [1, 96], strides = [1, 1]} : vector<9x96xf32> to vector<1x96xf32>
    %c1_280 = arith.constant 1 : index
    %c512_281 = arith.constant 512 : index
    %495 = vector.load %arg20[%c1_280, %c512_281] : memref<2x800xf32, #tpu.memory_space<vmem>>, vector<1x96xf32>
    tpu.vector_store %arg20[%c1_280, %c512_281], %494 {strides = array<i32>} : memref<2x800xf32, #tpu.memory_space<vmem>>, vector<1x96xf32>,
    %c0_282 = arith.constant 0 : index
    %c0_283 = arith.constant 0 : index
    %496 = vector.load %arg20[%c0_282, %c0_283] : memref<2x800xf32, #tpu.memory_space<vmem>>, vector<2x800xf32>
    %c0_284 = arith.constant 0 : index
    %c0_285 = arith.constant 0 : index
    %497 = vector.load %arg12[%c0_284, %c0_285] : memref<800x512xf32, #tpu.memory_space<vmem>>, vector<800x512xf32>
    %cst_286 = arith.constant dense<0.000000e+00> : vector<2x512xf32>
    %498 = tpu.matmul %496, %497, %cst_286 {dimension_numbers = #tpu.dot_dimension_numbers<[1], [0], [0], [1], [0, 0, 1, 1], [], []>} : vector<2x800xf32>, vector<800x512xf32>, vector<2x512xf32> -> vector<2x512xf32>
    %c0_287 = arith.constant 0 : index
    %c0_288 = arith.constant 0 : index
    %499 = vector.load %arg13[%c0_287, %c0_288] : memref<1x512xf32, #tpu.memory_space<vmem>>, vector<1x512xf32>
    %500 = vector.broadcast %499 : vector<1x512xf32> to vector<2x512xf32>
    %501 = arith.addf %498, %500 : vector<2x512xf32>
    %cst_289 = arith.constant 0.000000e+00 : f32
    %502 = vector.broadcast %cst_289 : f32 to vector<2x512xf32>
    %503 = arith.maximumf %501, %502 : vector<2x512xf32>
    %c0_290 = arith.constant 0 : index
    %c0_291 = arith.constant 0 : index
    %504 = vector.load %arg14[%c0_290, %c0_291] : memref<512x128xf32, #tpu.memory_space<vmem>>, vector<512x128xf32>
    %cst_292 = arith.constant dense<0.000000e+00> : vector<2x128xf32>
    %505 = tpu.matmul %503, %504, %cst_292 {dimension_numbers = #tpu.dot_dimension_numbers<[1], [0], [0], [1], [0, 0, 1, 1], [], []>} : vector<2x512xf32>, vector<512x128xf32>, vector<2x128xf32> -> vector<2x128xf32>
    %c0_293 = arith.constant 0 : index
    %c0_294 = arith.constant 0 : index
    %506 = vector.load %arg15[%c0_293, %c0_294] : memref<1x128xf32, #tpu.memory_space<vmem>>, vector<1x128xf32>
    %507 = vector.broadcast %506 : vector<1x128xf32> to vector<2x128xf32>
    %508 = arith.addf %505, %507 : vector<2x128xf32>
    %c0_295 = arith.constant 0 : index
    %c0_296 = arith.constant 0 : index
    %509 = vector.load %arg16[%c0_295, %c0_296] : memref<2x128xf32, #tpu.memory_space<vmem>>, vector<2x128xf32>
    tpu.vector_store %arg16[%c0_295, %c0_296], %508 {strides = array<i32>} : memref<2x128xf32, #tpu.memory_space<vmem>>, vector<2x128xf32>,
    return
  }
}

</mosaic_0001>

<llo_original>
// kernel: nlayer_discriminator_forward.1
$region0: #{nlayer_discriminator_forward.1}
  #allocation0 [shape = 'u32[]', space=smem, size = 0x4, offset = 0x4, fixed_abs, tag = 'smem constant byte address 0x4 - core index']
  #allocation1 [shape = 'u32[144,128]{1,0:T(1,128)}', space=vmem, size = 0x12000, scoped, tag = 'internal scratch']
  #allocation2 [shape = 'f32[36,72]{1,0:T(8,128)}', space=vmem, size = 0x5000, scoped, tag = 'scratch operand']
  #allocation3 [shape = 'f32[20,80]{1,0:T(8,128)}', space=vmem, size = 0x3000, scoped, tag = 'scratch operand']
  #allocation4 [shape = 'f32[12,96]{1,0:T(8,128)}', space=vmem, size = 0x2000, scoped, tag = 'scratch operand']
  #allocation5 [shape = 'f32[2,800]{1,0:T(2,128)}', space=vmem, size = 0x1c00, scoped, tag = 'scratch operand']
  %s0 = inlined_call_operand.vmem [shape: f32[68,136], index: 0, kind: input, shape index: {}]
  %s1 = inlined_call_operand.vmem [shape: bf16[4,136,64], index: 1, kind: input, shape index: {}]
  %s2 = inlined_call_operand.vmem [shape: f32[1,64], index: 2, kind: input, shape index: {}]
  %s3 = inlined_call_operand.vmem [shape: bf16[4,72,64], index: 3, kind: input, shape index: {}]
  %s4 = inlined_call_operand.vmem [shape: f32[1,8], index: 4, kind: input, shape index: {}]
  %s5 = inlined_call_operand.vmem [shape: f32[1,8], index: 5, kind: input, shape index: {}]
  %s6 = inlined_call_operand.vmem [shape: bf16[4,80,64], index: 6, kind: input, shape index: {}]
  %s7 = inlined_call_operand.vmem [shape: f32[1,16], index: 7, kind: input, shape index: {}]
  %s8 = inlined_call_operand.vmem [shape: f32[1,16], index: 8, kind: input, shape index: {}]
  %s9 = inlined_call_operand.vmem [shape: bf16[4,96,96], index: 9, kind: input, shape index: {}]
  %s10 = inlined_call_operand.vmem [shape: f32[1,32], index: 10, kind: input, shape index: {}]
  %s11 = inlined_call_operand.vmem [shape: f32[1,32], index: 11, kind: input, shape index: {}]
  %s12 = inlined_call_operand.vmem [shape: f32[800,512], index: 12, kind: input, shape index: {}]
  %s13 = inlined_call_operand.vmem [shape: f32[1,512], index: 13, kind: input, shape index: {}]
  %s14 = inlined_call_operand.vmem [shape: f32[512,128], index: 14, kind: input, shape index: {}]
  %s15 = inlined_call_operand.vmem [shape: f32[1,128], index: 15, kind: input, shape index: {}]
  %s16 = inlined_call_operand.vmem [shape: f32[2,128], index: 16, kind: output, shape index: {}]
  %s17 = sld [smem:[#allocation0]]
  $region74: #{nlayer_discriminator_forward.1} parent=0
    _
  %s19 = ssub.s32 1, %s17
  %s20 = scalar_select 0, %s19, %s17
  // Predicated region
  $region2: #{nlayer_discriminator_forward.1} parent=0 // pred_check
    _
  $region3: #{nlayer_discriminator_forward.1} parent=0 // pred_check_branch
    %22 = sbr.rel (0) target = $region5
  $region4: #{nlayer_discriminator_forward.1} parent=0 // pred_region
    _
  $region5: #{nlayer_discriminator_forward.1} parent=0 // pred_fallthru
    _
  // Predicated region
  $region6: #{nlayer_discriminator_forward.1} parent=0 // pred_check
    _
  $region7: #{nlayer_discriminator_forward.1} parent=0 // pred_check_branch
    %24 = sbr.rel (0) target = $region9
  $region8: #{nlayer_discriminator_forward.1} parent=0 // pred_region
    _
  $region9: #{nlayer_discriminator_forward.1} parent=0 // pred_fallthru
    _
  // Predicated region
  $region10: #{nlayer_discriminator_forward.1} parent=0 // pred_check
    _
  $region11: #{nlayer_discriminator_forward.1} parent=0 // pred_check_branch
    %26 = sbr.rel (0) target = $region13
  $region12: #{nlayer_discriminator_forward.1} parent=0 // pred_region
    _
  $region13: #{nlayer_discriminator_forward.1} parent=0 // pred_fallthru
    _
  // Predicated region
  $region14: #{nlayer_discriminator_forward.1} parent=0 // pred_check
    _
  $region15: #{nlayer_discriminator_forward.1} parent=0 // pred_check_branch
    %28 = sbr.rel (0) target = $region17
  $region16: #{nlayer_discriminator_forward.1} parent=0 // pred_region
    _
  $region17: #{nlayer_discriminator_forward.1} parent=0 // pred_fallthru
    _
  // Predicated region
  $region18: #{nlayer_discriminator_forward.1} parent=0 // pred_check
    _
  $region19: #{nlayer_discriminator_forward.1} parent=0 // pred_check_branch
    %30 = sbr.rel (0) target = $region21
  $region20: #{nlayer_discriminator_forward.1} parent=0 // pred_region
    _
  $region21: #{nlayer_discriminator_forward.1} parent=0 // pred_fallthru
    _
  // Predicated region
  $region22: #{nlayer_discriminator_forward.1} parent=0 // pred_check
    _
  $region23: #{nlayer_discriminator_forward.1} parent=0 // pred_check_branch
    %32 = sbr.rel (0) target = $region25
  $region24: #{nlayer_discriminator_forward.1} parent=0 // pred_region
    _
  $region25: #{nlayer_discriminator_forward.1} parent=0 // pred_fallthru
    _
  // Predicated region
  $region26: #{nlayer_discriminator_forward.1} parent=0 // pred_check
    _
  $region27: #{nlayer_discriminator_forward.1} parent=0 // pred_check_branch
    %34 = sbr.rel (0) target = $region29
  $region28: #{nlayer_discriminator_forward.1} parent=0 // pred_region
    _
  $region29: #{nlayer_discriminator_forward.1} parent=0 // pred_fallthru
    _
  // Predicated region
  $region30: #{nlayer_discriminator_forward.1} parent=0 // pred_check
    _
  $region31: #{nlayer_discriminator_forward.1} parent=0 // pred_check_branch
    %36 = sbr.rel (0) target = $region33
  $region32: #{nlayer_discriminator_forward.1} parent=0 // pred_region
    _
  $region33: #{nlayer_discriminator_forward.1} parent=0 // pred_fallthru
    _
  // Predicated region
  $region34: #{nlayer_discriminator_forward.1} parent=0 // pred_check
    _
  $region35: #{nlayer_discriminator_forward.1} parent=0 // pred_check_branch
    %38 = sbr.rel (0) target = $region37
  $region36: #{nlayer_discriminator_forward.1} parent=0 // pred_region
    _
  $region37: #{nlayer_discriminator_forward.1} parent=0 // pred_fallthru
    _
  // Predicated region
  $region38: #{nlayer_discriminator_forward.1} parent=0 // pred_check
    _
  $region39: #{nlayer_discriminator_forward.1} parent=0 // pred_check_branch
    %40 = sbr.rel (0) target = $region41
  $region40: #{nlayer_discriminator_forward.1} parent=0 // pred_region
    _
  $region41: #{nlayer_discriminator_forward.1} parent=0 // pred_fallthru
    _
  // Predicated region
  $region42: #{nlayer_discriminator_forward.1} parent=0 // pred_check
    _
  $region43: #{nlayer_discriminator_forward.1} parent=0 // pred_check_branch
    %42 = sbr.rel (0) target = $region45
  $region44: #{nlayer_discriminator_forward.1} parent=0 // pred_region
    _
  $region45: #{nlayer_discriminator_forward.1} parent=0 // pred_fallthru
    _
  // Predicated region
  $region46: #{nlayer_discriminator_forward.1} parent=0 // pred_check
    _
  $region47: #{nlayer_discriminator_forward.1} parent=0 // pred_check_branch
    %44 = sbr.rel (0) target = $region49
  $region48: #{nlayer_discriminator_forward.1} parent=0 // pred_region
    _
  $region49: #{nlayer_discriminator_forward.1} parent=0 // pred_fallthru
    _
  // Predicated region
  $region50: #{nlayer_discriminator_forward.1} parent=0 // pred_check
    _
  $region51: #{nlayer_discriminator_forward.1} parent=0 // pred_check_branch
    %46 = sbr.rel (0) target = $region53
  $region52: #{nlayer_discriminator_forward.1} parent=0 // pred_region
    _
  $region53: #{nlayer_discriminator_forward.1} parent=0 // pred_fallthru
    _
  // Predicated region
  $region54: #{nlayer_discriminator_forward.1} parent=0 // pred_check
    _
  $region55: #{nlayer_discriminator_forward.1} parent=0 // pred_check_branch
    %48 = sbr.rel (0) target = $region57
  $region56: #{nlayer_discriminator_forward.1} parent=0 // pred_region
    _
  $region57: #{nlayer_discriminator_forward.1} parent=0 // pred_fallthru
    _
  // Predicated region
  $region58: #{nlayer_discriminator_forward.1} parent=0 // pred_check
    _
  $region59: #{nlayer_discriminator_forward.1} parent=0 // pred_check_branch
    %50 = sbr.rel (0) target = $region61
  $region60: #{nlayer_discriminator_forward.1} parent=0 // pred_region
    _
  $region61: #{nlayer_discriminator_forward.1} parent=0 // pred_fallthru
    _
  // Predicated region
  $region62: #{nlayer_discriminator_forward.1} parent=0 // pred_check
    _
  $region63: #{nlayer_discriminator_forward.1} parent=0 // pred_check_branch
    %52 = sbr.rel (0) target = $region65
  $region64: #{nlayer_discriminator_forward.1} parent=0 // pred_region
    _
  $region65: #{nlayer_discriminator_forward.1} parent=0 // pred_fallthru
    _
  %vm54 = vcmask 588800
  %55 = vst.msk [vmem:[#allocation2] sm:$0xff] %vm54, 0.0
  %56 = vst.msk [vmem:[#allocation2 + $0x8] sm:$0xff] %vm54, 0.0
  %57 = vst.msk [vmem:[#allocation2 + $0x10] sm:$0xff] %vm54, 0.0
  %58 = vst.msk [vmem:[#allocation2 + $0x18] sm:$0xff] %vm54, 0.0
  %vm59 = vcmask 584704
  %60 = vst.msk [vmem:[#allocation2 + $0x20] sm:$0xf] %vm59, 0.0
  %vm61 = vcmask 654336
  %62 = vst.msk [vmem:[#allocation3] sm:$0xff] %vm61, 0.0
  %63 = vst.msk [vmem:[#allocation3 + $0x8] sm:$0xff] %vm61, 0.0
  %vm64 = vcmask 650240
  %65 = vst.msk [vmem:[#allocation3 + $0x10] sm:$0xf] %vm64, 0.0
  %vm66 = vcmask 785408
  %67 = vst.msk [vmem:[#allocation4] sm:$0xff] %vm66, 0.0
  %vm68 = vcmask 781312
  %69 = vst.msk [vmem:[#allocation4 + $0x8] sm:$0xf] %vm68, 0.0
  %70 = vst [vmem:[#allocation5] sm:$0xff] 0.0
  %vm71 = vcmask 1041408
  %vm72 = vcmask 1043458
  %vm73 = vmor %vm72, %vm71
  %vm74 = vcmask 259076
  %vm75 = vmor %vm74, %vm73
  %76 = vst.msk [vmem:[#allocation5 + $0x8] sm:$0x3f] %vm75, 0.0
  %v77 = vld [vmem:[%s0] sm:$0xff]
  %v78 = vld [vmem:[%s0 + $0x8] sm:$0xff]
  %v79 = vld [vmem:[%s0 + $0x10] sm:$0xff]
  %v80 = vld [vmem:[%s0 + $0x18] sm:$0xff]
  %v81 = vld [vmem:[%s0 + $0x20] sm:$0xff]
  %v82 = vld [vmem:[%s0 + $0x28] sm:$0xff]
  %v83 = vld [vmem:[%s0 + $0x30] sm:$0xff]
  %v84 = vld [vmem:[%s0 + $0x38] sm:$0xff]
  %v85 = vld [vmem:[%s0 + $0x40] sm:$0x1]
  %v86 = vld [vmem:[%s0 + $0x48] sm:$0x1]
  %v87 = vpack.c.bf16 %v79, %v77
  %v88 = vpack.c.bf16 %v80, %v78
  %v89 = vpack.c.bf16 %v83, %v81
  %v90 = vpack.c.bf16 %v84, %v82
  %v91 = vpack.c.bf16 %v85, %v85
  %v92 = vpack.c.bf16 %v86, %v86
  %v93 = vld [vmem:[%s1] sm:$0xf]
  %v94 = vld [vmem:[%s1 + $0x4] sm:$0xf]
  %v95 = vld [vmem:[%s1 + $0x8] sm:$0xf]
  %v96 = vld [vmem:[%s1 + $0xc] sm:$0xf]
  %v97 = vld [vmem:[%s1 + $0x10] sm:$0xf]
  %v98 = vld [vmem:[%s1 + $0x14] sm:$0xf]
  %v99 = vld [vmem:[%s1 + $0x18] sm:$0xf]
  %v100 = vld [vmem:[%s1 + $0x1c] sm:$0xf]
  %v101 = vld [vmem:[%s1 + $0x20] sm:$0xf]
  %v102 = vld [vmem:[%s1 + $0x24] sm:$0xf]
  %v103 = vld [vmem:[%s1 + $0x28] sm:$0xf]
  %v104 = vld [vmem:[%s1 + $0x2c] sm:$0xf]
  %v105 = vld [vmem:[%s1 + $0x30] sm:$0xf]
  %v106 = vld [vmem:[%s1 + $0x34] sm:$0xf]
  %v107 = vld [vmem:[%s1 + $0x38] sm:$0xf]
  %v108 = vld [vmem:[%s1 + $0x3c] sm:$0xf]
  %v109 = vld [vmem:[%s1 + $0x40] sm:$0xf]
  %v110 = vld [vmem:[%s0 + $0x40] sm:$0xfc]
  %v111 = vld [vmem:[%s0 + $0x48] sm:$0xfc]
  %v112 = vld [vmem:[%s0 + $0x50] sm:$0xff]
  %v113 = vld [vmem:[%s0 + $0x58] sm:$0xff]
  %v114 = vld [vmem:[%s0 + $0x60] sm:$0xff]
  %v115 = vld [vmem:[%s0 + $0x68] sm:$0xff]
  %v116 = vld [vmem:[%s0 + $0x70] sm:$0xff]
  %v117 = vld [vmem:[%s0 + $0x78] sm:$0xff]
  %v118 = vld [vmem:[%s0 + $0x80] sm:$0x7]
  %v119 = vld [vmem:[%s0 + $0x88] sm:$0x7]
  %v120 = vpack.c.bf16 %v112, %v110
  %v121 = vpack.c.bf16 %v113, %v111
  %v122 = vpack.c.bf16 %v116, %v114
  %v123 = vpack.c.bf16 %v117, %v115
  %v124 = vpack.c.bf16 %v118, %v118
  %v125 = vpack.c.bf16 %v119, %v119
  %s126 = scalar_lea.vmem %s1, 68
  %v127 = vld [vmem:[%s126] sm:$0xf]
  %v128 = vld [vmem:[%s126 + $0x4] sm:$0xf]
  %v129 = vld [vmem:[%s126 + $0x8] sm:$0xf]
  %v130 = vld [vmem:[%s126 + $0xc] sm:$0xf]
  %v131 = vld [vmem:[%s126 + $0x10] sm:$0xf]
  %v132 = vld [vmem:[%s126 + $0x14] sm:$0xf]
  %v133 = vld [vmem:[%s126 + $0x18] sm:$0xf]
  %v134 = vld [vmem:[%s126 + $0x1c] sm:$0xf]
  %v135 = vld [vmem:[%s126 + $0x20] sm:$0xf]
  %v136 = vld [vmem:[%s126 + $0x24] sm:$0xf]
  %v137 = vld [vmem:[%s126 + $0x28] sm:$0xf]
  %v138 = vld [vmem:[%s126 + $0x2c] sm:$0xf]
  %v139 = vld [vmem:[%s126 + $0x30] sm:$0xf]
  %v140 = vld [vmem:[%s126 + $0x34] sm:$0xf]
  %v141 = vld [vmem:[%s126 + $0x38] sm:$0xf]
  %v142 = vld [vmem:[%s126 + $0x3c] sm:$0xf]
  %v143 = vld [vmem:[%s126 + $0x40] sm:$0xf]
  %vm150 = vcmask 1046528
  %v151 = vrot.slane %v120, 1
  %v152 = vrot.slane %v122, 1
  %v153 = vsel %vm150, %v151, %v152
  %v154 = vrot.slane %v121, 1
  %v155 = vrot.slane %v123, 1
  %v156 = vsel %vm150, %v154, %v155
  %v157 = vrot.slane %v124, 1
  %v158 = vsel %vm150, %v152, %v157
  %v159 = vrot.slane %v125, 1
  %v160 = vsel %vm150, %v155, %v159
  %v181 = vunpack.c.l.b16 %v127
  %v182 = vunpack.c.l.b16 %v128
  %v183 = vunpack.c.l.b16 %v129
  %v184 = vunpack.c.l.b16 %v130
  %v185 = vunpack.c.l.b16 %v131
  %v186 = vunpack.c.l.b16 %v132
  %v187 = vunpack.c.l.b16 %v133
  %v188 = vunpack.c.l.b16 %v134
  %v189 = vunpack.c.l.b16 %v135
  %v190 = vunpack.c.l.b16 %v136
  %v191 = vunpack.c.l.b16 %v137
  %v192 = vunpack.c.l.b16 %v138
  %v193 = vunpack.c.l.b16 %v139
  %v194 = vunpack.c.l.b16 %v140
  %v195 = vunpack.c.l.b16 %v141
  %v196 = vunpack.c.l.b16 %v142
  %v197 = vunpack.c.l.b16 %v143
  %v198 = vpack.c.b16 %v182, %v181
  %v199 = vpack.c.b16 %v184, %v183
  %v200 = vpack.c.b16 %v186, %v185
  %v201 = vpack.c.b16 %v188, %v187
  %v202 = vpack.c.b16 %v190, %v189
  %v203 = vpack.c.b16 %v192, %v191
  %v204 = vpack.c.b16 %v194, %v193
  %v205 = vpack.c.b16 %v196, %v195
  %v206 = vpack.c.b16 %v197, %v197
  %vm215 = vcmask 64512
  %v217 = vsel %vm215, %v156, 0
  %v220 = vsel %vm215, %v160, 0
  %v223 = vsel %vm215, %v159, 0
  %vm225 = vcmask 1043456
  %v227 = vsel %vm225, %v206, 0
  %229 = vmatprep.subr.bf16.mxu0 0
  %230 = vmatpush1.bf16.msra.mxu0 %v198
  %231 = vmatprep.subr.bf16.mxu0 0
  %232 = vmatpush1.bf16.msra.mxu0 %v199
  %233 = vmatprep.subr.bf16.mxu0 0
  %234 = vmatpush1.bf16.msra.mxu0 %v200
  %235 = vmatprep.subr.bf16.mxu0 0
  %236 = vmatpush1.bf16.msra.mxu0 %v201
  %237 = vmatprep.subr.bf16.mxu0 0
  %238 = vmatpush1.bf16.msra.mxu0 %v202
  %239 = vmatprep.subr.bf16.mxu0 0
  %240 = vmatpush1.bf16.msra.mxu0 %v203
  %241 = vmatprep.subr.bf16.mxu0 0
  %242 = vmatpush1.bf16.msra.mxu0 %v204
  %243 = vmatprep.subr.bf16.mxu0 0
  %244 = vmatpush1.bf16.msra.mxu0 %v205
  %245 = vmatprep.subr.bf16.mxu0 0
  %246 = vmatpush1.bf16.msra.mxu0 %v227
  %247 = vmatprep.subr.bf16.mxu0 0
  %248 = vmatpush1.bf16.msra.mxu0 0
  %249 = vmatprep.subr.bf16.mxu0 0
  %250 = vmatpush1.bf16.msra.mxu0 0
  %251 = vmatprep.subr.bf16.mxu0 0
  %252 = vmatpush1.bf16.msra.mxu0 0
  %253 = vmatprep.subr.bf16.mxu0 0
  %254 = vmatpush1.bf16.msra.mxu0 0
  %255 = vmatprep.subr.bf16.mxu0 0
  %256 = vmatpush1.bf16.msra.mxu0 0
  %257 = vmatprep.subr.bf16.mxu0 0
  %258 = vmatpush1.bf16.msra.mxu0 0
  %259 = vmatprep.subr.bf16.mxu0 0
  %260 = vmatpush1.bf16.msra.mxu0 0
  %261 = vmatprep.mubr.bf16.mxu0 %v217
  %262 = vmatmul.mubr.bf16.gmra.mrb[0].mxu0 %v153
  %v263 = vpop.f32.mrb[0].mxu0
  %v264 = vadd.f32 0.0, %v263
  %v265 = vpop.f32.mrb[0].mxu0
  %v266 = vpop.f32.mrb[0].mxu0
  %v267 = vadd.f32 0.0, %v266
  %v268 = vpop.f32.mrb[0].mxu0
  %269 = vmatprep.mubr.bf16.mxu0 %v220
  %270 = vmatmul.mubr.bf16.gmra.mrb[0].mxu0 %v158
  %v271 = vpop.f32.mrb[0].mxu0
  %v272 = vadd.f32 0.0, %v271
  %v273 = vpop.f32.mrb[0].mxu0
  %v274 = vpop.f32.mrb[0].mxu0
  %v275 = vadd.f32 0.0, %v274
  %v276 = vpop.f32.mrb[0].mxu0
  %277 = vmatprep.mubr.bf16.mxu0 %v223
  %278 = vmatmul.mubr.bf16.gmra.mrb[0].mxu0 %v157
  %v279 = vpop.f32.mrb[0].mxu0
  %v280 = vadd.f32 0.0, %v279
  %v281 = vpop.f32.mrb[0].mxu0
  %v282 = vpop.f32.mrb[0].mxu0
  %v283 = vpop.f32.mrb[0].mxu0
  %284 = vdwg.mxu0
  %v302 = vunpack.c.l.b16 %v93
  %v303 = vunpack.c.l.b16 %v94
  %v304 = vunpack.c.l.b16 %v95
  %v305 = vunpack.c.l.b16 %v96
  %v306 = vunpack.c.l.b16 %v97
  %v307 = vunpack.c.l.b16 %v98
  %v308 = vunpack.c.l.b16 %v99
  %v309 = vunpack.c.l.b16 %v100
  %v310 = vunpack.c.l.b16 %v101
  %v311 = vunpack.c.l.b16 %v102
  %v312 = vunpack.c.l.b16 %v103
  %v313 = vunpack.c.l.b16 %v104
  %v314 = vunpack.c.l.b16 %v105
  %v315 = vunpack.c.l.b16 %v106
  %v316 = vunpack.c.l.b16 %v107
  %v317 = vunpack.c.l.b16 %v108
  %v318 = vunpack.c.l.b16 %v109
  %v319 = vpack.c.b16 %v303, %v302
  %v320 = vpack.c.b16 %v305, %v304
  %v321 = vpack.c.b16 %v307, %v306
  %v322 = vpack.c.b16 %v309, %v308
  %v323 = vpack.c.b16 %v311, %v310
  %v324 = vpack.c.b16 %v313, %v312
  %v325 = vpack.c.b16 %v315, %v314
  %v326 = vpack.c.b16 %v317, %v316
  %v327 = vpack.c.b16 %v318, %v318
  %v337 = vsel %vm215, %v88, 0
  %v340 = vsel %vm215, %v90, 0
  %v343 = vsel %vm215, %v92, 0
  %v346 = vsel %vm225, %v327, 0
  %348 = vmatprep.subr.bf16.mxu0 0
  %349 = vmatpush1.bf16.msra.mxu0 %v319
  %350 = vmatprep.subr.bf16.mxu0 0
  %351 = vmatpush1.bf16.msra.mxu0 %v320
  %352 = vmatprep.subr.bf16.mxu0 0
  %353 = vmatpush1.bf16.msra.mxu0 %v321
  %354 = vmatprep.subr.bf16.mxu0 0
  %355 = vmatpush1.bf16.msra.mxu0 %v322
  %356 = vmatprep.subr.bf16.mxu0 0
  %357 = vmatpush1.bf16.msra.mxu0 %v323
  %358 = vmatprep.subr.bf16.mxu0 0
  %359 = vmatpush1.bf16.msra.mxu0 %v324
  %360 = vmatprep.subr.bf16.mxu0 0
  %361 = vmatpush1.bf16.msra.mxu0 %v325
  %362 = vmatprep.subr.bf16.mxu0 0
  %363 = vmatpush1.bf16.msra.mxu0 %v326
  %364 = vmatprep.subr.bf16.mxu0 0
  %365 = vmatpush1.bf16.msra.mxu0 %v346
  %366 = vmatprep.subr.bf16.mxu0 0
  %367 = vmatpush1.bf16.msra.mxu0 0
  %368 = vmatprep.subr.bf16.mxu0 0
  %369 = vmatpush1.bf16.msra.mxu0 0
  %370 = vmatprep.subr.bf16.mxu0 0
  %371 = vmatpush1.bf16.msra.mxu0 0
  %372 = vmatprep.subr.bf16.mxu0 0
  %373 = vmatpush1.bf16.msra.mxu0 0
  %374 = vmatprep.subr.bf16.mxu0 0
  %375 = vmatpush1.bf16.msra.mxu0 0
  %376 = vmatprep.subr.bf16.mxu0 0
  %377 = vmatpush1.bf16.msra.mxu0 0
  %378 = vmatprep.subr.bf16.mxu0 0
  %379 = vmatpush1.bf16.msra.mxu0 0
  %380 = vmatprep.mubr.bf16.mxu0 %v337
  %381 = vmatmul.mubr.bf16.gmra.mrb[0].mxu0 %v87
  %v382 = vpop.f32.mrb[0].mxu0
  %v383 = vadd.f32 %v264, %v382
  %v384 = vpop.f32.mrb[0].mxu0
  %v385 = vpop.f32.mrb[0].mxu0
  %v386 = vadd.f32 %v267, %v385
  %v387 = vpop.f32.mrb[0].mxu0
  %388 = vmatprep.mubr.bf16.mxu0 %v340
  %389 = vmatmul.mubr.bf16.gmra.mrb[0].mxu0 %v89
  %v390 = vpop.f32.mrb[0].mxu0
  %v391 = vadd.f32 %v272, %v390
  %v392 = vpop.f32.mrb[0].mxu0
  %v393 = vpop.f32.mrb[0].mxu0
  %v394 = vadd.f32 %v275, %v393
  %v395 = vpop.f32.mrb[0].mxu0
  %396 = vmatprep.mubr.bf16.mxu0 %v343
  %397 = vmatmul.mubr.bf16.gmra.mrb[0].mxu0 %v91
  %v398 = vpop.f32.mrb[0].mxu0
  %v399 = vadd.f32 %v280, %v398
  %v400 = vpop.f32.mrb[0].mxu0
  %v401 = vpop.f32.mrb[0].mxu0
  %v402 = vpop.f32.mrb[0].mxu0
  %403 = vdwg.mxu0
  %v404 = vld [vmem:[%s0] sm:$0xfe]
  %v405 = vld [vmem:[%s0 + $0x8] sm:$0xfe]
  %v406 = vld [vmem:[%s0 + $0x40] sm:$0x3]
  %v407 = vld [vmem:[%s0 + $0x48] sm:$0x3]
  %v408 = vpack.c.bf16 %v79, %v404
  %v409 = vpack.c.bf16 %v80, %v405
  %v410 = vpack.c.bf16 %v406, %v406
  %v411 = vpack.c.bf16 %v407, %v407
  %s412 = scalar_lea.vmem %s1, 136
  %v413 = vld [vmem:[%s412] sm:$0xf]
  %v414 = vld [vmem:[%s412 + $0x4] sm:$0xf]
  %v415 = vld [vmem:[%s412 + $0x8] sm:$0xf]
  %v416 = vld [vmem:[%s412 + $0xc] sm:$0xf]
  %v417 = vld [vmem:[%s412 + $0x10] sm:$0xf]
  %v418 = vld [vmem:[%s412 + $0x14] sm:$0xf]
  %v419 = vld [vmem:[%s412 + $0x18] sm:$0xf]
  %v420 = vld [vmem:[%s412 + $0x1c] sm:$0xf]
  %v421 = vld [vmem:[%s412 + $0x20] sm:$0xf]
  %v422 = vld [vmem:[%s412 + $0x24] sm:$0xf]
  %v423 = vld [vmem:[%s412 + $0x28] sm:$0xf]
  %v424 = vld [vmem:[%s412 + $0x2c] sm:$0xf]
  %v425 = vld [vmem:[%s412 + $0x30] sm:$0xf]
  %v426 = vld [vmem:[%s412 + $0x34] sm:$0xf]
  %v427 = vld [vmem:[%s412 + $0x38] sm:$0xf]
  %v428 = vld [vmem:[%s412 + $0x3c] sm:$0xf]
  %v429 = vld [vmem:[%s412 + $0x40] sm:$0xf]
  %vm430 = vsmask.f32 7424
  %v432 = vshrl.u32 %v408, 16
  %v434 = vshll.u32 %v408, 16
  %v436 = vrot.slane %v434, 1
  %v437 = vor.u32 %v432, %v436
  %v439 = vshll.u32 %v89, 16
  %v441 = vrot.slane %v439, 1
  %v442 = vsel %vm430, %v437, %v441
  %v444 = vshrl.u32 %v409, 16
  %v446 = vshll.u32 %v409, 16
  %v448 = vrot.slane %v446, 1
  %v449 = vor.u32 %v444, %v448
  %v450 = vshll.u32 %v90, 16
  %v452 = vrot.slane %v450, 1
  %v453 = vsel %vm430, %v449, %v452
  %v454 = vshrl.u32 %v89, 16
  %v456 = vor.u32 %v454, %v441
  %v458 = vshll.u32 %v410, 16
  %v460 = vrot.slane %v458, 1
  %v461 = vsel %vm430, %v456, %v460
  %v462 = vshrl.u32 %v90, 16
  %v464 = vor.u32 %v462, %v452
  %v466 = vshll.u32 %v411, 16
  %v468 = vrot.slane %v466, 1
  %v469 = vsel %vm430, %v464, %v468
  %v470 = vshrl.u32 %v410, 16
  %v472 = vshrl.u32 %v411, 16
  %v494 = vunpack.c.l.b16 %v413
  %v495 = vunpack.c.l.b16 %v414
  %v496 = vunpack.c.l.b16 %v415
  %v497 = vunpack.c.l.b16 %v416
  %v498 = vunpack.c.l.b16 %v417
  %v499 = vunpack.c.l.b16 %v418
  %v500 = vunpack.c.l.b16 %v419
  %v501 = vunpack.c.l.b16 %v420
  %v502 = vunpack.c.l.b16 %v421
  %v503 = vunpack.c.l.b16 %v422
  %v504 = vunpack.c.l.b16 %v423
  %v505 = vunpack.c.l.b16 %v424
  %v506 = vunpack.c.l.b16 %v425
  %v507 = vunpack.c.l.b16 %v426
  %v508 = vunpack.c.l.b16 %v427
  %v509 = vunpack.c.l.b16 %v428
  %v510 = vunpack.c.l.b16 %v429
  %v511 = vpack.c.b16 %v495, %v494
  %v512 = vpack.c.b16 %v497, %v496
  %v513 = vpack.c.b16 %v499, %v498
  %v514 = vpack.c.b16 %v501, %v500
  %v515 = vpack.c.b16 %v503, %v502
  %v516 = vpack.c.b16 %v505, %v504
  %v517 = vpack.c.b16 %v507, %v506
  %v518 = vpack.c.b16 %v509, %v508
  %v519 = vpack.c.b16 %v510, %v510
  %v529 = vsel %vm215, %v453, 0
  %v532 = vsel %vm215, %v469, 0
  %v535 = vsel %vm215, %v472, 0
  %v538 = vsel %vm225, %v519, 0
  %540 = vmatprep.subr.bf16.mxu0 0
  %541 = vmatpush1.bf16.msra.mxu0 %v511
  %542 = vmatprep.subr.bf16.mxu0 0
  %543 = vmatpush1.bf16.msra.mxu0 %v512
  %544 = vmatprep.subr.bf16.mxu0 0
  %545 = vmatpush1.bf16.msra.mxu0 %v513
  %546 = vmatprep.subr.bf16.mxu0 0
  %547 = vmatpush1.bf16.msra.mxu0 %v514
  %548 = vmatprep.subr.bf16.mxu0 0
  %549 = vmatpush1.bf16.msra.mxu0 %v515
  %550 = vmatprep.subr.bf16.mxu0 0
  %551 = vmatpush1.bf16.msra.mxu0 %v516
  %552 = vmatprep.subr.bf16.mxu0 0
  %553 = vmatpush1.bf16.msra.mxu0 %v517
  %554 = vmatprep.subr.bf16.mxu0 0
  %555 = vmatpush1.bf16.msra.mxu0 %v518
  %556 = vmatprep.subr.bf16.mxu0 0
  %557 = vmatpush1.bf16.msra.mxu0 %v538
  %558 = vmatprep.subr.bf16.mxu0 0
  %559 = vmatpush1.bf16.msra.mxu0 0
  %560 = vmatprep.subr.bf16.mxu0 0
  %561 = vmatpush1.bf16.msra.mxu0 0
  %562 = vmatprep.subr.bf16.mxu0 0
  %563 = vmatpush1.bf16.msra.mxu0 0
  %564 = vmatprep.subr.bf16.mxu0 0
  %565 = vmatpush1.bf16.msra.mxu0 0
  %566 = vmatprep.subr.bf16.mxu0 0
  %567 = vmatpush1.bf16.msra.mxu0 0
  %568 = vmatprep.subr.bf16.mxu0 0
  %569 = vmatpush1.bf16.msra.mxu0 0
  %570 = vmatprep.subr.bf16.mxu0 0
  %571 = vmatpush1.bf16.msra.mxu0 0
  %572 = vmatprep.mubr.bf16.mxu0 %v529
  %573 = vmatmul.mubr.bf16.gmra.mrb[0].mxu0 %v442
  %v574 = vpop.f32.mrb[0].mxu0
  %v575 = vadd.f32 0.0, %v574
  %v576 = vpop.f32.mrb[0].mxu0
  %v577 = vpop.f32.mrb[0].mxu0
  %v578 = vadd.f32 0.0, %v577
  %v579 = vpop.f32.mrb[0].mxu0
  %580 = vmatprep.mubr.bf16.mxu0 %v532
  %581 = vmatmul.mubr.bf16.gmra.mrb[0].mxu0 %v461
  %v582 = vpop.f32.mrb[0].mxu0
  %v583 = vadd.f32 0.0, %v582
  %v584 = vpop.f32.mrb[0].mxu0
  %v585 = vpop.f32.mrb[0].mxu0
  %v586 = vadd.f32 0.0, %v585
  %v587 = vpop.f32.mrb[0].mxu0
  %588 = vmatprep.mubr.bf16.mxu0 %v535
  %589 = vmatmul.mubr.bf16.gmra.mrb[0].mxu0 %v470
  %v590 = vpop.f32.mrb[0].mxu0
  %v591 = vadd.f32 0.0, %v590
  %v592 = vpop.f32.mrb[0].mxu0
  %v593 = vpop.f32.mrb[0].mxu0
  %v594 = vpop.f32.mrb[0].mxu0
  %595 = vdwg.mxu0
  %v596 = vadd.f32 %v383, %v575
  %v597 = vadd.f32 %v386, %v578
  %v598 = vadd.f32 %v391, %v583
  %v599 = vadd.f32 %v394, %v586
  %v600 = vadd.f32 %v399, %v591
  %v601 = vld [vmem:[%s0 + $0x40] sm:$0xf8]
  %v602 = vld [vmem:[%s0 + $0x48] sm:$0xf8]
  %v603 = vld [vmem:[%s0 + $0x80] sm:$0xf]
  %v604 = vld [vmem:[%s0 + $0x88] sm:$0xf]
  %v605 = vpack.c.bf16 %v112, %v601
  %v606 = vpack.c.bf16 %v113, %v602
  %v607 = vpack.c.bf16 %v603, %v603
  %v608 = vpack.c.bf16 %v604, %v604
  %s609 = scalar_lea.vmem %s1, 204
  %v610 = vld [vmem:[%s609] sm:$0xf]
  %v611 = vld [vmem:[%s609 + $0x4] sm:$0xf]
  %v612 = vld [vmem:[%s609 + $0x8] sm:$0xf]
  %v613 = vld [vmem:[%s609 + $0xc] sm:$0xf]
  %v614 = vld [vmem:[%s609 + $0x10] sm:$0xf]
  %v615 = vld [vmem:[%s609 + $0x14] sm:$0xf]
  %v616 = vld [vmem:[%s609 + $0x18] sm:$0xf]
  %v617 = vld [vmem:[%s609 + $0x1c] sm:$0xf]
  %v618 = vld [vmem:[%s609 + $0x20] sm:$0xf]
  %v619 = vld [vmem:[%s609 + $0x24] sm:$0xf]
  %v620 = vld [vmem:[%s609 + $0x28] sm:$0xf]
  %v621 = vld [vmem:[%s609 + $0x2c] sm:$0xf]
  %v622 = vld [vmem:[%s609 + $0x30] sm:$0xf]
  %v623 = vld [vmem:[%s609 + $0x34] sm:$0xf]
  %v624 = vld [vmem:[%s609 + $0x38] sm:$0xf]
  %v625 = vld [vmem:[%s609 + $0x3c] sm:$0xf]
  %v626 = vld [vmem:[%s609 + $0x40] sm:$0xf]
  %vm627 = vsmask.f32 6400
  %v629 = vshrl.u32 %v605, 16
  %v631 = vrot.slane %v629, 1
  %v632 = vshll.u32 %v605, 16
  %v634 = vrot.slane %v632, 2
  %v635 = vor.u32 %v631, %v634
  %v637 = vshrl.u32 %v122, 16
  %v639 = vrot.slane %v637, 1
  %v640 = vshll.u32 %v122, 16
  %v642 = vrot.slane %v640, 2
  %v643 = vor.u32 %v639, %v642
  %v644 = vsel %vm627, %v635, %v643
  %v646 = vshrl.u32 %v606, 16
  %v648 = vrot.slane %v646, 1
  %v649 = vshll.u32 %v606, 16
  %v651 = vrot.slane %v649, 2
  %v652 = vor.u32 %v648, %v651
  %v654 = vshrl.u32 %v123, 16
  %v656 = vrot.slane %v654, 1
  %v657 = vshll.u32 %v123, 16
  %v659 = vrot.slane %v657, 2
  %v660 = vor.u32 %v656, %v659
  %v661 = vsel %vm627, %v652, %v660
  %v663 = vshrl.u32 %v607, 16
  %v665 = vrot.slane %v663, 1
  %v666 = vshll.u32 %v607, 16
  %v668 = vrot.slane %v666, 2
  %v669 = vor.u32 %v665, %v668
  %v670 = vsel %vm627, %v643, %v669
  %v672 = vshrl.u32 %v608, 16
  %v674 = vrot.slane %v672, 1
  %v675 = vshll.u32 %v608, 16
  %v677 = vrot.slane %v675, 2
  %v678 = vor.u32 %v674, %v677
  %v679 = vsel %vm627, %v660, %v678
  %v700 = vunpack.c.l.b16 %v610
  %v701 = vunpack.c.l.b16 %v611
  %v702 = vunpack.c.l.b16 %v612
  %v703 = vunpack.c.l.b16 %v613
  %v704 = vunpack.c.l.b16 %v614
  %v705 = vunpack.c.l.b16 %v615
  %v706 = vunpack.c.l.b16 %v616
  %v707 = vunpack.c.l.b16 %v617
  %v708 = vunpack.c.l.b16 %v618
  %v709 = vunpack.c.l.b16 %v619
  %v710 = vunpack.c.l.b16 %v620
  %v711 = vunpack.c.l.b16 %v621
  %v712 = vunpack.c.l.b16 %v622
  %v713 = vunpack.c.l.b16 %v623
  %v714 = vunpack.c.l.b16 %v624
  %v715 = vunpack.c.l.b16 %v625
  %v716 = vunpack.c.l.b16 %v626
  %v717 = vpack.c.b16 %v701, %v700
  %v718 = vpack.c.b16 %v703, %v702
  %v719 = vpack.c.b16 %v705, %v704
  %v720 = vpack.c.b16 %v707, %v706
  %v721 = vpack.c.b16 %v709, %v708
  %v722 = vpack.c.b16 %v711, %v710
  %v723 = vpack.c.b16 %v713, %v712
  %v724 = vpack.c.b16 %v715, %v714
  %v725 = vpack.c.b16 %v716, %v716
  %v735 = vsel %vm215, %v661, 0
  %v738 = vsel %vm215, %v679, 0
  %v741 = vsel %vm215, %v674, 0
  %v744 = vsel %vm225, %v725, 0
  %746 = vmatprep.subr.bf16.mxu0 0
  %747 = vmatpush1.bf16.msra.mxu0 %v717
  %748 = vmatprep.subr.bf16.mxu0 0
  %749 = vmatpush1.bf16.msra.mxu0 %v718
  %750 = vmatprep.subr.bf16.mxu0 0
  %751 = vmatpush1.bf16.msra.mxu0 %v719
  %752 = vmatprep.subr.bf16.mxu0 0
  %753 = vmatpush1.bf16.msra.mxu0 %v720
  %754 = vmatprep.subr.bf16.mxu0 0
  %755 = vmatpush1.bf16.msra.mxu0 %v721
  %756 = vmatprep.subr.bf16.mxu0 0
  %757 = vmatpush1.bf16.msra.mxu0 %v722
  %758 = vmatprep.subr.bf16.mxu0 0
  %759 = vmatpush1.bf16.msra.mxu0 %v723
  %760 = vmatprep.subr.bf16.mxu0 0
  %761 = vmatpush1.bf16.msra.mxu0 %v724
  %762 = vmatprep.subr.bf16.mxu0 0
  %763 = vmatpush1.bf16.msra.mxu0 %v744
  %764 = vmatprep.subr.bf16.mxu0 0
  %765 = vmatpush1.bf16.msra.mxu0 0
  %766 = vmatprep.subr.bf16.mxu0 0
  %767 = vmatpush1.bf16.msra.mxu0 0
  %768 = vmatprep.subr.bf16.mxu0 0
  %769 = vmatpush1.bf16.msra.mxu0 0
  %770 = vmatprep.subr.bf16.mxu0 0
  %771 = vmatpush1.bf16.msra.mxu0 0
  %772 = vmatprep.subr.bf16.mxu0 0
  %773 = vmatpush1.bf16.msra.mxu0 0
  %774 = vmatprep.subr.bf16.mxu0 0
  %775 = vmatpush1.bf16.msra.mxu0 0
  %776 = vmatprep.subr.bf16.mxu0 0
  %777 = vmatpush1.bf16.msra.mxu0 0
  %778 = vmatprep.mubr.bf16.mxu0 %v735
  %779 = vmatmul.mubr.bf16.gmra.mrb[0].mxu0 %v644
  %v780 = vpop.f32.mrb[0].mxu0
  %v781 = vadd.f32 0.0, %v780
  %v782 = vpop.f32.mrb[0].mxu0
  %v783 = vpop.f32.mrb[0].mxu0
  %v784 = vadd.f32 0.0, %v783
  %v785 = vpop.f32.mrb[0].mxu0
  %786 = vmatprep.mubr.bf16.mxu0 %v738
  %787 = vmatmul.mubr.bf16.gmra.mrb[0].mxu0 %v670
  %v788 = vpop.f32.mrb[0].mxu0
  %v789 = vadd.f32 0.0, %v788
  %v790 = vpop.f32.mrb[0].mxu0
  %v791 = vpop.f32.mrb[0].mxu0
  %v792 = vadd.f32 0.0, %v791
  %v793 = vpop.f32.mrb[0].mxu0
  %794 = vmatprep.mubr.bf16.mxu0 %v741
  %795 = vmatmul.mubr.bf16.gmra.mrb[0].mxu0 %v665
  %v796 = vpop.f32.mrb[0].mxu0
  %v797 = vadd.f32 0.0, %v796
  %v798 = vpop.f32.mrb[0].mxu0
  %v799 = vpop.f32.mrb[0].mxu0
  %v800 = vpop.f32.mrb[0].mxu0
  %801 = vdwg.mxu0
  %v802 = vadd.f32 %v596, %v781
  %v803 = vadd.f32 %v597, %v784
  %v804 = vadd.f32 %v598, %v789
  %v805 = vadd.f32 %v599, %v792
  %v806 = vadd.f32 %v600, %v797
  %v807 = vld [vmem:[%s2] sm:$0x1]
  %v809 = vlaneseq
  %v810 = vshrl.u32 %v809, 7
  %v811 = vsub.s32 0, %v810
  %v812 = vrot.slane %v807, %v811
  %v814 = vadd.f32 %v802, %v812
  %v815 = vadd.f32 %v803, %v812
  %v816 = vadd.f32 %v804, %v812
  %v817 = vadd.f32 %v805, %v812
  %v818 = vadd.f32 %v806, %v812
  %vm819 = vcmp.ge.f32.partialorder %v814, 0.0
  %vm820 = vcmp.ge.f32.partialorder %v815, 0.0
  %vm821 = vcmp.ge.f32.partialorder %v816, 0.0
  %vm822 = vcmp.ge.f32.partialorder %v817, 0.0
  %vm823 = vcmp.ge.f32.partialorder %v818, 0.0
  %v824 = vmul.f32 %v814, 0.2
  %v825 = vmul.f32 %v815, 0.2
  %v826 = vmul.f32 %v816, 0.2
  %v827 = vmul.f32 %v817, 0.2
  %v828 = vmul.f32 %v818, 0.2
  %v829 = vsel %vm819, %v814, %v824
  %v830 = vsel %vm820, %v815, %v825
  %v831 = vsel %vm821, %v816, %v826
  %v832 = vsel %vm822, %v817, %v827
  %v833 = vsel %vm823, %v818, %v828
  %835 = vrot.lane.b32.xlu0 %v829, 4
  %v836 = vpop.permute.xlu0 %835
  %vm838 = vcmask 548896
  %839 = vst.msk [vmem:[#allocation2 + $0x12] sm:$0x1] %vm838, %v836
  %vm840 = vcmask 549921
  %841 = vst.msk [vmem:[#allocation2] sm:$0x2] %vm840, %v836
  %vm842 = vcmask 550946
  %843 = vst.msk [vmem:[#allocation2 + $0x11] sm:$0x4] %vm842, %v836
  %vm844 = vcmask 551971
  %845 = vst.msk [vmem:[#allocation2 - $0x1] sm:$0x8] %vm844, %v836
  %vm846 = vcmask 552996
  %847 = vst.msk [vmem:[#allocation2 + $0x10] sm:$0x10] %vm846, %v836
  %vm848 = vcmask 554021
  %849 = vst.msk [vmem:[#allocation2 - $0x2] sm:$0x20] %vm848, %v836
  %vm850 = vcmask 555046
  %851 = vst.msk [vmem:[#allocation2 + $0xf] sm:$0x40] %vm850, %v836
  %vm852 = vcmask 556071
  %853 = vst.msk [vmem:[#allocation2 - $0x3] sm:$0x80] %vm852, %v836
  %855 = vrot.lane.b32.xlu0 %v830, 4
  %v856 = vpop.permute.xlu0 %855
  %858 = vst.msk [vmem:[#allocation2 + $0x16] sm:$0x1] %vm838, %v856
  %859 = vst.msk [vmem:[#allocation2 + $0x4] sm:$0x2] %vm840, %v856
  %860 = vst.msk [vmem:[#allocation2 + $0x15] sm:$0x4] %vm842, %v856
  %861 = vst.msk [vmem:[#allocation2 + $0x3] sm:$0x8] %vm844, %v856
  %862 = vst.msk [vmem:[#allocation2 + $0x14] sm:$0x10] %vm846, %v856
  %863 = vst.msk [vmem:[#allocation2 + $0x2] sm:$0x20] %vm848, %v856
  %864 = vst.msk [vmem:[#allocation2 + $0x13] sm:$0x40] %vm850, %v856
  %865 = vst.msk [vmem:[#allocation2 + $0x1] sm:$0x80] %vm852, %v856
  %867 = vrot.lane.b32.xlu0 %v831, 4
  %v868 = vpop.permute.xlu0 %867
  %870 = vst.msk [vmem:[#allocation2 + $0x1a] sm:$0x2] %vm840, %v868
  %871 = vst.msk [vmem:[#allocation2 + $0x8] sm:$0x4] %vm842, %v868
  %872 = vst.msk [vmem:[#allocation2 + $0x19] sm:$0x8] %vm844, %v868
  %873 = vst.msk [vmem:[#allocation2 + $0x7] sm:$0x10] %vm846, %v868
  %874 = vst.msk [vmem:[#allocation2 + $0x18] sm:$0x20] %vm848, %v868
  %875 = vst.msk [vmem:[#allocation2 + $0x6] sm:$0x40] %vm850, %v868
  %876 = vst.msk [vmem:[#allocation2 + $0x17] sm:$0x80] %vm852, %v868
  %878 = vrot.lane.b32.xlu0 %v832, 4
  %v879 = vpop.permute.xlu0 %878
  %881 = vst.msk [vmem:[#allocation2 + $0xd] sm:$0x1] %vm838, %v879
  %882 = vst.msk [vmem:[#allocation2 + $0x1e] sm:$0x2] %vm840, %v879
  %883 = vst.msk [vmem:[#allocation2 + $0xc] sm:$0x4] %vm842, %v879
  %884 = vst.msk [vmem:[#allocation2 + $0x1d] sm:$0x8] %vm844, %v879
  %885 = vst.msk [vmem:[#allocation2 + $0xb] sm:$0x10] %vm846, %v879
  %886 = vst.msk [vmem:[#allocation2 + $0x1c] sm:$0x20] %vm848, %v879
  %887 = vst.msk [vmem:[#allocation2 + $0xa] sm:$0x40] %vm850, %v879
  %888 = vst.msk [vmem:[#allocation2 + $0x1b] sm:$0x80] %vm852, %v879
  %890 = vrot.lane.b32.xlu0 %v833, 4
  %v891 = vpop.permute.xlu0 %890
  %893 = vst.msk [vmem:[#allocation2 + $0x11] sm:$0x1] %vm838, %v891
  %v894 = vld [vmem:[#allocation2] sm:$0xff]
  %v895 = vld [vmem:[#allocation2 + $0x8] sm:$0xff]
  %v896 = vld [vmem:[#allocation2 + $0x10] sm:$0x1]
  %v897 = vpack.c.bf16 %v895, %v894
  %v898 = vpack.c.bf16 %v896, %v896
  %v899 = vld [vmem:[%s3] sm:$0xf]
  %v900 = vld [vmem:[%s3 + $0x4] sm:$0xf]
  %v901 = vld [vmem:[%s3 + $0x8] sm:$0xf]
  %v902 = vld [vmem:[%s3 + $0xc] sm:$0xf]
  %v903 = vld [vmem:[%s3 + $0x10] sm:$0xf]
  %v904 = vld [vmem:[%s3 + $0x14] sm:$0xf]
  %v905 = vld [vmem:[%s3 + $0x18] sm:$0xf]
  %v906 = vld [vmem:[%s3 + $0x1c] sm:$0xf]
  %v907 = vld [vmem:[%s3 + $0x20] sm:$0xf]
  %v908 = vld [vmem:[#allocation2 + $0x12] sm:$0xff]
  %v909 = vld [vmem:[#allocation2 + $0x1a] sm:$0xff]
  %v910 = vld [vmem:[#allocation2 + $0x22] sm:$0x1]
  %v911 = vpack.c.bf16 %v909, %v908
  %v912 = vpack.c.bf16 %v910, %v910
  %s913 = scalar_lea.vmem %s3, 36
  %v914 = vld [vmem:[%s913] sm:$0xf]
  %v915 = vld [vmem:[%s913 + $0x4] sm:$0xf]
  %v916 = vld [vmem:[%s913 + $0x8] sm:$0xf]
  %v917 = vld [vmem:[%s913 + $0xc] sm:$0xf]
  %v918 = vld [vmem:[%s913 + $0x10] sm:$0xf]
  %v919 = vld [vmem:[%s913 + $0x14] sm:$0xf]
  %v920 = vld [vmem:[%s913 + $0x18] sm:$0xf]
  %v921 = vld [vmem:[%s913 + $0x1c] sm:$0xf]
  %v922 = vld [vmem:[%s913 + $0x20] sm:$0xf]
  %v932 = vunpack.c.l.b16 %v914
  %v933 = vunpack.c.l.b16 %v915
  %v934 = vunpack.c.l.b16 %v916
  %v935 = vunpack.c.l.b16 %v917
  %v936 = vunpack.c.l.b16 %v918
  %v937 = vunpack.c.l.b16 %v919
  %v938 = vunpack.c.l.b16 %v920
  %v939 = vunpack.c.l.b16 %v921
  %v940 = vunpack.c.l.b16 %v922
  %v941 = vpack.c.b16 %v933, %v932
  %v942 = vpack.c.b16 %v935, %v934
  %v943 = vpack.c.b16 %v937, %v936
  %v944 = vpack.c.b16 %v939, %v938
  %v945 = vpack.c.b16 %v940, %v940
  %v951 = vsel %vm54, %v911, 0
  %v954 = vsel %vm54, %v912, 0
  %v957 = vsel %vm225, %v945, 0
  %959 = vmatprep.subr.bf16.mxu0 0
  %960 = vmatpush1.bf16.msra.mxu0 %v941
  %961 = vmatprep.subr.bf16.mxu0 0
  %962 = vmatpush1.bf16.msra.mxu0 %v942
  %963 = vmatprep.subr.bf16.mxu0 0
  %964 = vmatpush1.bf16.msra.mxu0 %v943
  %965 = vmatprep.subr.bf16.mxu0 0
  %966 = vmatpush1.bf16.msra.mxu0 %v944
  %967 = vmatprep.subr.bf16.mxu0 0
  %968 = vmatpush1.bf16.msra.mxu0 %v957
  %969 = vmatprep.subr.bf16.mxu0 0
  %970 = vmatpush1.bf16.msra.mxu0 0
  %971 = vmatprep.subr.bf16.mxu0 0
  %972 = vmatpush1.bf16.msra.mxu0 0
  %973 = vmatprep.subr.bf16.mxu0 0
  %974 = vmatpush1.bf16.msra.mxu0 0
  %975 = vmatprep.subr.bf16.mxu0 0
  %976 = vmatpush1.bf16.msra.mxu0 0
  %977 = vmatprep.subr.bf16.mxu0 0
  %978 = vmatpush1.bf16.msra.mxu0 0
  %979 = vmatprep.subr.bf16.mxu0 0
  %980 = vmatpush1.bf16.msra.mxu0 0
  %981 = vmatprep.subr.bf16.mxu0 0
  %982 = vmatpush1.bf16.msra.mxu0 0
  %983 = vmatprep.subr.bf16.mxu0 0
  %984 = vmatpush1.bf16.msra.mxu0 0
  %985 = vmatprep.subr.bf16.mxu0 0
  %986 = vmatpush1.bf16.msra.mxu0 0
  %987 = vmatprep.subr.bf16.mxu0 0
  %988 = vmatpush1.bf16.msra.mxu0 0
  %989 = vmatprep.subr.bf16.mxu0 0
  %990 = vmatpush1.bf16.msra.mxu0 0
  %991 = vmatprep.mubr.bf16.mxu0 0
  %992 = vmatmul.mubr.bf16.gmra.mrb[0].mxu0 %v951
  %v993 = vpop.f32.mrb[0].mxu0
  %v994 = vadd.f32 0.0, %v993
  %v995 = vpop.f32.mrb[0].mxu0
  %v996 = vpop.f32.mrb[0].mxu0
  %v997 = vadd.f32 0.0, %v996
  %v998 = vpop.f32.mrb[0].mxu0
  %999 = vmatprep.mubr.bf16.mxu0 0
  %1000 = vmatmul.mubr.bf16.gmra.mrb[0].mxu0 %v954
  %v1001 = vpop.f32.mrb[0].mxu0
  %v1002 = vadd.f32 0.0, %v1001
  %v1003 = vpop.f32.mrb[0].mxu0
  %v1004 = vpop.f32.mrb[0].mxu0
  %v1005 = vpop.f32.mrb[0].mxu0
  %1006 = vdwg.mxu0
  %v1016 = vunpack.c.l.b16 %v899
  %v1017 = vunpack.c.l.b16 %v900
  %v1018 = vunpack.c.l.b16 %v901
  %v1019 = vunpack.c.l.b16 %v902
  %v1020 = vunpack.c.l.b16 %v903
  %v1021 = vunpack.c.l.b16 %v904
  %v1022 = vunpack.c.l.b16 %v905
  %v1023 = vunpack.c.l.b16 %v906
  %v1024 = vunpack.c.l.b16 %v907
  %v1025 = vpack.c.b16 %v1017, %v1016
  %v1026 = vpack.c.b16 %v1019, %v1018
  %v1027 = vpack.c.b16 %v1021, %v1020
  %v1028 = vpack.c.b16 %v1023, %v1022
  %v1029 = vpack.c.b16 %v1024, %v1024
  %v1035 = vsel %vm54, %v897, 0
  %v1038 = vsel %vm54, %v898, 0
  %v1041 = vsel %vm225, %v1029, 0
  %1043 = vmatprep.subr.bf16.mxu0 0
  %1044 = vmatpush1.bf16.msra.mxu0 %v1025
  %1045 = vmatprep.subr.bf16.mxu0 0
  %1046 = vmatpush1.bf16.msra.mxu0 %v1026
  %1047 = vmatprep.subr.bf16.mxu0 0
  %1048 = vmatpush1.bf16.msra.mxu0 %v1027
  %1049 = vmatprep.subr.bf16.mxu0 0
  %1050 = vmatpush1.bf16.msra.mxu0 %v1028
  %1051 = vmatprep.subr.bf16.mxu0 0
  %1052 = vmatpush1.bf16.msra.mxu0 %v1041
  %1053 = vmatprep.subr.bf16.mxu0 0
  %1054 = vmatpush1.bf16.msra.mxu0 0
  %1055 = vmatprep.subr.bf16.mxu0 0
  %1056 = vmatpush1.bf16.msra.mxu0 0
  %1057 = vmatprep.subr.bf16.mxu0 0
  %1058 = vmatpush1.bf16.msra.mxu0 0
  %1059 = vmatprep.subr.bf16.mxu0 0
  %1060 = vmatpush1.bf16.msra.mxu0 0
  %1061 = vmatprep.subr.bf16.mxu0 0
  %1062 = vmatpush1.bf16.msra.mxu0 0
  %1063 = vmatprep.subr.bf16.mxu0 0
  %1064 = vmatpush1.bf16.msra.mxu0 0
  %1065 = vmatprep.subr.bf16.mxu0 0
  %1066 = vmatpush1.bf16.msra.mxu0 0
  %1067 = vmatprep.subr.bf16.mxu0 0
  %1068 = vmatpush1.bf16.msra.mxu0 0
  %1069 = vmatprep.subr.bf16.mxu0 0
  %1070 = vmatpush1.bf16.msra.mxu0 0
  %1071 = vmatprep.subr.bf16.mxu0 0
  %1072 = vmatpush1.bf16.msra.mxu0 0
  %1073 = vmatprep.subr.bf16.mxu0 0
  %1074 = vmatpush1.bf16.msra.mxu0 0
  %1075 = vmatprep.mubr.bf16.mxu0 0
  %1076 = vmatmul.mubr.bf16.gmra.mrb[0].mxu0 %v1035
  %v1077 = vpop.f32.mrb[0].mxu0
  %v1078 = vadd.f32 %v994, %v1077
  %v1079 = vpop.f32.mrb[0].mxu0
  %v1080 = vpop.f32.mrb[0].mxu0
  %v1081 = vadd.f32 %v997, %v1080
  %v1082 = vpop.f32.mrb[0].mxu0
  %1083 = vmatprep.mubr.bf16.mxu0 0
  %1084 = vmatmul.mubr.bf16.gmra.mrb[0].mxu0 %v1038
  %v1085 = vpop.f32.mrb[0].mxu0
  %v1086 = vadd.f32 %v1002, %v1085
  %v1087 = vpop.f32.mrb[0].mxu0
  %v1088 = vpop.f32.mrb[0].mxu0
  %v1089 = vpop.f32.mrb[0].mxu0
  %1090 = vdwg.mxu0
  %v1091 = vld [vmem:[#allocation2 + $0x1] sm:$0xff]
  %v1092 = vld [vmem:[#allocation2 + $0x9] sm:$0xff]
  %v1093 = vld [vmem:[#allocation2 + $0x11] sm:$0x1]
  %v1094 = vpack.c.bf16 %v1092, %v1091
  %v1095 = vpack.c.bf16 %v1093, %v1093
  %s1096 = scalar_lea.vmem %s3, 72
  %v1097 = vld [vmem:[%s1096] sm:$0xf]
  %v1098 = vld [vmem:[%s1096 + $0x4] sm:$0xf]
  %v1099 = vld [vmem:[%s1096 + $0x8] sm:$0xf]
  %v1100 = vld [vmem:[%s1096 + $0xc] sm:$0xf]
  %v1101 = vld [vmem:[%s1096 + $0x10] sm:$0xf]
  %v1102 = vld [vmem:[%s1096 + $0x14] sm:$0xf]
  %v1103 = vld [vmem:[%s1096 + $0x18] sm:$0xf]
  %v1104 = vld [vmem:[%s1096 + $0x1c] sm:$0xf]
  %v1105 = vld [vmem:[%s1096 + $0x20] sm:$0xf]
  %v1115 = vunpack.c.l.b16 %v1097
  %v1116 = vunpack.c.l.b16 %v1098
  %v1117 = vunpack.c.l.b16 %v1099
  %v1118 = vunpack.c.l.b16 %v1100
  %v1119 = vunpack.c.l.b16 %v1101
  %v1120 = vunpack.c.l.b16 %v1102
  %v1121 = vunpack.c.l.b16 %v1103
  %v1122 = vunpack.c.l.b16 %v1104
  %v1123 = vunpack.c.l.b16 %v1105
  %v1124 = vpack.c.b16 %v1116, %v1115
  %v1125 = vpack.c.b16 %v1118, %v1117
  %v1126 = vpack.c.b16 %v1120, %v1119
  %v1127 = vpack.c.b16 %v1122, %v1121
  %v1128 = vpack.c.b16 %v1123, %v1123
  %v1134 = vsel %vm54, %v1094, 0
  %v1137 = vsel %vm54, %v1095, 0
  %v1140 = vsel %vm225, %v1128, 0
  %1142 = vmatprep.subr.bf16.mxu0 0
  %1143 = vmatpush1.bf16.msra.mxu0 %v1124
  %1144 = vmatprep.subr.bf16.mxu0 0
  %1145 = vmatpush1.bf16.msra.mxu0 %v1125
  %1146 = vmatprep.subr.bf16.mxu0 0
  %1147 = vmatpush1.bf16.msra.mxu0 %v1126
  %1148 = vmatprep.subr.bf16.mxu0 0
  %1149 = vmatpush1.bf16.msra.mxu0 %v1127
  %1150 = vmatprep.subr.bf16.mxu0 0
  %1151 = vmatpush1.bf16.msra.mxu0 %v1140
  %1152 = vmatprep.subr.bf16.mxu0 0
  %1153 = vmatpush1.bf16.msra.mxu0 0
  %1154 = vmatprep.subr.bf16.mxu0 0
  %1155 = vmatpush1.bf16.msra.mxu0 0
  %1156 = vmatprep.subr.bf16.mxu0 0
  %1157 = vmatpush1.bf16.msra.mxu0 0
  %1158 = vmatprep.subr.bf16.mxu0 0
  %1159 = vmatpush1.bf16.msra.mxu0 0
  %1160 = vmatprep.subr.bf16.mxu0 0
  %1161 = vmatpush1.bf16.msra.mxu0 0
  %1162 = vmatprep.subr.bf16.mxu0 0
  %1163 = vmatpush1.bf16.msra.mxu0 0
  %1164 = vmatprep.subr.bf16.mxu0 0
  %1165 = vmatpush1.bf16.msra.mxu0 0
  %1166 = vmatprep.subr.bf16.mxu0 0
  %1167 = vmatpush1.bf16.msra.mxu0 0
  %1168 = vmatprep.subr.bf16.mxu0 0
  %1169 = vmatpush1.bf16.msra.mxu0 0
  %1170 = vmatprep.subr.bf16.mxu0 0
  %1171 = vmatpush1.bf16.msra.mxu0 0
  %1172 = vmatprep.subr.bf16.mxu0 0
  %1173 = vmatpush1.bf16.msra.mxu0 0
  %1174 = vmatprep.mubr.bf16.mxu0 0
  %1175 = vmatmul.mubr.bf16.gmra.mrb[0].mxu0 %v1134
  %v1176 = vpop.f32.mrb[0].mxu0
  %v1177 = vadd.f32 0.0, %v1176
  %v1178 = vpop.f32.mrb[0].mxu0
  %v1179 = vpop.f32.mrb[0].mxu0
  %v1180 = vadd.f32 0.0, %v1179
  %v1181 = vpop.f32.mrb[0].mxu0
  %1182 = vmatprep.mubr.bf16.mxu0 0
  %1183 = vmatmul.mubr.bf16.gmra.mrb[0].mxu0 %v1137
  %v1184 = vpop.f32.mrb[0].mxu0
  %v1185 = vadd.f32 0.0, %v1184
  %v1186 = vpop.f32.mrb[0].mxu0
  %v1187 = vpop.f32.mrb[0].mxu0
  %v1188 = vpop.f32.mrb[0].mxu0
  %1189 = vdwg.mxu0
  %v1190 = vadd.f32 %v1078, %v1177
  %v1191 = vadd.f32 %v1081, %v1180
  %v1192 = vadd.f32 %v1086, %v1185
  %v1193 = vld [vmem:[#allocation2 + $0x13] sm:$0xff]
  %v1194 = vld [vmem:[#allocation2 + $0x1b] sm:$0xff]
  %v1195 = vld [vmem:[#allocation2 + $0x23] sm:$0x1]
  %v1196 = vpack.c.bf16 %v1194, %v1193
  %v1197 = vpack.c.bf16 %v1195, %v1195
  %s1198 = scalar_lea.vmem %s3, 108
  %v1199 = vld [vmem:[%s1198] sm:$0xf]
  %v1200 = vld [vmem:[%s1198 + $0x4] sm:$0xf]
  %v1201 = vld [vmem:[%s1198 + $0x8] sm:$0xf]
  %v1202 = vld [vmem:[%s1198 + $0xc] sm:$0xf]
  %v1203 = vld [vmem:[%s1198 + $0x10] sm:$0xf]
  %v1204 = vld [vmem:[%s1198 + $0x14] sm:$0xf]
  %v1205 = vld [vmem:[%s1198 + $0x18] sm:$0xf]
  %v1206 = vld [vmem:[%s1198 + $0x1c] sm:$0xf]
  %v1207 = vld [vmem:[%s1198 + $0x20] sm:$0xf]
  %v1217 = vunpack.c.l.b16 %v1199
  %v1218 = vunpack.c.l.b16 %v1200
  %v1219 = vunpack.c.l.b16 %v1201
  %v1220 = vunpack.c.l.b16 %v1202
  %v1221 = vunpack.c.l.b16 %v1203
  %v1222 = vunpack.c.l.b16 %v1204
  %v1223 = vunpack.c.l.b16 %v1205
  %v1224 = vunpack.c.l.b16 %v1206
  %v1225 = vunpack.c.l.b16 %v1207
  %v1226 = vpack.c.b16 %v1218, %v1217
  %v1227 = vpack.c.b16 %v1220, %v1219
  %v1228 = vpack.c.b16 %v1222, %v1221
  %v1229 = vpack.c.b16 %v1224, %v1223
  %v1230 = vpack.c.b16 %v1225, %v1225
  %v1236 = vsel %vm54, %v1196, 0
  %v1239 = vsel %vm54, %v1197, 0
  %v1242 = vsel %vm225, %v1230, 0
  %1244 = vmatprep.subr.bf16.mxu0 0
  %1245 = vmatpush1.bf16.msra.mxu0 %v1226
  %1246 = vmatprep.subr.bf16.mxu0 0
  %1247 = vmatpush1.bf16.msra.mxu0 %v1227
  %1248 = vmatprep.subr.bf16.mxu0 0
  %1249 = vmatpush1.bf16.msra.mxu0 %v1228
  %1250 = vmatprep.subr.bf16.mxu0 0
  %1251 = vmatpush1.bf16.msra.mxu0 %v1229
  %1252 = vmatprep.subr.bf16.mxu0 0
  %1253 = vmatpush1.bf16.msra.mxu0 %v1242
  %1254 = vmatprep.subr.bf16.mxu0 0
  %1255 = vmatpush1.bf16.msra.mxu0 0
  %1256 = vmatprep.subr.bf16.mxu0 0
  %1257 = vmatpush1.bf16.msra.mxu0 0
  %1258 = vmatprep.subr.bf16.mxu0 0
  %1259 = vmatpush1.bf16.msra.mxu0 0
  %1260 = vmatprep.subr.bf16.mxu0 0
  %1261 = vmatpush1.bf16.msra.mxu0 0
  %1262 = vmatprep.subr.bf16.mxu0 0
  %1263 = vmatpush1.bf16.msra.mxu0 0
  %1264 = vmatprep.subr.bf16.mxu0 0
  %1265 = vmatpush1.bf16.msra.mxu0 0
  %1266 = vmatprep.subr.bf16.mxu0 0
  %1267 = vmatpush1.bf16.msra.mxu0 0
  %1268 = vmatprep.subr.bf16.mxu0 0
  %1269 = vmatpush1.bf16.msra.mxu0 0
  %1270 = vmatprep.subr.bf16.mxu0 0
  %1271 = vmatpush1.bf16.msra.mxu0 0
  %1272 = vmatprep.subr.bf16.mxu0 0
  %1273 = vmatpush1.bf16.msra.mxu0 0
  %1274 = vmatprep.subr.bf16.mxu0 0
  %1275 = vmatpush1.bf16.msra.mxu0 0
  %1276 = vmatprep.mubr.bf16.mxu0 0
  %1277 = vmatmul.mubr.bf16.gmra.mrb[0].mxu0 %v1236
  %v1278 = vpop.f32.mrb[0].mxu0
  %v1279 = vadd.f32 0.0, %v1278
  %v1280 = vpop.f32.mrb[0].mxu0
  %v1281 = vpop.f32.mrb[0].mxu0
  %v1282 = vadd.f32 0.0, %v1281
  %v1283 = vpop.f32.mrb[0].mxu0
  %1284 = vmatprep.mubr.bf16.mxu0 0
  %1285 = vmatmul.mubr.bf16.gmra.mrb[0].mxu0 %v1239
  %v1286 = vpop.f32.mrb[0].mxu0
  %v1287 = vadd.f32 0.0, %v1286
  %v1288 = vpop.f32.mrb[0].mxu0
  %v1289 = vpop.f32.mrb[0].mxu0
  %v1290 = vpop.f32.mrb[0].mxu0
  %1291 = vdwg.mxu0
  %v1292 = vadd.f32 %v1190, %v1279
  %v1293 = vadd.f32 %v1191, %v1282
  %v1294 = vadd.f32 %v1192, %v1287
  %v1295 = vld [vmem:[%s4] sm:$0x1]
  %v1296 = vld [vmem:[%s5] sm:$0x1]
  %v1297 = vlaneseq
  %v1298 = vshrl.u32 %v1297, 7
  %v1299 = vadd.s32 %v1298, 8
  %v1300 = vadd.s32 %v1298, 16
  %v1301 = vadd.s32 %v1298, 24
  %v1302 = vadd.s32 %v1298, 32
  %v1303 = vadd.s32 %v1298, 40
  %v1304 = vadd.s32 %v1298, 48
  %v1305 = vadd.s32 %v1298, 56
  %v1306 = vlaneseq
  %v1307 = vand.u32 %v1306, 127
  %vm1308 = vcmp.lt.s32.totalorder %v1298, 0
  %v1309 = vsub.s32 0, %v1298
  %v1310 = vsel %vm1308, %v1309, %v1298
  %v1311 = vshrl.u32 %v1310, 3
  %v1312 = vand.u32 %v1310, 7
  %v1313 = vsub.s32 0, %v1312
  %v1314 = vsel %vm1308, %v1313, %v1312
  %vm1315 = vcmp.lt.s32.totalorder %v1299, 0
  %v1316 = vsub.s32 0, %v1299
  %v1317 = vsel %vm1315, %v1316, %v1299
  %v1318 = vshrl.u32 %v1317, 3
  %v1319 = vand.u32 %v1317, 7
  %v1320 = vsub.s32 0, %v1319
  %v1321 = vsel %vm1315, %v1320, %v1319
  %vm1322 = vcmp.lt.s32.totalorder %v1300, 0
  %v1323 = vsub.s32 0, %v1300
  %v1324 = vsel %vm1322, %v1323, %v1300
  %v1325 = vshrl.u32 %v1324, 3
  %v1326 = vand.u32 %v1324, 7
  %v1327 = vsub.s32 0, %v1326
  %v1328 = vsel %vm1322, %v1327, %v1326
  %vm1329 = vcmp.lt.s32.totalorder %v1301, 0
  %v1330 = vsub.s32 0, %v1301
  %v1331 = vsel %vm1329, %v1330, %v1301
  %v1332 = vshrl.u32 %v1331, 3
  %v1333 = vand.u32 %v1331, 7
  %v1334 = vsub.s32 0, %v1333
  %v1335 = vsel %vm1329, %v1334, %v1333
  %vm1336 = vcmp.lt.s32.totalorder %v1302, 0
  %v1337 = vsub.s32 0, %v1302
  %v1338 = vsel %vm1336, %v1337, %v1302
  %v1339 = vshrl.u32 %v1338, 3
  %v1340 = vand.u32 %v1338, 7
  %v1341 = vsub.s32 0, %v1340
  %v1342 = vsel %vm1336, %v1341, %v1340
  %vm1343 = vcmp.lt.s32.totalorder %v1303, 0
  %v1344 = vsub.s32 0, %v1303
  %v1345 = vsel %vm1343, %v1344, %v1303
  %v1346 = vshrl.u32 %v1345, 3
  %v1347 = vand.u32 %v1345, 7
  %v1348 = vsub.s32 0, %v1347
  %v1349 = vsel %vm1343, %v1348, %v1347
  %vm1350 = vcmp.lt.s32.totalorder %v1304, 0
  %v1351 = vsub.s32 0, %v1304
  %v1352 = vsel %vm1350, %v1351, %v1304
  %v1353 = vshrl.u32 %v1352, 3
  %v1354 = vand.u32 %v1352, 7
  %v1355 = vsub.s32 0, %v1354
  %v1356 = vsel %vm1350, %v1355, %v1354
  %vm1357 = vcmp.lt.s32.totalorder %v1305, 0
  %v1358 = vsub.s32 0, %v1305
  %v1359 = vsel %vm1357, %v1358, %v1305
  %v1360 = vshrl.u32 %v1359, 3
  %v1361 = vand.u32 %v1359, 7
  %v1362 = vsub.s32 0, %v1361
  %v1363 = vsel %vm1357, %v1362, %v1361
  %vm1364 = vcmp.ne.s32.totalorder %v1314, 0
  %vm1365 = vcmp.ne.s32.totalorder %v1321, 0
  %vm1366 = vcmp.ne.s32.totalorder %v1328, 0
  %vm1367 = vcmp.ne.s32.totalorder %v1335, 0
  %vm1368 = vcmp.ne.s32.totalorder %v1342, 0
  %vm1369 = vcmp.ne.s32.totalorder %v1349, 0
  %vm1370 = vcmp.ne.s32.totalorder %v1356, 0
  %vm1371 = vcmp.ne.s32.totalorder %v1363, 0
  %vm1372 = vcmp.lt.s32.totalorder %v1314, 0
  %vm1373 = vcmp.lt.s32.totalorder %v1321, 0
  %vm1374 = vcmp.lt.s32.totalorder %v1328, 0
  %vm1375 = vcmp.lt.s32.totalorder %v1335, 0
  %vm1376 = vcmp.lt.s32.totalorder %v1342, 0
  %vm1377 = vcmp.lt.s32.totalorder %v1349, 0
  %vm1378 = vcmp.lt.s32.totalorder %v1356, 0
  %vm1379 = vcmp.lt.s32.totalorder %v1363, 0
  %vm1380 = vmand %vm1372, %vm1364
  %vm1381 = vmand %vm1373, %vm1365
  %vm1382 = vmand %vm1374, %vm1366
  %vm1383 = vmand %vm1375, %vm1367
  %vm1384 = vmand %vm1376, %vm1368
  %vm1385 = vmand %vm1377, %vm1369
  %vm1386 = vmand %vm1378, %vm1370
  %vm1387 = vmand %vm1379, %vm1371
  %v1388 = vadd.s32 %v1314, 8
  %v1389 = vadd.s32 %v1321, 8
  %v1390 = vadd.s32 %v1328, 8
  %v1391 = vadd.s32 %v1335, 8
  %v1392 = vadd.s32 %v1342, 8
  %v1393 = vadd.s32 %v1349, 8
  %v1394 = vadd.s32 %v1356, 8
  %v1395 = vadd.s32 %v1363, 8
  %v1396 = vsel %vm1380, %v1388, %v1314
  %v1397 = vsel %vm1381, %v1389, %v1321
  %v1398 = vsel %vm1382, %v1390, %v1328
  %v1399 = vsel %vm1383, %v1391, %v1335
  %v1400 = vsel %vm1384, %v1392, %v1342
  %v1401 = vsel %vm1385, %v1393, %v1349
  %v1402 = vsel %vm1386, %v1394, %v1356
  %v1403 = vsel %vm1387, %v1395, %v1363
  %vm1404 = vcmp.eq.s32.totalorder %v1396, %v1307
  %vm1405 = vcmp.eq.s32.totalorder %v1397, %v1307
  %vm1406 = vcmp.eq.s32.totalorder %v1398, %v1307
  %vm1407 = vcmp.eq.s32.totalorder %v1399, %v1307
  %vm1408 = vcmp.eq.s32.totalorder %v1400, %v1307
  %vm1409 = vcmp.eq.s32.totalorder %v1401, %v1307
  %vm1410 = vcmp.eq.s32.totalorder %v1402, %v1307
  %vm1411 = vcmp.eq.s32.totalorder %v1403, %v1307
  %v1412 = vsel %vm1404, 1, 0
  %v1413 = vsel %vm1405, 1, 0
  %v1414 = vsel %vm1406, 1, 0
  %v1415 = vsel %vm1407, 1, 0
  %v1416 = vsel %vm1408, 1, 0
  %v1417 = vsel %vm1409, 1, 0
  %v1418 = vsel %vm1410, 1, 0
  %v1419 = vsel %vm1411, 1, 0
  %v1420 = vcvt.s32.f32 %v1412
  %v1421 = vcvt.s32.f32 %v1413
  %v1422 = vcvt.s32.f32 %v1414
  %v1423 = vcvt.s32.f32 %v1415
  %v1424 = vcvt.s32.f32 %v1416
  %v1425 = vcvt.s32.f32 %v1417
  %v1426 = vcvt.s32.f32 %v1418
  %v1427 = vcvt.s32.f32 %v1419
  %vm1428 = vcmp.lt.s32.totalorder %v1307, 0
  %v1429 = vsub.s32 0, %v1307
  %v1430 = vsel %vm1428, %v1429, %v1307
  %v1431 = vshrl.u32 %v1430, 3
  %v1432 = vand.u32 %v1430, 7
  %v1433 = vsub.s32 0, %v1432
  %v1434 = vsel %vm1428, %v1433, %v1432
  %vm1435 = vcmp.ne.s32.totalorder %v1434, 0
  %vm1436 = vcmp.lt.s32.totalorder %v1434, 0
  %vm1437 = vmand %vm1436, %vm1435
  %v1438 = vadd.s32 %v1434, 8
  %v1439 = vsel %vm1437, %v1438, %v1434
  %vm1440 = vcmp.eq.s32.totalorder %v1439, %v1298
  %v1441 = vsel %vm1440, 1, 0
  %v1442 = vcvt.s32.f32 %v1441
  %vm1443 = vcmask 523264
  %v1444 = vsel %vm1443, %v1292, 0.0
  %v1445 = vrot.slane %v1444, 4
  %v1446 = vadd.f32 %v1444, %v1445
  %v1447 = vrot.slane %v1446, 2
  %v1448 = vadd.f32 %v1446, %v1447
  %v1449 = vrot.slane %v1448, 1
  %v1450 = vadd.f32 %v1448, %v1449
  %vm1453 = vcmask 1046528
  %v1454 = vrot.slane %v1293, 1
  %v1455 = vrot.slane %v1294, 1
  %v1456 = vsel %vm1453, %v1454, %v1455
  %v1458 = vsel %vm1443, %v1456, 0.0
  %v1459 = vrot.slane %v1458, 4
  %v1460 = vadd.f32 %v1458, %v1459
  %v1461 = vrot.slane %v1460, 2
  %v1462 = vadd.f32 %v1460, %v1461
  %v1463 = vrot.slane %v1462, 1
  %v1464 = vadd.f32 %v1462, %v1463
  %v1465 = vadd.f32 %v1450, %v1464
  %v1467 = vsel %vm1443, %v1465, 0
  %1469 = vmatprep.subr.mxu0 0.0
  %1470 = vmatpush1.msra.mxu0 %v1420
  %1471 = vmatprep.subr.mxu0 0.0
  %1472 = vmatpush1.msra.mxu0 %v1421
  %1473 = vmatprep.subr.mxu0 0.0
  %1474 = vmatpush1.msra.mxu0 %v1422
  %1475 = vmatprep.subr.mxu0 0.0
  %1476 = vmatpush1.msra.mxu0 %v1423
  %1477 = vmatprep.subr.mxu0 0.0
  %1478 = vmatpush1.msra.mxu0 %v1424
  %1479 = vmatprep.subr.mxu0 0.0
  %1480 = vmatpush1.msra.mxu0 %v1425
  %1481 = vmatprep.subr.mxu0 0.0
  %1482 = vmatpush1.msra.mxu0 %v1426
  %1483 = vmatprep.subr.mxu0 0.0
  %1484 = vmatpush1.msra.mxu0 %v1427
  %1485 = vmatprep.subr.mxu0 0.0
  %1486 = vmatpush1.msra.mxu0 0.0
  %1487 = vmatprep.subr.mxu0 0.0
  %1488 = vmatpush1.msra.mxu0 0.0
  %1489 = vmatprep.subr.mxu0 0.0
  %1490 = vmatpush1.msra.mxu0 0.0
  %1491 = vmatprep.subr.mxu0 0.0
  %1492 = vmatpush1.msra.mxu0 0.0
  %1493 = vmatprep.subr.mxu0 0.0
  %1494 = vmatpush1.msra.mxu0 0.0
  %1495 = vmatprep.subr.mxu0 0.0
  %1496 = vmatpush1.msra.mxu0 0.0
  %1497 = vmatprep.subr.mxu0 0.0
  %1498 = vmatpush1.msra.mxu0 0.0
  %1499 = vmatprep.subr.mxu0 0.0
  %1500 = vmatpush1.msra.mxu0 0.0
  %1501 = vmatprep.subr.mxu0 0.0
  %1502 = vmatpush1.msra.mxu0 0.0
  %1503 = vmatprep.subr.mxu0 0.0
  %1504 = vmatpush1.msra.mxu0 0.0
  %1505 = vmatprep.subr.mxu0 0.0
  %1506 = vmatpush1.msra.mxu0 0.0
  %1507 = vmatprep.subr.mxu0 0.0
  %1508 = vmatpush1.msra.mxu0 0.0
  %1509 = vmatprep.subr.mxu0 0.0
  %1510 = vmatpush1.msra.mxu0 0.0
  %1511 = vmatprep.subr.mxu0 0.0
  %1512 = vmatpush1.msra.mxu0 0.0
  %1513 = vmatprep.subr.mxu0 0.0
  %1514 = vmatpush1.msra.mxu0 0.0
  %1515 = vmatprep.subr.mxu0 0.0
  %1516 = vmatpush1.msra.mxu0 0.0
  %1517 = vmatprep.subr.mxu0 0.0
  %1518 = vmatpush1.msra.mxu0 0.0
  %1519 = vmatprep.subr.mxu0 0.0
  %1520 = vmatpush1.msra.mxu0 0.0
  %1521 = vmatprep.subr.mxu0 0.0
  %1522 = vmatpush1.msra.mxu0 0.0
  %1523 = vmatprep.subr.mxu0 0.0
  %1524 = vmatpush1.msra.mxu0 0.0
  %1525 = vmatprep.subr.mxu0 0.0
  %1526 = vmatpush1.msra.mxu0 0.0
  %1527 = vmatprep.subr.mxu0 0.0
  %1528 = vmatpush1.msra.mxu0 0.0
  %1529 = vmatprep.subr.mxu0 0.0
  %1530 = vmatpush1.msra.mxu0 0.0
  %1531 = vmatprep.subr.mxu0 0.0
  %1532 = vmatpush1.msra.mxu0 0.0
  %1533 = vmatprep.mubr.f32.mxu0 0.0
  %1534 = vmatmul.mubr.f32.gmra.mrb[0].mxu0 %v1467
  %v1535 = vpop.f32.mrb[0].mxu0
  %v1536 = vadd.f32 0.0, %v1535
  %v1537 = vpop.f32.mrb[0].mxu0
  %1538 = vdwg.mxu0
  %v1539 = vrcp.pop 128.0
  %v1540 = vmul.f32 %v1536, %v1539
  %v1542 = vsel %vm215, %v1540, 0
  %1544 = vmatprep.subr.mxu0 0.0
  %1545 = vmatpush1.msra.mxu0 %v1442
  %1546 = vmatprep.subr.mxu0 0.0
  %1547 = vmatpush1.msra.mxu0 0.0
  %1548 = vmatprep.subr.mxu0 0.0
  %1549 = vmatpush1.msra.mxu0 0.0
  %1550 = vmatprep.subr.mxu0 0.0
  %1551 = vmatpush1.msra.mxu0 0.0
  %1552 = vmatprep.subr.mxu0 0.0
  %1553 = vmatpush1.msra.mxu0 0.0
  %1554 = vmatprep.subr.mxu0 0.0
  %1555 = vmatpush1.msra.mxu0 0.0
  %1556 = vmatprep.subr.mxu0 0.0
  %1557 = vmatpush1.msra.mxu0 0.0
  %1558 = vmatprep.subr.mxu0 0.0
  %1559 = vmatpush1.msra.mxu0 0.0
  %1560 = vmatprep.subr.mxu0 0.0
  %1561 = vmatpush1.msra.mxu0 0.0
  %1562 = vmatprep.subr.mxu0 0.0
  %1563 = vmatpush1.msra.mxu0 0.0
  %1564 = vmatprep.subr.mxu0 0.0
  %1565 = vmatpush1.msra.mxu0 0.0
  %1566 = vmatprep.subr.mxu0 0.0
  %1567 = vmatpush1.msra.mxu0 0.0
  %1568 = vmatprep.subr.mxu0 0.0
  %1569 = vmatpush1.msra.mxu0 0.0
  %1570 = vmatprep.subr.mxu0 0.0
  %1571 = vmatpush1.msra.mxu0 0.0
  %1572 = vmatprep.subr.mxu0 0.0
  %1573 = vmatpush1.msra.mxu0 0.0
  %1574 = vmatprep.subr.mxu0 0.0
  %1575 = vmatpush1.msra.mxu0 0.0
  %1576 = vmatprep.subr.mxu0 0.0
  %1577 = vmatpush1.msra.mxu0 0.0
  %1578 = vmatprep.subr.mxu0 0.0
  %1579 = vmatpush1.msra.mxu0 0.0
  %1580 = vmatprep.subr.mxu0 0.0
  %1581 = vmatpush1.msra.mxu0 0.0
  %1582 = vmatprep.subr.mxu0 0.0
  %1583 = vmatpush1.msra.mxu0 0.0
  %1584 = vmatprep.subr.mxu0 0.0
  %1585 = vmatpush1.msra.mxu0 0.0
  %1586 = vmatprep.subr.mxu0 0.0
  %1587 = vmatpush1.msra.mxu0 0.0
  %1588 = vmatprep.subr.mxu0 0.0
  %1589 = vmatpush1.msra.mxu0 0.0
  %1590 = vmatprep.subr.mxu0 0.0
  %1591 = vmatpush1.msra.mxu0 0.0
  %1592 = vmatprep.subr.mxu0 0.0
  %1593 = vmatpush1.msra.mxu0 0.0
  %1594 = vmatprep.subr.mxu0 0.0
  %1595 = vmatpush1.msra.mxu0 0.0
  %1596 = vmatprep.subr.mxu0 0.0
  %1597 = vmatpush1.msra.mxu0 0.0
  %1598 = vmatprep.subr.mxu0 0.0
  %1599 = vmatpush1.msra.mxu0 0.0
  %1600 = vmatprep.subr.mxu0 0.0
  %1601 = vmatpush1.msra.mxu0 0.0
  %1602 = vmatprep.subr.mxu0 0.0
  %1603 = vmatpush1.msra.mxu0 0.0
  %1604 = vmatprep.subr.mxu0 0.0
  %1605 = vmatpush1.msra.mxu0 0.0
  %1606 = vmatprep.subr.mxu0 0.0
  %1607 = vmatpush1.msra.mxu0 0.0
  %1608 = vmatprep.mubr.f32.mxu0 0.0
  %1609 = vmatmul.mubr.f32.gmra.mrb[0].mxu0 %v1542
  %v1610 = vpop.f32.mrb[0].mxu0
  %v1611 = vadd.f32 0.0, %v1610
  %v1612 = vpop.f32.mrb[0].mxu0
  %1613 = vdwg.mxu0
  %v1614 = vlaneseq
  %v1615 = vshrl.u32 %v1614, 7
  %v1616 = vsub.s32 0, %v1615
  %v1617 = vrot.slane %v1611, %v1616
  %v1618 = vsub.f32 %v1292, %v1617
  %v1619 = vmul.f32 %v1618, %v1618
  %v1620 = vsel %vm1443, %v1619, 0.0
  %v1621 = vrot.slane %v1620, 4
  %v1622 = vadd.f32 %v1620, %v1621
  %v1623 = vrot.slane %v1622, 2
  %v1624 = vadd.f32 %v1622, %v1623
  %v1625 = vrot.slane %v1624, 1
  %v1626 = vadd.f32 %v1624, %v1625
  %v1627 = vsub.f32 %v1293, %v1617
  %v1628 = vsub.f32 %v1294, %v1617
  %v1629 = vmul.f32 %v1627, %v1627
  %v1630 = vmul.f32 %v1628, %v1628
  %v1633 = vrot.slane %v1629, 1
  %v1634 = vrot.slane %v1630, 1
  %v1635 = vsel %vm1453, %v1633, %v1634
  %v1637 = vsel %vm1443, %v1635, 0.0
  %v1638 = vrot.slane %v1637, 4
  %v1639 = vadd.f32 %v1637, %v1638
  %v1640 = vrot.slane %v1639, 2
  %v1641 = vadd.f32 %v1639, %v1640
  %v1642 = vrot.slane %v1641, 1
  %v1643 = vadd.f32 %v1641, %v1642
  %v1644 = vadd.f32 %v1626, %v1643
  %v1646 = vsel %vm1443, %v1644, 0
  %1648 = vmatprep.subr.mxu0 0.0
  %1649 = vmatpush1.msra.mxu0 %v1420
  %1650 = vmatprep.subr.mxu0 0.0
  %1651 = vmatpush1.msra.mxu0 %v1421
  %1652 = vmatprep.subr.mxu0 0.0
  %1653 = vmatpush1.msra.mxu0 %v1422
  %1654 = vmatprep.subr.mxu0 0.0
  %1655 = vmatpush1.msra.mxu0 %v1423
  %1656 = vmatprep.subr.mxu0 0.0
  %1657 = vmatpush1.msra.mxu0 %v1424
  %1658 = vmatprep.subr.mxu0 0.0
  %1659 = vmatpush1.msra.mxu0 %v1425
  %1660 = vmatprep.subr.mxu0 0.0
  %1661 = vmatpush1.msra.mxu0 %v1426
  %1662 = vmatprep.subr.mxu0 0.0
  %1663 = vmatpush1.msra.mxu0 %v1427
  %1664 = vmatprep.subr.mxu0 0.0
  %1665 = vmatpush1.msra.mxu0 0.0
  %1666 = vmatprep.subr.mxu0 0.0
  %1667 = vmatpush1.msra.mxu0 0.0
  %1668 = vmatprep.subr.mxu0 0.0
  %1669 = vmatpush1.msra.mxu0 0.0
  %1670 = vmatprep.subr.mxu0 0.0
  %1671 = vmatpush1.msra.mxu0 0.0
  %1672 = vmatprep.subr.mxu0 0.0
  %1673 = vmatpush1.msra.mxu0 0.0
  %1674 = vmatprep.subr.mxu0 0.0
  %1675 = vmatpush1.msra.mxu0 0.0
  %1676 = vmatprep.subr.mxu0 0.0
  %1677 = vmatpush1.msra.mxu0 0.0
  %1678 = vmatprep.subr.mxu0 0.0
  %1679 = vmatpush1.msra.mxu0 0.0
  %1680 = vmatprep.subr.mxu0 0.0
  %1681 = vmatpush1.msra.mxu0 0.0
  %1682 = vmatprep.subr.mxu0 0.0
  %1683 = vmatpush1.msra.mxu0 0.0
  %1684 = vmatprep.subr.mxu0 0.0
  %1685 = vmatpush1.msra.mxu0 0.0
  %1686 = vmatprep.subr.mxu0 0.0
  %1687 = vmatpush1.msra.mxu0 0.0
  %1688 = vmatprep.subr.mxu0 0.0
  %1689 = vmatpush1.msra.mxu0 0.0
  %1690 = vmatprep.subr.mxu0 0.0
  %1691 = vmatpush1.msra.mxu0 0.0
  %1692 = vmatprep.subr.mxu0 0.0
  %1693 = vmatpush1.msra.mxu0 0.0
  %1694 = vmatprep.subr.mxu0 0.0
  %1695 = vmatpush1.msra.mxu0 0.0
  %1696 = vmatprep.subr.mxu0 0.0
  %1697 = vmatpush1.msra.mxu0 0.0
  %1698 = vmatprep.subr.mxu0 0.0
  %1699 = vmatpush1.msra.mxu0 0.0
  %1700 = vmatprep.subr.mxu0 0.0
  %1701 = vmatpush1.msra.mxu0 0.0
  %1702 = vmatprep.subr.mxu0 0.0
  %1703 = vmatpush1.msra.mxu0 0.0
  %1704 = vmatprep.subr.mxu0 0.0
  %1705 = vmatpush1.msra.mxu0 0.0
  %1706 = vmatprep.subr.mxu0 0.0
  %1707 = vmatpush1.msra.mxu0 0.0
  %1708 = vmatprep.subr.mxu0 0.0
  %1709 = vmatpush1.msra.mxu0 0.0
  %1710 = vmatprep.subr.mxu0 0.0
  %1711 = vmatpush1.msra.mxu0 0.0
  %1712 = vmatprep.mubr.f32.mxu0 0.0
  %1713 = vmatmul.mubr.f32.gmra.mrb[0].mxu0 %v1646
  %v1714 = vpop.f32.mrb[0].mxu0
  %v1715 = vadd.f32 0.0, %v1714
  %v1716 = vpop.f32.mrb[0].mxu0
  %1717 = vdwg.mxu0
  %v1718 = vmul.f32 %v1715, %v1539
  %v1719 = vadd.f32 %v1718, 1e-05
  %v1720 = vrsqrt.pop %v1719
  %v1721 = vmul.f32 %v1295, %v1720
  %v1723 = vsel %vm215, %v1721, 0
  %1725 = vmatprep.subr.mxu0 0.0
  %1726 = vmatpush1.msra.mxu0 %v1442
  %1727 = vmatprep.subr.mxu0 0.0
  %1728 = vmatpush1.msra.mxu0 0.0
  %1729 = vmatprep.subr.mxu0 0.0
  %1730 = vmatpush1.msra.mxu0 0.0
  %1731 = vmatprep.subr.mxu0 0.0
  %1732 = vmatpush1.msra.mxu0 0.0
  %1733 = vmatprep.subr.mxu0 0.0
  %1734 = vmatpush1.msra.mxu0 0.0
  %1735 = vmatprep.subr.mxu0 0.0
  %1736 = vmatpush1.msra.mxu0 0.0
  %1737 = vmatprep.subr.mxu0 0.0
  %1738 = vmatpush1.msra.mxu0 0.0
  %1739 = vmatprep.subr.mxu0 0.0
  %1740 = vmatpush1.msra.mxu0 0.0
  %1741 = vmatprep.subr.mxu0 0.0
  %1742 = vmatpush1.msra.mxu0 0.0
  %1743 = vmatprep.subr.mxu0 0.0
  %1744 = vmatpush1.msra.mxu0 0.0
  %1745 = vmatprep.subr.mxu0 0.0
  %1746 = vmatpush1.msra.mxu0 0.0
  %1747 = vmatprep.subr.mxu0 0.0
  %1748 = vmatpush1.msra.mxu0 0.0
  %1749 = vmatprep.subr.mxu0 0.0
  %1750 = vmatpush1.msra.mxu0 0.0
  %1751 = vmatprep.subr.mxu0 0.0
  %1752 = vmatpush1.msra.mxu0 0.0
  %1753 = vmatprep.subr.mxu0 0.0
  %1754 = vmatpush1.msra.mxu0 0.0
  %1755 = vmatprep.subr.mxu0 0.0
  %1756 = vmatpush1.msra.mxu0 0.0
  %1757 = vmatprep.subr.mxu0 0.0
  %1758 = vmatpush1.msra.mxu0 0.0
  %1759 = vmatprep.subr.mxu0 0.0
  %1760 = vmatpush1.msra.mxu0 0.0
  %1761 = vmatprep.subr.mxu0 0.0
  %1762 = vmatpush1.msra.mxu0 0.0
  %1763 = vmatprep.subr.mxu0 0.0
  %1764 = vmatpush1.msra.mxu0 0.0
  %1765 = vmatprep.subr.mxu0 0.0
  %1766 = vmatpush1.msra.mxu0 0.0
  %1767 = vmatprep.subr.mxu0 0.0
  %1768 = vmatpush1.msra.mxu0 0.0
  %1769 = vmatprep.subr.mxu0 0.0
  %1770 = vmatpush1.msra.mxu0 0.0
  %1771 = vmatprep.subr.mxu0 0.0
  %1772 = vmatpush1.msra.mxu0 0.0
  %1773 = vmatprep.subr.mxu0 0.0
  %1774 = vmatpush1.msra.mxu0 0.0
  %1775 = vmatprep.subr.mxu0 0.0
  %1776 = vmatpush1.msra.mxu0 0.0
  %1777 = vmatprep.subr.mxu0 0.0
  %1778 = vmatpush1.msra.mxu0 0.0
  %1779 = vmatprep.subr.mxu0 0.0
  %1780 = vmatpush1.msra.mxu0 0.0
  %1781 = vmatprep.subr.mxu0 0.0
  %1782 = vmatpush1.msra.mxu0 0.0
  %1783 = vmatprep.subr.mxu0 0.0
  %1784 = vmatpush1.msra.mxu0 0.0
  %1785 = vmatprep.subr.mxu0 0.0
  %1786 = vmatpush1.msra.mxu0 0.0
  %1787 = vmatprep.subr.mxu0 0.0
  %1788 = vmatpush1.msra.mxu0 0.0
  %1789 = vmatprep.mubr.f32.mxu0 0.0
  %1790 = vmatmul.mubr.f32.gmra.mrb[0].mxu0 %v1723
  %v1791 = vpop.f32.mrb[0].mxu0
  %v1792 = vadd.f32 0.0, %v1791
  %v1793 = vpop.f32.mrb[0].mxu0
  %1794 = vdwg.mxu0
  %v1795 = vmul.f32 %v1540, %v1721
  %v1796 = vsub.f32 %v1296, %v1795
  %v1798 = vsel %vm215, %v1796, 0
  %1800 = vmatprep.subr.mxu0 0.0
  %1801 = vmatpush1.msra.mxu0 %v1442
  %1802 = vmatprep.subr.mxu0 0.0
  %1803 = vmatpush1.msra.mxu0 0.0
  %1804 = vmatprep.subr.mxu0 0.0
  %1805 = vmatpush1.msra.mxu0 0.0
  %1806 = vmatprep.subr.mxu0 0.0
  %1807 = vmatpush1.msra.mxu0 0.0
  %1808 = vmatprep.subr.mxu0 0.0
  %1809 = vmatpush1.msra.mxu0 0.0
  %1810 = vmatprep.subr.mxu0 0.0
  %1811 = vmatpush1.msra.mxu0 0.0
  %1812 = vmatprep.subr.mxu0 0.0
  %1813 = vmatpush1.msra.mxu0 0.0
  %1814 = vmatprep.subr.mxu0 0.0
  %1815 = vmatpush1.msra.mxu0 0.0
  %1816 = vmatprep.subr.mxu0 0.0
  %1817 = vmatpush1.msra.mxu0 0.0
  %1818 = vmatprep.subr.mxu0 0.0
  %1819 = vmatpush1.msra.mxu0 0.0
  %1820 = vmatprep.subr.mxu0 0.0
  %1821 = vmatpush1.msra.mxu0 0.0
  %1822 = vmatprep.subr.mxu0 0.0
  %1823 = vmatpush1.msra.mxu0 0.0
  %1824 = vmatprep.subr.mxu0 0.0
  %1825 = vmatpush1.msra.mxu0 0.0
  %1826 = vmatprep.subr.mxu0 0.0
  %1827 = vmatpush1.msra.mxu0 0.0
  %1828 = vmatprep.subr.mxu0 0.0
  %1829 = vmatpush1.msra.mxu0 0.0
  %1830 = vmatprep.subr.mxu0 0.0
  %1831 = vmatpush1.msra.mxu0 0.0
  %1832 = vmatprep.subr.mxu0 0.0
  %1833 = vmatpush1.msra.mxu0 0.0
  %1834 = vmatprep.subr.mxu0 0.0
  %1835 = vmatpush1.msra.mxu0 0.0
  %1836 = vmatprep.subr.mxu0 0.0
  %1837 = vmatpush1.msra.mxu0 0.0
  %1838 = vmatprep.subr.mxu0 0.0
  %1839 = vmatpush1.msra.mxu0 0.0
  %1840 = vmatprep.subr.mxu0 0.0
  %1841 = vmatpush1.msra.mxu0 0.0
  %1842 = vmatprep.subr.mxu0 0.0
  %1843 = vmatpush1.msra.mxu0 0.0
  %1844 = vmatprep.subr.mxu0 0.0
  %1845 = vmatpush1.msra.mxu0 0.0
  %1846 = vmatprep.subr.mxu0 0.0
  %1847 = vmatpush1.msra.mxu0 0.0
  %1848 = vmatprep.subr.mxu0 0.0
  %1849 = vmatpush1.msra.mxu0 0.0
  %1850 = vmatprep.subr.mxu0 0.0
  %1851 = vmatpush1.msra.mxu0 0.0
  %1852 = vmatprep.subr.mxu0 0.0
  %1853 = vmatpush1.msra.mxu0 0.0
  %1854 = vmatprep.subr.mxu0 0.0
  %1855 = vmatpush1.msra.mxu0 0.0
  %1856 = vmatprep.subr.mxu0 0.0
  %1857 = vmatpush1.msra.mxu0 0.0
  %1858 = vmatprep.subr.mxu0 0.0
  %1859 = vmatpush1.msra.mxu0 0.0
  %1860 = vmatprep.subr.mxu0 0.0
  %1861 = vmatpush1.msra.mxu0 0.0
  %1862 = vmatprep.subr.mxu0 0.0
  %1863 = vmatpush1.msra.mxu0 0.0
  %1864 = vmatprep.mubr.f32.mxu0 0.0
  %1865 = vmatmul.mubr.f32.gmra.mrb[0].mxu0 %v1798
  %v1866 = vpop.f32.mrb[0].mxu0
  %v1867 = vadd.f32 0.0, %v1866
  %v1868 = vpop.f32.mrb[0].mxu0
  %1869 = vdwg.mxu0
  %v1870 = vlaneseq
  %v1871 = vshrl.u32 %v1870, 7
  %v1872 = vsub.s32 0, %v1871
  %v1873 = vrot.slane %v1792, %v1872
  %v1874 = vmul.f32 %v1292, %v1873
  %v1875 = vmul.f32 %v1293, %v1873
  %v1876 = vmul.f32 %v1294, %v1873
  %v1877 = vlaneseq
  %v1878 = vshrl.u32 %v1877, 7
  %v1879 = vsub.s32 0, %v1878
  %v1880 = vrot.slane %v1867, %v1879
  %v1881 = vadd.f32 %v1874, %v1880
  %v1882 = vadd.f32 %v1875, %v1880
  %v1883 = vadd.f32 %v1876, %v1880
  %vm1884 = vcmp.ge.f32.partialorder %v1881, 0.0
  %vm1885 = vcmp.ge.f32.partialorder %v1882, 0.0
  %vm1886 = vcmp.ge.f32.partialorder %v1883, 0.0
  %v1887 = vmul.f32 %v1881, 0.2
  %v1888 = vmul.f32 %v1882, 0.2
  %v1889 = vmul.f32 %v1883, 0.2
  %v1890 = vsel %vm1884, %v1881, %v1887
  %v1891 = vsel %vm1885, %v1882, %v1888
  %v1892 = vsel %vm1886, %v1883, %v1889
  %1894 = vrot.lane.b32.xlu0 %v1890, 8
  %v1895 = vpop.permute.xlu0 %1894
  %vm1897 = vcmask 581696
  %1898 = vst.msk [vmem:[#allocation3 + $0xa] sm:$0x1] %vm1897, %v1895
  %vm1899 = vcmask 582721
  %1900 = vst.msk [vmem:[#allocation3] sm:$0x2] %vm1899, %v1895
  %vm1901 = vcmask 583746
  %1902 = vst.msk [vmem:[#allocation3 + $0x9] sm:$0x4] %vm1901, %v1895
  %vm1903 = vcmask 584771
  %1904 = vst.msk [vmem:[#allocation3 - $0x1] sm:$0x8] %vm1903, %v1895
  %vm1905 = vcmask 585796
  %1906 = vst.msk [vmem:[#allocation3 + $0x8] sm:$0x10] %vm1905, %v1895
  %vm1907 = vcmask 586821
  %1908 = vst.msk [vmem:[#allocation3 - $0x2] sm:$0x20] %vm1907, %v1895
  %vm1909 = vcmask 587846
  %1910 = vst.msk [vmem:[#allocation3 + $0x7] sm:$0x40] %vm1909, %v1895
  %vm1911 = vcmask 588871
  %1912 = vst.msk [vmem:[#allocation3 - $0x3] sm:$0x80] %vm1911, %v1895
  %1914 = vrot.lane.b32.xlu0 %v1891, 8
  %v1915 = vpop.permute.xlu0 %1914
  %1917 = vst.msk [vmem:[#allocation3 + $0xe] sm:$0x2] %vm1899, %v1915
  %1918 = vst.msk [vmem:[#allocation3 + $0x4] sm:$0x4] %vm1901, %v1915
  %1919 = vst.msk [vmem:[#allocation3 + $0xd] sm:$0x8] %vm1903, %v1915
  %1920 = vst.msk [vmem:[#allocation3 + $0x3] sm:$0x10] %vm1905, %v1915
  %1921 = vst.msk [vmem:[#allocation3 + $0xc] sm:$0x20] %vm1907, %v1915
  %1922 = vst.msk [vmem:[#allocation3 + $0x2] sm:$0x40] %vm1909, %v1915
  %1923 = vst.msk [vmem:[#allocation3 + $0xb] sm:$0x80] %vm1911, %v1915
  %1925 = vrot.lane.b32.xlu0 %v1892, 8
  %v1926 = vpop.permute.xlu0 %1925
  %1928 = vst.msk [vmem:[#allocation3 + $0x9] sm:$0x1] %vm1897, %v1926
  %v1929 = vld [vmem:[#allocation3] sm:$0xff]
  %v1930 = vld [vmem:[#allocation3 + $0x8] sm:$0x1]
  %v1931 = vpack.c.bf16 %v1930, %v1929
  %v1932 = vld [vmem:[%s6] sm:$0xf]
  %v1933 = vld [vmem:[%s6 + $0x4] sm:$0xf]
  %v1934 = vld [vmem:[%s6 + $0x8] sm:$0xf]
  %v1935 = vld [vmem:[%s6 + $0xc] sm:$0xf]
  %v1936 = vld [vmem:[%s6 + $0x10] sm:$0xf]
  %v1937 = vld [vmem:[%s6 + $0x14] sm:$0xf]
  %v1938 = vld [vmem:[%s6 + $0x18] sm:$0xf]
  %v1939 = vld [vmem:[%s6 + $0x1c] sm:$0xf]
  %v1940 = vld [vmem:[%s6 + $0x20] sm:$0xf]
  %v1941 = vld [vmem:[%s6 + $0x24] sm:$0xf]
  %v1942 = vld [vmem:[#allocation3 + $0xa] sm:$0xff]
  %v1943 = vld [vmem:[#allocation3 + $0x12] sm:$0x1]
  %v1944 = vpack.c.bf16 %v1943, %v1942
  %s1945 = scalar_lea.vmem %s6, 40
  %v1946 = vld [vmem:[%s1945] sm:$0xf]
  %v1947 = vld [vmem:[%s1945 + $0x4] sm:$0xf]
  %v1948 = vld [vmem:[%s1945 + $0x8] sm:$0xf]
  %v1949 = vld [vmem:[%s1945 + $0xc] sm:$0xf]
  %v1950 = vld [vmem:[%s1945 + $0x10] sm:$0xf]
  %v1951 = vld [vmem:[%s1945 + $0x14] sm:$0xf]
  %v1952 = vld [vmem:[%s1945 + $0x18] sm:$0xf]
  %v1953 = vld [vmem:[%s1945 + $0x1c] sm:$0xf]
  %v1954 = vld [vmem:[%s1945 + $0x20] sm:$0xf]
  %v1955 = vld [vmem:[%s1945 + $0x24] sm:$0xf]
  %v1966 = vunpack.c.l.b16 %v1946
  %v1967 = vunpack.c.l.b16 %v1947
  %v1968 = vunpack.c.l.b16 %v1948
  %v1969 = vunpack.c.l.b16 %v1949
  %v1970 = vunpack.c.l.b16 %v1950
  %v1971 = vunpack.c.l.b16 %v1951
  %v1972 = vunpack.c.l.b16 %v1952
  %v1973 = vunpack.c.l.b16 %v1953
  %v1974 = vunpack.c.l.b16 %v1954
  %v1975 = vunpack.c.l.b16 %v1955
  %v1976 = vpack.c.b16 %v1967, %v1966
  %v1977 = vpack.c.b16 %v1969, %v1968
  %v1978 = vpack.c.b16 %v1971, %v1970
  %v1979 = vpack.c.b16 %v1973, %v1972
  %v1980 = vpack.c.b16 %v1975, %v1974
  %v1987 = vsel %vm61, %v1944, 0
  %1989 = vmatprep.subr.bf16.mxu0 0
  %1990 = vmatpush1.bf16.msra.mxu0 %v1976
  %1991 = vmatprep.subr.bf16.mxu0 0
  %1992 = vmatpush1.bf16.msra.mxu0 %v1977
  %1993 = vmatprep.subr.bf16.mxu0 0
  %1994 = vmatpush1.bf16.msra.mxu0 %v1978
  %1995 = vmatprep.subr.bf16.mxu0 0
  %1996 = vmatpush1.bf16.msra.mxu0 %v1979
  %1997 = vmatprep.subr.bf16.mxu0 0
  %1998 = vmatpush1.bf16.msra.mxu0 %v1980
  %1999 = vmatprep.subr.bf16.mxu0 0
  %2000 = vmatpush1.bf16.msra.mxu0 0
  %2001 = vmatprep.subr.bf16.mxu0 0
  %2002 = vmatpush1.bf16.msra.mxu0 0
  %2003 = vmatprep.subr.bf16.mxu0 0
  %2004 = vmatpush1.bf16.msra.mxu0 0
  %2005 = vmatprep.subr.bf16.mxu0 0
  %2006 = vmatpush1.bf16.msra.mxu0 0
  %2007 = vmatprep.subr.bf16.mxu0 0
  %2008 = vmatpush1.bf16.msra.mxu0 0
  %2009 = vmatprep.subr.bf16.mxu0 0
  %2010 = vmatpush1.bf16.msra.mxu0 0
  %2011 = vmatprep.subr.bf16.mxu0 0
  %2012 = vmatpush1.bf16.msra.mxu0 0
  %2013 = vmatprep.subr.bf16.mxu0 0
  %2014 = vmatpush1.bf16.msra.mxu0 0
  %2015 = vmatprep.subr.bf16.mxu0 0
  %2016 = vmatpush1.bf16.msra.mxu0 0
  %2017 = vmatprep.subr.bf16.mxu0 0
  %2018 = vmatpush1.bf16.msra.mxu0 0
  %2019 = vmatprep.subr.bf16.mxu0 0
  %2020 = vmatpush1.bf16.msra.mxu0 0
  %2021 = vmatprep.mubr.bf16.mxu0 0
  %2022 = vmatmul.mubr.bf16.gmra.mrb[0].mxu0 %v1987
  %v2023 = vpop.f32.mrb[0].mxu0
  %v2024 = vadd.f32 0.0, %v2023
  %v2025 = vpop.f32.mrb[0].mxu0
  %v2026 = vpop.f32.mrb[0].mxu0
  %v2027 = vadd.f32 0.0, %v2026
  %v2028 = vpop.f32.mrb[0].mxu0
  %2029 = vdwg.mxu0
  %v2040 = vunpack.c.l.b16 %v1932
  %v2041 = vunpack.c.l.b16 %v1933
  %v2042 = vunpack.c.l.b16 %v1934
  %v2043 = vunpack.c.l.b16 %v1935
  %v2044 = vunpack.c.l.b16 %v1936
  %v2045 = vunpack.c.l.b16 %v1937
  %v2046 = vunpack.c.l.b16 %v1938
  %v2047 = vunpack.c.l.b16 %v1939
  %v2048 = vunpack.c.l.b16 %v1940
  %v2049 = vunpack.c.l.b16 %v1941
  %v2050 = vpack.c.b16 %v2041, %v2040
  %v2051 = vpack.c.b16 %v2043, %v2042
  %v2052 = vpack.c.b16 %v2045, %v2044
  %v2053 = vpack.c.b16 %v2047, %v2046
  %v2054 = vpack.c.b16 %v2049, %v2048
  %v2061 = vsel %vm61, %v1931, 0
  %2063 = vmatprep.subr.bf16.mxu0 0
  %2064 = vmatpush1.bf16.msra.mxu0 %v2050
  %2065 = vmatprep.subr.bf16.mxu0 0
  %2066 = vmatpush1.bf16.msra.mxu0 %v2051
  %2067 = vmatprep.subr.bf16.mxu0 0
  %2068 = vmatpush1.bf16.msra.mxu0 %v2052
  %2069 = vmatprep.subr.bf16.mxu0 0
  %2070 = vmatpush1.bf16.msra.mxu0 %v2053
  %2071 = vmatprep.subr.bf16.mxu0 0
  %2072 = vmatpush1.bf16.msra.mxu0 %v2054
  %2073 = vmatprep.subr.bf16.mxu0 0
  %2074 = vmatpush1.bf16.msra.mxu0 0
  %2075 = vmatprep.subr.bf16.mxu0 0
  %2076 = vmatpush1.bf16.msra.mxu0 0
  %2077 = vmatprep.subr.bf16.mxu0 0
  %2078 = vmatpush1.bf16.msra.mxu0 0
  %2079 = vmatprep.subr.bf16.mxu0 0
  %2080 = vmatpush1.bf16.msra.mxu0 0
  %2081 = vmatprep.subr.bf16.mxu0 0
  %2082 = vmatpush1.bf16.msra.mxu0 0
  %2083 = vmatprep.subr.bf16.mxu0 0
  %2084 = vmatpush1.bf16.msra.mxu0 0
  %2085 = vmatprep.subr.bf16.mxu0 0
  %2086 = vmatpush1.bf16.msra.mxu0 0
  %2087 = vmatprep.subr.bf16.mxu0 0
  %2088 = vmatpush1.bf16.msra.mxu0 0
  %2089 = vmatprep.subr.bf16.mxu0 0
  %2090 = vmatpush1.bf16.msra.mxu0 0
  %2091 = vmatprep.subr.bf16.mxu0 0
  %2092 = vmatpush1.bf16.msra.mxu0 0
  %2093 = vmatprep.subr.bf16.mxu0 0
  %2094 = vmatpush1.bf16.msra.mxu0 0
  %2095 = vmatprep.mubr.bf16.mxu0 0
  %2096 = vmatmul.mubr.bf16.gmra.mrb[0].mxu0 %v2061
  %v2097 = vpop.f32.mrb[0].mxu0
  %v2098 = vadd.f32 %v2024, %v2097
  %v2099 = vpop.f32.mrb[0].mxu0
  %v2100 = vpop.f32.mrb[0].mxu0
  %v2101 = vadd.f32 %v2027, %v2100
  %v2102 = vpop.f32.mrb[0].mxu0
  %2103 = vdwg.mxu0
  %v2104 = vld [vmem:[#allocation3 + $0x1] sm:$0xff]
  %v2105 = vld [vmem:[#allocation3 + $0x9] sm:$0x1]
  %v2106 = vpack.c.bf16 %v2105, %v2104
  %s2107 = scalar_lea.vmem %s6, 80
  %v2108 = vld [vmem:[%s2107] sm:$0xf]
  %v2109 = vld [vmem:[%s2107 + $0x4] sm:$0xf]
  %v2110 = vld [vmem:[%s2107 + $0x8] sm:$0xf]
  %v2111 = vld [vmem:[%s2107 + $0xc] sm:$0xf]
  %v2112 = vld [vmem:[%s2107 + $0x10] sm:$0xf]
  %v2113 = vld [vmem:[%s2107 + $0x14] sm:$0xf]
  %v2114 = vld [vmem:[%s2107 + $0x18] sm:$0xf]
  %v2115 = vld [vmem:[%s2107 + $0x1c] sm:$0xf]
  %v2116 = vld [vmem:[%s2107 + $0x20] sm:$0xf]
  %v2117 = vld [vmem:[%s2107 + $0x24] sm:$0xf]
  %v2128 = vunpack.c.l.b16 %v2108
  %v2129 = vunpack.c.l.b16 %v2109
  %v2130 = vunpack.c.l.b16 %v2110
  %v2131 = vunpack.c.l.b16 %v2111
  %v2132 = vunpack.c.l.b16 %v2112
  %v2133 = vunpack.c.l.b16 %v2113
  %v2134 = vunpack.c.l.b16 %v2114
  %v2135 = vunpack.c.l.b16 %v2115
  %v2136 = vunpack.c.l.b16 %v2116
  %v2137 = vunpack.c.l.b16 %v2117
  %v2138 = vpack.c.b16 %v2129, %v2128
  %v2139 = vpack.c.b16 %v2131, %v2130
  %v2140 = vpack.c.b16 %v2133, %v2132
  %v2141 = vpack.c.b16 %v2135, %v2134
  %v2142 = vpack.c.b16 %v2137, %v2136
  %v2149 = vsel %vm61, %v2106, 0
  %2151 = vmatprep.subr.bf16.mxu0 0
  %2152 = vmatpush1.bf16.msra.mxu0 %v2138
  %2153 = vmatprep.subr.bf16.mxu0 0
  %2154 = vmatpush1.bf16.msra.mxu0 %v2139
  %2155 = vmatprep.subr.bf16.mxu0 0
  %2156 = vmatpush1.bf16.msra.mxu0 %v2140
  %2157 = vmatprep.subr.bf16.mxu0 0
  %2158 = vmatpush1.bf16.msra.mxu0 %v2141
  %2159 = vmatprep.subr.bf16.mxu0 0
  %2160 = vmatpush1.bf16.msra.mxu0 %v2142
  %2161 = vmatprep.subr.bf16.mxu0 0
  %2162 = vmatpush1.bf16.msra.mxu0 0
  %2163 = vmatprep.subr.bf16.mxu0 0
  %2164 = vmatpush1.bf16.msra.mxu0 0
  %2165 = vmatprep.subr.bf16.mxu0 0
  %2166 = vmatpush1.bf16.msra.mxu0 0
  %2167 = vmatprep.subr.bf16.mxu0 0
  %2168 = vmatpush1.bf16.msra.mxu0 0
  %2169 = vmatprep.subr.bf16.mxu0 0
  %2170 = vmatpush1.bf16.msra.mxu0 0
  %2171 = vmatprep.subr.bf16.mxu0 0
  %2172 = vmatpush1.bf16.msra.mxu0 0
  %2173 = vmatprep.subr.bf16.mxu0 0
  %2174 = vmatpush1.bf16.msra.mxu0 0
  %2175 = vmatprep.subr.bf16.mxu0 0
  %2176 = vmatpush1.bf16.msra.mxu0 0
  %2177 = vmatprep.subr.bf16.mxu0 0
  %2178 = vmatpush1.bf16.msra.mxu0 0
  %2179 = vmatprep.subr.bf16.mxu0 0
  %2180 = vmatpush1.bf16.msra.mxu0 0
  %2181 = vmatprep.subr.bf16.mxu0 0
  %2182 = vmatpush1.bf16.msra.mxu0 0
  %2183 = vmatprep.mubr.bf16.mxu0 0
  %2184 = vmatmul.mubr.bf16.gmra.mrb[0].mxu0 %v2149
  %v2185 = vpop.f32.mrb[0].mxu0
  %v2186 = vadd.f32 0.0, %v2185
  %v2187 = vpop.f32.mrb[0].mxu0
  %v2188 = vpop.f32.mrb[0].mxu0
  %v2189 = vadd.f32 0.0, %v2188
  %v2190 = vpop.f32.mrb[0].mxu0
  %2191 = vdwg.mxu0
  %v2192 = vadd.f32 %v2098, %v2186
  %v2193 = vadd.f32 %v2101, %v2189
  %v2194 = vld [vmem:[#allocation3 + $0xb] sm:$0xff]
  %v2195 = vld [vmem:[#allocation3 + $0x13] sm:$0x1]
  %v2196 = vpack.c.bf16 %v2195, %v2194
  %s2197 = scalar_lea.vmem %s6, 120
  %v2198 = vld [vmem:[%s2197] sm:$0xf]
  %v2199 = vld [vmem:[%s2197 + $0x4] sm:$0xf]
  %v2200 = vld [vmem:[%s2197 + $0x8] sm:$0xf]
  %v2201 = vld [vmem:[%s2197 + $0xc] sm:$0xf]
  %v2202 = vld [vmem:[%s2197 + $0x10] sm:$0xf]
  %v2203 = vld [vmem:[%s2197 + $0x14] sm:$0xf]
  %v2204 = vld [vmem:[%s2197 + $0x18] sm:$0xf]
  %v2205 = vld [vmem:[%s2197 + $0x1c] sm:$0xf]
  %v2206 = vld [vmem:[%s2197 + $0x20] sm:$0xf]
  %v2207 = vld [vmem:[%s2197 + $0x24] sm:$0xf]
  %v2218 = vunpack.c.l.b16 %v2198
  %v2219 = vunpack.c.l.b16 %v2199
  %v2220 = vunpack.c.l.b16 %v2200
  %v2221 = vunpack.c.l.b16 %v2201
  %v2222 = vunpack.c.l.b16 %v2202
  %v2223 = vunpack.c.l.b16 %v2203
  %v2224 = vunpack.c.l.b16 %v2204
  %v2225 = vunpack.c.l.b16 %v2205
  %v2226 = vunpack.c.l.b16 %v2206
  %v2227 = vunpack.c.l.b16 %v2207
  %v2228 = vpack.c.b16 %v2219, %v2218
  %v2229 = vpack.c.b16 %v2221, %v2220
  %v2230 = vpack.c.b16 %v2223, %v2222
  %v2231 = vpack.c.b16 %v2225, %v2224
  %v2232 = vpack.c.b16 %v2227, %v2226
  %v2239 = vsel %vm61, %v2196, 0
  %2241 = vmatprep.subr.bf16.mxu0 0
  %2242 = vmatpush1.bf16.msra.mxu0 %v2228
  %2243 = vmatprep.subr.bf16.mxu0 0
  %2244 = vmatpush1.bf16.msra.mxu0 %v2229
  %2245 = vmatprep.subr.bf16.mxu0 0
  %2246 = vmatpush1.bf16.msra.mxu0 %v2230
  %2247 = vmatprep.subr.bf16.mxu0 0
  %2248 = vmatpush1.bf16.msra.mxu0 %v2231
  %2249 = vmatprep.subr.bf16.mxu0 0
  %2250 = vmatpush1.bf16.msra.mxu0 %v2232
  %2251 = vmatprep.subr.bf16.mxu0 0
  %2252 = vmatpush1.bf16.msra.mxu0 0
  %2253 = vmatprep.subr.bf16.mxu0 0
  %2254 = vmatpush1.bf16.msra.mxu0 0
  %2255 = vmatprep.subr.bf16.mxu0 0
  %2256 = vmatpush1.bf16.msra.mxu0 0
  %2257 = vmatprep.subr.bf16.mxu0 0
  %2258 = vmatpush1.bf16.msra.mxu0 0
  %2259 = vmatprep.subr.bf16.mxu0 0
  %2260 = vmatpush1.bf16.msra.mxu0 0
  %2261 = vmatprep.subr.bf16.mxu0 0
  %2262 = vmatpush1.bf16.msra.mxu0 0
  %2263 = vmatprep.subr.bf16.mxu0 0
  %2264 = vmatpush1.bf16.msra.mxu0 0
  %2265 = vmatprep.subr.bf16.mxu0 0
  %2266 = vmatpush1.bf16.msra.mxu0 0
  %2267 = vmatprep.subr.bf16.mxu0 0
  %2268 = vmatpush1.bf16.msra.mxu0 0
  %2269 = vmatprep.subr.bf16.mxu0 0
  %2270 = vmatpush1.bf16.msra.mxu0 0
  %2271 = vmatprep.subr.bf16.mxu0 0
  %2272 = vmatpush1.bf16.msra.mxu0 0
  %2273 = vmatprep.mubr.bf16.mxu0 0
  %2274 = vmatmul.mubr.bf16.gmra.mrb[0].mxu0 %v2239
  %v2275 = vpop.f32.mrb[0].mxu0
  %v2276 = vadd.f32 0.0, %v2275
  %v2277 = vpop.f32.mrb[0].mxu0
  %v2278 = vpop.f32.mrb[0].mxu0
  %v2279 = vadd.f32 0.0, %v2278
  %v2280 = vpop.f32.mrb[0].mxu0
  %2281 = vdwg.mxu0
  %v2282 = vadd.f32 %v2192, %v2276
  %v2283 = vadd.f32 %v2193, %v2279
  %v2284 = vld [vmem:[%s7] sm:$0x1]
  %v2285 = vld [vmem:[%s8] sm:$0x1]
  %vm2286 = vcmp.lt.s32.totalorder %v1298, 0
  %v2287 = vsub.s32 0, %v1298
  %v2288 = vsel %vm2286, %v2287, %v1298
  %v2289 = vshrl.u32 %v2288, 4
  %v2290 = vand.u32 %v2288, 15
  %v2291 = vsub.s32 0, %v2290
  %v2292 = vsel %vm2286, %v2291, %v2290
  %vm2293 = vcmp.lt.s32.totalorder %v1299, 0
  %v2294 = vsub.s32 0, %v1299
  %v2295 = vsel %vm2293, %v2294, %v1299
  %v2296 = vshrl.u32 %v2295, 4
  %v2297 = vand.u32 %v2295, 15
  %v2298 = vsub.s32 0, %v2297
  %v2299 = vsel %vm2293, %v2298, %v2297
  %vm2300 = vcmp.lt.s32.totalorder %v1300, 0
  %v2301 = vsub.s32 0, %v1300
  %v2302 = vsel %vm2300, %v2301, %v1300
  %v2303 = vshrl.u32 %v2302, 4
  %v2304 = vand.u32 %v2302, 15
  %v2305 = vsub.s32 0, %v2304
  %v2306 = vsel %vm2300, %v2305, %v2304
  %vm2307 = vcmp.lt.s32.totalorder %v1301, 0
  %v2308 = vsub.s32 0, %v1301
  %v2309 = vsel %vm2307, %v2308, %v1301
  %v2310 = vshrl.u32 %v2309, 4
  %v2311 = vand.u32 %v2309, 15
  %v2312 = vsub.s32 0, %v2311
  %v2313 = vsel %vm2307, %v2312, %v2311
  %vm2314 = vcmp.lt.s32.totalorder %v1302, 0
  %v2315 = vsub.s32 0, %v1302
  %v2316 = vsel %vm2314, %v2315, %v1302
  %v2317 = vshrl.u32 %v2316, 4
  %v2318 = vand.u32 %v2316, 15
  %v2319 = vsub.s32 0, %v2318
  %v2320 = vsel %vm2314, %v2319, %v2318
  %vm2321 = vcmp.lt.s32.totalorder %v1303, 0
  %v2322 = vsub.s32 0, %v1303
  %v2323 = vsel %vm2321, %v2322, %v1303
  %v2324 = vshrl.u32 %v2323, 4
  %v2325 = vand.u32 %v2323, 15
  %v2326 = vsub.s32 0, %v2325
  %v2327 = vsel %vm2321, %v2326, %v2325
  %vm2328 = vcmp.lt.s32.totalorder %v1304, 0
  %v2329 = vsub.s32 0, %v1304
  %v2330 = vsel %vm2328, %v2329, %v1304
  %v2331 = vshrl.u32 %v2330, 4
  %v2332 = vand.u32 %v2330, 15
  %v2333 = vsub.s32 0, %v2332
  %v2334 = vsel %vm2328, %v2333, %v2332
  %vm2335 = vcmp.lt.s32.totalorder %v1305, 0
  %v2336 = vsub.s32 0, %v1305
  %v2337 = vsel %vm2335, %v2336, %v1305
  %v2338 = vshrl.u32 %v2337, 4
  %v2339 = vand.u32 %v2337, 15
  %v2340 = vsub.s32 0, %v2339
  %v2341 = vsel %vm2335, %v2340, %v2339
  %vm2342 = vcmp.ne.s32.totalorder %v2292, 0
  %vm2343 = vcmp.ne.s32.totalorder %v2299, 0
  %vm2344 = vcmp.ne.s32.totalorder %v2306, 0
  %vm2345 = vcmp.ne.s32.totalorder %v2313, 0
  %vm2346 = vcmp.ne.s32.totalorder %v2320, 0
  %vm2347 = vcmp.ne.s32.totalorder %v2327, 0
  %vm2348 = vcmp.ne.s32.totalorder %v2334, 0
  %vm2349 = vcmp.ne.s32.totalorder %v2341, 0
  %vm2350 = vcmp.lt.s32.totalorder %v2292, 0
  %vm2351 = vcmp.lt.s32.totalorder %v2299, 0
  %vm2352 = vcmp.lt.s32.totalorder %v2306, 0
  %vm2353 = vcmp.lt.s32.totalorder %v2313, 0
  %vm2354 = vcmp.lt.s32.totalorder %v2320, 0
  %vm2355 = vcmp.lt.s32.totalorder %v2327, 0
  %vm2356 = vcmp.lt.s32.totalorder %v2334, 0
  %vm2357 = vcmp.lt.s32.totalorder %v2341, 0
  %vm2358 = vmand %vm2350, %vm2342
  %vm2359 = vmand %vm2351, %vm2343
  %vm2360 = vmand %vm2352, %vm2344
  %vm2361 = vmand %vm2353, %vm2345
  %vm2362 = vmand %vm2354, %vm2346
  %vm2363 = vmand %vm2355, %vm2347
  %vm2364 = vmand %vm2356, %vm2348
  %vm2365 = vmand %vm2357, %vm2349
  %v2366 = vadd.s32 %v2292, 16
  %v2367 = vadd.s32 %v2299, 16
  %v2368 = vadd.s32 %v2306, 16
  %v2369 = vadd.s32 %v2313, 16
  %v2370 = vadd.s32 %v2320, 16
  %v2371 = vadd.s32 %v2327, 16
  %v2372 = vadd.s32 %v2334, 16
  %v2373 = vadd.s32 %v2341, 16
  %v2374 = vsel %vm2358, %v2366, %v2292
  %v2375 = vsel %vm2359, %v2367, %v2299
  %v2376 = vsel %vm2360, %v2368, %v2306
  %v2377 = vsel %vm2361, %v2369, %v2313
  %v2378 = vsel %vm2362, %v2370, %v2320
  %v2379 = vsel %vm2363, %v2371, %v2327
  %v2380 = vsel %vm2364, %v2372, %v2334
  %v2381 = vsel %vm2365, %v2373, %v2341
  %vm2382 = vcmp.eq.s32.totalorder %v2374, %v1307
  %vm2383 = vcmp.eq.s32.totalorder %v2375, %v1307
  %vm2384 = vcmp.eq.s32.totalorder %v2376, %v1307
  %vm2385 = vcmp.eq.s32.totalorder %v2377, %v1307
  %vm2386 = vcmp.eq.s32.totalorder %v2378, %v1307
  %vm2387 = vcmp.eq.s32.totalorder %v2379, %v1307
  %vm2388 = vcmp.eq.s32.totalorder %v2380, %v1307
  %vm2389 = vcmp.eq.s32.totalorder %v2381, %v1307
  %v2390 = vsel %vm2382, 1, 0
  %v2391 = vsel %vm2383, 1, 0
  %v2392 = vsel %vm2384, 1, 0
  %v2393 = vsel %vm2385, 1, 0
  %v2394 = vsel %vm2386, 1, 0
  %v2395 = vsel %vm2387, 1, 0
  %v2396 = vsel %vm2388, 1, 0
  %v2397 = vsel %vm2389, 1, 0
  %v2398 = vcvt.s32.f32 %v2390
  %v2399 = vcvt.s32.f32 %v2391
  %v2400 = vcvt.s32.f32 %v2392
  %v2401 = vcvt.s32.f32 %v2393
  %v2402 = vcvt.s32.f32 %v2394
  %v2403 = vcvt.s32.f32 %v2395
  %v2404 = vcvt.s32.f32 %v2396
  %v2405 = vcvt.s32.f32 %v2397
  %vm2406 = vcmp.lt.s32.totalorder %v1307, 0
  %v2407 = vsub.s32 0, %v1307
  %v2408 = vsel %vm2406, %v2407, %v1307
  %v2409 = vshrl.u32 %v2408, 4
  %v2410 = vand.u32 %v2408, 15
  %v2411 = vsub.s32 0, %v2410
  %v2412 = vsel %vm2406, %v2411, %v2410
  %vm2413 = vcmp.ne.s32.totalorder %v2412, 0
  %vm2414 = vcmp.lt.s32.totalorder %v2412, 0
  %vm2415 = vmand %vm2414, %vm2413
  %v2416 = vadd.s32 %v2412, 16
  %v2417 = vsel %vm2415, %v2416, %v2412
  %vm2418 = vcmp.eq.s32.totalorder %v2417, %v1298
  %vm2419 = vcmp.eq.s32.totalorder %v2417, %v1299
  %v2420 = vsel %vm2418, 1, 0
  %v2421 = vsel %vm2419, 1, 0
  %v2422 = vcvt.s32.f32 %v2420
  %v2423 = vcvt.s32.f32 %v2421
  %vm2424 = vcmask 519168
  %v2425 = vsel %vm2424, %v2282, 0.0
  %v2426 = vrot.slane %v2425, 4
  %v2427 = vadd.f32 %v2425, %v2426
  %v2428 = vrot.slane %v2427, 2
  %v2429 = vadd.f32 %v2427, %v2428
  %v2430 = vrot.slane %v2429, 1
  %v2431 = vadd.f32 %v2429, %v2430
  %vm2434 = vcmask 1042432
  %v2435 = vrot.slane %v2282, 5
  %v2436 = vrot.slane %v2283, 5
  %v2437 = vsel %vm2434, %v2435, %v2436
  %v2439 = vsel %vm2424, %v2437, 0.0
  %v2440 = vrot.slane %v2439, 4
  %v2441 = vadd.f32 %v2439, %v2440
  %v2442 = vrot.slane %v2441, 2
  %v2443 = vadd.f32 %v2441, %v2442
  %v2444 = vrot.slane %v2443, 1
  %v2445 = vadd.f32 %v2443, %v2444
  %v2446 = vadd.f32 %v2431, %v2445
  %v2448 = vsel %vm1443, %v2446, 0
  %2450 = vmatprep.subr.mxu0 0.0
  %2451 = vmatpush1.msra.mxu0 %v2398
  %2452 = vmatprep.subr.mxu0 0.0
  %2453 = vmatpush1.msra.mxu0 %v2399
  %2454 = vmatprep.subr.mxu0 0.0
  %2455 = vmatpush1.msra.mxu0 %v2400
  %2456 = vmatprep.subr.mxu0 0.0
  %2457 = vmatpush1.msra.mxu0 %v2401
  %2458 = vmatprep.subr.mxu0 0.0
  %2459 = vmatpush1.msra.mxu0 %v2402
  %2460 = vmatprep.subr.mxu0 0.0
  %2461 = vmatpush1.msra.mxu0 %v2403
  %2462 = vmatprep.subr.mxu0 0.0
  %2463 = vmatpush1.msra.mxu0 %v2404
  %2464 = vmatprep.subr.mxu0 0.0
  %2465 = vmatpush1.msra.mxu0 %v2405
  %2466 = vmatprep.subr.mxu0 0.0
  %2467 = vmatpush1.msra.mxu0 0.0
  %2468 = vmatprep.subr.mxu0 0.0
  %2469 = vmatpush1.msra.mxu0 0.0
  %2470 = vmatprep.subr.mxu0 0.0
  %2471 = vmatpush1.msra.mxu0 0.0
  %2472 = vmatprep.subr.mxu0 0.0
  %2473 = vmatpush1.msra.mxu0 0.0
  %2474 = vmatprep.subr.mxu0 0.0
  %2475 = vmatpush1.msra.mxu0 0.0
  %2476 = vmatprep.subr.mxu0 0.0
  %2477 = vmatpush1.msra.mxu0 0.0
  %2478 = vmatprep.subr.mxu0 0.0
  %2479 = vmatpush1.msra.mxu0 0.0
  %2480 = vmatprep.subr.mxu0 0.0
  %2481 = vmatpush1.msra.mxu0 0.0
  %2482 = vmatprep.subr.mxu0 0.0
  %2483 = vmatpush1.msra.mxu0 0.0
  %2484 = vmatprep.subr.mxu0 0.0
  %2485 = vmatpush1.msra.mxu0 0.0
  %2486 = vmatprep.subr.mxu0 0.0
  %2487 = vmatpush1.msra.mxu0 0.0
  %2488 = vmatprep.subr.mxu0 0.0
  %2489 = vmatpush1.msra.mxu0 0.0
  %2490 = vmatprep.subr.mxu0 0.0
  %2491 = vmatpush1.msra.mxu0 0.0
  %2492 = vmatprep.subr.mxu0 0.0
  %2493 = vmatpush1.msra.mxu0 0.0
  %2494 = vmatprep.subr.mxu0 0.0
  %2495 = vmatpush1.msra.mxu0 0.0
  %2496 = vmatprep.subr.mxu0 0.0
  %2497 = vmatpush1.msra.mxu0 0.0
  %2498 = vmatprep.subr.mxu0 0.0
  %2499 = vmatpush1.msra.mxu0 0.0
  %2500 = vmatprep.subr.mxu0 0.0
  %2501 = vmatpush1.msra.mxu0 0.0
  %2502 = vmatprep.subr.mxu0 0.0
  %2503 = vmatpush1.msra.mxu0 0.0
  %2504 = vmatprep.subr.mxu0 0.0
  %2505 = vmatpush1.msra.mxu0 0.0
  %2506 = vmatprep.subr.mxu0 0.0
  %2507 = vmatpush1.msra.mxu0 0.0
  %2508 = vmatprep.subr.mxu0 0.0
  %2509 = vmatpush1.msra.mxu0 0.0
  %2510 = vmatprep.subr.mxu0 0.0
  %2511 = vmatpush1.msra.mxu0 0.0
  %2512 = vmatprep.subr.mxu0 0.0
  %2513 = vmatpush1.msra.mxu0 0.0
  %2514 = vmatprep.mubr.f32.mxu0 0.0
  %2515 = vmatmul.mubr.f32.gmra.mrb[0].mxu0 %v2448
  %v2516 = vpop.f32.mrb[0].mxu0
  %v2517 = vadd.f32 0.0, %v2516
  %v2518 = vpop.f32.mrb[0].mxu0
  %2519 = vdwg.mxu0
  %v2520 = vrcp.pop 32.0
  %v2521 = vmul.f32 %v2517, %v2520
  %vm2522 = vcmask 130048
  %v2524 = vsel %vm2522, %v2521, 0
  %2526 = vmatprep.subr.mxu0 0.0
  %2527 = vmatpush1.msra.mxu0 %v2422
  %2528 = vmatprep.subr.mxu0 0.0
  %2529 = vmatpush1.msra.mxu0 %v2423
  %2530 = vmatprep.subr.mxu0 0.0
  %2531 = vmatpush1.msra.mxu0 0.0
  %2532 = vmatprep.subr.mxu0 0.0
  %2533 = vmatpush1.msra.mxu0 0.0
  %2534 = vmatprep.subr.mxu0 0.0
  %2535 = vmatpush1.msra.mxu0 0.0
  %2536 = vmatprep.subr.mxu0 0.0
  %2537 = vmatpush1.msra.mxu0 0.0
  %2538 = vmatprep.subr.mxu0 0.0
  %2539 = vmatpush1.msra.mxu0 0.0
  %2540 = vmatprep.subr.mxu0 0.0
  %2541 = vmatpush1.msra.mxu0 0.0
  %2542 = vmatprep.subr.mxu0 0.0
  %2543 = vmatpush1.msra.mxu0 0.0
  %2544 = vmatprep.subr.mxu0 0.0
  %2545 = vmatpush1.msra.mxu0 0.0
  %2546 = vmatprep.subr.mxu0 0.0
  %2547 = vmatpush1.msra.mxu0 0.0
  %2548 = vmatprep.subr.mxu0 0.0
  %2549 = vmatpush1.msra.mxu0 0.0
  %2550 = vmatprep.subr.mxu0 0.0
  %2551 = vmatpush1.msra.mxu0 0.0
  %2552 = vmatprep.subr.mxu0 0.0
  %2553 = vmatpush1.msra.mxu0 0.0
  %2554 = vmatprep.subr.mxu0 0.0
  %2555 = vmatpush1.msra.mxu0 0.0
  %2556 = vmatprep.subr.mxu0 0.0
  %2557 = vmatpush1.msra.mxu0 0.0
  %2558 = vmatprep.subr.mxu0 0.0
  %2559 = vmatpush1.msra.mxu0 0.0
  %2560 = vmatprep.subr.mxu0 0.0
  %2561 = vmatpush1.msra.mxu0 0.0
  %2562 = vmatprep.subr.mxu0 0.0
  %2563 = vmatpush1.msra.mxu0 0.0
  %2564 = vmatprep.subr.mxu0 0.0
  %2565 = vmatpush1.msra.mxu0 0.0
  %2566 = vmatprep.subr.mxu0 0.0
  %2567 = vmatpush1.msra.mxu0 0.0
  %2568 = vmatprep.subr.mxu0 0.0
  %2569 = vmatpush1.msra.mxu0 0.0
  %2570 = vmatprep.subr.mxu0 0.0
  %2571 = vmatpush1.msra.mxu0 0.0
  %2572 = vmatprep.subr.mxu0 0.0
  %2573 = vmatpush1.msra.mxu0 0.0
  %2574 = vmatprep.subr.mxu0 0.0
  %2575 = vmatpush1.msra.mxu0 0.0
  %2576 = vmatprep.subr.mxu0 0.0
  %2577 = vmatpush1.msra.mxu0 0.0
  %2578 = vmatprep.subr.mxu0 0.0
  %2579 = vmatpush1.msra.mxu0 0.0
  %2580 = vmatprep.subr.mxu0 0.0
  %2581 = vmatpush1.msra.mxu0 0.0
  %2582 = vmatprep.subr.mxu0 0.0
  %2583 = vmatpush1.msra.mxu0 0.0
  %2584 = vmatprep.subr.mxu0 0.0
  %2585 = vmatpush1.msra.mxu0 0.0
  %2586 = vmatprep.subr.mxu0 0.0
  %2587 = vmatpush1.msra.mxu0 0.0
  %2588 = vmatprep.subr.mxu0 0.0
  %2589 = vmatpush1.msra.mxu0 0.0
  %2590 = vmatprep.mubr.f32.mxu0 0.0
  %2591 = vmatmul.mubr.f32.gmra.mrb[0].mxu0 %v2524
  %v2592 = vpop.f32.mrb[0].mxu0
  %v2593 = vadd.f32 0.0, %v2592
  %v2594 = vpop.f32.mrb[0].mxu0
  %2595 = vdwg.mxu0
  %v2596 = vlaneseq
  %v2597 = vshrl.u32 %v2596, 7
  %v2598 = vsub.s32 0, %v2597
  %v2599 = vrot.slane %v2593, %v2598
  %v2600 = vsub.f32 %v2282, %v2599
  %v2601 = vmul.f32 %v2600, %v2600
  %v2602 = vsel %vm2424, %v2601, 0.0
  %v2603 = vrot.slane %v2602, 4
  %v2604 = vadd.f32 %v2602, %v2603
  %v2605 = vrot.slane %v2604, 2
  %v2606 = vadd.f32 %v2604, %v2605
  %v2607 = vrot.slane %v2606, 1
  %v2608 = vadd.f32 %v2606, %v2607
  %v2609 = vsub.f32 %v2283, %v2599
  %v2610 = vmul.f32 %v2609, %v2609
  %v2613 = vrot.slane %v2601, 5
  %v2614 = vrot.slane %v2610, 5
  %v2615 = vsel %vm2434, %v2613, %v2614
  %v2617 = vsel %vm2424, %v2615, 0.0
  %v2618 = vrot.slane %v2617, 4
  %v2619 = vadd.f32 %v2617, %v2618
  %v2620 = vrot.slane %v2619, 2
  %v2621 = vadd.f32 %v2619, %v2620
  %v2622 = vrot.slane %v2621, 1
  %v2623 = vadd.f32 %v2621, %v2622
  %v2624 = vadd.f32 %v2608, %v2623
  %v2626 = vsel %vm1443, %v2624, 0
  %2628 = vmatprep.subr.mxu0 0.0
  %2629 = vmatpush1.msra.mxu0 %v2398
  %2630 = vmatprep.subr.mxu0 0.0
  %2631 = vmatpush1.msra.mxu0 %v2399
  %2632 = vmatprep.subr.mxu0 0.0
  %2633 = vmatpush1.msra.mxu0 %v2400
  %2634 = vmatprep.subr.mxu0 0.0
  %2635 = vmatpush1.msra.mxu0 %v2401
  %2636 = vmatprep.subr.mxu0 0.0
  %2637 = vmatpush1.msra.mxu0 %v2402
  %2638 = vmatprep.subr.mxu0 0.0
  %2639 = vmatpush1.msra.mxu0 %v2403
  %2640 = vmatprep.subr.mxu0 0.0
  %2641 = vmatpush1.msra.mxu0 %v2404
  %2642 = vmatprep.subr.mxu0 0.0
  %2643 = vmatpush1.msra.mxu0 %v2405
  %2644 = vmatprep.subr.mxu0 0.0
  %2645 = vmatpush1.msra.mxu0 0.0
  %2646 = vmatprep.subr.mxu0 0.0
  %2647 = vmatpush1.msra.mxu0 0.0
  %2648 = vmatprep.subr.mxu0 0.0
  %2649 = vmatpush1.msra.mxu0 0.0
  %2650 = vmatprep.subr.mxu0 0.0
  %2651 = vmatpush1.msra.mxu0 0.0
  %2652 = vmatprep.subr.mxu0 0.0
  %2653 = vmatpush1.msra.mxu0 0.0
  %2654 = vmatprep.subr.mxu0 0.0
  %2655 = vmatpush1.msra.mxu0 0.0
  %2656 = vmatprep.subr.mxu0 0.0
  %2657 = vmatpush1.msra.mxu0 0.0
  %2658 = vmatprep.subr.mxu0 0.0
  %2659 = vmatpush1.msra.mxu0 0.0
  %2660 = vmatprep.subr.mxu0 0.0
  %2661 = vmatpush1.msra.mxu0 0.0
  %2662 = vmatprep.subr.mxu0 0.0
  %2663 = vmatpush1.msra.mxu0 0.0
  %2664 = vmatprep.subr.mxu0 0.0
  %2665 = vmatpush1.msra.mxu0 0.0
  %2666 = vmatprep.subr.mxu0 0.0
  %2667 = vmatpush1.msra.mxu0 0.0
  %2668 = vmatprep.subr.mxu0 0.0
  %2669 = vmatpush1.msra.mxu0 0.0
  %2670 = vmatprep.subr.mxu0 0.0
  %2671 = vmatpush1.msra.mxu0 0.0
  %2672 = vmatprep.subr.mxu0 0.0
  %2673 = vmatpush1.msra.mxu0 0.0
  %2674 = vmatprep.subr.mxu0 0.0
  %2675 = vmatpush1.msra.mxu0 0.0
  %2676 = vmatprep.subr.mxu0 0.0
  %2677 = vmatpush1.msra.mxu0 0.0
  %2678 = vmatprep.subr.mxu0 0.0
  %2679 = vmatpush1.msra.mxu0 0.0
  %2680 = vmatprep.subr.mxu0 0.0
  %2681 = vmatpush1.msra.mxu0 0.0
  %2682 = vmatprep.subr.mxu0 0.0
  %2683 = vmatpush1.msra.mxu0 0.0
  %2684 = vmatprep.subr.mxu0 0.0
  %2685 = vmatpush1.msra.mxu0 0.0
  %2686 = vmatprep.subr.mxu0 0.0
  %2687 = vmatpush1.msra.mxu0 0.0
  %2688 = vmatprep.subr.mxu0 0.0
  %2689 = vmatpush1.msra.mxu0 0.0
  %2690 = vmatprep.subr.mxu0 0.0
  %2691 = vmatpush1.msra.mxu0 0.0
  %2692 = vmatprep.mubr.f32.mxu0 0.0
  %2693 = vmatmul.mubr.f32.gmra.mrb[0].mxu0 %v2626
  %v2694 = vpop.f32.mrb[0].mxu0
  %v2695 = vadd.f32 0.0, %v2694
  %v2696 = vpop.f32.mrb[0].mxu0
  %2697 = vdwg.mxu0
  %v2698 = vmul.f32 %v2695, %v2520
  %v2699 = vadd.f32 %v2698, 1e-05
  %v2700 = vrsqrt.pop %v2699
  %v2701 = vmul.f32 %v2284, %v2700
  %v2703 = vsel %vm2522, %v2701, 0
  %2705 = vmatprep.subr.mxu0 0.0
  %2706 = vmatpush1.msra.mxu0 %v2422
  %2707 = vmatprep.subr.mxu0 0.0
  %2708 = vmatpush1.msra.mxu0 %v2423
  %2709 = vmatprep.subr.mxu0 0.0
  %2710 = vmatpush1.msra.mxu0 0.0
  %2711 = vmatprep.subr.mxu0 0.0
  %2712 = vmatpush1.msra.mxu0 0.0
  %2713 = vmatprep.subr.mxu0 0.0
  %2714 = vmatpush1.msra.mxu0 0.0
  %2715 = vmatprep.subr.mxu0 0.0
  %2716 = vmatpush1.msra.mxu0 0.0
  %2717 = vmatprep.subr.mxu0 0.0
  %2718 = vmatpush1.msra.mxu0 0.0
  %2719 = vmatprep.subr.mxu0 0.0
  %2720 = vmatpush1.msra.mxu0 0.0
  %2721 = vmatprep.subr.mxu0 0.0
  %2722 = vmatpush1.msra.mxu0 0.0
  %2723 = vmatprep.subr.mxu0 0.0
  %2724 = vmatpush1.msra.mxu0 0.0
  %2725 = vmatprep.subr.mxu0 0.0
  %2726 = vmatpush1.msra.mxu0 0.0
  %2727 = vmatprep.subr.mxu0 0.0
  %2728 = vmatpush1.msra.mxu0 0.0
  %2729 = vmatprep.subr.mxu0 0.0
  %2730 = vmatpush1.msra.mxu0 0.0
  %2731 = vmatprep.subr.mxu0 0.0
  %2732 = vmatpush1.msra.mxu0 0.0
  %2733 = vmatprep.subr.mxu0 0.0
  %2734 = vmatpush1.msra.mxu0 0.0
  %2735 = vmatprep.subr.mxu0 0.0
  %2736 = vmatpush1.msra.mxu0 0.0
  %2737 = vmatprep.subr.mxu0 0.0
  %2738 = vmatpush1.msra.mxu0 0.0
  %2739 = vmatprep.subr.mxu0 0.0
  %2740 = vmatpush1.msra.mxu0 0.0
  %2741 = vmatprep.subr.mxu0 0.0
  %2742 = vmatpush1.msra.mxu0 0.0
  %2743 = vmatprep.subr.mxu0 0.0
  %2744 = vmatpush1.msra.mxu0 0.0
  %2745 = vmatprep.subr.mxu0 0.0
  %2746 = vmatpush1.msra.mxu0 0.0
  %2747 = vmatprep.subr.mxu0 0.0
  %2748 = vmatpush1.msra.mxu0 0.0
  %2749 = vmatprep.subr.mxu0 0.0
  %2750 = vmatpush1.msra.mxu0 0.0
  %2751 = vmatprep.subr.mxu0 0.0
  %2752 = vmatpush1.msra.mxu0 0.0
  %2753 = vmatprep.subr.mxu0 0.0
  %2754 = vmatpush1.msra.mxu0 0.0
  %2755 = vmatprep.subr.mxu0 0.0
  %2756 = vmatpush1.msra.mxu0 0.0
  %2757 = vmatprep.subr.mxu0 0.0
  %2758 = vmatpush1.msra.mxu0 0.0
  %2759 = vmatprep.subr.mxu0 0.0
  %2760 = vmatpush1.msra.mxu0 0.0
  %2761 = vmatprep.subr.mxu0 0.0
  %2762 = vmatpush1.msra.mxu0 0.0
  %2763 = vmatprep.subr.mxu0 0.0
  %2764 = vmatpush1.msra.mxu0 0.0
  %2765 = vmatprep.subr.mxu0 0.0
  %2766 = vmatpush1.msra.mxu0 0.0
  %2767 = vmatprep.subr.mxu0 0.0
  %2768 = vmatpush1.msra.mxu0 0.0
  %2769 = vmatprep.mubr.f32.mxu0 0.0
  %2770 = vmatmul.mubr.f32.gmra.mrb[0].mxu0 %v2703
  %v2771 = vpop.f32.mrb[0].mxu0
  %v2772 = vadd.f32 0.0, %v2771
  %v2773 = vpop.f32.mrb[0].mxu0
  %2774 = vdwg.mxu0
  %v2775 = vmul.f32 %v2521, %v2701
  %v2776 = vsub.f32 %v2285, %v2775
  %v2778 = vsel %vm2522, %v2776, 0
  %2780 = vmatprep.subr.mxu0 0.0
  %2781 = vmatpush1.msra.mxu0 %v2422
  %2782 = vmatprep.subr.mxu0 0.0
  %2783 = vmatpush1.msra.mxu0 %v2423
  %2784 = vmatprep.subr.mxu0 0.0
  %2785 = vmatpush1.msra.mxu0 0.0
  %2786 = vmatprep.subr.mxu0 0.0
  %2787 = vmatpush1.msra.mxu0 0.0
  %2788 = vmatprep.subr.mxu0 0.0
  %2789 = vmatpush1.msra.mxu0 0.0
  %2790 = vmatprep.subr.mxu0 0.0
  %2791 = vmatpush1.msra.mxu0 0.0
  %2792 = vmatprep.subr.mxu0 0.0
  %2793 = vmatpush1.msra.mxu0 0.0
  %2794 = vmatprep.subr.mxu0 0.0
  %2795 = vmatpush1.msra.mxu0 0.0
  %2796 = vmatprep.subr.mxu0 0.0
  %2797 = vmatpush1.msra.mxu0 0.0
  %2798 = vmatprep.subr.mxu0 0.0
  %2799 = vmatpush1.msra.mxu0 0.0
  %2800 = vmatprep.subr.mxu0 0.0
  %2801 = vmatpush1.msra.mxu0 0.0
  %2802 = vmatprep.subr.mxu0 0.0
  %2803 = vmatpush1.msra.mxu0 0.0
  %2804 = vmatprep.subr.mxu0 0.0
  %2805 = vmatpush1.msra.mxu0 0.0
  %2806 = vmatprep.subr.mxu0 0.0
  %2807 = vmatpush1.msra.mxu0 0.0
  %2808 = vmatprep.subr.mxu0 0.0
  %2809 = vmatpush1.msra.mxu0 0.0
  %2810 = vmatprep.subr.mxu0 0.0
  %2811 = vmatpush1.msra.mxu0 0.0
  %2812 = vmatprep.subr.mxu0 0.0
  %2813 = vmatpush1.msra.mxu0 0.0
  %2814 = vmatprep.subr.mxu0 0.0
  %2815 = vmatpush1.msra.mxu0 0.0
  %2816 = vmatprep.subr.mxu0 0.0
  %2817 = vmatpush1.msra.mxu0 0.0
  %2818 = vmatprep.subr.mxu0 0.0
  %2819 = vmatpush1.msra.mxu0 0.0
  %2820 = vmatprep.subr.mxu0 0.0
  %2821 = vmatpush1.msra.mxu0 0.0
  %2822 = vmatprep.subr.mxu0 0.0
  %2823 = vmatpush1.msra.mxu0 0.0
  %2824 = vmatprep.subr.mxu0 0.0
  %2825 = vmatpush1.msra.mxu0 0.0
  %2826 = vmatprep.subr.mxu0 0.0
  %2827 = vmatpush1.msra.mxu0 0.0
  %2828 = vmatprep.subr.mxu0 0.0
  %2829 = vmatpush1.msra.mxu0 0.0
  %2830 = vmatprep.subr.mxu0 0.0
  %2831 = vmatpush1.msra.mxu0 0.0
  %2832 = vmatprep.subr.mxu0 0.0
  %2833 = vmatpush1.msra.mxu0 0.0
  %2834 = vmatprep.subr.mxu0 0.0
  %2835 = vmatpush1.msra.mxu0 0.0
  %2836 = vmatprep.subr.mxu0 0.0
  %2837 = vmatpush1.msra.mxu0 0.0
  %2838 = vmatprep.subr.mxu0 0.0
  %2839 = vmatpush1.msra.mxu0 0.0
  %2840 = vmatprep.subr.mxu0 0.0
  %2841 = vmatpush1.msra.mxu0 0.0
  %2842 = vmatprep.subr.mxu0 0.0
  %2843 = vmatpush1.msra.mxu0 0.0
  %2844 = vmatprep.mubr.f32.mxu0 0.0
  %2845 = vmatmul.mubr.f32.gmra.mrb[0].mxu0 %v2778
  %v2846 = vpop.f32.mrb[0].mxu0
  %v2847 = vadd.f32 0.0, %v2846
  %v2848 = vpop.f32.mrb[0].mxu0
  %2849 = vdwg.mxu0
  %v2850 = vlaneseq
  %v2851 = vshrl.u32 %v2850, 7
  %v2852 = vsub.s32 0, %v2851
  %v2853 = vrot.slane %v2772, %v2852
  %v2854 = vmul.f32 %v2282, %v2853
  %v2855 = vmul.f32 %v2283, %v2853
  %v2856 = vlaneseq
  %v2857 = vshrl.u32 %v2856, 7
  %v2858 = vsub.s32 0, %v2857
  %v2859 = vrot.slane %v2847, %v2858
  %v2860 = vadd.f32 %v2854, %v2859
  %v2861 = vadd.f32 %v2855, %v2859
  %vm2862 = vcmp.ge.f32.partialorder %v2860, 0.0
  %vm2863 = vcmp.ge.f32.partialorder %v2861, 0.0
  %v2864 = vmul.f32 %v2860, 0.2
  %v2865 = vmul.f32 %v2861, 0.2
  %v2866 = vsel %vm2862, %v2860, %v2864
  %v2867 = vsel %vm2863, %v2861, %v2865
  %2869 = vrot.lane.b32.xlu0 %v2866, 16
  %v2870 = vpop.permute.xlu0 %2869
  %vm2872 = vcmask 647296
  %2873 = vst.msk [vmem:[#allocation4 + $0x1] sm:$0x1] %vm2872, %v2870
  %vm2874 = vcmask 648321
  %2875 = vst.msk [vmem:[#allocation4 + $0x1] sm:$0x2] %vm2874, %v2870
  %vm2876 = vcmask 649346
  %2877 = vst.msk [vmem:[#allocation4 + $0x1] sm:$0x4] %vm2876, %v2870
  %vm2878 = vcmask 650371
  %2879 = vst.msk [vmem:[#allocation4 + $0x1] sm:$0x8] %vm2878, %v2870
  %vm2880 = vcmask 652421
  %2881 = vst.msk [vmem:[#allocation4 + $0x2] sm:$0x20] %vm2880, %v2870
  %vm2882 = vcmask 653446
  %2883 = vst.msk [vmem:[#allocation4 + $0x2] sm:$0x40] %vm2882, %v2870
  %vm2884 = vcmask 654471
  %2885 = vst.msk [vmem:[#allocation4 + $0x2] sm:$0x80] %vm2884, %v2870
  %2887 = vrot.lane.b32.xlu0 %v2867, 16
  %v2888 = vpop.permute.xlu0 %2887
  %2890 = vst.msk [vmem:[#allocation4 + $0xa] sm:$0x1] %vm2872, %v2888
  %v2891 = vld [vmem:[#allocation4] sm:$0xff]
  %v2892 = vld [vmem:[#allocation4 + $0x8] sm:$0x1]
  %v2893 = vpack.c.bf16 %v2892, %v2891
  %v2894 = vld [vmem:[%s9] sm:$0xf]
  %v2895 = vld [vmem:[%s9 + $0x4] sm:$0xf]
  %v2896 = vld [vmem:[%s9 + $0x8] sm:$0xf]
  %v2897 = vld [vmem:[%s9 + $0xc] sm:$0xf]
  %v2898 = vld [vmem:[%s9 + $0x10] sm:$0xf]
  %v2899 = vld [vmem:[%s9 + $0x14] sm:$0xf]
  %v2900 = vld [vmem:[%s9 + $0x18] sm:$0xf]
  %v2901 = vld [vmem:[%s9 + $0x1c] sm:$0xf]
  %v2902 = vld [vmem:[%s9 + $0x20] sm:$0xf]
  %v2903 = vld [vmem:[%s9 + $0x24] sm:$0xf]
  %v2904 = vld [vmem:[%s9 + $0x28] sm:$0xf]
  %v2905 = vld [vmem:[%s9 + $0x2c] sm:$0xf]
  %v2906 = vld [vmem:[#allocation4 + $0x1] sm:$0xff]
  %v2907 = vld [vmem:[#allocation4 + $0x9] sm:$0x1]
  %v2908 = vpack.c.bf16 %v2907, %v2906
  %s2909 = scalar_lea.vmem %s9, 48
  %v2910 = vld [vmem:[%s2909] sm:$0xf]
  %v2911 = vld [vmem:[%s2909 + $0x4] sm:$0xf]
  %v2912 = vld [vmem:[%s2909 + $0x8] sm:$0xf]
  %v2913 = vld [vmem:[%s2909 + $0xc] sm:$0xf]
  %v2914 = vld [vmem:[%s2909 + $0x10] sm:$0xf]
  %v2915 = vld [vmem:[%s2909 + $0x14] sm:$0xf]
  %v2916 = vld [vmem:[%s2909 + $0x18] sm:$0xf]
  %v2917 = vld [vmem:[%s2909 + $0x1c] sm:$0xf]
  %v2918 = vld [vmem:[%s2909 + $0x20] sm:$0xf]
  %v2919 = vld [vmem:[%s2909 + $0x24] sm:$0xf]
  %v2920 = vld [vmem:[%s2909 + $0x28] sm:$0xf]
  %v2921 = vld [vmem:[%s2909 + $0x2c] sm:$0xf]
  %v2934 = vunpack.c.l.b16 %v2910
  %v2935 = vunpack.c.l.b16 %v2911
  %v2936 = vunpack.c.l.b16 %v2912
  %v2937 = vunpack.c.l.b16 %v2913
  %v2938 = vunpack.c.l.b16 %v2914
  %v2939 = vunpack.c.l.b16 %v2915
  %v2940 = vunpack.c.l.b16 %v2916
  %v2941 = vunpack.c.l.b16 %v2917
  %v2942 = vunpack.c.l.b16 %v2918
  %v2943 = vunpack.c.l.b16 %v2919
  %v2944 = vunpack.c.l.b16 %v2920
  %v2945 = vunpack.c.l.b16 %v2921
  %v2946 = vpack.c.b16 %v2935, %v2934
  %v2947 = vpack.c.b16 %v2937, %v2936
  %v2948 = vpack.c.b16 %v2939, %v2938
  %v2949 = vpack.c.b16 %v2941, %v2940
  %v2950 = vpack.c.b16 %v2943, %v2942
  %v2951 = vpack.c.b16 %v2945, %v2944
  %v2959 = vsel %vm66, %v2908, 0
  %2961 = vmatprep.subr.bf16.mxu0 0
  %2962 = vmatpush1.bf16.msra.mxu0 %v2946
  %2963 = vmatprep.subr.bf16.mxu0 0
  %2964 = vmatpush1.bf16.msra.mxu0 %v2947
  %2965 = vmatprep.subr.bf16.mxu0 0
  %2966 = vmatpush1.bf16.msra.mxu0 %v2948
  %2967 = vmatprep.subr.bf16.mxu0 0
  %2968 = vmatpush1.bf16.msra.mxu0 %v2949
  %2969 = vmatprep.subr.bf16.mxu0 0
  %2970 = vmatpush1.bf16.msra.mxu0 %v2950
  %2971 = vmatprep.subr.bf16.mxu0 0
  %2972 = vmatpush1.bf16.msra.mxu0 %v2951
  %2973 = vmatprep.subr.bf16.mxu0 0
  %2974 = vmatpush1.bf16.msra.mxu0 0
  %2975 = vmatprep.subr.bf16.mxu0 0
  %2976 = vmatpush1.bf16.msra.mxu0 0
  %2977 = vmatprep.subr.bf16.mxu0 0
  %2978 = vmatpush1.bf16.msra.mxu0 0
  %2979 = vmatprep.subr.bf16.mxu0 0
  %2980 = vmatpush1.bf16.msra.mxu0 0
  %2981 = vmatprep.subr.bf16.mxu0 0
  %2982 = vmatpush1.bf16.msra.mxu0 0
  %2983 = vmatprep.subr.bf16.mxu0 0
  %2984 = vmatpush1.bf16.msra.mxu0 0
  %2985 = vmatprep.subr.bf16.mxu0 0
  %2986 = vmatpush1.bf16.msra.mxu0 0
  %2987 = vmatprep.subr.bf16.mxu0 0
  %2988 = vmatpush1.bf16.msra.mxu0 0
  %2989 = vmatprep.subr.bf16.mxu0 0
  %2990 = vmatpush1.bf16.msra.mxu0 0
  %2991 = vmatprep.subr.bf16.mxu0 0
  %2992 = vmatpush1.bf16.msra.mxu0 0
  %2993 = vmatprep.mubr.bf16.mxu0 0
  %2994 = vmatmul.mubr.bf16.gmra.mrb[0].mxu0 %v2959
  %v2995 = vpop.f32.mrb[0].mxu0
  %v2996 = vadd.f32 0.0, %v2995
  %v2997 = vpop.f32.mrb[0].mxu0
  %v2998 = vpop.f32.mrb[0].mxu0
  %v2999 = vadd.f32 0.0, %v2998
  %v3000 = vpop.f32.mrb[0].mxu0
  %3001 = vdwg.mxu0
  %v3014 = vunpack.c.l.b16 %v2894
  %v3015 = vunpack.c.l.b16 %v2895
  %v3016 = vunpack.c.l.b16 %v2896
  %v3017 = vunpack.c.l.b16 %v2897
  %v3018 = vunpack.c.l.b16 %v2898
  %v3019 = vunpack.c.l.b16 %v2899
  %v3020 = vunpack.c.l.b16 %v2900
  %v3021 = vunpack.c.l.b16 %v2901
  %v3022 = vunpack.c.l.b16 %v2902
  %v3023 = vunpack.c.l.b16 %v2903
  %v3024 = vunpack.c.l.b16 %v2904
  %v3025 = vunpack.c.l.b16 %v2905
  %v3026 = vpack.c.b16 %v3015, %v3014
  %v3027 = vpack.c.b16 %v3017, %v3016
  %v3028 = vpack.c.b16 %v3019, %v3018
  %v3029 = vpack.c.b16 %v3021, %v3020
  %v3030 = vpack.c.b16 %v3023, %v3022
  %v3031 = vpack.c.b16 %v3025, %v3024
  %v3039 = vsel %vm66, %v2893, 0
  %3041 = vmatprep.subr.bf16.mxu0 0
  %3042 = vmatpush1.bf16.msra.mxu0 %v3026
  %3043 = vmatprep.subr.bf16.mxu0 0
  %3044 = vmatpush1.bf16.msra.mxu0 %v3027
  %3045 = vmatprep.subr.bf16.mxu0 0
  %3046 = vmatpush1.bf16.msra.mxu0 %v3028
  %3047 = vmatprep.subr.bf16.mxu0 0
  %3048 = vmatpush1.bf16.msra.mxu0 %v3029
  %3049 = vmatprep.subr.bf16.mxu0 0
  %3050 = vmatpush1.bf16.msra.mxu0 %v3030
  %3051 = vmatprep.subr.bf16.mxu0 0
  %3052 = vmatpush1.bf16.msra.mxu0 %v3031
  %3053 = vmatprep.subr.bf16.mxu0 0
  %3054 = vmatpush1.bf16.msra.mxu0 0
  %3055 = vmatprep.subr.bf16.mxu0 0
  %3056 = vmatpush1.bf16.msra.mxu0 0
  %3057 = vmatprep.subr.bf16.mxu0 0
  %3058 = vmatpush1.bf16.msra.mxu0 0
  %3059 = vmatprep.subr.bf16.mxu0 0
  %3060 = vmatpush1.bf16.msra.mxu0 0
  %3061 = vmatprep.subr.bf16.mxu0 0
  %3062 = vmatpush1.bf16.msra.mxu0 0
  %3063 = vmatprep.subr.bf16.mxu0 0
  %3064 = vmatpush1.bf16.msra.mxu0 0
  %3065 = vmatprep.subr.bf16.mxu0 0
  %3066 = vmatpush1.bf16.msra.mxu0 0
  %3067 = vmatprep.subr.bf16.mxu0 0
  %3068 = vmatpush1.bf16.msra.mxu0 0
  %3069 = vmatprep.subr.bf16.mxu0 0
  %3070 = vmatpush1.bf16.msra.mxu0 0
  %3071 = vmatprep.subr.bf16.mxu0 0
  %3072 = vmatpush1.bf16.msra.mxu0 0
  %3073 = vmatprep.mubr.bf16.mxu0 0
  %3074 = vmatmul.mubr.bf16.gmra.mrb[0].mxu0 %v3039
  %v3075 = vpop.f32.mrb[0].mxu0
  %v3076 = vadd.f32 %v2996, %v3075
  %v3077 = vpop.f32.mrb[0].mxu0
  %v3078 = vpop.f32.mrb[0].mxu0
  %v3079 = vadd.f32 %v2999, %v3078
  %v3080 = vpop.f32.mrb[0].mxu0
  %3081 = vdwg.mxu0
  %v3082 = vld [vmem:[#allocation4 + $0x2] sm:$0xff]
  %v3083 = vld [vmem:[#allocation4 + $0xa] sm:$0x1]
  %v3084 = vpack.c.bf16 %v3083, %v3082
  %s3085 = scalar_lea.vmem %s9, 96
  %v3086 = vld [vmem:[%s3085] sm:$0xf]
  %v3087 = vld [vmem:[%s3085 + $0x4] sm:$0xf]
  %v3088 = vld [vmem:[%s3085 + $0x8] sm:$0xf]
  %v3089 = vld [vmem:[%s3085 + $0xc] sm:$0xf]
  %v3090 = vld [vmem:[%s3085 + $0x10] sm:$0xf]
  %v3091 = vld [vmem:[%s3085 + $0x14] sm:$0xf]
  %v3092 = vld [vmem:[%s3085 + $0x18] sm:$0xf]
  %v3093 = vld [vmem:[%s3085 + $0x1c] sm:$0xf]
  %v3094 = vld [vmem:[%s3085 + $0x20] sm:$0xf]
  %v3095 = vld [vmem:[%s3085 + $0x24] sm:$0xf]
  %v3096 = vld [vmem:[%s3085 + $0x28] sm:$0xf]
  %v3097 = vld [vmem:[%s3085 + $0x2c] sm:$0xf]
  %v3110 = vunpack.c.l.b16 %v3086
  %v3111 = vunpack.c.l.b16 %v3087
  %v3112 = vunpack.c.l.b16 %v3088
  %v3113 = vunpack.c.l.b16 %v3089
  %v3114 = vunpack.c.l.b16 %v3090
  %v3115 = vunpack.c.l.b16 %v3091
  %v3116 = vunpack.c.l.b16 %v3092
  %v3117 = vunpack.c.l.b16 %v3093
  %v3118 = vunpack.c.l.b16 %v3094
  %v3119 = vunpack.c.l.b16 %v3095
  %v3120 = vunpack.c.l.b16 %v3096
  %v3121 = vunpack.c.l.b16 %v3097
  %v3122 = vpack.c.b16 %v3111, %v3110
  %v3123 = vpack.c.b16 %v3113, %v3112
  %v3124 = vpack.c.b16 %v3115, %v3114
  %v3125 = vpack.c.b16 %v3117, %v3116
  %v3126 = vpack.c.b16 %v3119, %v3118
  %v3127 = vpack.c.b16 %v3121, %v3120
  %v3135 = vsel %vm66, %v3084, 0
  %3137 = vmatprep.subr.bf16.mxu0 0
  %3138 = vmatpush1.bf16.msra.mxu0 %v3122
  %3139 = vmatprep.subr.bf16.mxu0 0
  %3140 = vmatpush1.bf16.msra.mxu0 %v3123
  %3141 = vmatprep.subr.bf16.mxu0 0
  %3142 = vmatpush1.bf16.msra.mxu0 %v3124
  %3143 = vmatprep.subr.bf16.mxu0 0
  %3144 = vmatpush1.bf16.msra.mxu0 %v3125
  %3145 = vmatprep.subr.bf16.mxu0 0
  %3146 = vmatpush1.bf16.msra.mxu0 %v3126
  %3147 = vmatprep.subr.bf16.mxu0 0
  %3148 = vmatpush1.bf16.msra.mxu0 %v3127
  %3149 = vmatprep.subr.bf16.mxu0 0
  %3150 = vmatpush1.bf16.msra.mxu0 0
  %3151 = vmatprep.subr.bf16.mxu0 0
  %3152 = vmatpush1.bf16.msra.mxu0 0
  %3153 = vmatprep.subr.bf16.mxu0 0
  %3154 = vmatpush1.bf16.msra.mxu0 0
  %3155 = vmatprep.subr.bf16.mxu0 0
  %3156 = vmatpush1.bf16.msra.mxu0 0
  %3157 = vmatprep.subr.bf16.mxu0 0
  %3158 = vmatpush1.bf16.msra.mxu0 0
  %3159 = vmatprep.subr.bf16.mxu0 0
  %3160 = vmatpush1.bf16.msra.mxu0 0
  %3161 = vmatprep.subr.bf16.mxu0 0
  %3162 = vmatpush1.bf16.msra.mxu0 0
  %3163 = vmatprep.subr.bf16.mxu0 0
  %3164 = vmatpush1.bf16.msra.mxu0 0
  %3165 = vmatprep.subr.bf16.mxu0 0
  %3166 = vmatpush1.bf16.msra.mxu0 0
  %3167 = vmatprep.subr.bf16.mxu0 0
  %3168 = vmatpush1.bf16.msra.mxu0 0
  %3169 = vmatprep.mubr.bf16.mxu0 0
  %3170 = vmatmul.mubr.bf16.gmra.mrb[0].mxu0 %v3135
  %v3171 = vpop.f32.mrb[0].mxu0
  %v3172 = vadd.f32 0.0, %v3171
  %v3173 = vpop.f32.mrb[0].mxu0
  %v3174 = vpop.f32.mrb[0].mxu0
  %v3175 = vadd.f32 0.0, %v3174
  %v3176 = vpop.f32.mrb[0].mxu0
  %3177 = vdwg.mxu0
  %v3178 = vadd.f32 %v3076, %v3172
  %v3179 = vadd.f32 %v3079, %v3175
  %v3180 = vld [vmem:[#allocation4 + $0x3] sm:$0xff]
  %v3181 = vld [vmem:[#allocation4 + $0xb] sm:$0x1]
  %v3182 = vpack.c.bf16 %v3181, %v3180
  %s3183 = scalar_lea.vmem %s9, 144
  %v3184 = vld [vmem:[%s3183] sm:$0xf]
  %v3185 = vld [vmem:[%s3183 + $0x4] sm:$0xf]
  %v3186 = vld [vmem:[%s3183 + $0x8] sm:$0xf]
  %v3187 = vld [vmem:[%s3183 + $0xc] sm:$0xf]
  %v3188 = vld [vmem:[%s3183 + $0x10] sm:$0xf]
  %v3189 = vld [vmem:[%s3183 + $0x14] sm:$0xf]
  %v3190 = vld [vmem:[%s3183 + $0x18] sm:$0xf]
  %v3191 = vld [vmem:[%s3183 + $0x1c] sm:$0xf]
  %v3192 = vld [vmem:[%s3183 + $0x20] sm:$0xf]
  %v3193 = vld [vmem:[%s3183 + $0x24] sm:$0xf]
  %v3194 = vld [vmem:[%s3183 + $0x28] sm:$0xf]
  %v3195 = vld [vmem:[%s3183 + $0x2c] sm:$0xf]
  %v3208 = vunpack.c.l.b16 %v3184
  %v3209 = vunpack.c.l.b16 %v3185
  %v3210 = vunpack.c.l.b16 %v3186
  %v3211 = vunpack.c.l.b16 %v3187
  %v3212 = vunpack.c.l.b16 %v3188
  %v3213 = vunpack.c.l.b16 %v3189
  %v3214 = vunpack.c.l.b16 %v3190
  %v3215 = vunpack.c.l.b16 %v3191
  %v3216 = vunpack.c.l.b16 %v3192
  %v3217 = vunpack.c.l.b16 %v3193
  %v3218 = vunpack.c.l.b16 %v3194
  %v3219 = vunpack.c.l.b16 %v3195
  %v3220 = vpack.c.b16 %v3209, %v3208
  %v3221 = vpack.c.b16 %v3211, %v3210
  %v3222 = vpack.c.b16 %v3213, %v3212
  %v3223 = vpack.c.b16 %v3215, %v3214
  %v3224 = vpack.c.b16 %v3217, %v3216
  %v3225 = vpack.c.b16 %v3219, %v3218
  %v3233 = vsel %vm66, %v3182, 0
  %3235 = vmatprep.subr.bf16.mxu0 0
  %3236 = vmatpush1.bf16.msra.mxu0 %v3220
  %3237 = vmatprep.subr.bf16.mxu0 0
  %3238 = vmatpush1.bf16.msra.mxu0 %v3221
  %3239 = vmatprep.subr.bf16.mxu0 0
  %3240 = vmatpush1.bf16.msra.mxu0 %v3222
  %3241 = vmatprep.subr.bf16.mxu0 0
  %3242 = vmatpush1.bf16.msra.mxu0 %v3223
  %3243 = vmatprep.subr.bf16.mxu0 0
  %3244 = vmatpush1.bf16.msra.mxu0 %v3224
  %3245 = vmatprep.subr.bf16.mxu0 0
  %3246 = vmatpush1.bf16.msra.mxu0 %v3225
  %3247 = vmatprep.subr.bf16.mxu0 0
  %3248 = vmatpush1.bf16.msra.mxu0 0
  %3249 = vmatprep.subr.bf16.mxu0 0
  %3250 = vmatpush1.bf16.msra.mxu0 0
  %3251 = vmatprep.subr.bf16.mxu0 0
  %3252 = vmatpush1.bf16.msra.mxu0 0
  %3253 = vmatprep.subr.bf16.mxu0 0
  %3254 = vmatpush1.bf16.msra.mxu0 0
  %3255 = vmatprep.subr.bf16.mxu0 0
  %3256 = vmatpush1.bf16.msra.mxu0 0
  %3257 = vmatprep.subr.bf16.mxu0 0
  %3258 = vmatpush1.bf16.msra.mxu0 0
  %3259 = vmatprep.subr.bf16.mxu0 0
  %3260 = vmatpush1.bf16.msra.mxu0 0
  %3261 = vmatprep.subr.bf16.mxu0 0
  %3262 = vmatpush1.bf16.msra.mxu0 0
  %3263 = vmatprep.subr.bf16.mxu0 0
  %3264 = vmatpush1.bf16.msra.mxu0 0
  %3265 = vmatprep.subr.bf16.mxu0 0
  %3266 = vmatpush1.bf16.msra.mxu0 0
  %3267 = vmatprep.mubr.bf16.mxu0 0
  %3268 = vmatmul.mubr.bf16.gmra.mrb[0].mxu0 %v3233
  %v3269 = vpop.f32.mrb[0].mxu0
  %v3270 = vadd.f32 0.0, %v3269
  %v3271 = vpop.f32.mrb[0].mxu0
  %v3272 = vpop.f32.mrb[0].mxu0
  %v3273 = vadd.f32 0.0, %v3272
  %v3274 = vpop.f32.mrb[0].mxu0
  %3275 = vdwg.mxu0
  %v3276 = vadd.f32 %v3178, %v3270
  %v3277 = vadd.f32 %v3179, %v3273
  %v3278 = vld [vmem:[%s10] sm:$0x1]
  %v3279 = vld [vmem:[%s11] sm:$0x1]
  %v3280 = vadd.s32 %v1298, 64
  %v3281 = vadd.s32 %v1298, 72
  %v3282 = vadd.s32 %v1298, 80
  %v3283 = vadd.s32 %v1298, 88
  %vm3284 = vcmp.lt.s32.totalorder %v1298, 0
  %v3285 = vsub.s32 0, %v1298
  %v3286 = vsel %vm3284, %v3285, %v1298
  %v3287 = vshrl.u32 %v3286, 5
  %v3288 = vand.u32 %v3286, 31
  %v3289 = vsub.s32 0, %v3288
  %v3290 = vsel %vm3284, %v3289, %v3288
  %vm3291 = vcmp.lt.s32.totalorder %v1299, 0
  %v3292 = vsub.s32 0, %v1299
  %v3293 = vsel %vm3291, %v3292, %v1299
  %v3294 = vshrl.u32 %v3293, 5
  %v3295 = vand.u32 %v3293, 31
  %v3296 = vsub.s32 0, %v3295
  %v3297 = vsel %vm3291, %v3296, %v3295
  %vm3298 = vcmp.lt.s32.totalorder %v1300, 0
  %v3299 = vsub.s32 0, %v1300
  %v3300 = vsel %vm3298, %v3299, %v1300
  %v3301 = vshrl.u32 %v3300, 5
  %v3302 = vand.u32 %v3300, 31
  %v3303 = vsub.s32 0, %v3302
  %v3304 = vsel %vm3298, %v3303, %v3302
  %vm3305 = vcmp.lt.s32.totalorder %v1301, 0
  %v3306 = vsub.s32 0, %v1301
  %v3307 = vsel %vm3305, %v3306, %v1301
  %v3308 = vshrl.u32 %v3307, 5
  %v3309 = vand.u32 %v3307, 31
  %v3310 = vsub.s32 0, %v3309
  %v3311 = vsel %vm3305, %v3310, %v3309
  %vm3312 = vcmp.lt.s32.totalorder %v1302, 0
  %v3313 = vsub.s32 0, %v1302
  %v3314 = vsel %vm3312, %v3313, %v1302
  %v3315 = vshrl.u32 %v3314, 5
  %v3316 = vand.u32 %v3314, 31
  %v3317 = vsub.s32 0, %v3316
  %v3318 = vsel %vm3312, %v3317, %v3316
  %vm3319 = vcmp.lt.s32.totalorder %v1303, 0
  %v3320 = vsub.s32 0, %v1303
  %v3321 = vsel %vm3319, %v3320, %v1303
  %v3322 = vshrl.u32 %v3321, 5
  %v3323 = vand.u32 %v3321, 31
  %v3324 = vsub.s32 0, %v3323
  %v3325 = vsel %vm3319, %v3324, %v3323
  %vm3326 = vcmp.lt.s32.totalorder %v1304, 0
  %v3327 = vsub.s32 0, %v1304
  %v3328 = vsel %vm3326, %v3327, %v1304
  %v3329 = vshrl.u32 %v3328, 5
  %v3330 = vand.u32 %v3328, 31
  %v3331 = vsub.s32 0, %v3330
  %v3332 = vsel %vm3326, %v3331, %v3330
  %vm3333 = vcmp.lt.s32.totalorder %v1305, 0
  %v3334 = vsub.s32 0, %v1305
  %v3335 = vsel %vm3333, %v3334, %v1305
  %v3336 = vshrl.u32 %v3335, 5
  %v3337 = vand.u32 %v3335, 31
  %v3338 = vsub.s32 0, %v3337
  %v3339 = vsel %vm3333, %v3338, %v3337
  %vm3340 = vcmp.lt.s32.totalorder %v3280, 0
  %v3341 = vsub.s32 0, %v3280
  %v3342 = vsel %vm3340, %v3341, %v3280
  %v3343 = vshrl.u32 %v3342, 5
  %v3344 = vand.u32 %v3342, 31
  %v3345 = vsub.s32 0, %v3344
  %v3346 = vsel %vm3340, %v3345, %v3344
  %vm3347 = vcmp.lt.s32.totalorder %v3281, 0
  %v3348 = vsub.s32 0, %v3281
  %v3349 = vsel %vm3347, %v3348, %v3281
  %v3350 = vshrl.u32 %v3349, 5
  %v3351 = vand.u32 %v3349, 31
  %v3352 = vsub.s32 0, %v3351
  %v3353 = vsel %vm3347, %v3352, %v3351
  %vm3354 = vcmp.lt.s32.totalorder %v3282, 0
  %v3355 = vsub.s32 0, %v3282
  %v3356 = vsel %vm3354, %v3355, %v3282
  %v3357 = vshrl.u32 %v3356, 5
  %v3358 = vand.u32 %v3356, 31
  %v3359 = vsub.s32 0, %v3358
  %v3360 = vsel %vm3354, %v3359, %v3358
  %vm3361 = vcmp.lt.s32.totalorder %v3283, 0
  %v3362 = vsub.s32 0, %v3283
  %v3363 = vsel %vm3361, %v3362, %v3283
  %v3364 = vshrl.u32 %v3363, 5
  %v3365 = vand.u32 %v3363, 31
  %v3366 = vsub.s32 0, %v3365
  %v3367 = vsel %vm3361, %v3366, %v3365
  %vm3368 = vcmp.ne.s32.totalorder %v3290, 0
  %vm3369 = vcmp.ne.s32.totalorder %v3297, 0
  %vm3370 = vcmp.ne.s32.totalorder %v3304, 0
  %vm3371 = vcmp.ne.s32.totalorder %v3311, 0
  %vm3372 = vcmp.ne.s32.totalorder %v3318, 0
  %vm3373 = vcmp.ne.s32.totalorder %v3325, 0
  %vm3374 = vcmp.ne.s32.totalorder %v3332, 0
  %vm3375 = vcmp.ne.s32.totalorder %v3339, 0
  %vm3376 = vcmp.ne.s32.totalorder %v3346, 0
  %vm3377 = vcmp.ne.s32.totalorder %v3353, 0
  %vm3378 = vcmp.ne.s32.totalorder %v3360, 0
  %vm3379 = vcmp.ne.s32.totalorder %v3367, 0
  %vm3380 = vcmp.lt.s32.totalorder %v3290, 0
  %vm3381 = vcmp.lt.s32.totalorder %v3297, 0
  %vm3382 = vcmp.lt.s32.totalorder %v3304, 0
  %vm3383 = vcmp.lt.s32.totalorder %v3311, 0
  %vm3384 = vcmp.lt.s32.totalorder %v3318, 0
  %vm3385 = vcmp.lt.s32.totalorder %v3325, 0
  %vm3386 = vcmp.lt.s32.totalorder %v3332, 0
  %vm3387 = vcmp.lt.s32.totalorder %v3339, 0
  %vm3388 = vcmp.lt.s32.totalorder %v3346, 0
  %vm3389 = vcmp.lt.s32.totalorder %v3353, 0
  %vm3390 = vcmp.lt.s32.totalorder %v3360, 0
  %vm3391 = vcmp.lt.s32.totalorder %v3367, 0
  %vm3392 = vmand %vm3380, %vm3368
  %vm3393 = vmand %vm3381, %vm3369
  %vm3394 = vmand %vm3382, %vm3370
  %vm3395 = vmand %vm3383, %vm3371
  %vm3396 = vmand %vm3384, %vm3372
  %vm3397 = vmand %vm3385, %vm3373
  %vm3398 = vmand %vm3386, %vm3374
  %vm3399 = vmand %vm3387, %vm3375
  %vm3400 = vmand %vm3388, %vm3376
  %vm3401 = vmand %vm3389, %vm3377
  %vm3402 = vmand %vm3390, %vm3378
  %vm3403 = vmand %vm3391, %vm3379
  %v3404 = vadd.s32 %v3290, 32
  %v3405 = vadd.s32 %v3297, 32
  %v3406 = vadd.s32 %v3304, 32
  %v3407 = vadd.s32 %v3311, 32
  %v3408 = vadd.s32 %v3318, 32
  %v3409 = vadd.s32 %v3325, 32
  %v3410 = vadd.s32 %v3332, 32
  %v3411 = vadd.s32 %v3339, 32
  %v3412 = vadd.s32 %v3346, 32
  %v3413 = vadd.s32 %v3353, 32
  %v3414 = vadd.s32 %v3360, 32
  %v3415 = vadd.s32 %v3367, 32
  %v3416 = vsel %vm3392, %v3404, %v3290
  %v3417 = vsel %vm3393, %v3405, %v3297
  %v3418 = vsel %vm3394, %v3406, %v3304
  %v3419 = vsel %vm3395, %v3407, %v3311
  %v3420 = vsel %vm3396, %v3408, %v3318
  %v3421 = vsel %vm3397, %v3409, %v3325
  %v3422 = vsel %vm3398, %v3410, %v3332
  %v3423 = vsel %vm3399, %v3411, %v3339
  %v3424 = vsel %vm3400, %v3412, %v3346
  %v3425 = vsel %vm3401, %v3413, %v3353
  %v3426 = vsel %vm3402, %v3414, %v3360
  %v3427 = vsel %vm3403, %v3415, %v3367
  %vm3428 = vcmp.eq.s32.totalorder %v3416, %v1307
  %vm3429 = vcmp.eq.s32.totalorder %v3417, %v1307
  %vm3430 = vcmp.eq.s32.totalorder %v3418, %v1307
  %vm3431 = vcmp.eq.s32.totalorder %v3419, %v1307
  %vm3432 = vcmp.eq.s32.totalorder %v3420, %v1307
  %vm3433 = vcmp.eq.s32.totalorder %v3421, %v1307
  %vm3434 = vcmp.eq.s32.totalorder %v3422, %v1307
  %vm3435 = vcmp.eq.s32.totalorder %v3423, %v1307
  %vm3436 = vcmp.eq.s32.totalorder %v3424, %v1307
  %vm3437 = vcmp.eq.s32.totalorder %v3425, %v1307
  %vm3438 = vcmp.eq.s32.totalorder %v3426, %v1307
  %vm3439 = vcmp.eq.s32.totalorder %v3427, %v1307
  %v3440 = vsel %vm3428, 1, 0
  %v3441 = vsel %vm3429, 1, 0
  %v3442 = vsel %vm3430, 1, 0
  %v3443 = vsel %vm3431, 1, 0
  %v3444 = vsel %vm3432, 1, 0
  %v3445 = vsel %vm3433, 1, 0
  %v3446 = vsel %vm3434, 1, 0
  %v3447 = vsel %vm3435, 1, 0
  %v3448 = vsel %vm3436, 1, 0
  %v3449 = vsel %vm3437, 1, 0
  %v3450 = vsel %vm3438, 1, 0
  %v3451 = vsel %vm3439, 1, 0
  %v3452 = vcvt.s32.f32 %v3440
  %v3453 = vcvt.s32.f32 %v3441
  %v3454 = vcvt.s32.f32 %v3442
  %v3455 = vcvt.s32.f32 %v3443
  %v3456 = vcvt.s32.f32 %v3444
  %v3457 = vcvt.s32.f32 %v3445
  %v3458 = vcvt.s32.f32 %v3446
  %v3459 = vcvt.s32.f32 %v3447
  %v3460 = vcvt.s32.f32 %v3448
  %v3461 = vcvt.s32.f32 %v3449
  %v3462 = vcvt.s32.f32 %v3450
  %v3463 = vcvt.s32.f32 %v3451
  %vm3464 = vcmp.lt.s32.totalorder %v1307, 0
  %v3465 = vsub.s32 0, %v1307
  %v3466 = vsel %vm3464, %v3465, %v1307
  %v3467 = vshrl.u32 %v3466, 5
  %v3468 = vand.u32 %v3466, 31
  %v3469 = vsub.s32 0, %v3468
  %v3470 = vsel %vm3464, %v3469, %v3468
  %vm3471 = vcmp.ne.s32.totalorder %v3470, 0
  %vm3472 = vcmp.lt.s32.totalorder %v3470, 0
  %vm3473 = vmand %vm3472, %vm3471
  %v3474 = vadd.s32 %v3470, 32
  %v3475 = vsel %vm3473, %v3474, %v3470
  %vm3476 = vcmp.eq.s32.totalorder %v3475, %v1298
  %vm3477 = vcmp.eq.s32.totalorder %v3475, %v1299
  %vm3478 = vcmp.eq.s32.totalorder %v3475, %v1300
  %vm3479 = vcmp.eq.s32.totalorder %v3475, %v1301
  %v3480 = vsel %vm3476, 1, 0
  %v3481 = vsel %vm3477, 1, 0
  %v3482 = vsel %vm3478, 1, 0
  %v3483 = vsel %vm3479, 1, 0
  %v3484 = vcvt.s32.f32 %v3480
  %v3485 = vcvt.s32.f32 %v3481
  %v3486 = vcvt.s32.f32 %v3482
  %v3487 = vcvt.s32.f32 %v3483
  %vm3488 = vcmask 780288
  %v3489 = vsel %vm3488, %v3276, 0.0
  %v3490 = vrot.slane %v3489, 4
  %v3491 = vadd.f32 %v3489, %v3490
  %v3492 = vrot.slane %v3491, 2
  %v3493 = vadd.f32 %v3491, %v3492
  %v3494 = vrot.slane %v3493, 1
  %v3495 = vadd.f32 %v3493, %v3494
  %v3498 = vrot.slane %v3276, 6
  %v3499 = vrot.slane %v3277, 6
  %v3500 = vsel %vm71, %v3498, %v3499
  %v3502 = vsel %vm3488, %v3500, 0.0
  %v3503 = vrot.slane %v3502, 4
  %v3504 = vadd.f32 %v3502, %v3503
  %v3505 = vrot.slane %v3504, 2
  %v3506 = vadd.f32 %v3504, %v3505
  %v3507 = vrot.slane %v3506, 1
  %v3508 = vadd.f32 %v3506, %v3507
  %v3509 = vadd.f32 %v3495, %v3508
  %v3511 = vsel %vm66, %v3509, 0
  %3513 = vmatprep.subr.mxu0 0.0
  %3514 = vmatpush1.msra.mxu0 %v3452
  %3515 = vmatprep.subr.mxu0 0.0
  %3516 = vmatpush1.msra.mxu0 %v3453
  %3517 = vmatprep.subr.mxu0 0.0
  %3518 = vmatpush1.msra.mxu0 %v3454
  %3519 = vmatprep.subr.mxu0 0.0
  %3520 = vmatpush1.msra.mxu0 %v3455
  %3521 = vmatprep.subr.mxu0 0.0
  %3522 = vmatpush1.msra.mxu0 %v3456
  %3523 = vmatprep.subr.mxu0 0.0
  %3524 = vmatpush1.msra.mxu0 %v3457
  %3525 = vmatprep.subr.mxu0 0.0
  %3526 = vmatpush1.msra.mxu0 %v3458
  %3527 = vmatprep.subr.mxu0 0.0
  %3528 = vmatpush1.msra.mxu0 %v3459
  %3529 = vmatprep.subr.mxu0 0.0
  %3530 = vmatpush1.msra.mxu0 %v3460
  %3531 = vmatprep.subr.mxu0 0.0
  %3532 = vmatpush1.msra.mxu0 %v3461
  %3533 = vmatprep.subr.mxu0 0.0
  %3534 = vmatpush1.msra.mxu0 %v3462
  %3535 = vmatprep.subr.mxu0 0.0
  %3536 = vmatpush1.msra.mxu0 %v3463
  %3537 = vmatprep.subr.mxu0 0.0
  %3538 = vmatpush1.msra.mxu0 0.0
  %3539 = vmatprep.subr.mxu0 0.0
  %3540 = vmatpush1.msra.mxu0 0.0
  %3541 = vmatprep.subr.mxu0 0.0
  %3542 = vmatpush1.msra.mxu0 0.0
  %3543 = vmatprep.subr.mxu0 0.0
  %3544 = vmatpush1.msra.mxu0 0.0
  %3545 = vmatprep.subr.mxu0 0.0
  %3546 = vmatpush1.msra.mxu0 0.0
  %3547 = vmatprep.subr.mxu0 0.0
  %3548 = vmatpush1.msra.mxu0 0.0
  %3549 = vmatprep.subr.mxu0 0.0
  %3550 = vmatpush1.msra.mxu0 0.0
  %3551 = vmatprep.subr.mxu0 0.0
  %3552 = vmatpush1.msra.mxu0 0.0
  %3553 = vmatprep.subr.mxu0 0.0
  %3554 = vmatpush1.msra.mxu0 0.0
  %3555 = vmatprep.subr.mxu0 0.0
  %3556 = vmatpush1.msra.mxu0 0.0
  %3557 = vmatprep.subr.mxu0 0.0
  %3558 = vmatpush1.msra.mxu0 0.0
  %3559 = vmatprep.subr.mxu0 0.0
  %3560 = vmatpush1.msra.mxu0 0.0
  %3561 = vmatprep.subr.mxu0 0.0
  %3562 = vmatpush1.msra.mxu0 0.0
  %3563 = vmatprep.subr.mxu0 0.0
  %3564 = vmatpush1.msra.mxu0 0.0
  %3565 = vmatprep.subr.mxu0 0.0
  %3566 = vmatpush1.msra.mxu0 0.0
  %3567 = vmatprep.subr.mxu0 0.0
  %3568 = vmatpush1.msra.mxu0 0.0
  %3569 = vmatprep.subr.mxu0 0.0
  %3570 = vmatpush1.msra.mxu0 0.0
  %3571 = vmatprep.subr.mxu0 0.0
  %3572 = vmatpush1.msra.mxu0 0.0
  %3573 = vmatprep.subr.mxu0 0.0
  %3574 = vmatpush1.msra.mxu0 0.0
  %3575 = vmatprep.subr.mxu0 0.0
  %3576 = vmatpush1.msra.mxu0 0.0
  %3577 = vmatprep.mubr.f32.mxu0 0.0
  %3578 = vmatmul.mubr.f32.gmra.mrb[0].mxu0 %v3511
  %v3579 = vpop.f32.mrb[0].mxu0
  %v3580 = vadd.f32 0.0, %v3579
  %v3581 = vpop.f32.mrb[0].mxu0
  %3582 = vdwg.mxu0
  %v3583 = vrcp.pop 18.0
  %v3584 = vmul.f32 %v3580, %v3583
  %vm3585 = vcmask 261120
  %v3587 = vsel %vm3585, %v3584, 0
  %3589 = vmatprep.subr.mxu0 0.0
  %3590 = vmatpush1.msra.mxu0 %v3484
  %3591 = vmatprep.subr.mxu0 0.0
  %3592 = vmatpush1.msra.mxu0 %v3485
  %3593 = vmatprep.subr.mxu0 0.0
  %3594 = vmatpush1.msra.mxu0 %v3486
  %3595 = vmatprep.subr.mxu0 0.0
  %3596 = vmatpush1.msra.mxu0 %v3487
  %3597 = vmatprep.subr.mxu0 0.0
  %3598 = vmatpush1.msra.mxu0 0.0
  %3599 = vmatprep.subr.mxu0 0.0
  %3600 = vmatpush1.msra.mxu0 0.0
  %3601 = vmatprep.subr.mxu0 0.0
  %3602 = vmatpush1.msra.mxu0 0.0
  %3603 = vmatprep.subr.mxu0 0.0
  %3604 = vmatpush1.msra.mxu0 0.0
  %3605 = vmatprep.subr.mxu0 0.0
  %3606 = vmatpush1.msra.mxu0 0.0
  %3607 = vmatprep.subr.mxu0 0.0
  %3608 = vmatpush1.msra.mxu0 0.0
  %3609 = vmatprep.subr.mxu0 0.0
  %3610 = vmatpush1.msra.mxu0 0.0
  %3611 = vmatprep.subr.mxu0 0.0
  %3612 = vmatpush1.msra.mxu0 0.0
  %3613 = vmatprep.subr.mxu0 0.0
  %3614 = vmatpush1.msra.mxu0 0.0
  %3615 = vmatprep.subr.mxu0 0.0
  %3616 = vmatpush1.msra.mxu0 0.0
  %3617 = vmatprep.subr.mxu0 0.0
  %3618 = vmatpush1.msra.mxu0 0.0
  %3619 = vmatprep.subr.mxu0 0.0
  %3620 = vmatpush1.msra.mxu0 0.0
  %3621 = vmatprep.subr.mxu0 0.0
  %3622 = vmatpush1.msra.mxu0 0.0
  %3623 = vmatprep.subr.mxu0 0.0
  %3624 = vmatpush1.msra.mxu0 0.0
  %3625 = vmatprep.subr.mxu0 0.0
  %3626 = vmatpush1.msra.mxu0 0.0
  %3627 = vmatprep.subr.mxu0 0.0
  %3628 = vmatpush1.msra.mxu0 0.0
  %3629 = vmatprep.subr.mxu0 0.0
  %3630 = vmatpush1.msra.mxu0 0.0
  %3631 = vmatprep.subr.mxu0 0.0
  %3632 = vmatpush1.msra.mxu0 0.0
  %3633 = vmatprep.subr.mxu0 0.0
  %3634 = vmatpush1.msra.mxu0 0.0
  %3635 = vmatprep.subr.mxu0 0.0
  %3636 = vmatpush1.msra.mxu0 0.0
  %3637 = vmatprep.subr.mxu0 0.0
  %3638 = vmatpush1.msra.mxu0 0.0
  %3639 = vmatprep.subr.mxu0 0.0
  %3640 = vmatpush1.msra.mxu0 0.0
  %3641 = vmatprep.subr.mxu0 0.0
  %3642 = vmatpush1.msra.mxu0 0.0
  %3643 = vmatprep.subr.mxu0 0.0
  %3644 = vmatpush1.msra.mxu0 0.0
  %3645 = vmatprep.subr.mxu0 0.0
  %3646 = vmatpush1.msra.mxu0 0.0
  %3647 = vmatprep.subr.mxu0 0.0
  %3648 = vmatpush1.msra.mxu0 0.0
  %3649 = vmatprep.subr.mxu0 0.0
  %3650 = vmatpush1.msra.mxu0 0.0
  %3651 = vmatprep.subr.mxu0 0.0
  %3652 = vmatpush1.msra.mxu0 0.0
  %3653 = vmatprep.mubr.f32.mxu0 0.0
  %3654 = vmatmul.mubr.f32.gmra.mrb[0].mxu0 %v3587
  %v3655 = vpop.f32.mrb[0].mxu0
  %v3656 = vadd.f32 0.0, %v3655
  %v3657 = vpop.f32.mrb[0].mxu0
  %3658 = vdwg.mxu0
  %v3659 = vlaneseq
  %v3660 = vshrl.u32 %v3659, 7
  %v3661 = vsub.s32 0, %v3660
  %v3662 = vrot.slane %v3656, %v3661
  %v3663 = vsub.f32 %v3276, %v3662
  %v3664 = vmul.f32 %v3663, %v3663
  %v3665 = vsel %vm3488, %v3664, 0.0
  %v3666 = vrot.slane %v3665, 4
  %v3667 = vadd.f32 %v3665, %v3666
  %v3668 = vrot.slane %v3667, 2
  %v3669 = vadd.f32 %v3667, %v3668
  %v3670 = vrot.slane %v3669, 1
  %v3671 = vadd.f32 %v3669, %v3670
  %v3672 = vsub.f32 %v3277, %v3662
  %v3673 = vmul.f32 %v3672, %v3672
  %v3676 = vrot.slane %v3664, 6
  %v3677 = vrot.slane %v3673, 6
  %v3678 = vsel %vm71, %v3676, %v3677
  %v3680 = vsel %vm3488, %v3678, 0.0
  %v3681 = vrot.slane %v3680, 4
  %v3682 = vadd.f32 %v3680, %v3681
  %v3683 = vrot.slane %v3682, 2
  %v3684 = vadd.f32 %v3682, %v3683
  %v3685 = vrot.slane %v3684, 1
  %v3686 = vadd.f32 %v3684, %v3685
  %v3687 = vadd.f32 %v3671, %v3686
  %v3689 = vsel %vm66, %v3687, 0
  %3691 = vmatprep.subr.mxu0 0.0
  %3692 = vmatpush1.msra.mxu0 %v3452
  %3693 = vmatprep.subr.mxu0 0.0
  %3694 = vmatpush1.msra.mxu0 %v3453
  %3695 = vmatprep.subr.mxu0 0.0
  %3696 = vmatpush1.msra.mxu0 %v3454
  %3697 = vmatprep.subr.mxu0 0.0
  %3698 = vmatpush1.msra.mxu0 %v3455
  %3699 = vmatprep.subr.mxu0 0.0
  %3700 = vmatpush1.msra.mxu0 %v3456
  %3701 = vmatprep.subr.mxu0 0.0
  %3702 = vmatpush1.msra.mxu0 %v3457
  %3703 = vmatprep.subr.mxu0 0.0
  %3704 = vmatpush1.msra.mxu0 %v3458
  %3705 = vmatprep.subr.mxu0 0.0
  %3706 = vmatpush1.msra.mxu0 %v3459
  %3707 = vmatprep.subr.mxu0 0.0
  %3708 = vmatpush1.msra.mxu0 %v3460
  %3709 = vmatprep.subr.mxu0 0.0
  %3710 = vmatpush1.msra.mxu0 %v3461
  %3711 = vmatprep.subr.mxu0 0.0
  %3712 = vmatpush1.msra.mxu0 %v3462
  %3713 = vmatprep.subr.mxu0 0.0
  %3714 = vmatpush1.msra.mxu0 %v3463
  %3715 = vmatprep.subr.mxu0 0.0
  %3716 = vmatpush1.msra.mxu0 0.0
  %3717 = vmatprep.subr.mxu0 0.0
  %3718 = vmatpush1.msra.mxu0 0.0
  %3719 = vmatprep.subr.mxu0 0.0
  %3720 = vmatpush1.msra.mxu0 0.0
  %3721 = vmatprep.subr.mxu0 0.0
  %3722 = vmatpush1.msra.mxu0 0.0
  %3723 = vmatprep.subr.mxu0 0.0
  %3724 = vmatpush1.msra.mxu0 0.0
  %3725 = vmatprep.subr.mxu0 0.0
  %3726 = vmatpush1.msra.mxu0 0.0
  %3727 = vmatprep.subr.mxu0 0.0
  %3728 = vmatpush1.msra.mxu0 0.0
  %3729 = vmatprep.subr.mxu0 0.0
  %3730 = vmatpush1.msra.mxu0 0.0
  %3731 = vmatprep.subr.mxu0 0.0
  %3732 = vmatpush1.msra.mxu0 0.0
  %3733 = vmatprep.subr.mxu0 0.0
  %3734 = vmatpush1.msra.mxu0 0.0
  %3735 = vmatprep.subr.mxu0 0.0
  %3736 = vmatpush1.msra.mxu0 0.0
  %3737 = vmatprep.subr.mxu0 0.0
  %3738 = vmatpush1.msra.mxu0 0.0
  %3739 = vmatprep.subr.mxu0 0.0
  %3740 = vmatpush1.msra.mxu0 0.0
  %3741 = vmatprep.subr.mxu0 0.0
  %3742 = vmatpush1.msra.mxu0 0.0
  %3743 = vmatprep.subr.mxu0 0.0
  %3744 = vmatpush1.msra.mxu0 0.0
  %3745 = vmatprep.subr.mxu0 0.0
  %3746 = vmatpush1.msra.mxu0 0.0
  %3747 = vmatprep.subr.mxu0 0.0
  %3748 = vmatpush1.msra.mxu0 0.0
  %3749 = vmatprep.subr.mxu0 0.0
  %3750 = vmatpush1.msra.mxu0 0.0
  %3751 = vmatprep.subr.mxu0 0.0
  %3752 = vmatpush1.msra.mxu0 0.0
  %3753 = vmatprep.subr.mxu0 0.0
  %3754 = vmatpush1.msra.mxu0 0.0
  %3755 = vmatprep.mubr.f32.mxu0 0.0
  %3756 = vmatmul.mubr.f32.gmra.mrb[0].mxu0 %v3689
  %v3757 = vpop.f32.mrb[0].mxu0
  %v3758 = vadd.f32 0.0, %v3757
  %v3759 = vpop.f32.mrb[0].mxu0
  %3760 = vdwg.mxu0
  %v3761 = vmul.f32 %v3758, %v3583
  %v3762 = vadd.f32 %v3761, 1e-05
  %v3763 = vrsqrt.pop %v3762
  %v3764 = vmul.f32 %v3278, %v3763
  %v3766 = vsel %vm3585, %v3764, 0
  %3768 = vmatprep.subr.mxu0 0.0
  %3769 = vmatpush1.msra.mxu0 %v3484
  %3770 = vmatprep.subr.mxu0 0.0
  %3771 = vmatpush1.msra.mxu0 %v3485
  %3772 = vmatprep.subr.mxu0 0.0
  %3773 = vmatpush1.msra.mxu0 %v3486
  %3774 = vmatprep.subr.mxu0 0.0
  %3775 = vmatpush1.msra.mxu0 %v3487
  %3776 = vmatprep.subr.mxu0 0.0
  %3777 = vmatpush1.msra.mxu0 0.0
  %3778 = vmatprep.subr.mxu0 0.0
  %3779 = vmatpush1.msra.mxu0 0.0
  %3780 = vmatprep.subr.mxu0 0.0
  %3781 = vmatpush1.msra.mxu0 0.0
  %3782 = vmatprep.subr.mxu0 0.0
  %3783 = vmatpush1.msra.mxu0 0.0
  %3784 = vmatprep.subr.mxu0 0.0
  %3785 = vmatpush1.msra.mxu0 0.0
  %3786 = vmatprep.subr.mxu0 0.0
  %3787 = vmatpush1.msra.mxu0 0.0
  %3788 = vmatprep.subr.mxu0 0.0
  %3789 = vmatpush1.msra.mxu0 0.0
  %3790 = vmatprep.subr.mxu0 0.0
  %3791 = vmatpush1.msra.mxu0 0.0
  %3792 = vmatprep.subr.mxu0 0.0
  %3793 = vmatpush1.msra.mxu0 0.0
  %3794 = vmatprep.subr.mxu0 0.0
  %3795 = vmatpush1.msra.mxu0 0.0
  %3796 = vmatprep.subr.mxu0 0.0
  %3797 = vmatpush1.msra.mxu0 0.0
  %3798 = vmatprep.subr.mxu0 0.0
  %3799 = vmatpush1.msra.mxu0 0.0
  %3800 = vmatprep.subr.mxu0 0.0
  %3801 = vmatpush1.msra.mxu0 0.0
  %3802 = vmatprep.subr.mxu0 0.0
  %3803 = vmatpush1.msra.mxu0 0.0
  %3804 = vmatprep.subr.mxu0 0.0
  %3805 = vmatpush1.msra.mxu0 0.0
  %3806 = vmatprep.subr.mxu0 0.0
  %3807 = vmatpush1.msra.mxu0 0.0
  %3808 = vmatprep.subr.mxu0 0.0
  %3809 = vmatpush1.msra.mxu0 0.0
  %3810 = vmatprep.subr.mxu0 0.0
  %3811 = vmatpush1.msra.mxu0 0.0
  %3812 = vmatprep.subr.mxu0 0.0
  %3813 = vmatpush1.msra.mxu0 0.0
  %3814 = vmatprep.subr.mxu0 0.0
  %3815 = vmatpush1.msra.mxu0 0.0
  %3816 = vmatprep.subr.mxu0 0.0
  %3817 = vmatpush1.msra.mxu0 0.0
  %3818 = vmatprep.subr.mxu0 0.0
  %3819 = vmatpush1.msra.mxu0 0.0
  %3820 = vmatprep.subr.mxu0 0.0
  %3821 = vmatpush1.msra.mxu0 0.0
  %3822 = vmatprep.subr.mxu0 0.0
  %3823 = vmatpush1.msra.mxu0 0.0
  %3824 = vmatprep.subr.mxu0 0.0
  %3825 = vmatpush1.msra.mxu0 0.0
  %3826 = vmatprep.subr.mxu0 0.0
  %3827 = vmatpush1.msra.mxu0 0.0
  %3828 = vmatprep.subr.mxu0 0.0
  %3829 = vmatpush1.msra.mxu0 0.0
  %3830 = vmatprep.subr.mxu0 0.0
  %3831 = vmatpush1.msra.mxu0 0.0
  %3832 = vmatprep.mubr.f32.mxu0 0.0
  %3833 = vmatmul.mubr.f32.gmra.mrb[0].mxu0 %v3766
  %v3834 = vpop.f32.mrb[0].mxu0
  %v3835 = vadd.f32 0.0, %v3834
  %v3836 = vpop.f32.mrb[0].mxu0
  %3837 = vdwg.mxu0
  %v3838 = vmul.f32 %v3584, %v3764
  %v3839 = vsub.f32 %v3279, %v3838
  %v3841 = vsel %vm3585, %v3839, 0
  %3843 = vmatprep.subr.mxu0 0.0
  %3844 = vmatpush1.msra.mxu0 %v3484
  %3845 = vmatprep.subr.mxu0 0.0
  %3846 = vmatpush1.msra.mxu0 %v3485
  %3847 = vmatprep.subr.mxu0 0.0
  %3848 = vmatpush1.msra.mxu0 %v3486
  %3849 = vmatprep.subr.mxu0 0.0
  %3850 = vmatpush1.msra.mxu0 %v3487
  %3851 = vmatprep.subr.mxu0 0.0
  %3852 = vmatpush1.msra.mxu0 0.0
  %3853 = vmatprep.subr.mxu0 0.0
  %3854 = vmatpush1.msra.mxu0 0.0
  %3855 = vmatprep.subr.mxu0 0.0
  %3856 = vmatpush1.msra.mxu0 0.0
  %3857 = vmatprep.subr.mxu0 0.0
  %3858 = vmatpush1.msra.mxu0 0.0
  %3859 = vmatprep.subr.mxu0 0.0
  %3860 = vmatpush1.msra.mxu0 0.0
  %3861 = vmatprep.subr.mxu0 0.0
  %3862 = vmatpush1.msra.mxu0 0.0
  %3863 = vmatprep.subr.mxu0 0.0
  %3864 = vmatpush1.msra.mxu0 0.0
  %3865 = vmatprep.subr.mxu0 0.0
  %3866 = vmatpush1.msra.mxu0 0.0
  %3867 = vmatprep.subr.mxu0 0.0
  %3868 = vmatpush1.msra.mxu0 0.0
  %3869 = vmatprep.subr.mxu0 0.0
  %3870 = vmatpush1.msra.mxu0 0.0
  %3871 = vmatprep.subr.mxu0 0.0
  %3872 = vmatpush1.msra.mxu0 0.0
  %3873 = vmatprep.subr.mxu0 0.0
  %3874 = vmatpush1.msra.mxu0 0.0
  %3875 = vmatprep.subr.mxu0 0.0
  %3876 = vmatpush1.msra.mxu0 0.0
  %3877 = vmatprep.subr.mxu0 0.0
  %3878 = vmatpush1.msra.mxu0 0.0
  %3879 = vmatprep.subr.mxu0 0.0
  %3880 = vmatpush1.msra.mxu0 0.0
  %3881 = vmatprep.subr.mxu0 0.0
  %3882 = vmatpush1.msra.mxu0 0.0
  %3883 = vmatprep.subr.mxu0 0.0
  %3884 = vmatpush1.msra.mxu0 0.0
  %3885 = vmatprep.subr.mxu0 0.0
  %3886 = vmatpush1.msra.mxu0 0.0
  %3887 = vmatprep.subr.mxu0 0.0
  %3888 = vmatpush1.msra.mxu0 0.0
  %3889 = vmatprep.subr.mxu0 0.0
  %3890 = vmatpush1.msra.mxu0 0.0
  %3891 = vmatprep.subr.mxu0 0.0
  %3892 = vmatpush1.msra.mxu0 0.0
  %3893 = vmatprep.subr.mxu0 0.0
  %3894 = vmatpush1.msra.mxu0 0.0
  %3895 = vmatprep.subr.mxu0 0.0
  %3896 = vmatpush1.msra.mxu0 0.0
  %3897 = vmatprep.subr.mxu0 0.0
  %3898 = vmatpush1.msra.mxu0 0.0
  %3899 = vmatprep.subr.mxu0 0.0
  %3900 = vmatpush1.msra.mxu0 0.0
  %3901 = vmatprep.subr.mxu0 0.0
  %3902 = vmatpush1.msra.mxu0 0.0
  %3903 = vmatprep.subr.mxu0 0.0
  %3904 = vmatpush1.msra.mxu0 0.0
  %3905 = vmatprep.subr.mxu0 0.0
  %3906 = vmatpush1.msra.mxu0 0.0
  %3907 = vmatprep.mubr.f32.mxu0 0.0
  %3908 = vmatmul.mubr.f32.gmra.mrb[0].mxu0 %v3841
  %v3909 = vpop.f32.mrb[0].mxu0
  %v3910 = vadd.f32 0.0, %v3909
  %v3911 = vpop.f32.mrb[0].mxu0
  %3912 = vdwg.mxu0
  %v3913 = vlaneseq
  %v3914 = vshrl.u32 %v3913, 7
  %v3915 = vsub.s32 0, %v3914
  %v3916 = vrot.slane %v3835, %v3915
  %v3917 = vmul.f32 %v3276, %v3916
  %v3918 = vmul.f32 %v3277, %v3916
  %v3919 = vlaneseq
  %v3920 = vshrl.u32 %v3919, 7
  %v3921 = vsub.s32 0, %v3920
  %v3922 = vrot.slane %v3910, %v3921
  %v3923 = vadd.f32 %v3917, %v3922
  %v3924 = vadd.f32 %v3918, %v3922
  %vm3925 = vcmp.ge.f32.partialorder %v3923, 0.0
  %vm3926 = vcmp.ge.f32.partialorder %v3924, 0.0
  %v3927 = vmul.f32 %v3923, 0.2
  %v3928 = vmul.f32 %v3924, 0.2
  %v3929 = vsel %vm3925, %v3923, %v3927
  %v3930 = vsel %vm3926, %v3924, %v3928
  %v3933 = vunpack.c.l.s4 1983009808
  %v3934 = vunpack.c.0.s8 %v3933
  %v3935 = vlaneseq
  %v3936 = vshrl.u32 %v3935, 7
  %v3937 = vsub.s32 %v3934, %v3936
  %v3938 = vrot.slane %v3929, %v3937
  %3939 = vrot.lane.b32.xlu0 %v3938, 64
  %v3940 = vpop.permute.xlu0 %3939
  %v3941 = vrot.slane %v3940, 6
  %v3942 = vsel %vm1443, %v3941, %v3940
  %vm3944 = vcmask 1040896
  %vm3945 = vcmask 256002
  %vm3946 = vmor %vm3945, %vm3944
  %3947 = vst.msk [vmem:[#allocation5 + $0x2] sm:$0x5] %vm3946, %v3942
  %v3948 = vrot.slane %v3938, 7
  %v3949 = vrot.slane %v3948, 2
  %3950 = vrot.lane.b32.xlu0 %v3949, 96
  %v3951 = vpop.permute.xlu0 %3950
  %v3952 = vrot.slane %v3951, 6
  %v3953 = vsel %vm66, %v3952, %v3951
  %vm3955 = vcmask 1041152
  %vm3956 = vcmask 518146
  %vm3957 = vmor %vm3956, %vm3955
  %3958 = vst.msk [vmem:[#allocation5 + $0x4] sm:$0x5] %vm3957, %v3953
  %v3959 = vcombine.high %v3938, %v3938
  %vm3961 = vcmask 778240
  %3962 = vst.msk [vmem:[#allocation5 + $0x8] sm:$0x1] %vm3961, %v3959
  %v3963 = vcombine.high %v3929, %v3929
  %v3965 = vunpack.c.l.s4 1983009808
  %v3966 = vunpack.c.0.s8 %v3965
  %v3967 = vlaneseq
  %v3968 = vshrl.u32 %v3967, 7
  %v3969 = vsub.s32 %v3966, %v3968
  %v3970 = vrot.slane %v3963, %v3969
  %v3971 = vcombine.high %v3970, %v3970
  %3972 = vrot.lane.b32.xlu0 %v3971, 64
  %v3973 = vpop.permute.xlu0 %3972
  %v3974 = vrot.slane %v3973, 6
  %v3975 = vsel %vm1443, %v3974, %v3973
  %3977 = vst.msk [vmem:[#allocation5 + $0x3] sm:$0x5] %vm3946, %v3975
  %v3978 = vrot.slane %v3971, 7
  %v3979 = vrot.slane %v3978, 2
  %3980 = vrot.lane.b32.xlu0 %v3979, 96
  %v3981 = vpop.permute.xlu0 %3980
  %v3982 = vrot.slane %v3981, 6
  %v3983 = vsel %vm66, %v3982, %v3981
  %3985 = vst.msk [vmem:[#allocation5 + $0x5] sm:$0x5] %vm3957, %v3983
  %3986 = vst.msk [vmem:[#allocation5 + $0x9] sm:$0x1] %vm3961, %v3930
  %v3987 = vld [vmem:[#allocation5] sm:$0xff]
  %v3988 = vld [vmem:[#allocation5 + $0x8] sm:$0x3f]
  %v3989 = vld [vmem:[%s12] sm:$0xff]
  %v3990 = vld [vmem:[%s12 + $0x8] sm:$0xff]
  %v3991 = vld [vmem:[%s12 + $0x10] sm:$0xff]
  %v3992 = vld [vmem:[%s12 + $0x18] sm:$0xff]
  %v3993 = vld [vmem:[%s12 + $0x20] sm:$0xff]
  %v3994 = vld [vmem:[%s12 + $0x28] sm:$0xff]
  %v3995 = vld [vmem:[%s12 + $0x30] sm:$0xff]
  %v3996 = vld [vmem:[%s12 + $0x38] sm:$0xff]
  %v3997 = vld [vmem:[%s12 + $0x40] sm:$0xff]
  %v3998 = vld [vmem:[%s12 + $0x48] sm:$0xff]
  %v3999 = vld [vmem:[%s12 + $0x50] sm:$0xff]
  %v4000 = vld [vmem:[%s12 + $0x58] sm:$0xff]
  %v4001 = vld [vmem:[%s12 + $0x60] sm:$0xff]
  %v4002 = vld [vmem:[%s12 + $0x68] sm:$0xff]
  %v4003 = vld [vmem:[%s12 + $0x70] sm:$0xff]
  %v4004 = vld [vmem:[%s12 + $0x78] sm:$0xff]
  %v4005 = vld [vmem:[%s12 + $0x80] sm:$0xff]
  %v4006 = vld [vmem:[%s12 + $0x88] sm:$0xff]
  %v4007 = vld [vmem:[%s12 + $0x90] sm:$0xff]
  %v4008 = vld [vmem:[%s12 + $0x98] sm:$0xff]
  %v4009 = vld [vmem:[%s12 + $0xa0] sm:$0xff]
  %v4010 = vld [vmem:[%s12 + $0xa8] sm:$0xff]
  %v4011 = vld [vmem:[%s12 + $0xb0] sm:$0xff]
  %v4012 = vld [vmem:[%s12 + $0xb8] sm:$0xff]
  %v4013 = vld [vmem:[%s12 + $0xc0] sm:$0xff]
  %v4014 = vld [vmem:[%s12 + $0xc8] sm:$0xff]
  %v4015 = vld [vmem:[%s12 + $0xd0] sm:$0xff]
  %v4016 = vld [vmem:[%s12 + $0xd8] sm:$0xff]
  %v4017 = vld [vmem:[%s12 + $0xe0] sm:$0xff]
  %v4018 = vld [vmem:[%s12 + $0xe8] sm:$0xff]
  %v4019 = vld [vmem:[%s12 + $0xf0] sm:$0xff]
  %v4020 = vld [vmem:[%s12 + $0xf8] sm:$0xff]
  %v4021 = vld [vmem:[%s12 + $0x100] sm:$0xff]
  %v4022 = vld [vmem:[%s12 + $0x108] sm:$0xff]
  %v4023 = vld [vmem:[%s12 + $0x110] sm:$0xff]
  %v4024 = vld [vmem:[%s12 + $0x118] sm:$0xff]
  %v4025 = vld [vmem:[%s12 + $0x120] sm:$0xff]
  %v4026 = vld [vmem:[%s12 + $0x128] sm:$0xff]
  %v4027 = vld [vmem:[%s12 + $0x130] sm:$0xff]
  %v4028 = vld [vmem:[%s12 + $0x138] sm:$0xff]
  %v4029 = vld [vmem:[%s12 + $0x140] sm:$0xff]
  %v4030 = vld [vmem:[%s12 + $0x148] sm:$0xff]
  %v4031 = vld [vmem:[%s12 + $0x150] sm:$0xff]
  %v4032 = vld [vmem:[%s12 + $0x158] sm:$0xff]
  %v4033 = vld [vmem:[%s12 + $0x160] sm:$0xff]
  %v4034 = vld [vmem:[%s12 + $0x168] sm:$0xff]
  %v4035 = vld [vmem:[%s12 + $0x170] sm:$0xff]
  %v4036 = vld [vmem:[%s12 + $0x178] sm:$0xff]
  %v4037 = vld [vmem:[%s12 + $0x180] sm:$0xff]
  %v4038 = vld [vmem:[%s12 + $0x188] sm:$0xff]
  %v4039 = vld [vmem:[%s12 + $0x190] sm:$0xff]
  %v4040 = vld [vmem:[%s12 + $0x198] sm:$0xff]
  %v4041 = vld [vmem:[%s12 + $0x1a0] sm:$0xff]
  %v4042 = vld [vmem:[%s12 + $0x1a8] sm:$0xff]
  %v4043 = vld [vmem:[%s12 + $0x1b0] sm:$0xff]
  %v4044 = vld [vmem:[%s12 + $0x1b8] sm:$0xff]
  %v4045 = vld [vmem:[%s12 + $0x1c0] sm:$0xff]
  %v4046 = vld [vmem:[%s12 + $0x1c8] sm:$0xff]
  %v4047 = vld [vmem:[%s12 + $0x1d0] sm:$0xff]
  %v4048 = vld [vmem:[%s12 + $0x1d8] sm:$0xff]
  %v4049 = vld [vmem:[%s12 + $0x1e0] sm:$0xff]
  %v4050 = vld [vmem:[%s12 + $0x1e8] sm:$0xff]
  %v4051 = vld [vmem:[%s12 + $0x1f0] sm:$0xff]
  %v4052 = vld [vmem:[%s12 + $0x1f8] sm:$0xff]
  %v4053 = vld [vmem:[%s12 + $0x200] sm:$0xff]
  %v4054 = vld [vmem:[%s12 + $0x208] sm:$0xff]
  %v4055 = vld [vmem:[%s12 + $0x210] sm:$0xff]
  %v4056 = vld [vmem:[%s12 + $0x218] sm:$0xff]
  %v4057 = vld [vmem:[%s12 + $0x220] sm:$0xff]
  %v4058 = vld [vmem:[%s12 + $0x228] sm:$0xff]
  %v4059 = vld [vmem:[%s12 + $0x230] sm:$0xff]
  %v4060 = vld [vmem:[%s12 + $0x238] sm:$0xff]
  %v4061 = vld [vmem:[%s12 + $0x240] sm:$0xff]
  %v4062 = vld [vmem:[%s12 + $0x248] sm:$0xff]
  %v4063 = vld [vmem:[%s12 + $0x250] sm:$0xff]
  %v4064 = vld [vmem:[%s12 + $0x258] sm:$0xff]
  %v4065 = vld [vmem:[%s12 + $0x260] sm:$0xff]
  %v4066 = vld [vmem:[%s12 + $0x268] sm:$0xff]
  %v4067 = vld [vmem:[%s12 + $0x270] sm:$0xff]
  %v4068 = vld [vmem:[%s12 + $0x278] sm:$0xff]
  %v4069 = vld [vmem:[%s12 + $0x280] sm:$0xff]
  %v4070 = vld [vmem:[%s12 + $0x288] sm:$0xff]
  %v4071 = vld [vmem:[%s12 + $0x290] sm:$0xff]
  %v4072 = vld [vmem:[%s12 + $0x298] sm:$0xff]
  %v4073 = vld [vmem:[%s12 + $0x2a0] sm:$0xff]
  %v4074 = vld [vmem:[%s12 + $0x2a8] sm:$0xff]
  %v4075 = vld [vmem:[%s12 + $0x2b0] sm:$0xff]
  %v4076 = vld [vmem:[%s12 + $0x2b8] sm:$0xff]
  %v4077 = vld [vmem:[%s12 + $0x2c0] sm:$0xff]
  %v4078 = vld [vmem:[%s12 + $0x2c8] sm:$0xff]
  %v4079 = vld [vmem:[%s12 + $0x2d0] sm:$0xff]
  %v4080 = vld [vmem:[%s12 + $0x2d8] sm:$0xff]
  %v4081 = vld [vmem:[%s12 + $0x2e0] sm:$0xff]
  %v4082 = vld [vmem:[%s12 + $0x2e8] sm:$0xff]
  %v4083 = vld [vmem:[%s12 + $0x2f0] sm:$0xff]
  %v4084 = vld [vmem:[%s12 + $0x2f8] sm:$0xff]
  %v4085 = vld [vmem:[%s12 + $0x300] sm:$0xff]
  %v4086 = vld [vmem:[%s12 + $0x308] sm:$0xff]
  %v4087 = vld [vmem:[%s12 + $0x310] sm:$0xff]
  %v4088 = vld [vmem:[%s12 + $0x318] sm:$0xff]
  %v4089 = vld [vmem:[%s12 + $0x320] sm:$0xff]
  %v4090 = vld [vmem:[%s12 + $0x328] sm:$0xff]
  %v4091 = vld [vmem:[%s12 + $0x330] sm:$0xff]
  %v4092 = vld [vmem:[%s12 + $0x338] sm:$0xff]
  %v4093 = vld [vmem:[%s12 + $0x340] sm:$0xff]
  %v4094 = vld [vmem:[%s12 + $0x348] sm:$0xff]
  %v4095 = vld [vmem:[%s12 + $0x350] sm:$0xff]
  %v4096 = vld [vmem:[%s12 + $0x358] sm:$0xff]
  %v4097 = vld [vmem:[%s12 + $0x360] sm:$0xff]
  %v4098 = vld [vmem:[%s12 + $0x368] sm:$0xff]
  %v4099 = vld [vmem:[%s12 + $0x370] sm:$0xff]
  %v4100 = vld [vmem:[%s12 + $0x378] sm:$0xff]
  %v4101 = vld [vmem:[%s12 + $0x380] sm:$0xff]
  %v4102 = vld [vmem:[%s12 + $0x388] sm:$0xff]
  %v4103 = vld [vmem:[%s12 + $0x390] sm:$0xff]
  %v4104 = vld [vmem:[%s12 + $0x398] sm:$0xff]
  %v4105 = vld [vmem:[%s12 + $0x3a0] sm:$0xff]
  %v4106 = vld [vmem:[%s12 + $0x3a8] sm:$0xff]
  %v4107 = vld [vmem:[%s12 + $0x3b0] sm:$0xff]
  %v4108 = vld [vmem:[%s12 + $0x3b8] sm:$0xff]
  %v4109 = vld [vmem:[%s12 + $0x3c0] sm:$0xff]
  %v4110 = vld [vmem:[%s12 + $0x3c8] sm:$0xff]
  %v4111 = vld [vmem:[%s12 + $0x3d0] sm:$0xff]
  %v4112 = vld [vmem:[%s12 + $0x3d8] sm:$0xff]
  %v4113 = vld [vmem:[%s12 + $0x3e0] sm:$0xff]
  %v4114 = vld [vmem:[%s12 + $0x3e8] sm:$0xff]
  %v4115 = vld [vmem:[%s12 + $0x3f0] sm:$0xff]
  %v4116 = vld [vmem:[%s12 + $0x3f8] sm:$0xff]
  %v4117 = vld [vmem:[%s12 + $0x400] sm:$0xff]
  %v4118 = vld [vmem:[%s12 + $0x408] sm:$0xff]
  %v4119 = vld [vmem:[%s12 + $0x410] sm:$0xff]
  %v4120 = vld [vmem:[%s12 + $0x418] sm:$0xff]
  %v4121 = vld [vmem:[%s12 + $0x420] sm:$0xff]
  %v4122 = vld [vmem:[%s12 + $0x428] sm:$0xff]
  %v4123 = vld [vmem:[%s12 + $0x430] sm:$0xff]
  %v4124 = vld [vmem:[%s12 + $0x438] sm:$0xff]
  %v4125 = vld [vmem:[%s12 + $0x440] sm:$0xff]
  %v4126 = vld [vmem:[%s12 + $0x448] sm:$0xff]
  %v4127 = vld [vmem:[%s12 + $0x450] sm:$0xff]
  %v4128 = vld [vmem:[%s12 + $0x458] sm:$0xff]
  %v4129 = vld [vmem:[%s12 + $0x460] sm:$0xff]
  %v4130 = vld [vmem:[%s12 + $0x468] sm:$0xff]
  %v4131 = vld [vmem:[%s12 + $0x470] sm:$0xff]
  %v4132 = vld [vmem:[%s12 + $0x478] sm:$0xff]
  %v4133 = vld [vmem:[%s12 + $0x480] sm:$0xff]
  %v4134 = vld [vmem:[%s12 + $0x488] sm:$0xff]
  %v4135 = vld [vmem:[%s12 + $0x490] sm:$0xff]
  %v4136 = vld [vmem:[%s12 + $0x498] sm:$0xff]
  %v4137 = vld [vmem:[%s12 + $0x4a0] sm:$0xff]
  %v4138 = vld [vmem:[%s12 + $0x4a8] sm:$0xff]
  %v4139 = vld [vmem:[%s12 + $0x4b0] sm:$0xff]
  %v4140 = vld [vmem:[%s12 + $0x4b8] sm:$0xff]
  %v4141 = vld [vmem:[%s12 + $0x4c0] sm:$0xff]
  %v4142 = vld [vmem:[%s12 + $0x4c8] sm:$0xff]
  %v4143 = vld [vmem:[%s12 + $0x4d0] sm:$0xff]
  %v4144 = vld [vmem:[%s12 + $0x4d8] sm:$0xff]
  %v4145 = vld [vmem:[%s12 + $0x4e0] sm:$0xff]
  %v4146 = vld [vmem:[%s12 + $0x4e8] sm:$0xff]
  %v4147 = vld [vmem:[%s12 + $0x4f0] sm:$0xff]
  %v4148 = vld [vmem:[%s12 + $0x4f8] sm:$0xff]
  %v4149 = vld [vmem:[%s12 + $0x500] sm:$0xff]
  %v4150 = vld [vmem:[%s12 + $0x508] sm:$0xff]
  %v4151 = vld [vmem:[%s12 + $0x510] sm:$0xff]
  %v4152 = vld [vmem:[%s12 + $0x518] sm:$0xff]
  %v4153 = vld [vmem:[%s12 + $0x520] sm:$0xff]
  %v4154 = vld [vmem:[%s12 + $0x528] sm:$0xff]
  %v4155 = vld [vmem:[%s12 + $0x530] sm:$0xff]
  %v4156 = vld [vmem:[%s12 + $0x538] sm:$0xff]
  %v4157 = vld [vmem:[%s12 + $0x540] sm:$0xff]
  %v4158 = vld [vmem:[%s12 + $0x548] sm:$0xff]
  %v4159 = vld [vmem:[%s12 + $0x550] sm:$0xff]
  %v4160 = vld [vmem:[%s12 + $0x558] sm:$0xff]
  %v4161 = vld [vmem:[%s12 + $0x560] sm:$0xff]
  %v4162 = vld [vmem:[%s12 + $0x568] sm:$0xff]
  %v4163 = vld [vmem:[%s12 + $0x570] sm:$0xff]
  %v4164 = vld [vmem:[%s12 + $0x578] sm:$0xff]
  %v4165 = vld [vmem:[%s12 + $0x580] sm:$0xff]
  %v4166 = vld [vmem:[%s12 + $0x588] sm:$0xff]
  %v4167 = vld [vmem:[%s12 + $0x590] sm:$0xff]
  %v4168 = vld [vmem:[%s12 + $0x598] sm:$0xff]
  %v4169 = vld [vmem:[%s12 + $0x5a0] sm:$0xff]
  %v4170 = vld [vmem:[%s12 + $0x5a8] sm:$0xff]
  %v4171 = vld [vmem:[%s12 + $0x5b0] sm:$0xff]
  %v4172 = vld [vmem:[%s12 + $0x5b8] sm:$0xff]
  %v4173 = vld [vmem:[%s12 + $0x5c0] sm:$0xff]
  %v4174 = vld [vmem:[%s12 + $0x5c8] sm:$0xff]
  %v4175 = vld [vmem:[%s12 + $0x5d0] sm:$0xff]
  %v4176 = vld [vmem:[%s12 + $0x5d8] sm:$0xff]
  %v4177 = vld [vmem:[%s12 + $0x5e0] sm:$0xff]
  %v4178 = vld [vmem:[%s12 + $0x5e8] sm:$0xff]
  %v4179 = vld [vmem:[%s12 + $0x5f0] sm:$0xff]
  %v4180 = vld [vmem:[%s12 + $0x5f8] sm:$0xff]
  %v4181 = vld [vmem:[%s12 + $0x600] sm:$0xff]
  %v4182 = vld [vmem:[%s12 + $0x608] sm:$0xff]
  %v4183 = vld [vmem:[%s12 + $0x610] sm:$0xff]
  %v4184 = vld [vmem:[%s12 + $0x618] sm:$0xff]
  %v4185 = vld [vmem:[%s12 + $0x620] sm:$0xff]
  %v4186 = vld [vmem:[%s12 + $0x628] sm:$0xff]
  %v4187 = vld [vmem:[%s12 + $0x630] sm:$0xff]
  %v4188 = vld [vmem:[%s12 + $0x638] sm:$0xff]
  %v4189 = vld [vmem:[%s12 + $0x640] sm:$0xff]
  %v4190 = vld [vmem:[%s12 + $0x648] sm:$0xff]
  %v4191 = vld [vmem:[%s12 + $0x650] sm:$0xff]
  %v4192 = vld [vmem:[%s12 + $0x658] sm:$0xff]
  %v4193 = vld [vmem:[%s12 + $0x660] sm:$0xff]
  %v4194 = vld [vmem:[%s12 + $0x668] sm:$0xff]
  %v4195 = vld [vmem:[%s12 + $0x670] sm:$0xff]
  %v4196 = vld [vmem:[%s12 + $0x678] sm:$0xff]
  %v4197 = vld [vmem:[%s12 + $0x680] sm:$0xff]
  %v4198 = vld [vmem:[%s12 + $0x688] sm:$0xff]
  %v4199 = vld [vmem:[%s12 + $0x690] sm:$0xff]
  %v4200 = vld [vmem:[%s12 + $0x698] sm:$0xff]
  %v4201 = vld [vmem:[%s12 + $0x6a0] sm:$0xff]
  %v4202 = vld [vmem:[%s12 + $0x6a8] sm:$0xff]
  %v4203 = vld [vmem:[%s12 + $0x6b0] sm:$0xff]
  %v4204 = vld [vmem:[%s12 + $0x6b8] sm:$0xff]
  %v4205 = vld [vmem:[%s12 + $0x6c0] sm:$0xff]
  %v4206 = vld [vmem:[%s12 + $0x6c8] sm:$0xff]
  %v4207 = vld [vmem:[%s12 + $0x6d0] sm:$0xff]
  %v4208 = vld [vmem:[%s12 + $0x6d8] sm:$0xff]
  %v4209 = vld [vmem:[%s12 + $0x6e0] sm:$0xff]
  %v4210 = vld [vmem:[%s12 + $0x6e8] sm:$0xff]
  %v4211 = vld [vmem:[%s12 + $0x6f0] sm:$0xff]
  %v4212 = vld [vmem:[%s12 + $0x6f8] sm:$0xff]
  %v4213 = vld [vmem:[%s12 + $0x700] sm:$0xff]
  %v4214 = vld [vmem:[%s12 + $0x708] sm:$0xff]
  %v4215 = vld [vmem:[%s12 + $0x710] sm:$0xff]
  %v4216 = vld [vmem:[%s12 + $0x718] sm:$0xff]
  %v4217 = vld [vmem:[%s12 + $0x720] sm:$0xff]
  %v4218 = vld [vmem:[%s12 + $0x728] sm:$0xff]
  %v4219 = vld [vmem:[%s12 + $0x730] sm:$0xff]
  %v4220 = vld [vmem:[%s12 + $0x738] sm:$0xff]
  %v4221 = vld [vmem:[%s12 + $0x740] sm:$0xff]
  %v4222 = vld [vmem:[%s12 + $0x748] sm:$0xff]
  %v4223 = vld [vmem:[%s12 + $0x750] sm:$0xff]
  %v4224 = vld [vmem:[%s12 + $0x758] sm:$0xff]
  %v4225 = vld [vmem:[%s12 + $0x760] sm:$0xff]
  %v4226 = vld [vmem:[%s12 + $0x768] sm:$0xff]
  %v4227 = vld [vmem:[%s12 + $0x770] sm:$0xff]
  %v4228 = vld [vmem:[%s12 + $0x778] sm:$0xff]
  %v4229 = vld [vmem:[%s12 + $0x780] sm:$0xff]
  %v4230 = vld [vmem:[%s12 + $0x788] sm:$0xff]
  %v4231 = vld [vmem:[%s12 + $0x790] sm:$0xff]
  %v4232 = vld [vmem:[%s12 + $0x798] sm:$0xff]
  %v4233 = vld [vmem:[%s12 + $0x7a0] sm:$0xff]
  %v4234 = vld [vmem:[%s12 + $0x7a8] sm:$0xff]
  %v4235 = vld [vmem:[%s12 + $0x7b0] sm:$0xff]
  %v4236 = vld [vmem:[%s12 + $0x7b8] sm:$0xff]
  %v4237 = vld [vmem:[%s12 + $0x7c0] sm:$0xff]
  %v4238 = vld [vmem:[%s12 + $0x7c8] sm:$0xff]
  %v4239 = vld [vmem:[%s12 + $0x7d0] sm:$0xff]
  %v4240 = vld [vmem:[%s12 + $0x7d8] sm:$0xff]
  %v4241 = vld [vmem:[%s12 + $0x7e0] sm:$0xff]
  %v4242 = vld [vmem:[%s12 + $0x7e8] sm:$0xff]
  %v4243 = vld [vmem:[%s12 + $0x7f0] sm:$0xff]
  %v4244 = vld [vmem:[%s12 + $0x7f8] sm:$0xff]
  %v4245 = vld [vmem:[%s12 + $0x800] sm:$0xff]
  %v4246 = vld [vmem:[%s12 + $0x808] sm:$0xff]
  %v4247 = vld [vmem:[%s12 + $0x810] sm:$0xff]
  %v4248 = vld [vmem:[%s12 + $0x818] sm:$0xff]
  %v4249 = vld [vmem:[%s12 + $0x820] sm:$0xff]
  %v4250 = vld [vmem:[%s12 + $0x828] sm:$0xff]
  %v4251 = vld [vmem:[%s12 + $0x830] sm:$0xff]
  %v4252 = vld [vmem:[%s12 + $0x838] sm:$0xff]
  %v4253 = vld [vmem:[%s12 + $0x840] sm:$0xff]
  %v4254 = vld [vmem:[%s12 + $0x848] sm:$0xff]
  %v4255 = vld [vmem:[%s12 + $0x850] sm:$0xff]
  %v4256 = vld [vmem:[%s12 + $0x858] sm:$0xff]
  %v4257 = vld [vmem:[%s12 + $0x860] sm:$0xff]
  %v4258 = vld [vmem:[%s12 + $0x868] sm:$0xff]
  %v4259 = vld [vmem:[%s12 + $0x870] sm:$0xff]
  %v4260 = vld [vmem:[%s12 + $0x878] sm:$0xff]
  %v4261 = vld [vmem:[%s12 + $0x880] sm:$0xff]
  %v4262 = vld [vmem:[%s12 + $0x888] sm:$0xff]
  %v4263 = vld [vmem:[%s12 + $0x890] sm:$0xff]
  %v4264 = vld [vmem:[%s12 + $0x898] sm:$0xff]
  %v4265 = vld [vmem:[%s12 + $0x8a0] sm:$0xff]
  %v4266 = vld [vmem:[%s12 + $0x8a8] sm:$0xff]
  %v4267 = vld [vmem:[%s12 + $0x8b0] sm:$0xff]
  %v4268 = vld [vmem:[%s12 + $0x8b8] sm:$0xff]
  %v4269 = vld [vmem:[%s12 + $0x8c0] sm:$0xff]
  %v4270 = vld [vmem:[%s12 + $0x8c8] sm:$0xff]
  %v4271 = vld [vmem:[%s12 + $0x8d0] sm:$0xff]
  %v4272 = vld [vmem:[%s12 + $0x8d8] sm:$0xff]
  %v4273 = vld [vmem:[%s12 + $0x8e0] sm:$0xff]
  %v4274 = vld [vmem:[%s12 + $0x8e8] sm:$0xff]
  %v4275 = vld [vmem:[%s12 + $0x8f0] sm:$0xff]
  %v4276 = vld [vmem:[%s12 + $0x8f8] sm:$0xff]
  %v4277 = vld [vmem:[%s12 + $0x900] sm:$0xff]
  %v4278 = vld [vmem:[%s12 + $0x908] sm:$0xff]
  %v4279 = vld [vmem:[%s12 + $0x910] sm:$0xff]
  %v4280 = vld [vmem:[%s12 + $0x918] sm:$0xff]
  %v4281 = vld [vmem:[%s12 + $0x920] sm:$0xff]
  %v4282 = vld [vmem:[%s12 + $0x928] sm:$0xff]
  %v4283 = vld [vmem:[%s12 + $0x930] sm:$0xff]
  %v4284 = vld [vmem:[%s12 + $0x938] sm:$0xff]
  %v4285 = vld [vmem:[%s12 + $0x940] sm:$0xff]
  %v4286 = vld [vmem:[%s12 + $0x948] sm:$0xff]
  %v4287 = vld [vmem:[%s12 + $0x950] sm:$0xff]
  %v4288 = vld [vmem:[%s12 + $0x958] sm:$0xff]
  %v4289 = vld [vmem:[%s12 + $0x960] sm:$0xff]
  %v4290 = vld [vmem:[%s12 + $0x968] sm:$0xff]
  %v4291 = vld [vmem:[%s12 + $0x970] sm:$0xff]
  %v4292 = vld [vmem:[%s12 + $0x978] sm:$0xff]
  %v4293 = vld [vmem:[%s12 + $0x980] sm:$0xff]
  %v4294 = vld [vmem:[%s12 + $0x988] sm:$0xff]
  %v4295 = vld [vmem:[%s12 + $0x990] sm:$0xff]
  %v4296 = vld [vmem:[%s12 + $0x998] sm:$0xff]
  %v4297 = vld [vmem:[%s12 + $0x9a0] sm:$0xff]
  %v4298 = vld [vmem:[%s12 + $0x9a8] sm:$0xff]
  %v4299 = vld [vmem:[%s12 + $0x9b0] sm:$0xff]
  %v4300 = vld [vmem:[%s12 + $0x9b8] sm:$0xff]
  %v4301 = vld [vmem:[%s12 + $0x9c0] sm:$0xff]
  %v4302 = vld [vmem:[%s12 + $0x9c8] sm:$0xff]
  %v4303 = vld [vmem:[%s12 + $0x9d0] sm:$0xff]
  %v4304 = vld [vmem:[%s12 + $0x9d8] sm:$0xff]
  %v4305 = vld [vmem:[%s12 + $0x9e0] sm:$0xff]
  %v4306 = vld [vmem:[%s12 + $0x9e8] sm:$0xff]
  %v4307 = vld [vmem:[%s12 + $0x9f0] sm:$0xff]
  %v4308 = vld [vmem:[%s12 + $0x9f8] sm:$0xff]
  %v4309 = vld [vmem:[%s12 + $0xa00] sm:$0xff]
  %v4310 = vld [vmem:[%s12 + $0xa08] sm:$0xff]
  %v4311 = vld [vmem:[%s12 + $0xa10] sm:$0xff]
  %v4312 = vld [vmem:[%s12 + $0xa18] sm:$0xff]
  %v4313 = vld [vmem:[%s12 + $0xa20] sm:$0xff]
  %v4314 = vld [vmem:[%s12 + $0xa28] sm:$0xff]
  %v4315 = vld [vmem:[%s12 + $0xa30] sm:$0xff]
  %v4316 = vld [vmem:[%s12 + $0xa38] sm:$0xff]
  %v4317 = vld [vmem:[%s12 + $0xa40] sm:$0xff]
  %v4318 = vld [vmem:[%s12 + $0xa48] sm:$0xff]
  %v4319 = vld [vmem:[%s12 + $0xa50] sm:$0xff]
  %v4320 = vld [vmem:[%s12 + $0xa58] sm:$0xff]
  %v4321 = vld [vmem:[%s12 + $0xa60] sm:$0xff]
  %v4322 = vld [vmem:[%s12 + $0xa68] sm:$0xff]
  %v4323 = vld [vmem:[%s12 + $0xa70] sm:$0xff]
  %v4324 = vld [vmem:[%s12 + $0xa78] sm:$0xff]
  %v4325 = vld [vmem:[%s12 + $0xa80] sm:$0xff]
  %v4326 = vld [vmem:[%s12 + $0xa88] sm:$0xff]
  %v4327 = vld [vmem:[%s12 + $0xa90] sm:$0xff]
  %v4328 = vld [vmem:[%s12 + $0xa98] sm:$0xff]
  %v4329 = vld [vmem:[%s12 + $0xaa0] sm:$0xff]
  %v4330 = vld [vmem:[%s12 + $0xaa8] sm:$0xff]
  %v4331 = vld [vmem:[%s12 + $0xab0] sm:$0xff]
  %v4332 = vld [vmem:[%s12 + $0xab8] sm:$0xff]
  %v4333 = vld [vmem:[%s12 + $0xac0] sm:$0xff]
  %v4334 = vld [vmem:[%s12 + $0xac8] sm:$0xff]
  %v4335 = vld [vmem:[%s12 + $0xad0] sm:$0xff]
  %v4336 = vld [vmem:[%s12 + $0xad8] sm:$0xff]
  %v4337 = vld [vmem:[%s12 + $0xae0] sm:$0xff]
  %v4338 = vld [vmem:[%s12 + $0xae8] sm:$0xff]
  %v4339 = vld [vmem:[%s12 + $0xaf0] sm:$0xff]
  %v4340 = vld [vmem:[%s12 + $0xaf8] sm:$0xff]
  %v4341 = vld [vmem:[%s12 + $0xb00] sm:$0xff]
  %v4342 = vld [vmem:[%s12 + $0xb08] sm:$0xff]
  %v4343 = vld [vmem:[%s12 + $0xb10] sm:$0xff]
  %v4344 = vld [vmem:[%s12 + $0xb18] sm:$0xff]
  %v4345 = vld [vmem:[%s12 + $0xb20] sm:$0xff]
  %v4346 = vld [vmem:[%s12 + $0xb28] sm:$0xff]
  %v4347 = vld [vmem:[%s12 + $0xb30] sm:$0xff]
  %v4348 = vld [vmem:[%s12 + $0xb38] sm:$0xff]
  %v4349 = vld [vmem:[%s12 + $0xb40] sm:$0xff]
  %v4350 = vld [vmem:[%s12 + $0xb48] sm:$0xff]
  %v4351 = vld [vmem:[%s12 + $0xb50] sm:$0xff]
  %v4352 = vld [vmem:[%s12 + $0xb58] sm:$0xff]
  %v4353 = vld [vmem:[%s12 + $0xb60] sm:$0xff]
  %v4354 = vld [vmem:[%s12 + $0xb68] sm:$0xff]
  %v4355 = vld [vmem:[%s12 + $0xb70] sm:$0xff]
  %v4356 = vld [vmem:[%s12 + $0xb78] sm:$0xff]
  %v4357 = vld [vmem:[%s12 + $0xb80] sm:$0xff]
  %v4358 = vld [vmem:[%s12 + $0xb88] sm:$0xff]
  %v4359 = vld [vmem:[%s12 + $0xb90] sm:$0xff]
  %v4360 = vld [vmem:[%s12 + $0xb98] sm:$0xff]
  %v4361 = vld [vmem:[%s12 + $0xba0] sm:$0xff]
  %v4362 = vld [vmem:[%s12 + $0xba8] sm:$0xff]
  %v4363 = vld [vmem:[%s12 + $0xbb0] sm:$0xff]
  %v4364 = vld [vmem:[%s12 + $0xbb8] sm:$0xff]
  %v4365 = vld [vmem:[%s12 + $0xbc0] sm:$0xff]
  %v4366 = vld [vmem:[%s12 + $0xbc8] sm:$0xff]
  %v4367 = vld [vmem:[%s12 + $0xbd0] sm:$0xff]
  %v4368 = vld [vmem:[%s12 + $0xbd8] sm:$0xff]
  %v4369 = vld [vmem:[%s12 + $0xbe0] sm:$0xff]
  %v4370 = vld [vmem:[%s12 + $0xbe8] sm:$0xff]
  %v4371 = vld [vmem:[%s12 + $0xbf0] sm:$0xff]
  %v4372 = vld [vmem:[%s12 + $0xbf8] sm:$0xff]
  %v4373 = vld [vmem:[%s12 + $0xc00] sm:$0xff]
  %v4374 = vld [vmem:[%s12 + $0xc08] sm:$0xff]
  %v4375 = vld [vmem:[%s12 + $0xc10] sm:$0xff]
  %v4376 = vld [vmem:[%s12 + $0xc18] sm:$0xff]
  %v4377 = vld [vmem:[%s12 + $0xc20] sm:$0xff]
  %v4378 = vld [vmem:[%s12 + $0xc28] sm:$0xff]
  %v4379 = vld [vmem:[%s12 + $0xc30] sm:$0xff]
  %v4380 = vld [vmem:[%s12 + $0xc38] sm:$0xff]
  %v4381 = vld [vmem:[%s12 + $0xc40] sm:$0xff]
  %v4382 = vld [vmem:[%s12 + $0xc48] sm:$0xff]
  %v4383 = vld [vmem:[%s12 + $0xc50] sm:$0xff]
  %v4384 = vld [vmem:[%s12 + $0xc58] sm:$0xff]
  %v4385 = vld [vmem:[%s12 + $0xc60] sm:$0xff]
  %v4386 = vld [vmem:[%s12 + $0xc68] sm:$0xff]
  %v4387 = vld [vmem:[%s12 + $0xc70] sm:$0xff]
  %v4388 = vld [vmem:[%s12 + $0xc78] sm:$0xff]
  %v4389 = vld [vmem:[%s13] sm:$0xf]
  %v4391 = vlaneseq
  %v4392 = vshrl.u32 %v4391, 7
  %v4393 = vsub.s32 0, %v4392
  %v4394 = vrot.slane %v4389, %v4393
  %v4395 = vlaneseq
  %v4396 = vshrl.u32 %v4395, 7
  %v4397 = vsub.s32 1, %v4396
  %v4398 = vrot.slane %v4389, %v4397
  %v4399 = vlaneseq
  %v4400 = vshrl.u32 %v4399, 7
  %v4401 = vsub.s32 2, %v4400
  %v4402 = vrot.slane %v4389, %v4401
  %v4403 = vlaneseq
  %v4404 = vshrl.u32 %v4403, 7
  %v4405 = vsub.s32 3, %v4404
  %v4406 = vrot.slane %v4389, %v4405
  %v4413 = vcombine.high %v3987, %v3987
  %v4415 = vunpack.c.l.s4 1983009808
  %v4416 = vunpack.c.0.s8 %v4415
  %v4417 = vlaneseq
  %v4418 = vshrl.u32 %v4417, 7
  %v4419 = vsub.s32 %v4416, %v4418
  %v4420 = vrot.slane %v3987, %v4419
  %v4422 = vunpack.c.l.s4 1983009808
  %v4423 = vunpack.c.0.s8 %v4422
  %v4424 = vlaneseq
  %v4425 = vshrl.u32 %v4424, 7
  %v4426 = vsub.s32 %v4423, %v4425
  %v4427 = vrot.slane %v4413, %v4426
  %v4428 = vcombine.high %v4420, %v4420
  %v4429 = vcombine.high %v4427, %v4427
  %v4430 = vcombine.high %v3988, %v3988
  %v4432 = vunpack.c.l.s4 1983009808
  %v4433 = vunpack.c.0.s8 %v4432
  %v4434 = vlaneseq
  %v4435 = vshrl.u32 %v4434, 7
  %v4436 = vsub.s32 %v4433, %v4435
  %v4437 = vrot.slane %v3988, %v4436
  %v4439 = vunpack.c.l.s4 1983009808
  %v4440 = vunpack.c.0.s8 %v4439
  %v4441 = vlaneseq
  %v4442 = vshrl.u32 %v4441, 7
  %v4443 = vsub.s32 %v4440, %v4442
  %v4444 = vrot.slane %v4430, %v4443
  %v4445 = vcombine.high %v4437, %v4437
  %v4452 = vsel %vm3585, %v4444, 0
  %4454 = vmatprep.subr.mxu0 %v3990
  %4455 = vmatpush1.msra.mxu0 %v3989
  %4456 = vmatprep.subr.mxu0 %v3994
  %4457 = vmatpush1.msra.mxu0 %v3993
  %4458 = vmatprep.subr.mxu0 %v3998
  %4459 = vmatpush1.msra.mxu0 %v3997
  %4460 = vmatprep.subr.mxu0 %v4002
  %4461 = vmatpush1.msra.mxu0 %v4001
  %4462 = vmatprep.subr.mxu0 %v4006
  %4463 = vmatpush1.msra.mxu0 %v4005
  %4464 = vmatprep.subr.mxu0 %v4010
  %4465 = vmatpush1.msra.mxu0 %v4009
  %4466 = vmatprep.subr.mxu0 %v4014
  %4467 = vmatpush1.msra.mxu0 %v4013
  %4468 = vmatprep.subr.mxu0 %v4018
  %4469 = vmatpush1.msra.mxu0 %v4017
  %4470 = vmatprep.subr.mxu0 %v4022
  %4471 = vmatpush1.msra.mxu0 %v4021
  %4472 = vmatprep.subr.mxu0 %v4026
  %4473 = vmatpush1.msra.mxu0 %v4025
  %4474 = vmatprep.subr.mxu0 %v4030
  %4475 = vmatpush1.msra.mxu0 %v4029
  %4476 = vmatprep.subr.mxu0 %v4034
  %4477 = vmatpush1.msra.mxu0 %v4033
  %4478 = vmatprep.subr.mxu0 %v4038
  %4479 = vmatpush1.msra.mxu0 %v4037
  %4480 = vmatprep.subr.mxu0 %v4042
  %4481 = vmatpush1.msra.mxu0 %v4041
  %4482 = vmatprep.subr.mxu0 %v4046
  %4483 = vmatpush1.msra.mxu0 %v4045
  %4484 = vmatprep.subr.mxu0 %v4050
  %4485 = vmatpush1.msra.mxu0 %v4049
  %4486 = vmatprep.subr.mxu0 %v4054
  %4487 = vmatpush1.msra.mxu0 %v4053
  %4488 = vmatprep.subr.mxu0 %v4058
  %4489 = vmatpush1.msra.mxu0 %v4057
  %4490 = vmatprep.subr.mxu0 %v4062
  %4491 = vmatpush1.msra.mxu0 %v4061
  %4492 = vmatprep.subr.mxu0 %v4066
  %4493 = vmatpush1.msra.mxu0 %v4065
  %4494 = vmatprep.subr.mxu0 %v4070
  %4495 = vmatpush1.msra.mxu0 %v4069
  %4496 = vmatprep.subr.mxu0 %v4074
  %4497 = vmatpush1.msra.mxu0 %v4073
  %4498 = vmatprep.subr.mxu0 %v4078
  %4499 = vmatpush1.msra.mxu0 %v4077
  %4500 = vmatprep.subr.mxu0 %v4082
  %4501 = vmatpush1.msra.mxu0 %v4081
  %4502 = vmatprep.subr.mxu0 %v4086
  %4503 = vmatpush1.msra.mxu0 %v4085
  %4504 = vmatprep.subr.mxu0 %v4090
  %4505 = vmatpush1.msra.mxu0 %v4089
  %4506 = vmatprep.subr.mxu0 %v4094
  %4507 = vmatpush1.msra.mxu0 %v4093
  %4508 = vmatprep.subr.mxu0 %v4098
  %4509 = vmatpush1.msra.mxu0 %v4097
  %4510 = vmatprep.subr.mxu0 %v4102
  %4511 = vmatpush1.msra.mxu0 %v4101
  %4512 = vmatprep.subr.mxu0 %v4106
  %4513 = vmatpush1.msra.mxu0 %v4105
  %4514 = vmatprep.subr.mxu0 %v4110
  %4515 = vmatpush1.msra.mxu0 %v4109
  %4516 = vmatprep.subr.mxu0 %v4114
  %4517 = vmatpush1.msra.mxu0 %v4113
  %4518 = vmatprep.mubr.f32.mxu0 %v4428
  %4519 = vmatmul.mubr.f32.gmra.mrb[0].mxu0 %v4420
  %v4520 = vpop.f32.mrb[0].mxu0
  %v4521 = vadd.f32 %v4394, %v4520
  %v4522 = vpop.f32.mrb[0].mxu0
  %v4523 = vadd.f32 %v4398, %v4522
  %4524 = vdwg.mxu0
  %4525 = vmatprep.subr.mxu0 %v4118
  %4526 = vmatpush1.msra.mxu0 %v4117
  %4527 = vmatprep.subr.mxu0 %v4122
  %4528 = vmatpush1.msra.mxu0 %v4121
  %4529 = vmatprep.subr.mxu0 %v4126
  %4530 = vmatpush1.msra.mxu0 %v4125
  %4531 = vmatprep.subr.mxu0 %v4130
  %4532 = vmatpush1.msra.mxu0 %v4129
  %4533 = vmatprep.subr.mxu0 %v4134
  %4534 = vmatpush1.msra.mxu0 %v4133
  %4535 = vmatprep.subr.mxu0 %v4138
  %4536 = vmatpush1.msra.mxu0 %v4137
  %4537 = vmatprep.subr.mxu0 %v4142
  %4538 = vmatpush1.msra.mxu0 %v4141
  %4539 = vmatprep.subr.mxu0 %v4146
  %4540 = vmatpush1.msra.mxu0 %v4145
  %4541 = vmatprep.subr.mxu0 %v4150
  %4542 = vmatpush1.msra.mxu0 %v4149
  %4543 = vmatprep.subr.mxu0 %v4154
  %4544 = vmatpush1.msra.mxu0 %v4153
  %4545 = vmatprep.subr.mxu0 %v4158
  %4546 = vmatpush1.msra.mxu0 %v4157
  %4547 = vmatprep.subr.mxu0 %v4162
  %4548 = vmatpush1.msra.mxu0 %v4161
  %4549 = vmatprep.subr.mxu0 %v4166
  %4550 = vmatpush1.msra.mxu0 %v4165
  %4551 = vmatprep.subr.mxu0 %v4170
  %4552 = vmatpush1.msra.mxu0 %v4169
  %4553 = vmatprep.subr.mxu0 %v4174
  %4554 = vmatpush1.msra.mxu0 %v4173
  %4555 = vmatprep.subr.mxu0 %v4178
  %4556 = vmatpush1.msra.mxu0 %v4177
  %4557 = vmatprep.subr.mxu0 %v4182
  %4558 = vmatpush1.msra.mxu0 %v4181
  %4559 = vmatprep.subr.mxu0 %v4186
  %4560 = vmatpush1.msra.mxu0 %v4185
  %4561 = vmatprep.subr.mxu0 %v4190
  %4562 = vmatpush1.msra.mxu0 %v4189
  %4563 = vmatprep.subr.mxu0 %v4194
  %4564 = vmatpush1.msra.mxu0 %v4193
  %4565 = vmatprep.subr.mxu0 %v4198
  %4566 = vmatpush1.msra.mxu0 %v4197
  %4567 = vmatprep.subr.mxu0 %v4202
  %4568 = vmatpush1.msra.mxu0 %v4201
  %4569 = vmatprep.subr.mxu0 %v4206
  %4570 = vmatpush1.msra.mxu0 %v4205
  %4571 = vmatprep.subr.mxu0 %v4210
  %4572 = vmatpush1.msra.mxu0 %v4209
  %4573 = vmatprep.subr.mxu0 %v4214
  %4574 = vmatpush1.msra.mxu0 %v4213
  %4575 = vmatprep.subr.mxu0 %v4218
  %4576 = vmatpush1.msra.mxu0 %v4217
  %4577 = vmatprep.subr.mxu0 %v4222
  %4578 = vmatpush1.msra.mxu0 %v4221
  %4579 = vmatprep.subr.mxu0 %v4226
  %4580 = vmatpush1.msra.mxu0 %v4225
  %4581 = vmatprep.subr.mxu0 %v4230
  %4582 = vmatpush1.msra.mxu0 %v4229
  %4583 = vmatprep.subr.mxu0 %v4234
  %4584 = vmatpush1.msra.mxu0 %v4233
  %4585 = vmatprep.subr.mxu0 %v4238
  %4586 = vmatpush1.msra.mxu0 %v4237
  %4587 = vmatprep.subr.mxu0 %v4242
  %4588 = vmatpush1.msra.mxu0 %v4241
  %4589 = vmatprep.mubr.f32.mxu0 %v4429
  %4590 = vmatmul.mubr.f32.gmra.mrb[0].mxu0 %v4427
  %v4591 = vpop.f32.mrb[0].mxu0
  %v4592 = vadd.f32 %v4521, %v4591
  %v4593 = vpop.f32.mrb[0].mxu0
  %v4594 = vadd.f32 %v4523, %v4593
  %4595 = vdwg.mxu0
  %4596 = vmatprep.subr.mxu0 %v4246
  %4597 = vmatpush1.msra.mxu0 %v4245
  %4598 = vmatprep.subr.mxu0 %v4250
  %4599 = vmatpush1.msra.mxu0 %v4249
  %4600 = vmatprep.subr.mxu0 %v4254
  %4601 = vmatpush1.msra.mxu0 %v4253
  %4602 = vmatprep.subr.mxu0 %v4258
  %4603 = vmatpush1.msra.mxu0 %v4257
  %4604 = vmatprep.subr.mxu0 %v4262
  %4605 = vmatpush1.msra.mxu0 %v4261
  %4606 = vmatprep.subr.mxu0 %v4266
  %4607 = vmatpush1.msra.mxu0 %v4265
  %4608 = vmatprep.subr.mxu0 %v4270
  %4609 = vmatpush1.msra.mxu0 %v4269
  %4610 = vmatprep.subr.mxu0 %v4274
  %4611 = vmatpush1.msra.mxu0 %v4273
  %4612 = vmatprep.subr.mxu0 %v4278
  %4613 = vmatpush1.msra.mxu0 %v4277
  %4614 = vmatprep.subr.mxu0 %v4282
  %4615 = vmatpush1.msra.mxu0 %v4281
  %4616 = vmatprep.subr.mxu0 %v4286
  %4617 = vmatpush1.msra.mxu0 %v4285
  %4618 = vmatprep.subr.mxu0 %v4290
  %4619 = vmatpush1.msra.mxu0 %v4289
  %4620 = vmatprep.subr.mxu0 %v4294
  %4621 = vmatpush1.msra.mxu0 %v4293
  %4622 = vmatprep.subr.mxu0 %v4298
  %4623 = vmatpush1.msra.mxu0 %v4297
  %4624 = vmatprep.subr.mxu0 %v4302
  %4625 = vmatpush1.msra.mxu0 %v4301
  %4626 = vmatprep.subr.mxu0 %v4306
  %4627 = vmatpush1.msra.mxu0 %v4305
  %4628 = vmatprep.subr.mxu0 %v4310
  %4629 = vmatpush1.msra.mxu0 %v4309
  %4630 = vmatprep.subr.mxu0 %v4314
  %4631 = vmatpush1.msra.mxu0 %v4313
  %4632 = vmatprep.subr.mxu0 %v4318
  %4633 = vmatpush1.msra.mxu0 %v4317
  %4634 = vmatprep.subr.mxu0 %v4322
  %4635 = vmatpush1.msra.mxu0 %v4321
  %4636 = vmatprep.subr.mxu0 %v4326
  %4637 = vmatpush1.msra.mxu0 %v4325
  %4638 = vmatprep.subr.mxu0 %v4330
  %4639 = vmatpush1.msra.mxu0 %v4329
  %4640 = vmatprep.subr.mxu0 %v4334
  %4641 = vmatpush1.msra.mxu0 %v4333
  %4642 = vmatprep.subr.mxu0 %v4338
  %4643 = vmatpush1.msra.mxu0 %v4337
  %4644 = vmatprep.subr.mxu0 %v4342
  %4645 = vmatpush1.msra.mxu0 %v4341
  %4646 = vmatprep.subr.mxu0 %v4346
  %4647 = vmatpush1.msra.mxu0 %v4345
  %4648 = vmatprep.subr.mxu0 %v4350
  %4649 = vmatpush1.msra.mxu0 %v4349
  %4650 = vmatprep.subr.mxu0 %v4354
  %4651 = vmatpush1.msra.mxu0 %v4353
  %4652 = vmatprep.subr.mxu0 %v4358
  %4653 = vmatpush1.msra.mxu0 %v4357
  %4654 = vmatprep.subr.mxu0 %v4362
  %4655 = vmatpush1.msra.mxu0 %v4361
  %4656 = vmatprep.subr.mxu0 %v4366
  %4657 = vmatpush1.msra.mxu0 %v4365
  %4658 = vmatprep.subr.mxu0 %v4370
  %4659 = vmatpush1.msra.mxu0 %v4369
  %4660 = vmatprep.mubr.f32.mxu0 %v4445
  %4661 = vmatmul.mubr.f32.gmra.mrb[0].mxu0 %v4437
  %v4662 = vpop.f32.mrb[0].mxu0
  %v4663 = vadd.f32 %v4592, %v4662
  %v4664 = vpop.f32.mrb[0].mxu0
  %v4665 = vadd.f32 %v4594, %v4664
  %4666 = vdwg.mxu0
  %4667 = vmatprep.subr.mxu0 %v4374
  %4668 = vmatpush1.msra.mxu0 %v4373
  %4669 = vmatprep.subr.mxu0 %v4378
  %4670 = vmatpush1.msra.mxu0 %v4377
  %4671 = vmatprep.subr.mxu0 %v4382
  %4672 = vmatpush1.msra.mxu0 %v4381
  %4673 = vmatprep.subr.mxu0 %v4386
  %4674 = vmatpush1.msra.mxu0 %v4385
  %4675 = vmatprep.subr.mxu0 0.0
  %4676 = vmatpush1.msra.mxu0 0.0
  %4677 = vmatprep.subr.mxu0 0.0
  %4678 = vmatpush1.msra.mxu0 0.0
  %4679 = vmatprep.subr.mxu0 0.0
  %4680 = vmatpush1.msra.mxu0 0.0
  %4681 = vmatprep.subr.mxu0 0.0
  %4682 = vmatpush1.msra.mxu0 0.0
  %4683 = vmatprep.subr.mxu0 0.0
  %4684 = vmatpush1.msra.mxu0 0.0
  %4685 = vmatprep.subr.mxu0 0.0
  %4686 = vmatpush1.msra.mxu0 0.0
  %4687 = vmatprep.subr.mxu0 0.0
  %4688 = vmatpush1.msra.mxu0 0.0
  %4689 = vmatprep.subr.mxu0 0.0
  %4690 = vmatpush1.msra.mxu0 0.0
  %4691 = vmatprep.subr.mxu0 0.0
  %4692 = vmatpush1.msra.mxu0 0.0
  %4693 = vmatprep.subr.mxu0 0.0
  %4694 = vmatpush1.msra.mxu0 0.0
  %4695 = vmatprep.subr.mxu0 0.0
  %4696 = vmatpush1.msra.mxu0 0.0
  %4697 = vmatprep.subr.mxu0 0.0
  %4698 = vmatpush1.msra.mxu0 0.0
  %4699 = vmatprep.subr.mxu0 0.0
  %4700 = vmatpush1.msra.mxu0 0.0
  %4701 = vmatprep.subr.mxu0 0.0
  %4702 = vmatpush1.msra.mxu0 0.0
  %4703 = vmatprep.subr.mxu0 0.0
  %4704 = vmatpush1.msra.mxu0 0.0
  %4705 = vmatprep.subr.mxu0 0.0
  %4706 = vmatpush1.msra.mxu0 0.0
  %4707 = vmatprep.subr.mxu0 0.0
  %4708 = vmatpush1.msra.mxu0 0.0
  %4709 = vmatprep.subr.mxu0 0.0
  %4710 = vmatpush1.msra.mxu0 0.0
  %4711 = vmatprep.subr.mxu0 0.0
  %4712 = vmatpush1.msra.mxu0 0.0
  %4713 = vmatprep.subr.mxu0 0.0
  %4714 = vmatpush1.msra.mxu0 0.0
  %4715 = vmatprep.subr.mxu0 0.0
  %4716 = vmatpush1.msra.mxu0 0.0
  %4717 = vmatprep.subr.mxu0 0.0
  %4718 = vmatpush1.msra.mxu0 0.0
  %4719 = vmatprep.subr.mxu0 0.0
  %4720 = vmatpush1.msra.mxu0 0.0
  %4721 = vmatprep.subr.mxu0 0.0
  %4722 = vmatpush1.msra.mxu0 0.0
  %4723 = vmatprep.subr.mxu0 0.0
  %4724 = vmatpush1.msra.mxu0 0.0
  %4725 = vmatprep.subr.mxu0 0.0
  %4726 = vmatpush1.msra.mxu0 0.0
  %4727 = vmatprep.subr.mxu0 0.0
  %4728 = vmatpush1.msra.mxu0 0.0
  %4729 = vmatprep.subr.mxu0 0.0
  %4730 = vmatpush1.msra.mxu0 0.0
  %4731 = vmatprep.mubr.f32.mxu0 0.0
  %4732 = vmatmul.mubr.f32.gmra.mrb[0].mxu0 %v4452
  %v4733 = vpop.f32.mrb[0].mxu0
  %v4734 = vadd.f32 %v4663, %v4733
  %v4735 = vpop.f32.mrb[0].mxu0
  %v4736 = vadd.f32 %v4665, %v4735
  %4737 = vdwg.mxu0
  %4738 = vmatprep.subr.mxu0 %v3992
  %4739 = vmatpush1.msra.mxu0 %v3991
  %4740 = vmatprep.subr.mxu0 %v3996
  %4741 = vmatpush1.msra.mxu0 %v3995
  %4742 = vmatprep.subr.mxu0 %v4000
  %4743 = vmatpush1.msra.mxu0 %v3999
  %4744 = vmatprep.subr.mxu0 %v4004
  %4745 = vmatpush1.msra.mxu0 %v4003
  %4746 = vmatprep.subr.mxu0 %v4008
  %4747 = vmatpush1.msra.mxu0 %v4007
  %4748 = vmatprep.subr.mxu0 %v4012
  %4749 = vmatpush1.msra.mxu0 %v4011
  %4750 = vmatprep.subr.mxu0 %v4016
  %4751 = vmatpush1.msra.mxu0 %v4015
  %4752 = vmatprep.subr.mxu0 %v4020
  %4753 = vmatpush1.msra.mxu0 %v4019
  %4754 = vmatprep.subr.mxu0 %v4024
  %4755 = vmatpush1.msra.mxu0 %v4023
  %4756 = vmatprep.subr.mxu0 %v4028
  %4757 = vmatpush1.msra.mxu0 %v4027
  %4758 = vmatprep.subr.mxu0 %v4032
  %4759 = vmatpush1.msra.mxu0 %v4031
  %4760 = vmatprep.subr.mxu0 %v4036
  %4761 = vmatpush1.msra.mxu0 %v4035
  %4762 = vmatprep.subr.mxu0 %v4040
  %4763 = vmatpush1.msra.mxu0 %v4039
  %4764 = vmatprep.subr.mxu0 %v4044
  %4765 = vmatpush1.msra.mxu0 %v4043
  %4766 = vmatprep.subr.mxu0 %v4048
  %4767 = vmatpush1.msra.mxu0 %v4047
  %4768 = vmatprep.subr.mxu0 %v4052
  %4769 = vmatpush1.msra.mxu0 %v4051
  %4770 = vmatprep.subr.mxu0 %v4056
  %4771 = vmatpush1.msra.mxu0 %v4055
  %4772 = vmatprep.subr.mxu0 %v4060
  %4773 = vmatpush1.msra.mxu0 %v4059
  %4774 = vmatprep.subr.mxu0 %v4064
  %4775 = vmatpush1.msra.mxu0 %v4063
  %4776 = vmatprep.subr.mxu0 %v4068
  %4777 = vmatpush1.msra.mxu0 %v4067
  %4778 = vmatprep.subr.mxu0 %v4072
  %4779 = vmatpush1.msra.mxu0 %v4071
  %4780 = vmatprep.subr.mxu0 %v4076
  %4781 = vmatpush1.msra.mxu0 %v4075
  %4782 = vmatprep.subr.mxu0 %v4080
  %4783 = vmatpush1.msra.mxu0 %v4079
  %4784 = vmatprep.subr.mxu0 %v4084
  %4785 = vmatpush1.msra.mxu0 %v4083
  %4786 = vmatprep.subr.mxu0 %v4088
  %4787 = vmatpush1.msra.mxu0 %v4087
  %4788 = vmatprep.subr.mxu0 %v4092
  %4789 = vmatpush1.msra.mxu0 %v4091
  %4790 = vmatprep.subr.mxu0 %v4096
  %4791 = vmatpush1.msra.mxu0 %v4095
  %4792 = vmatprep.subr.mxu0 %v4100
  %4793 = vmatpush1.msra.mxu0 %v4099
  %4794 = vmatprep.subr.mxu0 %v4104
  %4795 = vmatpush1.msra.mxu0 %v4103
  %4796 = vmatprep.subr.mxu0 %v4108
  %4797 = vmatpush1.msra.mxu0 %v4107
  %4798 = vmatprep.subr.mxu0 %v4112
  %4799 = vmatpush1.msra.mxu0 %v4111
  %4800 = vmatprep.subr.mxu0 %v4116
  %4801 = vmatpush1.msra.mxu0 %v4115
  %4802 = vmatprep.mubr.f32.mxu0 %v4428
  %4803 = vmatmul.mubr.f32.gmra.mrb[0].mxu0 %v4420
  %v4804 = vpop.f32.mrb[0].mxu0
  %v4805 = vadd.f32 %v4402, %v4804
  %v4806 = vpop.f32.mrb[0].mxu0
  %v4807 = vadd.f32 %v4406, %v4806
  %4808 = vdwg.mxu0
  %4809 = vmatprep.subr.mxu0 %v4120
  %4810 = vmatpush1.msra.mxu0 %v4119
  %4811 = vmatprep.subr.mxu0 %v4124
  %4812 = vmatpush1.msra.mxu0 %v4123
  %4813 = vmatprep.subr.mxu0 %v4128
  %4814 = vmatpush1.msra.mxu0 %v4127
  %4815 = vmatprep.subr.mxu0 %v4132
  %4816 = vmatpush1.msra.mxu0 %v4131
  %4817 = vmatprep.subr.mxu0 %v4136
  %4818 = vmatpush1.msra.mxu0 %v4135
  %4819 = vmatprep.subr.mxu0 %v4140
  %4820 = vmatpush1.msra.mxu0 %v4139
  %4821 = vmatprep.subr.mxu0 %v4144
  %4822 = vmatpush1.msra.mxu0 %v4143
  %4823 = vmatprep.subr.mxu0 %v4148
  %4824 = vmatpush1.msra.mxu0 %v4147
  %4825 = vmatprep.subr.mxu0 %v4152
  %4826 = vmatpush1.msra.mxu0 %v4151
  %4827 = vmatprep.subr.mxu0 %v4156
  %4828 = vmatpush1.msra.mxu0 %v4155
  %4829 = vmatprep.subr.mxu0 %v4160
  %4830 = vmatpush1.msra.mxu0 %v4159
  %4831 = vmatprep.subr.mxu0 %v4164
  %4832 = vmatpush1.msra.mxu0 %v4163
  %4833 = vmatprep.subr.mxu0 %v4168
  %4834 = vmatpush1.msra.mxu0 %v4167
  %4835 = vmatprep.subr.mxu0 %v4172
  %4836 = vmatpush1.msra.mxu0 %v4171
  %4837 = vmatprep.subr.mxu0 %v4176
  %4838 = vmatpush1.msra.mxu0 %v4175
  %4839 = vmatprep.subr.mxu0 %v4180
  %4840 = vmatpush1.msra.mxu0 %v4179
  %4841 = vmatprep.subr.mxu0 %v4184
  %4842 = vmatpush1.msra.mxu0 %v4183
  %4843 = vmatprep.subr.mxu0 %v4188
  %4844 = vmatpush1.msra.mxu0 %v4187
  %4845 = vmatprep.subr.mxu0 %v4192
  %4846 = vmatpush1.msra.mxu0 %v4191
  %4847 = vmatprep.subr.mxu0 %v4196
  %4848 = vmatpush1.msra.mxu0 %v4195
  %4849 = vmatprep.subr.mxu0 %v4200
  %4850 = vmatpush1.msra.mxu0 %v4199
  %4851 = vmatprep.subr.mxu0 %v4204
  %4852 = vmatpush1.msra.mxu0 %v4203
  %4853 = vmatprep.subr.mxu0 %v4208
  %4854 = vmatpush1.msra.mxu0 %v4207
  %4855 = vmatprep.subr.mxu0 %v4212
  %4856 = vmatpush1.msra.mxu0 %v4211
  %4857 = vmatprep.subr.mxu0 %v4216
  %4858 = vmatpush1.msra.mxu0 %v4215
  %4859 = vmatprep.subr.mxu0 %v4220
  %4860 = vmatpush1.msra.mxu0 %v4219
  %4861 = vmatprep.subr.mxu0 %v4224
  %4862 = vmatpush1.msra.mxu0 %v4223
  %4863 = vmatprep.subr.mxu0 %v4228
  %4864 = vmatpush1.msra.mxu0 %v4227
  %4865 = vmatprep.subr.mxu0 %v4232
  %4866 = vmatpush1.msra.mxu0 %v4231
  %4867 = vmatprep.subr.mxu0 %v4236
  %4868 = vmatpush1.msra.mxu0 %v4235
  %4869 = vmatprep.subr.mxu0 %v4240
  %4870 = vmatpush1.msra.mxu0 %v4239
  %4871 = vmatprep.subr.mxu0 %v4244
  %4872 = vmatpush1.msra.mxu0 %v4243
  %4873 = vmatprep.mubr.f32.mxu0 %v4429
  %4874 = vmatmul.mubr.f32.gmra.mrb[0].mxu0 %v4427
  %v4875 = vpop.f32.mrb[0].mxu0
  %v4876 = vadd.f32 %v4805, %v4875
  %v4877 = vpop.f32.mrb[0].mxu0
  %v4878 = vadd.f32 %v4807, %v4877
  %4879 = vdwg.mxu0
  %4880 = vmatprep.subr.mxu0 %v4248
  %4881 = vmatpush1.msra.mxu0 %v4247
  %4882 = vmatprep.subr.mxu0 %v4252
  %4883 = vmatpush1.msra.mxu0 %v4251
  %4884 = vmatprep.subr.mxu0 %v4256
  %4885 = vmatpush1.msra.mxu0 %v4255
  %4886 = vmatprep.subr.mxu0 %v4260
  %4887 = vmatpush1.msra.mxu0 %v4259
  %4888 = vmatprep.subr.mxu0 %v4264
  %4889 = vmatpush1.msra.mxu0 %v4263
  %4890 = vmatprep.subr.mxu0 %v4268
  %4891 = vmatpush1.msra.mxu0 %v4267
  %4892 = vmatprep.subr.mxu0 %v4272
  %4893 = vmatpush1.msra.mxu0 %v4271
  %4894 = vmatprep.subr.mxu0 %v4276
  %4895 = vmatpush1.msra.mxu0 %v4275
  %4896 = vmatprep.subr.mxu0 %v4280
  %4897 = vmatpush1.msra.mxu0 %v4279
  %4898 = vmatprep.subr.mxu0 %v4284
  %4899 = vmatpush1.msra.mxu0 %v4283
  %4900 = vmatprep.subr.mxu0 %v4288
  %4901 = vmatpush1.msra.mxu0 %v4287
  %4902 = vmatprep.subr.mxu0 %v4292
  %4903 = vmatpush1.msra.mxu0 %v4291
  %4904 = vmatprep.subr.mxu0 %v4296
  %4905 = vmatpush1.msra.mxu0 %v4295
  %4906 = vmatprep.subr.mxu0 %v4300
  %4907 = vmatpush1.msra.mxu0 %v4299
  %4908 = vmatprep.subr.mxu0 %v4304
  %4909 = vmatpush1.msra.mxu0 %v4303
  %4910 = vmatprep.subr.mxu0 %v4308
  %4911 = vmatpush1.msra.mxu0 %v4307
  %4912 = vmatprep.subr.mxu0 %v4312
  %4913 = vmatpush1.msra.mxu0 %v4311
  %4914 = vmatprep.subr.mxu0 %v4316
  %4915 = vmatpush1.msra.mxu0 %v4315
  %4916 = vmatprep.subr.mxu0 %v4320
  %4917 = vmatpush1.msra.mxu0 %v4319
  %4918 = vmatprep.subr.mxu0 %v4324
  %4919 = vmatpush1.msra.mxu0 %v4323
  %4920 = vmatprep.subr.mxu0 %v4328
  %4921 = vmatpush1.msra.mxu0 %v4327
  %4922 = vmatprep.subr.mxu0 %v4332
  %4923 = vmatpush1.msra.mxu0 %v4331
  %4924 = vmatprep.subr.mxu0 %v4336
  %4925 = vmatpush1.msra.mxu0 %v4335
  %4926 = vmatprep.subr.mxu0 %v4340
  %4927 = vmatpush1.msra.mxu0 %v4339
  %4928 = vmatprep.subr.mxu0 %v4344
  %4929 = vmatpush1.msra.mxu0 %v4343
  %4930 = vmatprep.subr.mxu0 %v4348
  %4931 = vmatpush1.msra.mxu0 %v4347
  %4932 = vmatprep.subr.mxu0 %v4352
  %4933 = vmatpush1.msra.mxu0 %v4351
  %4934 = vmatprep.subr.mxu0 %v4356
  %4935 = vmatpush1.msra.mxu0 %v4355
  %4936 = vmatprep.subr.mxu0 %v4360
  %4937 = vmatpush1.msra.mxu0 %v4359
  %4938 = vmatprep.subr.mxu0 %v4364
  %4939 = vmatpush1.msra.mxu0 %v4363
  %4940 = vmatprep.subr.mxu0 %v4368
  %4941 = vmatpush1.msra.mxu0 %v4367
  %4942 = vmatprep.subr.mxu0 %v4372
  %4943 = vmatpush1.msra.mxu0 %v4371
  %4944 = vmatprep.mubr.f32.mxu0 %v4445
  %4945 = vmatmul.mubr.f32.gmra.mrb[0].mxu0 %v4437
  %v4946 = vpop.f32.mrb[0].mxu0
  %v4947 = vadd.f32 %v4876, %v4946
  %v4948 = vpop.f32.mrb[0].mxu0
  %v4949 = vadd.f32 %v4878, %v4948
  %4950 = vdwg.mxu0
  %4951 = vmatprep.subr.mxu0 %v4376
  %4952 = vmatpush1.msra.mxu0 %v4375
  %4953 = vmatprep.subr.mxu0 %v4380
  %4954 = vmatpush1.msra.mxu0 %v4379
  %4955 = vmatprep.subr.mxu0 %v4384
  %4956 = vmatpush1.msra.mxu0 %v4383
  %4957 = vmatprep.subr.mxu0 %v4388
  %4958 = vmatpush1.msra.mxu0 %v4387
  %4959 = vmatprep.subr.mxu0 0.0
  %4960 = vmatpush1.msra.mxu0 0.0
  %4961 = vmatprep.subr.mxu0 0.0
  %4962 = vmatpush1.msra.mxu0 0.0
  %4963 = vmatprep.subr.mxu0 0.0
  %4964 = vmatpush1.msra.mxu0 0.0
  %4965 = vmatprep.subr.mxu0 0.0
  %4966 = vmatpush1.msra.mxu0 0.0
  %4967 = vmatprep.subr.mxu0 0.0
  %4968 = vmatpush1.msra.mxu0 0.0
  %4969 = vmatprep.subr.mxu0 0.0
  %4970 = vmatpush1.msra.mxu0 0.0
  %4971 = vmatprep.subr.mxu0 0.0
  %4972 = vmatpush1.msra.mxu0 0.0
  %4973 = vmatprep.subr.mxu0 0.0
  %4974 = vmatpush1.msra.mxu0 0.0
  %4975 = vmatprep.subr.mxu0 0.0
  %4976 = vmatpush1.msra.mxu0 0.0
  %4977 = vmatprep.subr.mxu0 0.0
  %4978 = vmatpush1.msra.mxu0 0.0
  %4979 = vmatprep.subr.mxu0 0.0
  %4980 = vmatpush1.msra.mxu0 0.0
  %4981 = vmatprep.subr.mxu0 0.0
  %4982 = vmatpush1.msra.mxu0 0.0
  %4983 = vmatprep.subr.mxu0 0.0
  %4984 = vmatpush1.msra.mxu0 0.0
  %4985 = vmatprep.subr.mxu0 0.0
  %4986 = vmatpush1.msra.mxu0 0.0
  %4987 = vmatprep.subr.mxu0 0.0
  %4988 = vmatpush1.msra.mxu0 0.0
  %4989 = vmatprep.subr.mxu0 0.0
  %4990 = vmatpush1.msra.mxu0 0.0
  %4991 = vmatprep.subr.mxu0 0.0
  %4992 = vmatpush1.msra.mxu0 0.0
  %4993 = vmatprep.subr.mxu0 0.0
  %4994 = vmatpush1.msra.mxu0 0.0
  %4995 = vmatprep.subr.mxu0 0.0
  %4996 = vmatpush1.msra.mxu0 0.0
  %4997 = vmatprep.subr.mxu0 0.0
  %4998 = vmatpush1.msra.mxu0 0.0
  %4999 = vmatprep.subr.mxu0 0.0
  %5000 = vmatpush1.msra.mxu0 0.0
  %5001 = vmatprep.subr.mxu0 0.0
  %5002 = vmatpush1.msra.mxu0 0.0
  %5003 = vmatprep.subr.mxu0 0.0
  %5004 = vmatpush1.msra.mxu0 0.0
  %5005 = vmatprep.subr.mxu0 0.0
  %5006 = vmatpush1.msra.mxu0 0.0
  %5007 = vmatprep.subr.mxu0 0.0
  %5008 = vmatpush1.msra.mxu0 0.0
  %5009 = vmatprep.subr.mxu0 0.0
  %5010 = vmatpush1.msra.mxu0 0.0
  %5011 = vmatprep.subr.mxu0 0.0
  %5012 = vmatpush1.msra.mxu0 0.0
  %5013 = vmatprep.subr.mxu0 0.0
  %5014 = vmatpush1.msra.mxu0 0.0
  %5015 = vmatprep.mubr.f32.mxu0 0.0
  %5016 = vmatmul.mubr.f32.gmra.mrb[0].mxu0 %v4452
  %v5017 = vpop.f32.mrb[0].mxu0
  %v5018 = vadd.f32 %v4947, %v5017
  %v5019 = vpop.f32.mrb[0].mxu0
  %v5020 = vadd.f32 %v4949, %v5019
  %5021 = vdwg.mxu0
  %v5022 = vmax.f32 %v4734, 0.0
  %v5023 = vmax.f32 %v4736, 0.0
  %v5024 = vmax.f32 %v5018, 0.0
  %v5025 = vmax.f32 %v5020, 0.0
  %v5026 = vld [vmem:[%s14] sm:$0xff]
  %v5027 = vld [vmem:[%s14 + $0x8] sm:$0xff]
  %v5028 = vld [vmem:[%s14 + $0x10] sm:$0xff]
  %v5029 = vld [vmem:[%s14 + $0x18] sm:$0xff]
  %v5030 = vld [vmem:[%s14 + $0x20] sm:$0xff]
  %v5031 = vld [vmem:[%s14 + $0x28] sm:$0xff]
  %v5032 = vld [vmem:[%s14 + $0x30] sm:$0xff]
  %v5033 = vld [vmem:[%s14 + $0x38] sm:$0xff]
  %v5034 = vld [vmem:[%s14 + $0x40] sm:$0xff]
  %v5035 = vld [vmem:[%s14 + $0x48] sm:$0xff]
  %v5036 = vld [vmem:[%s14 + $0x50] sm:$0xff]
  %v5037 = vld [vmem:[%s14 + $0x58] sm:$0xff]
  %v5038 = vld [vmem:[%s14 + $0x60] sm:$0xff]
  %v5039 = vld [vmem:[%s14 + $0x68] sm:$0xff]
  %v5040 = vld [vmem:[%s14 + $0x70] sm:$0xff]
  %v5041 = vld [vmem:[%s14 + $0x78] sm:$0xff]
  %v5042 = vld [vmem:[%s14 + $0x80] sm:$0xff]
  %v5043 = vld [vmem:[%s14 + $0x88] sm:$0xff]
  %v5044 = vld [vmem:[%s14 + $0x90] sm:$0xff]
  %v5045 = vld [vmem:[%s14 + $0x98] sm:$0xff]
  %v5046 = vld [vmem:[%s14 + $0xa0] sm:$0xff]
  %v5047 = vld [vmem:[%s14 + $0xa8] sm:$0xff]
  %v5048 = vld [vmem:[%s14 + $0xb0] sm:$0xff]
  %v5049 = vld [vmem:[%s14 + $0xb8] sm:$0xff]
  %v5050 = vld [vmem:[%s14 + $0xc0] sm:$0xff]
  %v5051 = vld [vmem:[%s14 + $0xc8] sm:$0xff]
  %v5052 = vld [vmem:[%s14 + $0xd0] sm:$0xff]
  %v5053 = vld [vmem:[%s14 + $0xd8] sm:$0xff]
  %v5054 = vld [vmem:[%s14 + $0xe0] sm:$0xff]
  %v5055 = vld [vmem:[%s14 + $0xe8] sm:$0xff]
  %v5056 = vld [vmem:[%s14 + $0xf0] sm:$0xff]
  %v5057 = vld [vmem:[%s14 + $0xf8] sm:$0xff]
  %v5058 = vld [vmem:[%s14 + $0x100] sm:$0xff]
  %v5059 = vld [vmem:[%s14 + $0x108] sm:$0xff]
  %v5060 = vld [vmem:[%s14 + $0x110] sm:$0xff]
  %v5061 = vld [vmem:[%s14 + $0x118] sm:$0xff]
  %v5062 = vld [vmem:[%s14 + $0x120] sm:$0xff]
  %v5063 = vld [vmem:[%s14 + $0x128] sm:$0xff]
  %v5064 = vld [vmem:[%s14 + $0x130] sm:$0xff]
  %v5065 = vld [vmem:[%s14 + $0x138] sm:$0xff]
  %v5066 = vld [vmem:[%s14 + $0x140] sm:$0xff]
  %v5067 = vld [vmem:[%s14 + $0x148] sm:$0xff]
  %v5068 = vld [vmem:[%s14 + $0x150] sm:$0xff]
  %v5069 = vld [vmem:[%s14 + $0x158] sm:$0xff]
  %v5070 = vld [vmem:[%s14 + $0x160] sm:$0xff]
  %v5071 = vld [vmem:[%s14 + $0x168] sm:$0xff]
  %v5072 = vld [vmem:[%s14 + $0x170] sm:$0xff]
  %v5073 = vld [vmem:[%s14 + $0x178] sm:$0xff]
  %v5074 = vld [vmem:[%s14 + $0x180] sm:$0xff]
  %v5075 = vld [vmem:[%s14 + $0x188] sm:$0xff]
  %v5076 = vld [vmem:[%s14 + $0x190] sm:$0xff]
  %v5077 = vld [vmem:[%s14 + $0x198] sm:$0xff]
  %v5078 = vld [vmem:[%s14 + $0x1a0] sm:$0xff]
  %v5079 = vld [vmem:[%s14 + $0x1a8] sm:$0xff]
  %v5080 = vld [vmem:[%s14 + $0x1b0] sm:$0xff]
  %v5081 = vld [vmem:[%s14 + $0x1b8] sm:$0xff]
  %v5082 = vld [vmem:[%s14 + $0x1c0] sm:$0xff]
  %v5083 = vld [vmem:[%s14 + $0x1c8] sm:$0xff]
  %v5084 = vld [vmem:[%s14 + $0x1d0] sm:$0xff]
  %v5085 = vld [vmem:[%s14 + $0x1d8] sm:$0xff]
  %v5086 = vld [vmem:[%s14 + $0x1e0] sm:$0xff]
  %v5087 = vld [vmem:[%s14 + $0x1e8] sm:$0xff]
  %v5088 = vld [vmem:[%s14 + $0x1f0] sm:$0xff]
  %v5089 = vld [vmem:[%s14 + $0x1f8] sm:$0xff]
  %v5090 = vld [vmem:[%s15] sm:$0x1]
  %v5092 = vlaneseq
  %v5093 = vshrl.u32 %v5092, 7
  %v5094 = vsub.s32 0, %v5093
  %v5095 = vrot.slane %v5090, %v5094
  %5097 = vmatprep.subr.mxu0 0.0
  %5098 = vmatpush1.msra.mxu0 %v5026
  %5099 = vmatprep.subr.mxu0 0.0
  %5100 = vmatpush1.msra.mxu0 %v5027
  %5101 = vmatprep.subr.mxu0 0.0
  %5102 = vmatpush1.msra.mxu0 %v5028
  %5103 = vmatprep.subr.mxu0 0.0
  %5104 = vmatpush1.msra.mxu0 %v5029
  %5105 = vmatprep.subr.mxu0 0.0
  %5106 = vmatpush1.msra.mxu0 %v5030
  %5107 = vmatprep.subr.mxu0 0.0
  %5108 = vmatpush1.msra.mxu0 %v5031
  %5109 = vmatprep.subr.mxu0 0.0
  %5110 = vmatpush1.msra.mxu0 %v5032
  %5111 = vmatprep.subr.mxu0 0.0
  %5112 = vmatpush1.msra.mxu0 %v5033
  %5113 = vmatprep.subr.mxu0 0.0
  %5114 = vmatpush1.msra.mxu0 %v5034
  %5115 = vmatprep.subr.mxu0 0.0
  %5116 = vmatpush1.msra.mxu0 %v5035
  %5117 = vmatprep.subr.mxu0 0.0
  %5118 = vmatpush1.msra.mxu0 %v5036
  %5119 = vmatprep.subr.mxu0 0.0
  %5120 = vmatpush1.msra.mxu0 %v5037
  %5121 = vmatprep.subr.mxu0 0.0
  %5122 = vmatpush1.msra.mxu0 %v5038
  %5123 = vmatprep.subr.mxu0 0.0
  %5124 = vmatpush1.msra.mxu0 %v5039
  %5125 = vmatprep.subr.mxu0 0.0
  %5126 = vmatpush1.msra.mxu0 %v5040
  %5127 = vmatprep.subr.mxu0 0.0
  %5128 = vmatpush1.msra.mxu0 %v5041
  %5129 = vmatprep.subr.mxu0 0.0
  %5130 = vmatpush1.msra.mxu0 %v5042
  %5131 = vmatprep.subr.mxu0 0.0
  %5132 = vmatpush1.msra.mxu0 %v5043
  %5133 = vmatprep.subr.mxu0 0.0
  %5134 = vmatpush1.msra.mxu0 %v5044
  %5135 = vmatprep.subr.mxu0 0.0
  %5136 = vmatpush1.msra.mxu0 %v5045
  %5137 = vmatprep.subr.mxu0 0.0
  %5138 = vmatpush1.msra.mxu0 %v5046
  %5139 = vmatprep.subr.mxu0 0.0
  %5140 = vmatpush1.msra.mxu0 %v5047
  %5141 = vmatprep.subr.mxu0 0.0
  %5142 = vmatpush1.msra.mxu0 %v5048
  %5143 = vmatprep.subr.mxu0 0.0
  %5144 = vmatpush1.msra.mxu0 %v5049
  %5145 = vmatprep.subr.mxu0 0.0
  %5146 = vmatpush1.msra.mxu0 %v5050
  %5147 = vmatprep.subr.mxu0 0.0
  %5148 = vmatpush1.msra.mxu0 %v5051
  %5149 = vmatprep.subr.mxu0 0.0
  %5150 = vmatpush1.msra.mxu0 %v5052
  %5151 = vmatprep.subr.mxu0 0.0
  %5152 = vmatpush1.msra.mxu0 %v5053
  %5153 = vmatprep.subr.mxu0 0.0
  %5154 = vmatpush1.msra.mxu0 %v5054
  %5155 = vmatprep.subr.mxu0 0.0
  %5156 = vmatpush1.msra.mxu0 %v5055
  %5157 = vmatprep.subr.mxu0 0.0
  %5158 = vmatpush1.msra.mxu0 %v5056
  %5159 = vmatprep.subr.mxu0 0.0
  %5160 = vmatpush1.msra.mxu0 %v5057
  %5161 = vmatprep.mubr.f32.mxu0 %v5023
  %5162 = vmatmul.mubr.f32.gmra.mrb[0].mxu0 %v5022
  %v5163 = vpop.f32.mrb[0].mxu0
  %v5164 = vadd.f32 %v5095, %v5163
  %v5165 = vpop.f32.mrb[0].mxu0
  %5166 = vdwg.mxu0
  %5167 = vmatprep.subr.mxu0 0.0
  %5168 = vmatpush1.msra.mxu0 %v5058
  %5169 = vmatprep.subr.mxu0 0.0
  %5170 = vmatpush1.msra.mxu0 %v5059
  %5171 = vmatprep.subr.mxu0 0.0
  %5172 = vmatpush1.msra.mxu0 %v5060
  %5173 = vmatprep.subr.mxu0 0.0
  %5174 = vmatpush1.msra.mxu0 %v5061
  %5175 = vmatprep.subr.mxu0 0.0
  %5176 = vmatpush1.msra.mxu0 %v5062
  %5177 = vmatprep.subr.mxu0 0.0
  %5178 = vmatpush1.msra.mxu0 %v5063
  %5179 = vmatprep.subr.mxu0 0.0
  %5180 = vmatpush1.msra.mxu0 %v5064
  %5181 = vmatprep.subr.mxu0 0.0
  %5182 = vmatpush1.msra.mxu0 %v5065
  %5183 = vmatprep.subr.mxu0 0.0
  %5184 = vmatpush1.msra.mxu0 %v5066
  %5185 = vmatprep.subr.mxu0 0.0
  %5186 = vmatpush1.msra.mxu0 %v5067
  %5187 = vmatprep.subr.mxu0 0.0
  %5188 = vmatpush1.msra.mxu0 %v5068
  %5189 = vmatprep.subr.mxu0 0.0
  %5190 = vmatpush1.msra.mxu0 %v5069
  %5191 = vmatprep.subr.mxu0 0.0
  %5192 = vmatpush1.msra.mxu0 %v5070
  %5193 = vmatprep.subr.mxu0 0.0
  %5194 = vmatpush1.msra.mxu0 %v5071
  %5195 = vmatprep.subr.mxu0 0.0
  %5196 = vmatpush1.msra.mxu0 %v5072
  %5197 = vmatprep.subr.mxu0 0.0
  %5198 = vmatpush1.msra.mxu0 %v5073
  %5199 = vmatprep.subr.mxu0 0.0
  %5200 = vmatpush1.msra.mxu0 %v5074
  %5201 = vmatprep.subr.mxu0 0.0
  %5202 = vmatpush1.msra.mxu0 %v5075
  %5203 = vmatprep.subr.mxu0 0.0
  %5204 = vmatpush1.msra.mxu0 %v5076
  %5205 = vmatprep.subr.mxu0 0.0
  %5206 = vmatpush1.msra.mxu0 %v5077
  %5207 = vmatprep.subr.mxu0 0.0
  %5208 = vmatpush1.msra.mxu0 %v5078
  %5209 = vmatprep.subr.mxu0 0.0
  %5210 = vmatpush1.msra.mxu0 %v5079
  %5211 = vmatprep.subr.mxu0 0.0
  %5212 = vmatpush1.msra.mxu0 %v5080
  %5213 = vmatprep.subr.mxu0 0.0
  %5214 = vmatpush1.msra.mxu0 %v5081
  %5215 = vmatprep.subr.mxu0 0.0
  %5216 = vmatpush1.msra.mxu0 %v5082
  %5217 = vmatprep.subr.mxu0 0.0
  %5218 = vmatpush1.msra.mxu0 %v5083
  %5219 = vmatprep.subr.mxu0 0.0
  %5220 = vmatpush1.msra.mxu0 %v5084
  %5221 = vmatprep.subr.mxu0 0.0
  %5222 = vmatpush1.msra.mxu0 %v5085
  %5223 = vmatprep.subr.mxu0 0.0
  %5224 = vmatpush1.msra.mxu0 %v5086
  %5225 = vmatprep.subr.mxu0 0.0
  %5226 = vmatpush1.msra.mxu0 %v5087
  %5227 = vmatprep.subr.mxu0 0.0
  %5228 = vmatpush1.msra.mxu0 %v5088
  %5229 = vmatprep.subr.mxu0 0.0
  %5230 = vmatpush1.msra.mxu0 %v5089
  %5231 = vmatprep.mubr.f32.mxu0 %v5025
  %5232 = vmatmul.mubr.f32.gmra.mrb[0].mxu0 %v5024
  %v5233 = vpop.f32.mrb[0].mxu0
  %v5234 = vadd.f32 %v5164, %v5233
  %v5235 = vpop.f32.mrb[0].mxu0
  %5236 = vdwg.mxu0
  %5237 = vst [vmem:[%s16] sm:$0x3] %v5234
  // Predicated region
  $region66: #{nlayer_discriminator_forward.1} parent=0 // pred_check
    _
  $region67: #{nlayer_discriminator_forward.1} parent=0 // pred_check_branch
    %5239 = sbr.rel (0) target = $region69
  $region68: #{nlayer_discriminator_forward.1} parent=0 // pred_region
    _
  $region69: #{nlayer_discriminator_forward.1} parent=0 // pred_fallthru
    _
  // Predicated region
  $region70: #{nlayer_discriminator_forward.1} parent=0 // pred_check
    _
  $region71: #{nlayer_discriminator_forward.1} parent=0 // pred_check_branch
    %5241 = sbr.rel (0) target = $region73
  $region72: #{nlayer_discriminator_forward.1} parent=0 // pred_region
    _
  $region73: #{nlayer_discriminator_forward.1} parent=0 // pred_fallthru
    _

</llo_original>
